<compile_context>
chip_gen: v6e
topology: v6e:2x2x1
jax: 0.10.0
libtpu: 0.0.40
codegen_flags: <defaults>
</compile_context>

<pallas_src>
import functools

import jax
import jax.numpy as jnp
from jax import lax
from jax.experimental import pallas as pl
from jax.experimental.pallas import tpu as pltpu

_BN_EPS = 1e-5
_EDGE_DTYPE = jnp.bfloat16          # edge activations live in bf16 in HBM (halves DMA bytes)
_OUT_PAD = 128                      # lane-dense width for the head's final MXU matmul only
_MIB = 1024 * 1024


# ----------------------------- Pallas kernels ------------------------------

def _gcn_stats_kernel(xp_ref, e_ref, wue_ref, xtmp_ref, stats_ref,
                      *, n_real, masked, mean_agg):
    """Pass 1: gate pre-activation (bf16 MXU), sigmoid gating, aggregation, BN partials.

    xp_ref : (1, Np, 4H) f32 hoisted node projections [Ve.x+bVe | Ve.x+bVe+bUe | Ux | Vx]
    e_ref  : (1, TI, Np, H) bf16 edge tile
    wue_ref: (H, H) bf16 W_Ue
    """
    _, ti, Np, H = e_ref.shape
    i0 = pl.multiple_of(pl.program_id(1) * ti, ti)

    xp = xp_ref[0]                                              # (Np, 4H) f32
    vexb = xp[:, H:2 * H]                                       # j-side term (b_Ue folded in)
    vx = xp[:, 3 * H:4 * H]
    xp_i = xp_ref[0, pl.ds(i0, ti), :]                          # (TI, 4H)
    vex_i = xp_i[:, 0:H]
    ux_i = xp_i[:, 2 * H:3 * H]

    e = e_ref[0]                                                # (TI, Np, H) bf16 (no f32 copy)
    ue = jnp.dot(e.reshape(ti * Np, H), wue_ref[...],           # bf16 x bf16 -> f32 on the MXU
                 preferred_element_type=jnp.float32)
    e_tmp = ue.reshape(ti, Np, H) + vex_i[:, None, :] + vexb[None, :, :]

    gate = jax.nn.sigmoid(e_tmp)                                # EUP
    if masked:
        col_ok = lax.broadcasted_iota(jnp.int32, (1, Np, 1), 1) < n_real
        row_ok = (lax.broadcasted_iota(jnp.int32, (ti, 1, 1), 0) + i0) < n_real
        gate = jnp.where(col_ok, gate, 0.0)                     # pad columns don't aggregate

    num = jnp.sum(gate * vx[None, :, :], axis=1)                # (TI, H)
    if mean_agg:
        den = jnp.sum(gate, axis=1)
        x_tmp = ux_i + num / (den + 1e-20)                      # exact division (per-node only)
    else:
        x_tmp = ux_i + num
    xtmp_ref[0] = x_tmp

    # Per-tile BatchNorm partials; edge column-sums as ones-row matmuls on the MXU.
    e_stat = e_tmp
    x_stat = x_tmp
    if masked:
        e_stat = jnp.where(jnp.logical_and(row_ok, col_ok), e_tmp, 0.0)
        x_stat = jnp.where((lax.broadcasted_iota(jnp.int32, (ti, 1), 0) + i0) < n_real,
                           x_tmp, 0.0)
    etf = e_stat.reshape(ti * Np, H)
    ones_r = jnp.ones((1, ti * Np), jnp.float32)
    sum_e = jnp.dot(ones_r, etf, preferred_element_type=jnp.float32)
    sumsq_e = jnp.dot(ones_r, etf * etf, preferred_element_type=jnp.float32)
    sum_x = jnp.sum(x_stat, axis=0, keepdims=True)
    sumsq_x = jnp.sum(x_stat * x_stat, axis=0, keepdims=True)
    stats_ref[0, 0] = jnp.concatenate([sum_e, sumsq_e, sum_x, sumsq_x], axis=0)   # (4, H)


def _gcn_update_kernel(xp_ref, x_ref, e_ref, wue_ref, bn_ref, xtmp_ref,
                       x_out_ref, e_out_ref, *, n_real, masked):
    """Pass 2: recompute gate pre-activation, apply global-stats BN + ReLU + residual."""
    _, ti, Np, H = e_ref.shape
    i0 = pl.multiple_of(pl.program_id(1) * ti, ti)

    xp = xp_ref[0]                                              # (Np, 2H) f32
    vexb = xp[:, H:2 * H]
    vex_i = xp_ref[0, pl.ds(i0, ti), :][:, 0:H]

    e = e_ref[0]                                                # bf16
    ue = jnp.dot(e.reshape(ti * Np, H), wue_ref[...],
                 preferred_element_type=jnp.float32)
    e_tmp = ue.reshape(ti, Np, H) + vex_i[:, None, :] + vexb[None, :, :]

    # bn_ref rows: [scale_e, shift_e, scale_x, shift_x]
    e_new = e.astype(jnp.float32) + jnp.maximum(e_tmp * bn_ref[0] + bn_ref[1], 0.0)
    x_new = x_ref[0] + jnp.maximum(xtmp_ref[0] * bn_ref[2] + bn_ref[3], 0.0)
    if masked:
        col_ok = lax.broadcasted_iota(jnp.int32, (1, Np, 1), 1) < n_real
        row_ok = (lax.broadcasted_iota(jnp.int32, (ti, 1, 1), 0) + i0) < n_real
        e_new = jnp.where(jnp.logical_and(row_ok, col_ok), e_new, 0.0)   # keep pads at zero
        x_new = jnp.where((lax.broadcasted_iota(jnp.int32, (ti, 1), 0) + i0) < n_real,
                          x_new, 0.0)
    e_out_ref[0] = e_new.astype(e_out_ref.dtype)
    x_out_ref[0] = x_new


def _gcn_head_kernel(xp_ref, e_ref, wue_ref, bn_ref, whid_ref, bhid_ref,
                     wout_ref, bout_ref, y_ref, *, n_hidden, out_dim):
    """Last-layer pass 2 fused with the MLP edge head; e_out is never written to HBM."""
    _, ti, Np, H = e_ref.shape
    i0 = pl.multiple_of(pl.program_id(1) * ti, ti)

    xp = xp_ref[0]
    vexb = xp[:, H:2 * H]
    vex_i = xp_ref[0, pl.ds(i0, ti), :][:, 0:H]

    e = e_ref[0]                                                # bf16
    ue = jnp.dot(e.reshape(ti * Np, H), wue_ref[...],
                 preferred_element_type=jnp.float32)
    e_tmp = ue.reshape(ti, Np, H) + vex_i[:, None, :] + vexb[None, :, :]
    e_new = e.astype(jnp.float32) + jnp.maximum(e_tmp * bn_ref[0] + bn_ref[1], 0.0)

    h = e_new.reshape(ti * Np, H)
    for i in range(n_hidden):                                   # static unroll
        h = jnp.maximum(
            jnp.dot(h.astype(jnp.bfloat16), whid_ref[i],
                    preferred_element_type=jnp.float32) + bhid_ref[i], 0.0)
    y = jnp.dot(h.astype(jnp.bfloat16), wout_ref[...],
                preferred_element_type=jnp.float32) + bout_ref[...]
    # Only the real logit channels are written to HBM (pad rows/cols are sliced off outside).
    y_ref[0] = y[:, 0:out_dim].reshape(ti, Np, out_dim)


# ----------------------------- planning / glue ------------------------------

def _vmem_capacity_bytes():
    try:
        cap = int(pltpu.get_tpu_info().vmem_capacity_bytes)
        if cap > 0:
            return cap
    except Exception:
        pass
    return 64 * _MIB            # conservative default (v7x per-TensorCore)


def _plan_tiles(N, H):
    """Generation-aware tile plan: (row tile TI, padded node count Np, vmem limit)."""
    cap = _vmem_capacity_bytes()
    # Live working set per grid step ~ (2x bf16 in + 2x bf16 out + ~3 f32 temporaries) of the
    # (TI, Np, H) edge tile ~= 20 B/elem, plus ~1-2 MiB of weights / node slabs.
    budget = 20 * _MIB if cap <= 64 * _MIB else 28 * _MIB       # v7x: <=20 MiB, v5e/v6e: ~28 MiB
    vmem_limit = max(32 * _MIB, min(int(cap * 0.8), cap - 24 * _MIB))
    npad = -(-N // 8) * 8
    per_row = 20 * npad * H
    ti_cap = max(8, min(npad, (budget // per_row) // 8 * 8))
    # TI must divide Np so every block is exact (no ragged tail / OOB reads).
    # TODO(synk): a masked ragged tail would decouple TI from Np's divisor structure entirely.
    divisors = [d for d in range(8, npad + 1, 8) if npad % d == 0 and d <= ti_cap]
    ti = max(divisors) if divisors else 8
    return ti, npad, vmem_limit


def _compiler_params(vmem_limit):
    return pltpu.CompilerParams(
        dimension_semantics=("parallel", "parallel"),
        vmem_limit_bytes=vmem_limit)


def _node_projections(x, lp):
    """Hoisted x-side projections, computed ONCE per layer (plain XLA; tiny vs edge work).

    Returns (B, Np, 4H) slab [Ve.x+bVe | Ve.x+bVe+bUe | Ux.x+bUx | Vx.x+bVx]."""
    H = x.shape[-1]
    p = x @ lp['w_all'][:, H:] + lp['b_all'][0, H:]             # (B, Np, 3H)
    vex = p[..., :H]
    return jnp.concatenate([vex, vex + lp['b_all'][0, :H], p[..., H:]], axis=-1)


def _finalize_bn(stats, cnt_e, cnt_x, lp):
    """Tiny JAX glue: reduce per-tile partials to the global BN scale/shift slab (4, H)."""
    # f32 sum / sum-of-squares with a >=0 clamp; adequate for activation-scale data.
    # TODO(synk): switch to mean-shifted (Welford-style) partials if |mean| >> std in practice.
    tot = jnp.sum(stats, axis=(0, 1))                           # (4, H)
    mean_e = tot[0] / cnt_e
    var_e = jnp.maximum(tot[1] / cnt_e - mean_e * mean_e, 0.0)
    mean_x = tot[2] / cnt_x
    var_x = jnp.maximum(tot[3] / cnt_x - mean_x * mean_x, 0.0)
    scale_e = lp['ge'] * jax.lax.rsqrt(var_e + _BN_EPS)
    shift_e = lp['be'] - mean_e * scale_e
    scale_x = lp['gx'] * jax.lax.rsqrt(var_x + _BN_EPS)
    shift_x = lp['bx'] - mean_x * scale_x
    return jnp.stack([scale_e, shift_e, scale_x, shift_x], axis=0)


def _gcn_layer(x, e, lp, ti, vmem_limit, n_real, mean_agg, head=None):
    """One ResidualGatedGCNLayer.  head=None -> returns (x_new, e_new);
    head=(mlp_params, out_dim) -> last layer, returns the fused MLP head logits."""
    B, Np, H = x.shape
    nt = Np // ti
    masked = (Np != n_real)
    grid = (B, nt)

    xp = _node_projections(x, lp)                               # (B, Np, 4H) f32, once/layer
    wue = lp['w_all'][:, :H].astype(jnp.bfloat16)               # W_Ue as bf16 for the MXU

    xp_spec1 = pl.BlockSpec((1, Np, 4 * H), lambda b, t: (b, 0, 0))
    xp_spec2 = pl.BlockSpec((1, Np, 2 * H), lambda b, t: (b, 0, 0))   # only [vex|vexb] needed
    # NOTE: if the bf16 e stream ever shows exposed DMA, pipeline_mode=pl.Buffered(3) on this
    # spec is the next lever (cheap on v5e/v6e VMEM, re-check the budget on v7x).
    e_spec = pl.BlockSpec((1, ti, Np, H), lambda b, t: (b, t, 0, 0))
    wue_spec = pl.BlockSpec((H, H), lambda b, t: (0, 0))
    xt_spec = pl.BlockSpec((1, ti, H), lambda b, t: (b, t, 0))
    st_spec = pl.BlockSpec((1, 1, 4, H), lambda b, t: (b, t, 0, 0))
    bn_spec = pl.BlockSpec((4, H), lambda b, t: (0, 0))
    cparams = _compiler_params(vmem_limit)

    e_bytes = B * Np * Np * H * e.dtype.itemsize
    mm_flops = 2 * B * Np * Np * H * H

    # Pass 1: gating + aggregation + BN partial statistics.
    x_tmp, stats = pl.pallas_call(
        functools.partial(_gcn_stats_kernel, n_real=n_real, masked=masked, mean_agg=mean_agg),
        grid=grid,
        in_specs=[xp_spec1, e_spec, wue_spec],
        out_specs=(xt_spec, st_spec),
        out_shape=(jax.ShapeDtypeStruct((B, Np, H), jnp.float32),
                   jax.ShapeDtypeStruct((B, nt, 4, H), jnp.float32)),
        compiler_params=cparams,
        cost_estimate=pl.CostEstimate(
            flops=mm_flops + 14 * B * Np * Np * H,
            transcendentals=B * Np * Np * H,
            bytes_accessed=e_bytes + B * Np * H * 20 + B * nt * 4 * H * 4),
    )(xp, e, wue)

    bn = _finalize_bn(stats, B * n_real * n_real, B * n_real, lp)

    if head is None:
        # Pass 2: normalize + ReLU + residual; e_out written in place over e.
        x_new, e_new = pl.pallas_call(
            functools.partial(_gcn_update_kernel, n_real=n_real, masked=masked),
            grid=grid,
            in_specs=[xp_spec2, xt_spec, e_spec, wue_spec, bn_spec, xt_spec],
            out_specs=(xt_spec, e_spec),
            out_shape=(jax.ShapeDtypeStruct((B, Np, H), jnp.float32),
                       jax.ShapeDtypeStruct((B, Np, Np, H), e.dtype)),
            input_output_aliases={2: 1},
            compiler_params=cparams,
            cost_estimate=pl.CostEstimate(
                flops=mm_flops + 10 * B * Np * Np * H,
                transcendentals=0,
                bytes_accessed=2 * e_bytes + B * Np * H * 16),
        )(xp, x, e, wue, bn, x_tmp)
        return x_new, e_new

    # Last layer: pass 2 fused with the MLP edge head (no e_out HBM write, no padded output).
    mp, out_dim = head
    whid = mp['w_hidden'].astype(jnp.bfloat16)
    bhid = mp['b_hidden']
    wout = mp['w_out_pad'].astype(jnp.bfloat16)
    bout = mp['b_out_pad']
    n_hidden = whid.shape[0]
    y = pl.pallas_call(
        functools.partial(_gcn_head_kernel, n_hidden=n_hidden, out_dim=out_dim),
        grid=grid,
        in_specs=[xp_spec2, e_spec, wue_spec, bn_spec,
                  pl.BlockSpec((n_hidden, H, H), lambda b, t: (0, 0, 0)),
                  pl.BlockSpec((n_hidden, H), lambda b, t: (0, 0)),
                  pl.BlockSpec((H, _OUT_PAD), lambda b, t: (0, 0)),
                  pl.BlockSpec((1, _OUT_PAD), lambda b, t: (0, 0))],
        out_specs=pl.BlockSpec((1, ti, Np, out_dim), lambda b, t: (b, t, 0, 0)),
        out_shape=jax.ShapeDtypeStruct((B, Np, Np, out_dim), jnp.float32),
        compiler_params=cparams,
        cost_estimate=pl.CostEstimate(
            flops=mm_flops * (1 + n_hidden) + 2 * B * Np * Np * H * _OUT_PAD
                  + 10 * B * Np * Np * H,
            transcendentals=0,
            bytes_accessed=e_bytes + B * Np * Np * out_dim * 4),
    )(xp, e, wue, bn, whid, bhid, wout, bout)
    return y


# ----------------------------- model (params + forward) ---------------------

def init_params(key, cfg):
    H = cfg['hidden_dim']
    H2 = H // 2
    L = cfg['num_layers']
    n_hidden = cfg['mlp_layers'] - 1
    out_dim = cfg['voc_edges_out']
    assert H % 128 == 0, "pad hidden_dim to a multiple of 128 for lane-dense layout"
    assert n_hidden >= 1

    keys = iter(jax.random.split(key, 4 + 2 * L + 2 * n_hidden + 2))

    def rnd(shape, scale=0.1):
        return (scale * jax.random.normal(next(keys), shape)).astype(jnp.float32)

    params = {
        'w_nodes_coord': rnd((cfg['node_dim'], H2)),       # Linear(node_dim, H/2, bias=False)
        'nodes_emb': rnd((cfg['voc_nodes_in'], H2)),       # Embedding(voc_nodes_in, H/2)
        'w_edges_values': rnd((H2,)),                      # Linear(1, H/2, bias=False)
        'edges_emb': rnd((cfg['voc_edges_in'], H2)),       # Embedding(voc_edges_in, H/2)
    }

    layers = []
    for _ in range(L):
        layers.append({
            # fused weight slab [W_Ue | W_Ve | W_Ux | W_Vx] and the matching biases
            'w_all': rnd((H, 4 * H)),
            'b_all': rnd((1, 4 * H)),
            'ge': jnp.ones((H,), jnp.float32), 'be': jnp.zeros((H,), jnp.float32),
            'gx': jnp.ones((H,), jnp.float32), 'bx': jnp.zeros((H,), jnp.float32),
        })
    params['layers'] = layers

    w_hidden = jnp.stack([rnd((H, H)) for _ in range(n_hidden)], axis=0)
    b_hidden = jnp.stack([rnd((H,)) for _ in range(n_hidden)], axis=0)
    w_out = rnd((H, out_dim))
    b_out = rnd((1, out_dim))
    params['mlp'] = {
        'w_hidden': w_hidden,
        'b_hidden': b_hidden,
        # padded to 128 only so the final matmul is lane-dense on the MXU;
        # the kernel stores just the first out_dim columns.
        'w_out_pad': jnp.zeros((H, _OUT_PAD), jnp.float32).at[:, :out_dim].set(w_out),
        'b_out_pad': jnp.zeros((1, _OUT_PAD), jnp.float32).at[:, :out_dim].set(b_out),
    }
    return params


def forward(params, cfg, x_edges, x_edges_values, x_nodes, x_nodes_coord,
            y_edges=None, edge_cw=None):
    """Mirrors ResidualGatedGCNModel.forward (y_edges=None -> loss=None)."""
    H = cfg['hidden_dim']
    mean_agg = (cfg.get('aggregation', 'mean') == 'mean')
    B, N = x_nodes.shape

    ti, npad, vmem_limit = _plan_tiles(N, H)

    # --- input embeddings (tiny; plain-JAX glue) ---
    x_vals = jnp.dot(x_nodes_coord.astype(jnp.float32), params['w_nodes_coord'])
    x_tags = params['nodes_emb'][x_nodes]
    x = jnp.concatenate([x_vals, x_tags], axis=-1).astype(jnp.float32)        # (B, N, H)

    e_vals = x_edges_values[..., None].astype(jnp.float32) * params['w_edges_values']
    e_tags = params['edges_emb'][x_edges]
    e = jnp.concatenate([e_vals, e_tags], axis=-1)                            # (B, N, N, H)

    if npad != N:                                    # zero-pad; pads are masked in the kernels
        x = jnp.pad(x, ((0, 0), (0, npad - N), (0, 0)))
        e = jnp.pad(e, ((0, 0), (0, npad - N), (0, npad - N), (0, 0)))
    e = e.astype(_EDGE_DTYPE)

    # --- GCN layers; the last layer is fused with the MLP edge head ---
    layers = params['layers']
    y_pred = None
    for li, lp in enumerate(layers):
        if li + 1 < len(layers):
            x, e = _gcn_layer(x, e, lp, ti, vmem_limit, N, mean_agg)
        else:
            y_pred = _gcn_layer(x, e, lp, ti, vmem_limit, N, mean_agg,
                                head=(params['mlp'], cfg['voc_edges_out']))

    y_pred_edges = y_pred[:, :N, :N, :]
    # TODO(synk): log_softmax + NLLLoss branch not implemented (y_edges=None here -> loss=None).
    return y_pred_edges, None


# --------------------------------- main --------------------------------------

if __name__ == "__main__":
    cfg = {
        'node_dim': 3, 'voc_nodes_in': 2, 'voc_nodes_out': 2,
        'voc_edges_in': 6, 'voc_edges_out': 2,
        # hidden_dim kept a multiple of 128 so H is lane-dense (real model: pad 300 -> 384)
        'hidden_dim': 128, 'num_layers': 3, 'mlp_layers': 3,
        'aggregation': 'mean',
    }
    B, N = 2, 12     # N deliberately NOT a multiple of 8: exercises the padded / masked path

    key = jax.random.PRNGKey(0)
    kp, k1, k2, k3, k4 = jax.random.split(key, 5)
    params = init_params(kp, cfg)

    x_edges = jax.random.randint(k1, (B, N, N), 0, cfg['voc_edges_in'], dtype=jnp.int32)
    x_edges_values = jax.random.uniform(k2, (B, N, N), dtype=jnp.float32)
    x_nodes = jax.random.randint(k3, (B, N), 0, cfg['voc_nodes_in'], dtype=jnp.int32)
    x_nodes_coord = jax.random.uniform(k4, (B, N, cfg['node_dim']), dtype=jnp.float32)

    fwd = jax.jit(lambda p, a, b, c, d: forward(p, cfg, a, b, c, d))
    y_pred_edges, loss = fwd(params, x_edges, x_edges_values, x_nodes, x_nodes_coord)
    y_pred_edges = jax.block_until_ready(y_pred_edges)

    assert y_pred_edges.shape == (B, N, N, cfg['voc_edges_out'])
    assert bool(jnp.all(jnp.isfinite(y_pred_edges)))
    assert loss is None
    print("KERNEL_OK")
</pallas_src>

<mosaic_0001>
module attributes {stable_mosaic.version = 11 : i64} {
  func.func @_gcn_stats_kernel(%arg0: i32, %arg1: i32, %arg2: memref<1x16x512xf32, #tpu.memory_space<vmem>>, %arg3: memref<1x16x16x128xbf16, #tpu.memory_space<vmem>>, %arg4: memref<128x128xbf16, #tpu.memory_space<vmem>>, %arg5: memref<1x16x128xf32, #tpu.memory_space<vmem>>, %arg6: memref<1x1x4x128xf32, #tpu.memory_space<vmem>>) attributes {dimension_semantics = [#tpu.dimension_semantics<parallel>, #tpu.dimension_semantics<parallel>], iteration_bounds = array<i64: 2, 1>, scalar_prefetch = 0 : i64, scratch_operands = 0 : i64, tpu.core_type = #tpu.core_type<tc>, window_params = [{transform_indices = @transform_0, window_bounds = array<i64: 1, 16, 512>}, {transform_indices = @transform_1, window_bounds = array<i64: 1, 16, 16, 128>}, {pipeline_mode = #tpu.pipeline_mode<synchronous>, transform_indices = @transform_2, window_bounds = array<i64: 128, 128>}, {transform_indices = @transform_3, window_bounds = array<i64: 1, 16, 128>}, {transform_indices = @transform_4, window_bounds = array<i64: 1, 1, 4, 128>}]} {
    %c16_i32 = arith.constant 16 : i32
    %0 = arith.muli %arg1, %c16_i32 : i32
    %1 = tpu.assume_multiple %0, 16 : i32
    %c0 = arith.constant 0 : index
    %c0_0 = arith.constant 0 : index
    %c0_1 = arith.constant 0 : index
    %2 = vector.load %arg2[%c0, %c0_0, %c0_1] : memref<1x16x512xf32, #tpu.memory_space<vmem>>, vector<1x16x512xf32>
    %3 = vector.shape_cast %2 : vector<1x16x512xf32> to vector<16x512xf32>
    %4 = vector.extract_strided_slice %3 {offsets = [0, 128], sizes = [16, 128], strides = [1, 1]} : vector<16x512xf32> to vector<16x128xf32>
    %5 = vector.extract_strided_slice %3 {offsets = [0, 384], sizes = [16, 128], strides = [1, 1]} : vector<16x512xf32> to vector<16x128xf32>
    %c0_2 = arith.constant 0 : index
    %6 = arith.index_cast %1 : i32 to index
    %c0_3 = arith.constant 0 : index
    %7 = vector.load %arg2[%c0_2, %6, %c0_3] : memref<1x16x512xf32, #tpu.memory_space<vmem>>, vector<1x16x512xf32>
    %8 = vector.shape_cast %7 : vector<1x16x512xf32> to vector<16x512xf32>
    %9 = vector.extract_strided_slice %8 {offsets = [0, 0], sizes = [16, 128], strides = [1, 1]} : vector<16x512xf32> to vector<16x128xf32>
    %10 = vector.extract_strided_slice %8 {offsets = [0, 256], sizes = [16, 128], strides = [1, 1]} : vector<16x512xf32> to vector<16x128xf32>
    %c0_4 = arith.constant 0 : index
    %c0_5 = arith.constant 0 : index
    %c0_6 = arith.constant 0 : index
    %c0_7 = arith.constant 0 : index
    %11 = vector.load %arg3[%c0_4, %c0_5, %c0_6, %c0_7] : memref<1x16x16x128xbf16, #tpu.memory_space<vmem>>, vector<1x16x16x128xbf16>
    %12 = vector.shape_cast %11 : vector<1x16x16x128xbf16> to vector<16x16x128xbf16>
    %13 = vector.shape_cast %12 : vector<16x16x128xbf16> to vector<256x128xbf16>
    %c0_8 = arith.constant 0 : index
    %c0_9 = arith.constant 0 : index
    %14 = vector.load %arg4[%c0_8, %c0_9] : memref<128x128xbf16, #tpu.memory_space<vmem>>, vector<128x128xbf16>
    %cst = arith.constant dense<0.000000e+00> : vector<256x128xf32>
    %15 = tpu.matmul %13, %14, %cst {dimension_numbers = #tpu.dot_dimension_numbers<[1], [0], [0], [1], [0, 0, 1, 1], [], []>} : vector<256x128xbf16>, vector<128x128xbf16>, vector<256x128xf32> -> vector<256x128xf32>
    %16 = vector.shape_cast %15 : vector<256x128xf32> to vector<16x16x128xf32>
    %17 = vector.shape_cast %9 : vector<16x128xf32> to vector<16x1x128xf32>
    %18 = vector.broadcast %17 : vector<16x1x128xf32> to vector<16x16x128xf32>
    %19 = arith.addf %16, %18 : vector<16x16x128xf32>
    %20 = vector.shape_cast %4 : vector<16x128xf32> to vector<1x16x128xf32>
    %21 = vector.broadcast %20 : vector<1x16x128xf32> to vector<16x16x128xf32>
    %22 = arith.addf %19, %21 : vector<16x16x128xf32>
    %23 = arith.negf %22 : vector<16x16x128xf32>
    %24 = math.exp %23 : vector<16x16x128xf32>
    %cst_10 = arith.constant 1.000000e+00 : f32
    %25 = vector.broadcast %cst_10 : f32 to vector<16x16x128xf32>
    %26 = arith.addf %25, %24 : vector<16x16x128xf32>
    %27 = arith.divf %25, %26 : vector<16x16x128xf32>
    %28 = tpu.iota {dimensions = array<i32: 1>} : vector<1x16x1xi32>
    %c12_i32 = arith.constant 12 : i32
    %29 = vector.broadcast %c12_i32 : i32 to vector<1x16x1xi32>
    %30 = arith.cmpi slt, %28, %29 : vector<1x16x1xi32>
    %31 = tpu.iota {dimensions = array<i32: 0>} : vector<16x1x1xi32>
    %32 = vector.broadcast %1 : i32 to vector<16x1x1xi32>
    %33 = arith.addi %31, %32 : vector<16x1x1xi32>
    %c12_i32_11 = arith.constant 12 : i32
    %34 = vector.broadcast %c12_i32_11 : i32 to vector<16x1x1xi32>
    %35 = arith.cmpi slt, %33, %34 : vector<16x1x1xi32>
    %cst_12 = arith.constant 0.000000e+00 : f32
    %36 = vector.shape_cast %30 : vector<1x16x1xi1> to vector<1x16x1xi1>
    %37 = vector.broadcast %36 : vector<1x16x1xi1> to vector<16x16x128xi1>
    %38 = vector.broadcast %cst_12 : f32 to vector<16x16x128xf32>
    %39 = arith.select %37, %27, %38 : vector<16x16x128xi1>, vector<16x16x128xf32>
    %40 = vector.shape_cast %5 : vector<16x128xf32> to vector<1x16x128xf32>
    %41 = vector.broadcast %40 : vector<1x16x128xf32> to vector<16x16x128xf32>
    %42 = arith.mulf %39, %41 : vector<16x16x128xf32>
    %cst_13 = arith.constant dense<0.000000e+00> : vector<16x128xf32>
    %43 = vector.multi_reduction <add>, %42, %cst_13 [1] : vector<16x16x128xf32> to vector<16x128xf32>
    %cst_14 = arith.constant dense<0.000000e+00> : vector<16x128xf32>
    %44 = vector.multi_reduction <add>, %39, %cst_14 [1] : vector<16x16x128xf32> to vector<16x128xf32>
    %cst_15 = arith.constant 9.99999968E-21 : f32
    %45 = vector.broadcast %cst_15 : f32 to vector<16x128xf32>
    %46 = arith.addf %44, %45 : vector<16x128xf32>
    %47 = arith.divf %43, %46 : vector<16x128xf32>
    %48 = arith.addf %10, %47 : vector<16x128xf32>
    %c0_16 = arith.constant 0 : index
    %c0_17 = arith.constant 0 : index
    %c0_18 = arith.constant 0 : index
    %49 = vector.load %arg5[%c0_16, %c0_17, %c0_18] : memref<1x16x128xf32, #tpu.memory_space<vmem>>, vector<1x16x128xf32>
    %50 = vector.shape_cast %49 : vector<1x16x128xf32> to vector<16x128xf32>
    %51 = vector.shape_cast %48 : vector<16x128xf32> to vector<1x16x128xf32>
    tpu.vector_store %arg5[%c0_16, %c0_17, %c0_18], %51 {strides = array<i32>} : memref<1x16x128xf32, #tpu.memory_space<vmem>>, vector<1x16x128xf32>,
    %52 = vector.broadcast %35 : vector<16x1x1xi1> to vector<16x16x1xi1>
    %53 = vector.broadcast %30 : vector<1x16x1xi1> to vector<16x16x1xi1>
    %54 = arith.andi %52, %53 : vector<16x16x1xi1>
    %cst_19 = arith.constant 0.000000e+00 : f32
    %55 = vector.shape_cast %54 : vector<16x16x1xi1> to vector<16x16x1xi1>
    %56 = vector.broadcast %55 : vector<16x16x1xi1> to vector<16x16x128xi1>
    %57 = vector.broadcast %cst_19 : f32 to vector<16x16x128xf32>
    %58 = arith.select %56, %22, %57 : vector<16x16x128xi1>, vector<16x16x128xf32>
    %59 = tpu.iota {dimensions = array<i32: 0>} : vector<16x1xi32>
    %60 = vector.broadcast %1 : i32 to vector<16x1xi32>
    %61 = arith.addi %59, %60 : vector<16x1xi32>
    %c12_i32_20 = arith.constant 12 : i32
    %62 = vector.broadcast %c12_i32_20 : i32 to vector<16x1xi32>
    %63 = arith.cmpi slt, %61, %62 : vector<16x1xi32>
    %cst_21 = arith.constant 0.000000e+00 : f32
    %64 = vector.shape_cast %63 : vector<16x1xi1> to vector<16x1xi1>
    %65 = vector.broadcast %64 : vector<16x1xi1> to vector<16x128xi1>
    %66 = vector.broadcast %cst_21 : f32 to vector<16x128xf32>
    %67 = arith.select %65, %48, %66 : vector<16x128xi1>, vector<16x128xf32>
    %68 = vector.shape_cast %58 : vector<16x16x128xf32> to vector<256x128xf32>
    %cst_22 = arith.constant 1.000000e+00 : f32
    %69 = vector.broadcast %cst_22 : f32 to vector<1x256xf32>
    %cst_23 = arith.constant dense<0.000000e+00> : vector<1x128xf32>
    %70 = tpu.matmul %69, %68, %cst_23 {dimension_numbers = #tpu.dot_dimension_numbers<[1], [0], [0], [1], [0, 0, 1, 1], [], []>} : vector<1x256xf32>, vector<256x128xf32>, vector<1x128xf32> -> vector<1x128xf32>
    %71 = arith.mulf %68, %68 : vector<256x128xf32>
    %cst_24 = arith.constant dense<0.000000e+00> : vector<1x128xf32>
    %72 = tpu.matmul %69, %71, %cst_24 {dimension_numbers = #tpu.dot_dimension_numbers<[1], [0], [0], [1], [0, 0, 1, 1], [], []>} : vector<1x256xf32>, vector<256x128xf32>, vector<1x128xf32> -> vector<1x128xf32>
    %cst_25 = arith.constant dense<0.000000e+00> : vector<128xf32>
    %73 = vector.multi_reduction <add>, %67, %cst_25 [0] : vector<16x128xf32> to vector<128xf32>
    %74 = vector.shape_cast %73 : vector<128xf32> to vector<1x128xf32>
    %75 = arith.mulf %67, %67 : vector<16x128xf32>
    %cst_26 = arith.constant dense<0.000000e+00> : vector<128xf32>
    %76 = vector.multi_reduction <add>, %75, %cst_26 [0] : vector<16x128xf32> to vector<128xf32>
    %77 = vector.shape_cast %76 : vector<128xf32> to vector<1x128xf32>
    %78 = tpu.concatenate %70, %72, %74, %77 in 0 : vector<1x128xf32>, vector<1x128xf32>, vector<1x128xf32>, vector<1x128xf32> -> vector<4x128xf32>
    %c0_27 = arith.constant 0 : index
    %c0_28 = arith.constant 0 : index
    %c0_29 = arith.constant 0 : index
    %c0_30 = arith.constant 0 : index
    %79 = vector.load %arg6[%c0_27, %c0_28, %c0_29, %c0_30] : memref<1x1x4x128xf32, #tpu.memory_space<vmem>>, vector<1x1x4x128xf32>
    %80 = vector.shape_cast %79 : vector<1x1x4x128xf32> to vector<4x128xf32>
    %81 = vector.shape_cast %78 : vector<4x128xf32> to vector<1x1x4x128xf32>
    tpu.vector_store %arg6[%c0_27, %c0_28, %c0_29, %c0_30], %81 {strides = array<i32>} : memref<1x1x4x128xf32, #tpu.memory_space<vmem>>, vector<1x1x4x128xf32>,
    return
  }
  func.func @transform_0(%arg0: i32, %arg1: i32) -> (i32, i32, i32) {
    %c0_i32 = arith.constant 0 : i32
    %c0_i32_0 = arith.constant 0 : i32
    %c0_i32_1 = arith.constant 0 : i32
    return %arg0, %c0_i32, %c0_i32_0 : i32, i32, i32
  }
  func.func @transform_1(%arg0: i32, %arg1: i32) -> (i32, i32, i32, i32) {
    %c0_i32 = arith.constant 0 : i32
    %c0_i32_0 = arith.constant 0 : i32
    %c0_i32_1 = arith.constant 0 : i32
    return %arg0, %arg1, %c0_i32, %c0_i32_0 : i32, i32, i32, i32
  }
  func.func @transform_2(%arg0: i32, %arg1: i32) -> (i32, i32) {
    %c0_i32 = arith.constant 0 : i32
    %c0_i32_0 = arith.constant 0 : i32
    %c0_i32_1 = arith.constant 0 : i32
    return %c0_i32, %c0_i32_0 : i32, i32
  }
  func.func @transform_3(%arg0: i32, %arg1: i32) -> (i32, i32, i32) {
    %c0_i32 = arith.constant 0 : i32
    %c0_i32_0 = arith.constant 0 : i32
    return %arg0, %arg1, %c0_i32 : i32, i32, i32
  }
  func.func @transform_4(%arg0: i32, %arg1: i32) -> (i32, i32, i32, i32) {
    %c0_i32 = arith.constant 0 : i32
    %c0_i32_0 = arith.constant 0 : i32
    %c0_i32_1 = arith.constant 0 : i32
    return %arg0, %arg1, %c0_i32, %c0_i32_0 : i32, i32, i32, i32
  }
}

module attributes {stable_mosaic.version = 11 : i64} {
  func.func @_gcn_update_kernel(%arg0: i32, %arg1: i32, %arg2: memref<1x16x256xf32, #tpu.memory_space<vmem>>, %arg3: memref<1x16x128xf32, #tpu.memory_space<vmem>>, %arg4: memref<1x16x16x128xbf16, #tpu.memory_space<vmem>>, %arg5: memref<128x128xbf16, #tpu.memory_space<vmem>>, %arg6: memref<4x128xf32, #tpu.memory_space<vmem>>, %arg7: memref<1x16x128xf32, #tpu.memory_space<vmem>>, %arg8: memref<1x16x128xf32, #tpu.memory_space<vmem>>, %arg9: memref<1x16x16x128xbf16, #tpu.memory_space<vmem>>) attributes {dimension_semantics = [#tpu.dimension_semantics<parallel>, #tpu.dimension_semantics<parallel>], iteration_bounds = array<i64: 2, 1>, scalar_prefetch = 0 : i64, scratch_operands = 0 : i64, tpu.core_type = #tpu.core_type<tc>, window_params = [{transform_indices = @transform_0, window_bounds = array<i64: 1, 16, 256>}, {transform_indices = @transform_1, window_bounds = array<i64: 1, 16, 128>}, {transform_indices = @transform_2, window_bounds = array<i64: 1, 16, 16, 128>}, {pipeline_mode = #tpu.pipeline_mode<synchronous>, transform_indices = @transform_3, window_bounds = array<i64: 128, 128>}, {pipeline_mode = #tpu.pipeline_mode<synchronous>, transform_indices = @transform_4, window_bounds = array<i64: 4, 128>}, {transform_indices = @transform_5, window_bounds = array<i64: 1, 16, 128>}, {transform_indices = @transform_6, window_bounds = array<i64: 1, 16, 128>}, {transform_indices = @transform_7, window_bounds = array<i64: 1, 16, 16, 128>}]} {
    %c16_i32 = arith.constant 16 : i32
    %0 = arith.muli %arg1, %c16_i32 : i32
    %1 = tpu.assume_multiple %0, 16 : i32
    %c0 = arith.constant 0 : index
    %c0_0 = arith.constant 0 : index
    %c0_1 = arith.constant 0 : index
    %2 = vector.load %arg2[%c0, %c0_0, %c0_1] : memref<1x16x256xf32, #tpu.memory_space<vmem>>, vector<1x16x256xf32>
    %3 = vector.shape_cast %2 : vector<1x16x256xf32> to vector<16x256xf32>
    %4 = vector.extract_strided_slice %3 {offsets = [0, 128], sizes = [16, 128], strides = [1, 1]} : vector<16x256xf32> to vector<16x128xf32>
    %c0_2 = arith.constant 0 : index
    %5 = arith.index_cast %1 : i32 to index
    %c0_3 = arith.constant 0 : index
    %6 = vector.load %arg2[%c0_2, %5, %c0_3] : memref<1x16x256xf32, #tpu.memory_space<vmem>>, vector<1x16x256xf32>
    %7 = vector.shape_cast %6 : vector<1x16x256xf32> to vector<16x256xf32>
    %8 = vector.extract_strided_slice %7 {offsets = [0, 0], sizes = [16, 128], strides = [1, 1]} : vector<16x256xf32> to vector<16x128xf32>
    %c0_4 = arith.constant 0 : index
    %c0_5 = arith.constant 0 : index
    %c0_6 = arith.constant 0 : index
    %c0_7 = arith.constant 0 : index
    %9 = vector.load %arg4[%c0_4, %c0_5, %c0_6, %c0_7] : memref<1x16x16x128xbf16, #tpu.memory_space<vmem>>, vector<1x16x16x128xbf16>
    %10 = vector.shape_cast %9 : vector<1x16x16x128xbf16> to vector<16x16x128xbf16>
    %11 = vector.shape_cast %10 : vector<16x16x128xbf16> to vector<256x128xbf16>
    %c0_8 = arith.constant 0 : index
    %c0_9 = arith.constant 0 : index
    %12 = vector.load %arg5[%c0_8, %c0_9] : memref<128x128xbf16, #tpu.memory_space<vmem>>, vector<128x128xbf16>
    %cst = arith.constant dense<0.000000e+00> : vector<256x128xf32>
    %13 = tpu.matmul %11, %12, %cst {dimension_numbers = #tpu.dot_dimension_numbers<[1], [0], [0], [1], [0, 0, 1, 1], [], []>} : vector<256x128xbf16>, vector<128x128xbf16>, vector<256x128xf32> -> vector<256x128xf32>
    %14 = vector.shape_cast %13 : vector<256x128xf32> to vector<16x16x128xf32>
    %15 = vector.shape_cast %8 : vector<16x128xf32> to vector<16x1x128xf32>
    %16 = vector.broadcast %15 : vector<16x1x128xf32> to vector<16x16x128xf32>
    %17 = arith.addf %14, %16 : vector<16x16x128xf32>
    %18 = vector.shape_cast %4 : vector<16x128xf32> to vector<1x16x128xf32>
    %19 = vector.broadcast %18 : vector<1x16x128xf32> to vector<16x16x128xf32>
    %20 = arith.addf %17, %19 : vector<16x16x128xf32>
    %21 = arith.extf %10 : vector<16x16x128xbf16> to vector<16x16x128xf32>
    %c0_10 = arith.constant 0 : index
    %c0_11 = arith.constant 0 : index
    %22 = vector.load %arg6[%c0_10, %c0_11] : memref<4x128xf32, #tpu.memory_space<vmem>>, vector<1x128xf32>
    %23 = vector.shape_cast %22 : vector<1x128xf32> to vector<128xf32>
    %24 = vector.shape_cast %23 : vector<128xf32> to vector<1x1x128xf32>
    %25 = vector.broadcast %24 : vector<1x1x128xf32> to vector<16x16x128xf32>
    %26 = arith.mulf %20, %25 : vector<16x16x128xf32>
    %c1 = arith.constant 1 : index
    %c0_12 = arith.constant 0 : index
    %27 = vector.load %arg6[%c1, %c0_12] : memref<4x128xf32, #tpu.memory_space<vmem>>, vector<1x128xf32>
    %28 = vector.shape_cast %27 : vector<1x128xf32> to vector<128xf32>
    %29 = vector.shape_cast %28 : vector<128xf32> to vector<1x1x128xf32>
    %30 = vector.broadcast %29 : vector<1x1x128xf32> to vector<16x16x128xf32>
    %31 = arith.addf %26, %30 : vector<16x16x128xf32>
    %cst_13 = arith.constant 0.000000e+00 : f32
    %32 = vector.broadcast %cst_13 : f32 to vector<16x16x128xf32>
    %33 = arith.maximumf %31, %32 : vector<16x16x128xf32>
    %34 = arith.addf %21, %33 : vector<16x16x128xf32>
    %c0_14 = arith.constant 0 : index
    %c0_15 = arith.constant 0 : index
    %c0_16 = arith.constant 0 : index
    %35 = vector.load %arg3[%c0_14, %c0_15, %c0_16] : memref<1x16x128xf32, #tpu.memory_space<vmem>>, vector<1x16x128xf32>
    %36 = vector.shape_cast %35 : vector<1x16x128xf32> to vector<16x128xf32>
    %c0_17 = arith.constant 0 : index
    %c0_18 = arith.constant 0 : index
    %c0_19 = arith.constant 0 : index
    %37 = vector.load %arg7[%c0_17, %c0_18, %c0_19] : memref<1x16x128xf32, #tpu.memory_space<vmem>>, vector<1x16x128xf32>
    %38 = vector.shape_cast %37 : vector<1x16x128xf32> to vector<16x128xf32>
    %c2 = arith.constant 2 : index
    %c0_20 = arith.constant 0 : index
    %39 = vector.load %arg6[%c2, %c0_20] : memref<4x128xf32, #tpu.memory_space<vmem>>, vector<1x128xf32>
    %40 = vector.shape_cast %39 : vector<1x128xf32> to vector<128xf32>
    %41 = vector.shape_cast %40 : vector<128xf32> to vector<1x128xf32>
    %42 = vector.broadcast %41 : vector<1x128xf32> to vector<16x128xf32>
    %43 = arith.mulf %38, %42 : vector<16x128xf32>
    %c3 = arith.constant 3 : index
    %c0_21 = arith.constant 0 : index
    %44 = vector.load %arg6[%c3, %c0_21] : memref<4x128xf32, #tpu.memory_space<vmem>>, vector<1x128xf32>
    %45 = vector.shape_cast %44 : vector<1x128xf32> to vector<128xf32>
    %46 = vector.shape_cast %45 : vector<128xf32> to vector<1x128xf32>
    %47 = vector.broadcast %46 : vector<1x128xf32> to vector<16x128xf32>
    %48 = arith.addf %43, %47 : vector<16x128xf32>
    %cst_22 = arith.constant 0.000000e+00 : f32
    %49 = vector.broadcast %cst_22 : f32 to vector<16x128xf32>
    %50 = arith.maximumf %48, %49 : vector<16x128xf32>
    %51 = arith.addf %36, %50 : vector<16x128xf32>
    %52 = tpu.iota {dimensions = array<i32: 1>} : vector<1x16x1xi32>
    %c12_i32 = arith.constant 12 : i32
    %53 = vector.broadcast %c12_i32 : i32 to vector<1x16x1xi32>
    %54 = arith.cmpi slt, %52, %53 : vector<1x16x1xi32>
    %55 = tpu.iota {dimensions = array<i32: 0>} : vector<16x1x1xi32>
    %56 = vector.broadcast %1 : i32 to vector<16x1x1xi32>
    %57 = arith.addi %55, %56 : vector<16x1x1xi32>
    %c12_i32_23 = arith.constant 12 : i32
    %58 = vector.broadcast %c12_i32_23 : i32 to vector<16x1x1xi32>
    %59 = arith.cmpi slt, %57, %58 : vector<16x1x1xi32>
    %60 = vector.broadcast %59 : vector<16x1x1xi1> to vector<16x16x1xi1>
    %61 = vector.broadcast %54 : vector<1x16x1xi1> to vector<16x16x1xi1>
    %62 = arith.andi %60, %61 : vector<16x16x1xi1>
    %cst_24 = arith.constant 0.000000e+00 : f32
    %63 = vector.shape_cast %62 : vector<16x16x1xi1> to vector<16x16x1xi1>
    %64 = vector.broadcast %63 : vector<16x16x1xi1> to vector<16x16x128xi1>
    %65 = vector.broadcast %cst_24 : f32 to vector<16x16x128xf32>
    %66 = arith.select %64, %34, %65 : vector<16x16x128xi1>, vector<16x16x128xf32>
    %67 = tpu.iota {dimensions = array<i32: 0>} : vector<16x1xi32>
    %68 = vector.broadcast %1 : i32 to vector<16x1xi32>
    %69 = arith.addi %67, %68 : vector<16x1xi32>
    %c12_i32_25 = arith.constant 12 : i32
    %70 = vector.broadcast %c12_i32_25 : i32 to vector<16x1xi32>
    %71 = arith.cmpi slt, %69, %70 : vector<16x1xi32>
    %cst_26 = arith.constant 0.000000e+00 : f32
    %72 = vector.shape_cast %71 : vector<16x1xi1> to vector<16x1xi1>
    %73 = vector.broadcast %72 : vector<16x1xi1> to vector<16x128xi1>
    %74 = vector.broadcast %cst_26 : f32 to vector<16x128xf32>
    %75 = arith.select %73, %51, %74 : vector<16x128xi1>, vector<16x128xf32>
    %76 = arith.truncf %66 : vector<16x16x128xf32> to vector<16x16x128xbf16>
    %c0_27 = arith.constant 0 : index
    %c0_28 = arith.constant 0 : index
    %c0_29 = arith.constant 0 : index
    %c0_30 = arith.constant 0 : index
    %77 = vector.load %arg9[%c0_27, %c0_28, %c0_29, %c0_30] : memref<1x16x16x128xbf16, #tpu.memory_space<vmem>>, vector<1x16x16x128xbf16>
    %78 = vector.shape_cast %77 : vector<1x16x16x128xbf16> to vector<16x16x128xbf16>
    %79 = vector.shape_cast %76 : vector<16x16x128xbf16> to vector<1x16x16x128xbf16>
    tpu.vector_store %arg9[%c0_27, %c0_28, %c0_29, %c0_30], %79 {strides = array<i32>} : memref<1x16x16x128xbf16, #tpu.memory_space<vmem>>, vector<1x16x16x128xbf16>,
    %c0_31 = arith.constant 0 : index
    %c0_32 = arith.constant 0 : index
    %c0_33 = arith.constant 0 : index
    %80 = vector.load %arg8[%c0_31, %c0_32, %c0_33] : memref<1x16x128xf32, #tpu.memory_space<vmem>>, vector<1x16x128xf32>
    %81 = vector.shape_cast %80 : vector<1x16x128xf32> to vector<16x128xf32>
    %82 = vector.shape_cast %75 : vector<16x128xf32> to vector<1x16x128xf32>
    tpu.vector_store %arg8[%c0_31, %c0_32, %c0_33], %82 {strides = array<i32>} : memref<1x16x128xf32, #tpu.memory_space<vmem>>, vector<1x16x128xf32>,
    return
  }
  func.func @transform_0(%arg0: i32, %arg1: i32) -> (i32, i32, i32) {
    %c0_i32 = arith.constant 0 : i32
    %c0_i32_0 = arith.constant 0 : i32
    %c0_i32_1 = arith.constant 0 : i32
    return %arg0, %c0_i32, %c0_i32_0 : i32, i32, i32
  }
  func.func @transform_1(%arg0: i32, %arg1: i32) -> (i32, i32, i32) {
    %c0_i32 = arith.constant 0 : i32
    %c0_i32_0 = arith.constant 0 : i32
    return %arg0, %arg1, %c0_i32 : i32, i32, i32
  }
  func.func @transform_2(%arg0: i32, %arg1: i32) -> (i32, i32, i32, i32) {
    %c0_i32 = arith.constant 0 : i32
    %c0_i32_0 = arith.constant 0 : i32
    %c0_i32_1 = arith.constant 0 : i32
    return %arg0, %arg1, %c0_i32, %c0_i32_0 : i32, i32, i32, i32
  }
  func.func @transform_3(%arg0: i32, %arg1: i32) -> (i32, i32) {
    %c0_i32 = arith.constant 0 : i32
    %c0_i32_0 = arith.constant 0 : i32
    %c0_i32_1 = arith.constant 0 : i32
    return %c0_i32, %c0_i32_0 : i32, i32
  }
  func.func @transform_4(%arg0: i32, %arg1: i32) -> (i32, i32) {
    %c0_i32 = arith.constant 0 : i32
    %c0_i32_0 = arith.constant 0 : i32
    %c0_i32_1 = arith.constant 0 : i32
    return %c0_i32, %c0_i32_0 : i32, i32
  }
  func.func @transform_5(%arg0: i32, %arg1: i32) -> (i32, i32, i32) {
    %c0_i32 = arith.constant 0 : i32
    %c0_i32_0 = arith.constant 0 : i32
    return %arg0, %arg1, %c0_i32 : i32, i32, i32
  }
  func.func @transform_6(%arg0: i32, %arg1: i32) -> (i32, i32, i32) {
    %c0_i32 = arith.constant 0 : i32
    %c0_i32_0 = arith.constant 0 : i32
    return %arg0, %arg1, %c0_i32 : i32, i32, i32
  }
  func.func @transform_7(%arg0: i32, %arg1: i32) -> (i32, i32, i32, i32) {
    %c0_i32 = arith.constant 0 : i32
    %c0_i32_0 = arith.constant 0 : i32
    %c0_i32_1 = arith.constant 0 : i32
    return %arg0, %arg1, %c0_i32, %c0_i32_0 : i32, i32, i32, i32
  }
}

module attributes {stable_mosaic.version = 11 : i64} {
  func.func @_gcn_stats_kernel(%arg0: i32, %arg1: i32, %arg2: memref<1x16x512xf32, #tpu.memory_space<vmem>>, %arg3: memref<1x16x16x128xbf16, #tpu.memory_space<vmem>>, %arg4: memref<128x128xbf16, #tpu.memory_space<vmem>>, %arg5: memref<1x16x128xf32, #tpu.memory_space<vmem>>, %arg6: memref<1x1x4x128xf32, #tpu.memory_space<vmem>>) attributes {dimension_semantics = [#tpu.dimension_semantics<parallel>, #tpu.dimension_semantics<parallel>], iteration_bounds = array<i64: 2, 1>, scalar_prefetch = 0 : i64, scratch_operands = 0 : i64, tpu.core_type = #tpu.core_type<tc>, window_params = [{transform_indices = @transform_0, window_bounds = array<i64: 1, 16, 512>}, {transform_indices = @transform_1, window_bounds = array<i64: 1, 16, 16, 128>}, {pipeline_mode = #tpu.pipeline_mode<synchronous>, transform_indices = @transform_2, window_bounds = array<i64: 128, 128>}, {transform_indices = @transform_3, window_bounds = array<i64: 1, 16, 128>}, {transform_indices = @transform_4, window_bounds = array<i64: 1, 1, 4, 128>}]} {
    %c16_i32 = arith.constant 16 : i32
    %0 = arith.muli %arg1, %c16_i32 : i32
    %1 = tpu.assume_multiple %0, 16 : i32
    %c0 = arith.constant 0 : index
    %c0_0 = arith.constant 0 : index
    %c0_1 = arith.constant 0 : index
    %2 = vector.load %arg2[%c0, %c0_0, %c0_1] : memref<1x16x512xf32, #tpu.memory_space<vmem>>, vector<1x16x512xf32>
    %3 = vector.shape_cast %2 : vector<1x16x512xf32> to vector<16x512xf32>
    %4 = vector.extract_strided_slice %3 {offsets = [0, 128], sizes = [16, 128], strides = [1, 1]} : vector<16x512xf32> to vector<16x128xf32>
    %5 = vector.extract_strided_slice %3 {offsets = [0, 384], sizes = [16, 128], strides = [1, 1]} : vector<16x512xf32> to vector<16x128xf32>
    %c0_2 = arith.constant 0 : index
    %6 = arith.index_cast %1 : i32 to index
    %c0_3 = arith.constant 0 : index
    %7 = vector.load %arg2[%c0_2, %6, %c0_3] : memref<1x16x512xf32, #tpu.memory_space<vmem>>, vector<1x16x512xf32>
    %8 = vector.shape_cast %7 : vector<1x16x512xf32> to vector<16x512xf32>
    %9 = vector.extract_strided_slice %8 {offsets = [0, 0], sizes = [16, 128], strides = [1, 1]} : vector<16x512xf32> to vector<16x128xf32>
    %10 = vector.extract_strided_slice %8 {offsets = [0, 256], sizes = [16, 128], strides = [1, 1]} : vector<16x512xf32> to vector<16x128xf32>
    %c0_4 = arith.constant 0 : index
    %c0_5 = arith.constant 0 : index
    %c0_6 = arith.constant 0 : index
    %c0_7 = arith.constant 0 : index
    %11 = vector.load %arg3[%c0_4, %c0_5, %c0_6, %c0_7] : memref<1x16x16x128xbf16, #tpu.memory_space<vmem>>, vector<1x16x16x128xbf16>
    %12 = vector.shape_cast %11 : vector<1x16x16x128xbf16> to vector<16x16x128xbf16>
    %13 = vector.shape_cast %12 : vector<16x16x128xbf16> to vector<256x128xbf16>
    %c0_8 = arith.constant 0 : index
    %c0_9 = arith.constant 0 : index
    %14 = vector.load %arg4[%c0_8, %c0_9] : memref<128x128xbf16, #tpu.memory_space<vmem>>, vector<128x128xbf16>
    %cst = arith.constant dense<0.000000e+00> : vector<256x128xf32>
    %15 = tpu.matmul %13, %14, %cst {dimension_numbers = #tpu.dot_dimension_numbers<[1], [0], [0], [1], [0, 0, 1, 1], [], []>} : vector<256x128xbf16>, vector<128x128xbf16>, vector<256x128xf32> -> vector<256x128xf32>
    %16 = vector.shape_cast %15 : vector<256x128xf32> to vector<16x16x128xf32>
    %17 = vector.shape_cast %9 : vector<16x128xf32> to vector<16x1x128xf32>
    %18 = vector.broadcast %17 : vector<16x1x128xf32> to vector<16x16x128xf32>
    %19 = arith.addf %16, %18 : vector<16x16x128xf32>
    %20 = vector.shape_cast %4 : vector<16x128xf32> to vector<1x16x128xf32>
    %21 = vector.broadcast %20 : vector<1x16x128xf32> to vector<16x16x128xf32>
    %22 = arith.addf %19, %21 : vector<16x16x128xf32>
    %23 = arith.negf %22 : vector<16x16x128xf32>
    %24 = math.exp %23 : vector<16x16x128xf32>
    %cst_10 = arith.constant 1.000000e+00 : f32
    %25 = vector.broadcast %cst_10 : f32 to vector<16x16x128xf32>
    %26 = arith.addf %25, %24 : vector<16x16x128xf32>
    %27 = arith.divf %25, %26 : vector<16x16x128xf32>
    %28 = tpu.iota {dimensions = array<i32: 1>} : vector<1x16x1xi32>
    %c12_i32 = arith.constant 12 : i32
    %29 = vector.broadcast %c12_i32 : i32 to vector<1x16x1xi32>
    %30 = arith.cmpi slt, %28, %29 : vector<1x16x1xi32>
    %31 = tpu.iota {dimensions = array<i32: 0>} : vector<16x1x1xi32>
    %32 = vector.broadcast %1 : i32 to vector<16x1x1xi32>
    %33 = arith.addi %31, %32 : vector<16x1x1xi32>
    %c12_i32_11 = arith.constant 12 : i32
    %34 = vector.broadcast %c12_i32_11 : i32 to vector<16x1x1xi32>
    %35 = arith.cmpi slt, %33, %34 : vector<16x1x1xi32>
    %cst_12 = arith.constant 0.000000e+00 : f32
    %36 = vector.shape_cast %30 : vector<1x16x1xi1> to vector<1x16x1xi1>
    %37 = vector.broadcast %36 : vector<1x16x1xi1> to vector<16x16x128xi1>
    %38 = vector.broadcast %cst_12 : f32 to vector<16x16x128xf32>
    %39 = arith.select %37, %27, %38 : vector<16x16x128xi1>, vector<16x16x128xf32>
    %40 = vector.shape_cast %5 : vector<16x128xf32> to vector<1x16x128xf32>
    %41 = vector.broadcast %40 : vector<1x16x128xf32> to vector<16x16x128xf32>
    %42 = arith.mulf %39, %41 : vector<16x16x128xf32>
    %cst_13 = arith.constant dense<0.000000e+00> : vector<16x128xf32>
    %43 = vector.multi_reduction <add>, %42, %cst_13 [1] : vector<16x16x128xf32> to vector<16x128xf32>
    %cst_14 = arith.constant dense<0.000000e+00> : vector<16x128xf32>
    %44 = vector.multi_reduction <add>, %39, %cst_14 [1] : vector<16x16x128xf32> to vector<16x128xf32>
    %cst_15 = arith.constant 9.99999968E-21 : f32
    %45 = vector.broadcast %cst_15 : f32 to vector<16x128xf32>
    %46 = arith.addf %44, %45 : vector<16x128xf32>
    %47 = arith.divf %43, %46 : vector<16x128xf32>
    %48 = arith.addf %10, %47 : vector<16x128xf32>
    %c0_16 = arith.constant 0 : index
    %c0_17 = arith.constant 0 : index
    %c0_18 = arith.constant 0 : index
    %49 = vector.load %arg5[%c0_16, %c0_17, %c0_18] : memref<1x16x128xf32, #tpu.memory_space<vmem>>, vector<1x16x128xf32>
    %50 = vector.shape_cast %49 : vector<1x16x128xf32> to vector<16x128xf32>
    %51 = vector.shape_cast %48 : vector<16x128xf32> to vector<1x16x128xf32>
    tpu.vector_store %arg5[%c0_16, %c0_17, %c0_18], %51 {strides = array<i32>} : memref<1x16x128xf32, #tpu.memory_space<vmem>>, vector<1x16x128xf32>,
    %52 = vector.broadcast %35 : vector<16x1x1xi1> to vector<16x16x1xi1>
    %53 = vector.broadcast %30 : vector<1x16x1xi1> to vector<16x16x1xi1>
    %54 = arith.andi %52, %53 : vector<16x16x1xi1>
    %cst_19 = arith.constant 0.000000e+00 : f32
    %55 = vector.shape_cast %54 : vector<16x16x1xi1> to vector<16x16x1xi1>
    %56 = vector.broadcast %55 : vector<16x16x1xi1> to vector<16x16x128xi1>
    %57 = vector.broadcast %cst_19 : f32 to vector<16x16x128xf32>
    %58 = arith.select %56, %22, %57 : vector<16x16x128xi1>, vector<16x16x128xf32>
    %59 = tpu.iota {dimensions = array<i32: 0>} : vector<16x1xi32>
    %60 = vector.broadcast %1 : i32 to vector<16x1xi32>
    %61 = arith.addi %59, %60 : vector<16x1xi32>
    %c12_i32_20 = arith.constant 12 : i32
    %62 = vector.broadcast %c12_i32_20 : i32 to vector<16x1xi32>
    %63 = arith.cmpi slt, %61, %62 : vector<16x1xi32>
    %cst_21 = arith.constant 0.000000e+00 : f32
    %64 = vector.shape_cast %63 : vector<16x1xi1> to vector<16x1xi1>
    %65 = vector.broadcast %64 : vector<16x1xi1> to vector<16x128xi1>
    %66 = vector.broadcast %cst_21 : f32 to vector<16x128xf32>
    %67 = arith.select %65, %48, %66 : vector<16x128xi1>, vector<16x128xf32>
    %68 = vector.shape_cast %58 : vector<16x16x128xf32> to vector<256x128xf32>
    %cst_22 = arith.constant 1.000000e+00 : f32
    %69 = vector.broadcast %cst_22 : f32 to vector<1x256xf32>
    %cst_23 = arith.constant dense<0.000000e+00> : vector<1x128xf32>
    %70 = tpu.matmul %69, %68, %cst_23 {dimension_numbers = #tpu.dot_dimension_numbers<[1], [0], [0], [1], [0, 0, 1, 1], [], []>} : vector<1x256xf32>, vector<256x128xf32>, vector<1x128xf32> -> vector<1x128xf32>
    %71 = arith.mulf %68, %68 : vector<256x128xf32>
    %cst_24 = arith.constant dense<0.000000e+00> : vector<1x128xf32>
    %72 = tpu.matmul %69, %71, %cst_24 {dimension_numbers = #tpu.dot_dimension_numbers<[1], [0], [0], [1], [0, 0, 1, 1], [], []>} : vector<1x256xf32>, vector<256x128xf32>, vector<1x128xf32> -> vector<1x128xf32>
    %cst_25 = arith.constant dense<0.000000e+00> : vector<128xf32>
    %73 = vector.multi_reduction <add>, %67, %cst_25 [0] : vector<16x128xf32> to vector<128xf32>
    %74 = vector.shape_cast %73 : vector<128xf32> to vector<1x128xf32>
    %75 = arith.mulf %67, %67 : vector<16x128xf32>
    %cst_26 = arith.constant dense<0.000000e+00> : vector<128xf32>
    %76 = vector.multi_reduction <add>, %75, %cst_26 [0] : vector<16x128xf32> to vector<128xf32>
    %77 = vector.shape_cast %76 : vector<128xf32> to vector<1x128xf32>
    %78 = tpu.concatenate %70, %72, %74, %77 in 0 : vector<1x128xf32>, vector<1x128xf32>, vector<1x128xf32>, vector<1x128xf32> -> vector<4x128xf32>
    %c0_27 = arith.constant 0 : index
    %c0_28 = arith.constant 0 : index
    %c0_29 = arith.constant 0 : index
    %c0_30 = arith.constant 0 : index
    %79 = vector.load %arg6[%c0_27, %c0_28, %c0_29, %c0_30] : memref<1x1x4x128xf32, #tpu.memory_space<vmem>>, vector<1x1x4x128xf32>
    %80 = vector.shape_cast %79 : vector<1x1x4x128xf32> to vector<4x128xf32>
    %81 = vector.shape_cast %78 : vector<4x128xf32> to vector<1x1x4x128xf32>
    tpu.vector_store %arg6[%c0_27, %c0_28, %c0_29, %c0_30], %81 {strides = array<i32>} : memref<1x1x4x128xf32, #tpu.memory_space<vmem>>, vector<1x1x4x128xf32>,
    return
  }
  func.func @transform_0(%arg0: i32, %arg1: i32) -> (i32, i32, i32) {
    %c0_i32 = arith.constant 0 : i32
    %c0_i32_0 = arith.constant 0 : i32
    %c0_i32_1 = arith.constant 0 : i32
    return %arg0, %c0_i32, %c0_i32_0 : i32, i32, i32
  }
  func.func @transform_1(%arg0: i32, %arg1: i32) -> (i32, i32, i32, i32) {
    %c0_i32 = arith.constant 0 : i32
    %c0_i32_0 = arith.constant 0 : i32
    %c0_i32_1 = arith.constant 0 : i32
    return %arg0, %arg1, %c0_i32, %c0_i32_0 : i32, i32, i32, i32
  }
  func.func @transform_2(%arg0: i32, %arg1: i32) -> (i32, i32) {
    %c0_i32 = arith.constant 0 : i32
    %c0_i32_0 = arith.constant 0 : i32
    %c0_i32_1 = arith.constant 0 : i32
    return %c0_i32, %c0_i32_0 : i32, i32
  }
  func.func @transform_3(%arg0: i32, %arg1: i32) -> (i32, i32, i32) {
    %c0_i32 = arith.constant 0 : i32
    %c0_i32_0 = arith.constant 0 : i32
    return %arg0, %arg1, %c0_i32 : i32, i32, i32
  }
  func.func @transform_4(%arg0: i32, %arg1: i32) -> (i32, i32, i32, i32) {
    %c0_i32 = arith.constant 0 : i32
    %c0_i32_0 = arith.constant 0 : i32
    %c0_i32_1 = arith.constant 0 : i32
    return %arg0, %arg1, %c0_i32, %c0_i32_0 : i32, i32, i32, i32
  }
}

module attributes {stable_mosaic.version = 11 : i64} {
  func.func @_gcn_head_kernel(%arg0: i32, %arg1: i32, %arg2: memref<1x16x256xf32, #tpu.memory_space<vmem>>, %arg3: memref<1x16x16x128xbf16, #tpu.memory_space<vmem>>, %arg4: memref<128x128xbf16, #tpu.memory_space<vmem>>, %arg5: memref<4x128xf32, #tpu.memory_space<vmem>>, %arg6: memref<2x128x128xbf16, #tpu.memory_space<vmem>>, %arg7: memref<2x128xf32, #tpu.memory_space<vmem>>, %arg8: memref<128x128xbf16, #tpu.memory_space<vmem>>, %arg9: memref<1x128xf32, #tpu.memory_space<vmem>>, %arg10: memref<1x16x16x2xf32, #tpu.memory_space<vmem>>) attributes {dimension_semantics = [#tpu.dimension_semantics<parallel>, #tpu.dimension_semantics<parallel>], iteration_bounds = array<i64: 2, 1>, scalar_prefetch = 0 : i64, scratch_operands = 0 : i64, tpu.core_type = #tpu.core_type<tc>, window_params = [{transform_indices = @transform_0, window_bounds = array<i64: 1, 16, 256>}, {transform_indices = @transform_1, window_bounds = array<i64: 1, 16, 16, 128>}, {pipeline_mode = #tpu.pipeline_mode<synchronous>, transform_indices = @transform_2, window_bounds = array<i64: 128, 128>}, {pipeline_mode = #tpu.pipeline_mode<synchronous>, transform_indices = @transform_3, window_bounds = array<i64: 4, 128>}, {pipeline_mode = #tpu.pipeline_mode<synchronous>, transform_indices = @transform_4, window_bounds = array<i64: 2, 128, 128>}, {pipeline_mode = #tpu.pipeline_mode<synchronous>, transform_indices = @transform_5, window_bounds = array<i64: 2, 128>}, {pipeline_mode = #tpu.pipeline_mode<synchronous>, transform_indices = @transform_6, window_bounds = array<i64: 128, 128>}, {pipeline_mode = #tpu.pipeline_mode<synchronous>, transform_indices = @transform_7, window_bounds = array<i64: 1, 128>}, {transform_indices = @transform_8, window_bounds = array<i64: 1, 16, 16, 2>}]} {
    %c16_i32 = arith.constant 16 : i32
    %0 = arith.muli %arg1, %c16_i32 : i32
    %1 = tpu.assume_multiple %0, 16 : i32
    %c0 = arith.constant 0 : index
    %c0_0 = arith.constant 0 : index
    %c0_1 = arith.constant 0 : index
    %2 = vector.load %arg2[%c0, %c0_0, %c0_1] : memref<1x16x256xf32, #tpu.memory_space<vmem>>, vector<1x16x256xf32>
    %3 = vector.shape_cast %2 : vector<1x16x256xf32> to vector<16x256xf32>
    %4 = vector.extract_strided_slice %3 {offsets = [0, 128], sizes = [16, 128], strides = [1, 1]} : vector<16x256xf32> to vector<16x128xf32>
    %c0_2 = arith.constant 0 : index
    %5 = arith.index_cast %1 : i32 to index
    %c0_3 = arith.constant 0 : index
    %6 = vector.load %arg2[%c0_2, %5, %c0_3] : memref<1x16x256xf32, #tpu.memory_space<vmem>>, vector<1x16x256xf32>
    %7 = vector.shape_cast %6 : vector<1x16x256xf32> to vector<16x256xf32>
    %8 = vector.extract_strided_slice %7 {offsets = [0, 0], sizes = [16, 128], strides = [1, 1]} : vector<16x256xf32> to vector<16x128xf32>
    %c0_4 = arith.constant 0 : index
    %c0_5 = arith.constant 0 : index
    %c0_6 = arith.constant 0 : index
    %c0_7 = arith.constant 0 : index
    %9 = vector.load %arg3[%c0_4, %c0_5, %c0_6, %c0_7] : memref<1x16x16x128xbf16, #tpu.memory_space<vmem>>, vector<1x16x16x128xbf16>
    %10 = vector.shape_cast %9 : vector<1x16x16x128xbf16> to vector<16x16x128xbf16>
    %11 = vector.shape_cast %10 : vector<16x16x128xbf16> to vector<256x128xbf16>
    %c0_8 = arith.constant 0 : index
    %c0_9 = arith.constant 0 : index
    %12 = vector.load %arg4[%c0_8, %c0_9] : memref<128x128xbf16, #tpu.memory_space<vmem>>, vector<128x128xbf16>
    %cst = arith.constant dense<0.000000e+00> : vector<256x128xf32>
    %13 = tpu.matmul %11, %12, %cst {dimension_numbers = #tpu.dot_dimension_numbers<[1], [0], [0], [1], [0, 0, 1, 1], [], []>} : vector<256x128xbf16>, vector<128x128xbf16>, vector<256x128xf32> -> vector<256x128xf32>
    %14 = vector.shape_cast %13 : vector<256x128xf32> to vector<16x16x128xf32>
    %15 = vector.shape_cast %8 : vector<16x128xf32> to vector<16x1x128xf32>
    %16 = vector.broadcast %15 : vector<16x1x128xf32> to vector<16x16x128xf32>
    %17 = arith.addf %14, %16 : vector<16x16x128xf32>
    %18 = vector.shape_cast %4 : vector<16x128xf32> to vector<1x16x128xf32>
    %19 = vector.broadcast %18 : vector<1x16x128xf32> to vector<16x16x128xf32>
    %20 = arith.addf %17, %19 : vector<16x16x128xf32>
    %21 = arith.extf %10 : vector<16x16x128xbf16> to vector<16x16x128xf32>
    %c0_10 = arith.constant 0 : index
    %c0_11 = arith.constant 0 : index
    %22 = vector.load %arg5[%c0_10, %c0_11] : memref<4x128xf32, #tpu.memory_space<vmem>>, vector<1x128xf32>
    %23 = vector.shape_cast %22 : vector<1x128xf32> to vector<128xf32>
    %24 = vector.shape_cast %23 : vector<128xf32> to vector<1x1x128xf32>
    %25 = vector.broadcast %24 : vector<1x1x128xf32> to vector<16x16x128xf32>
    %26 = arith.mulf %20, %25 : vector<16x16x128xf32>
    %c1 = arith.constant 1 : index
    %c0_12 = arith.constant 0 : index
    %27 = vector.load %arg5[%c1, %c0_12] : memref<4x128xf32, #tpu.memory_space<vmem>>, vector<1x128xf32>
    %28 = vector.shape_cast %27 : vector<1x128xf32> to vector<128xf32>
    %29 = vector.shape_cast %28 : vector<128xf32> to vector<1x1x128xf32>
    %30 = vector.broadcast %29 : vector<1x1x128xf32> to vector<16x16x128xf32>
    %31 = arith.addf %26, %30 : vector<16x16x128xf32>
    %cst_13 = arith.constant 0.000000e+00 : f32
    %32 = vector.broadcast %cst_13 : f32 to vector<16x16x128xf32>
    %33 = arith.maximumf %31, %32 : vector<16x16x128xf32>
    %34 = arith.addf %21, %33 : vector<16x16x128xf32>
    %35 = vector.shape_cast %34 : vector<16x16x128xf32> to vector<256x128xf32>
    %36 = arith.truncf %35 : vector<256x128xf32> to vector<256x128xbf16>
    %c0_14 = arith.constant 0 : index
    %c0_15 = arith.constant 0 : index
    %c0_16 = arith.constant 0 : index
    %37 = vector.load %arg6[%c0_14, %c0_15, %c0_16] : memref<2x128x128xbf16, #tpu.memory_space<vmem>>, vector<1x128x128xbf16>
    %38 = vector.shape_cast %37 : vector<1x128x128xbf16> to vector<128x128xbf16>
    %cst_17 = arith.constant dense<0.000000e+00> : vector<256x128xf32>
    %39 = tpu.matmul %36, %38, %cst_17 {dimension_numbers = #tpu.dot_dimension_numbers<[1], [0], [0], [1], [0, 0, 1, 1], [], []>} : vector<256x128xbf16>, vector<128x128xbf16>, vector<256x128xf32> -> vector<256x128xf32>
    %c0_18 = arith.constant 0 : index
    %c0_19 = arith.constant 0 : index
    %40 = vector.load %arg7[%c0_18, %c0_19] : memref<2x128xf32, #tpu.memory_space<vmem>>, vector<1x128xf32>
    %41 = vector.shape_cast %40 : vector<1x128xf32> to vector<128xf32>
    %42 = vector.shape_cast %41 : vector<128xf32> to vector<1x128xf32>
    %43 = vector.broadcast %42 : vector<1x128xf32> to vector<256x128xf32>
    %44 = arith.addf %39, %43 : vector<256x128xf32>
    %cst_20 = arith.constant 0.000000e+00 : f32
    %45 = vector.broadcast %cst_20 : f32 to vector<256x128xf32>
    %46 = arith.maximumf %44, %45 : vector<256x128xf32>
    %47 = arith.truncf %46 : vector<256x128xf32> to vector<256x128xbf16>
    %c1_21 = arith.constant 1 : index
    %c0_22 = arith.constant 0 : index
    %c0_23 = arith.constant 0 : index
    %48 = vector.load %arg6[%c1_21, %c0_22, %c0_23] : memref<2x128x128xbf16, #tpu.memory_space<vmem>>, vector<1x128x128xbf16>
    %49 = vector.shape_cast %48 : vector<1x128x128xbf16> to vector<128x128xbf16>
    %cst_24 = arith.constant dense<0.000000e+00> : vector<256x128xf32>
    %50 = tpu.matmul %47, %49, %cst_24 {dimension_numbers = #tpu.dot_dimension_numbers<[1], [0], [0], [1], [0, 0, 1, 1], [], []>} : vector<256x128xbf16>, vector<128x128xbf16>, vector<256x128xf32> -> vector<256x128xf32>
    %c1_25 = arith.constant 1 : index
    %c0_26 = arith.constant 0 : index
    %51 = vector.load %arg7[%c1_25, %c0_26] : memref<2x128xf32, #tpu.memory_space<vmem>>, vector<1x128xf32>
    %52 = vector.shape_cast %51 : vector<1x128xf32> to vector<128xf32>
    %53 = vector.shape_cast %52 : vector<128xf32> to vector<1x128xf32>
    %54 = vector.broadcast %53 : vector<1x128xf32> to vector<256x128xf32>
    %55 = arith.addf %50, %54 : vector<256x128xf32>
    %cst_27 = arith.constant 0.000000e+00 : f32
    %56 = vector.broadcast %cst_27 : f32 to vector<256x128xf32>
    %57 = arith.maximumf %55, %56 : vector<256x128xf32>
    %58 = arith.truncf %57 : vector<256x128xf32> to vector<256x128xbf16>
    %c0_28 = arith.constant 0 : index
    %c0_29 = arith.constant 0 : index
    %59 = vector.load %arg8[%c0_28, %c0_29] : memref<128x128xbf16, #tpu.memory_space<vmem>>, vector<128x128xbf16>
    %cst_30 = arith.constant dense<0.000000e+00> : vector<256x128xf32>
    %60 = tpu.matmul %58, %59, %cst_30 {dimension_numbers = #tpu.dot_dimension_numbers<[1], [0], [0], [1], [0, 0, 1, 1], [], []>} : vector<256x128xbf16>, vector<128x128xbf16>, vector<256x128xf32> -> vector<256x128xf32>
    %c0_31 = arith.constant 0 : index
    %c0_32 = arith.constant 0 : index
    %61 = vector.load %arg9[%c0_31, %c0_32] : memref<1x128xf32, #tpu.memory_space<vmem>>, vector<1x128xf32>
    %62 = vector.broadcast %61 : vector<1x128xf32> to vector<256x128xf32>
    %63 = arith.addf %60, %62 : vector<256x128xf32>
    %64 = vector.extract_strided_slice %63 {offsets = [0, 0], sizes = [256, 2], strides = [1, 1]} : vector<256x128xf32> to vector<256x2xf32>
    %65 = vector.shape_cast %64 : vector<256x2xf32> to vector<16x16x2xf32>
    %c0_33 = arith.constant 0 : index
    %c0_34 = arith.constant 0 : index
    %c0_35 = arith.constant 0 : index
    %c0_36 = arith.constant 0 : index
    %66 = vector.load %arg10[%c0_33, %c0_34, %c0_35, %c0_36] : memref<1x16x16x2xf32, #tpu.memory_space<vmem>>, vector<1x16x16x2xf32>
    %67 = vector.shape_cast %66 : vector<1x16x16x2xf32> to vector<16x16x2xf32>
    %68 = vector.shape_cast %65 : vector<16x16x2xf32> to vector<1x16x16x2xf32>
    tpu.vector_store %arg10[%c0_33, %c0_34, %c0_35, %c0_36], %68 {strides = array<i32>} : memref<1x16x16x2xf32, #tpu.memory_space<vmem>>, vector<1x16x16x2xf32>,
    return
  }
  func.func @transform_0(%arg0: i32, %arg1: i32) -> (i32, i32, i32) {
    %c0_i32 = arith.constant 0 : i32
    %c0_i32_0 = arith.constant 0 : i32
    %c0_i32_1 = arith.constant 0 : i32
    return %arg0, %c0_i32, %c0_i32_0 : i32, i32, i32
  }
  func.func @transform_1(%arg0: i32, %arg1: i32) -> (i32, i32, i32, i32) {
    %c0_i32 = arith.constant 0 : i32
    %c0_i32_0 = arith.constant 0 : i32
    %c0_i32_1 = arith.constant 0 : i32
    return %arg0, %arg1, %c0_i32, %c0_i32_0 : i32, i32, i32, i32
  }
  func.func @transform_2(%arg0: i32, %arg1: i32) -> (i32, i32) {
    %c0_i32 = arith.constant 0 : i32
    %c0_i32_0 = arith.constant 0 : i32
    %c0_i32_1 = arith.constant 0 : i32
    return %c0_i32, %c0_i32_0 : i32, i32
  }
  func.func @transform_3(%arg0: i32, %arg1: i32) -> (i32, i32) {
    %c0_i32 = arith.constant 0 : i32
    %c0_i32_0 = arith.constant 0 : i32
    %c0_i32_1 = arith.constant 0 : i32
    return %c0_i32, %c0_i32_0 : i32, i32
  }
  func.func @transform_4(%arg0: i32, %arg1: i32) -> (i32, i32, i32) {
    %c0_i32 = arith.constant 0 : i32
    %c0_i32_0 = arith.constant 0 : i32
    %c0_i32_1 = arith.constant 0 : i32
    %c0_i32_2 = arith.constant 0 : i32
    return %c0_i32, %c0_i32_0, %c0_i32_1 : i32, i32, i32
  }
  func.func @transform_5(%arg0: i32, %arg1: i32) -> (i32, i32) {
    %c0_i32 = arith.constant 0 : i32
    %c0_i32_0 = arith.constant 0 : i32
    %c0_i32_1 = arith.constant 0 : i32
    return %c0_i32, %c0_i32_0 : i32, i32
  }
  func.func @transform_6(%arg0: i32, %arg1: i32) -> (i32, i32) {
    %c0_i32 = arith.constant 0 : i32
    %c0_i32_0 = arith.constant 0 : i32
    %c0_i32_1 = arith.constant 0 : i32
    return %c0_i32, %c0_i32_0 : i32, i32
  }
  func.func @transform_7(%arg0: i32, %arg1: i32) -> (i32, i32) {
    %c0_i32 = arith.constant 0 : i32
    %c0_i32_0 = arith.constant 0 : i32
    %c0_i32_1 = arith.constant 0 : i32
    return %c0_i32, %c0_i32_0 : i32, i32
  }
  func.func @transform_8(%arg0: i32, %arg1: i32) -> (i32, i32, i32, i32) {
    %c0_i32 = arith.constant 0 : i32
    %c0_i32_0 = arith.constant 0 : i32
    %c0_i32_1 = arith.constant 0 : i32
    return %arg0, %arg1, %c0_i32, %c0_i32_0 : i32, i32, i32, i32
  }
}

</mosaic_0001>

<llo_original>
// kernel: _lambda_.7
$region0: #{_lambda_.7}
  #allocation0 [shape = 'u32[]', space=smem, size = 0x4, offset = 0x4, fixed_abs, tag = 'smem constant byte address 0x4 - core index']
  #allocation1 [shape = 'u32[144,128]{1,0:T(1,128)}', space=vmem, size = 0x12000, scoped, tag = 'internal scratch']
  %s0 = inlined_call_operand.vmem [shape: f32[2,16,512], index: 0, kind: input, shape index: {}]
  %s1 = inlined_call_operand.vmem [shape: f32[2,16,128], index: 1, kind: input, shape index: {}]
  %s2 = inlined_call_operand.vmem [shape: bf16[2,16,16,128], index: 2, kind: input, shape index: {}, may-alias: {2,7}]
  %s3 = inlined_call_operand.vmem [shape: bf16[128,128], index: 3, kind: input, shape index: {}]
  %s4 = inlined_call_operand.vmem [shape: f32[4,128], index: 4, kind: input, shape index: {}]
  %s5 = inlined_call_operand.vmem [shape: f32[2,16,128], index: 5, kind: input, shape index: {}]
  %s6 = inlined_call_operand.vmem [shape: f32[2,16,128], index: 6, kind: output, shape index: {0}]
  %s7 = inlined_call_operand.vmem [shape: bf16[2,16,16,128], index: 7, kind: output, shape index: {1}, may-alias: {2,7}]
  %8 = xla_tuple %s6, %s7
  %s9 = sld [smem:[#allocation0]]
  $region88: #{_lambda_.7} parent=0
    _
  %s11 = ssub.s32 1, %s9
  %s12 = scalar_select 0, %s11, %s9
  $region1: #{_lambda_.7} parent=0
    #allocation2 [shape = 'u8[32768]{0}', space=vmem, size = 0x8000, scoped, tag = 'input window, operand 0']
    loop: start=0, step=1, limit=4
    $region2: #{_lambda_.7} parent=1 // loop_pre_header
      _
    $region3: #{_lambda_.7} parent=1 // loop_header
      %s14 = sphi 0, %s18
      %p15 = scmp.ge.s32.totalorder %s14, 4
      %s21 = sphi 0, %s33
      %s22 = sphi 0, %s29
      %s23 = sphi 0, %s21
      %s24 = sphi 0, %s22
      %s25 = sphi 0, %s23
      %s26 = sphi 0, %s24
      %s36 = sphi 0, %s38
      %s39 = sphi 0, %s36
      %s40 = sphi 0, %s39
      %s56 = sphi 0, %s40
      %s64 = sphi 0, %s66
      %s67 = sphi 0, %s64
      %s68 = sphi 0, %s67
      %s84 = sphi 0, %s68
      %s92 = sphi 0, %s94
      %s95 = sphi 0, %s92
      %s96 = sphi 0, %s95
      %s112 = sphi 0, %s96
      %s116 = sphi 0, %s116
      %s118 = sphi 0, %s116
      %s119 = sphi 0, %s118
      %s133 = sphi 0, %s119
      %s137 = sphi 0, %s137
      %s139 = sphi 0, %s137
      %s140 = sphi 0, %s139
      %s154 = sphi 0, %s140
      %s162 = sphi 0, %s164
      %s165 = sphi 0, %s162
      %s166 = sphi 0, %s165
      %s182 = sphi 0, %s166
      %s190 = sphi 0, %s192
      %s193 = sphi 0, %s190
      %s194 = sphi 0, %s193
      %s210 = sphi 0, %s194
      %s218 = sphi 0, %s220
      %s221 = sphi 0, %s218
      %s222 = sphi 0, %s221
      %s238 = sphi 0, %s222
    $region4: #{_lambda_.7} parent=1 // loop_header_branch
      %17 = sbr.rel (%p15) target = $region8
    $region5: #{_lambda_.7} parent=1 // loop_body
      %s19 = ssub.s32 %s14, 1
      %s20 = ssub.s32 %s14, 2
      %s27 = sadd.s32 1, %s22
      %p28 = scmp.ge.s32.totalorder %s27, 1
      %s29 = scalar_select %p28, 0, %s27
      %s30 = sadd.s32 1, %s21
      %s31 = scalar_select %p28, %s30, %s21
      %p32 = scmp.ge.s32.totalorder %s31, 2
      %s33 = scalar_select %p32, 0, %s31
      %s34 = ssub.s32 %s21, %s33
      %p35 = scmp.eq.s32.totalorder %s34, 0
      %s37 = sadd.s32 %s36, 1
      %s38 = scalar_select %p35, %s36, %s37
      %p41 = pneg %p35
      %p42 = scmp.eq.s32.totalorder %s14, 1
      %p43 = por %p41, %p42
      %p44 = scmp.ne.s32.totalorder %s36, %s39
      %p45 = scmp.eq.s32.totalorder %s14, 0
      %p46 = por %p44, %p45
      %p47 = scmp.ne.s32.totalorder %s36, %s39
      %p48 = scmp.eq.s32.totalorder %s19, 1
      %p49 = por %p47, %p48
      %p50 = scmp.ne.s32.totalorder %s39, %s40
      %p51 = scmp.eq.s32.totalorder %s19, 0
      %p52 = por %p50, %p51
      %p53 = scmp.ne.s32.totalorder %s39, %s40
      %p54 = scmp.eq.s32.totalorder %s20, 1
      %p55 = por %p53, %p54
      %p57 = scmp.ne.s32.totalorder %s40, %s56
      %p58 = scmp.eq.s32.totalorder %s20, 0
      %p59 = por %p57, %p58
      %s60 = ssub.s32 %s21, %s33
      %s61 = ssub.s32 %s22, %s29
      %s62 = sor.u32 %s60, %s61
      %p63 = scmp.eq.s32.totalorder %s62, 0
      %s65 = sadd.s32 %s64, 1
      %s66 = scalar_select %p63, %s64, %s65
      %p69 = pneg %p63
      %p70 = scmp.eq.s32.totalorder %s14, 1
      %p71 = por %p69, %p70
      %p72 = scmp.ne.s32.totalorder %s64, %s67
      %p73 = scmp.eq.s32.totalorder %s14, 0
      %p74 = por %p72, %p73
      %p75 = scmp.ne.s32.totalorder %s64, %s67
      %p76 = scmp.eq.s32.totalorder %s19, 1
      %p77 = por %p75, %p76
      %p78 = scmp.ne.s32.totalorder %s67, %s68
      %p79 = scmp.eq.s32.totalorder %s19, 0
      %p80 = por %p78, %p79
      %p81 = scmp.ne.s32.totalorder %s67, %s68
      %p82 = scmp.eq.s32.totalorder %s20, 1
      %p83 = por %p81, %p82
      %p85 = scmp.ne.s32.totalorder %s68, %s84
      %p86 = scmp.eq.s32.totalorder %s20, 0
      %p87 = por %p85, %p86
      %s88 = ssub.s32 %s21, %s33
      %s89 = ssub.s32 %s22, %s29
      %s90 = sor.u32 %s88, %s89
      %p91 = scmp.eq.s32.totalorder %s90, 0
      %s93 = sadd.s32 %s92, 1
      %s94 = scalar_select %p91, %s92, %s93
      %p97 = pneg %p91
      %p98 = scmp.eq.s32.totalorder %s14, 1
      %p99 = por %p97, %p98
      %p100 = scmp.ne.s32.totalorder %s92, %s95
      %p101 = scmp.eq.s32.totalorder %s14, 0
      %p102 = por %p100, %p101
      %p103 = scmp.ne.s32.totalorder %s92, %s95
      %p104 = scmp.eq.s32.totalorder %s19, 1
      %p105 = por %p103, %p104
      %p106 = scmp.ne.s32.totalorder %s95, %s96
      %p107 = scmp.eq.s32.totalorder %s19, 0
      %p108 = por %p106, %p107
      %p109 = scmp.ne.s32.totalorder %s95, %s96
      %p110 = scmp.eq.s32.totalorder %s20, 1
      %p111 = por %p109, %p110
      %p113 = scmp.ne.s32.totalorder %s96, %s112
      %p114 = scmp.eq.s32.totalorder %s20, 0
      %p115 = por %p113, %p114
      %s117 = sadd.s32 %s116, 1
      %p120 = scmp.eq.s32.totalorder %s14, 1
      %p121 = scmp.ne.s32.totalorder %s116, %s118
      %p122 = scmp.eq.s32.totalorder %s14, 0
      %p123 = por %p121, %p122
      %p124 = scmp.ne.s32.totalorder %s116, %s118
      %p125 = scmp.eq.s32.totalorder %s19, 1
      %p126 = por %p124, %p125
      %p127 = scmp.ne.s32.totalorder %s118, %s119
      %p128 = scmp.eq.s32.totalorder %s19, 0
      %p129 = por %p127, %p128
      %p130 = scmp.ne.s32.totalorder %s118, %s119
      %p131 = scmp.eq.s32.totalorder %s20, 1
      %p132 = por %p130, %p131
      %p134 = scmp.ne.s32.totalorder %s119, %s133
      %p135 = scmp.eq.s32.totalorder %s20, 0
      %p136 = por %p134, %p135
      %s138 = sadd.s32 %s137, 1
      %p141 = scmp.eq.s32.totalorder %s14, 1
      %p142 = scmp.ne.s32.totalorder %s137, %s139
      %p143 = scmp.eq.s32.totalorder %s14, 0
      %p144 = por %p142, %p143
      %p145 = scmp.ne.s32.totalorder %s137, %s139
      %p146 = scmp.eq.s32.totalorder %s19, 1
      %p147 = por %p145, %p146
      %p148 = scmp.ne.s32.totalorder %s139, %s140
      %p149 = scmp.eq.s32.totalorder %s19, 0
      %p150 = por %p148, %p149
      %p151 = scmp.ne.s32.totalorder %s139, %s140
      %p152 = scmp.eq.s32.totalorder %s20, 1
      %p153 = por %p151, %p152
      %p155 = scmp.ne.s32.totalorder %s140, %s154
      %p156 = scmp.eq.s32.totalorder %s20, 0
      %p157 = por %p155, %p156
      %s158 = ssub.s32 %s21, %s33
      %s159 = ssub.s32 %s22, %s29
      %s160 = sor.u32 %s158, %s159
      %p161 = scmp.eq.s32.totalorder %s160, 0
      %s163 = sadd.s32 %s162, 1
      %s164 = scalar_select %p161, %s162, %s163
      %p167 = pneg %p161
      %p168 = scmp.eq.s32.totalorder %s14, 1
      %p169 = por %p167, %p168
      %p170 = scmp.ne.s32.totalorder %s162, %s165
      %p171 = scmp.eq.s32.totalorder %s14, 0
      %p172 = por %p170, %p171
      %p173 = scmp.ne.s32.totalorder %s162, %s165
      %p174 = scmp.eq.s32.totalorder %s19, 1
      %p175 = por %p173, %p174
      %p176 = scmp.ne.s32.totalorder %s165, %s166
      %p177 = scmp.eq.s32.totalorder %s19, 0
      %p178 = por %p176, %p177
      %p179 = scmp.ne.s32.totalorder %s165, %s166
      %p180 = scmp.eq.s32.totalorder %s20, 1
      %p181 = por %p179, %p180
      %p183 = scmp.ne.s32.totalorder %s166, %s182
      %p184 = scmp.eq.s32.totalorder %s20, 0
      %p185 = por %p183, %p184
      %s186 = ssub.s32 %s21, %s33
      %s187 = ssub.s32 %s22, %s29
      %s188 = sor.u32 %s186, %s187
      %p189 = scmp.eq.s32.totalorder %s188, 0
      %s191 = sadd.s32 %s190, 1
      %s192 = scalar_select %p189, %s190, %s191
      %p195 = pneg %p189
      %p196 = scmp.eq.s32.totalorder %s14, 1
      %p197 = por %p195, %p196
      %p198 = scmp.ne.s32.totalorder %s190, %s193
      %p199 = scmp.eq.s32.totalorder %s14, 0
      %p200 = por %p198, %p199
      %p201 = scmp.ne.s32.totalorder %s190, %s193
      %p202 = scmp.eq.s32.totalorder %s19, 1
      %p203 = por %p201, %p202
      %p204 = scmp.ne.s32.totalorder %s193, %s194
      %p205 = scmp.eq.s32.totalorder %s19, 0
      %p206 = por %p204, %p205
      %p207 = scmp.ne.s32.totalorder %s193, %s194
      %p208 = scmp.eq.s32.totalorder %s20, 1
      %p209 = por %p207, %p208
      %p211 = scmp.ne.s32.totalorder %s194, %s210
      %p212 = scmp.eq.s32.totalorder %s20, 0
      %p213 = por %p211, %p212
      %s214 = ssub.s32 %s21, %s33
      %s215 = ssub.s32 %s22, %s29
      %s216 = sor.u32 %s214, %s215
      %p217 = scmp.eq.s32.totalorder %s216, 0
      %s219 = sadd.s32 %s218, 1
      %s220 = scalar_select %p217, %s218, %s219
      %p223 = pneg %p217
      %p224 = scmp.eq.s32.totalorder %s14, 1
      %p225 = por %p223, %p224
      %p226 = scmp.ne.s32.totalorder %s218, %s221
      %p227 = scmp.eq.s32.totalorder %s14, 0
      %p228 = por %p226, %p227
      %p229 = scmp.ne.s32.totalorder %s218, %s221
      %p230 = scmp.eq.s32.totalorder %s19, 1
      %p231 = por %p229, %p230
      %p232 = scmp.ne.s32.totalorder %s221, %s222
      %p233 = scmp.eq.s32.totalorder %s19, 0
      %p234 = por %p232, %p233
      %p235 = scmp.ne.s32.totalorder %s221, %s222
      %p236 = scmp.eq.s32.totalorder %s20, 1
      %p237 = por %p235, %p236
      %p239 = scmp.ne.s32.totalorder %s222, %s238
      %p240 = scmp.eq.s32.totalorder %s20, 0
      %p241 = por %p239, %p240
      %p242 = scmp.le.s32.totalorder 1, %s14
      %p243 = scmp.lt.s32.totalorder %s14, 3
      %p244 = pnand %p242, %p243
      %p245 = pneg %p244
      // Predicated region
      $region9: #{_lambda_.7} parent=5 // pred_check
        _
      $region10: #{_lambda_.7} parent=5 // pred_check_branch
        %247 = sbr.rel (%p244) target = $region12
      $region11: #{_lambda_.7} parent=5 // pred_region
        %s248 = ssub.s32 %s14, 1
        // Predicated region
        $region13: #{_lambda_.7} parent=11 // pred_check
          %p249 = pneg %p129
        $region14: #{_lambda_.7} parent=11 // pred_check_branch
          %251 = sbr.rel (%p249) target = $region16
        $region15: #{_lambda_.7} parent=11 // pred_region
          _
        $region16: #{_lambda_.7} parent=11 // pred_fallthru
          _
        // Predicated region
        $region17: #{_lambda_.7} parent=11 // pred_check
          %p252 = pneg %p150
        $region18: #{_lambda_.7} parent=11 // pred_check_branch
          %254 = sbr.rel (%p252) target = $region20
        $region19: #{_lambda_.7} parent=11 // pred_region
          _
        $region20: #{_lambda_.7} parent=11 // pred_fallthru
          _
      $region12: #{_lambda_.7} parent=5 // pred_fallthru
        _
      %p255 = scmp.lt.s32.totalorder %s14, 2
      // Predicated region
      $region21: #{_lambda_.7} parent=5 // pred_check
        %p256 = pneg %p255
      $region22: #{_lambda_.7} parent=5 // pred_check_branch
        %258 = sbr.rel (%p256) target = $region24
      $region23: #{_lambda_.7} parent=5 // pred_region
        // Predicated region
        $region25: #{_lambda_.7} parent=23 // pred_check
          %p259 = pneg %p46
        $region26: #{_lambda_.7} parent=23 // pred_check_branch
          %261 = sbr.rel (%p259) target = $region28
        $region27: #{_lambda_.7} parent=23 // pred_region
          %s262 = sand.u32 %s36, 1
          %s263 = sand.u32 %s36, 1
          %s264 = smul.addr %s263, 32
          %s265 = scalar_lea.vmem [#allocation2], %s264
          %s266 = smul.addr %s21, 8
          %s267 = smul.addr %s266, 8
          %s268 = scalar_lea.vmem %s0, %s267
          // Predicated region
          $region29: #{_lambda_.7} parent=27 // pred_check
            _
          $region30: #{_lambda_.7} parent=27 // pred_check_branch
            %270 = sbr.rel (0) target = $region32
          $region31: #{_lambda_.7} parent=27 // pred_region
            // Predicated region
            $region33: #{_lambda_.7} parent=31 // pred_check
              _
            $region34: #{_lambda_.7} parent=31 // pred_check_branch
              %272 = sbr.rel (0) target = $region36
            $region35: #{_lambda_.7} parent=31 // pred_region
              loop: start=0, step=1, limit=1
              $region37: #{_lambda_.7} parent=35 // loop_pre_header
                _
              $region38: #{_lambda_.7} parent=35 // loop_header
                %s274 = sphi 0, %s278
                %p275 = scmp.ge.s32.totalorder %s274, 1
                %s279 = sphi %s268, %s268
                %s280 = sphi %s265, %s265
              $region39: #{_lambda_.7} parent=35 // loop_header_branch
                %277 = sbr.rel (%p275) target = $region43
              $region40: #{_lambda_.7} parent=35 // loop_body
                %v281 = vld [vmem:[%s279] sm:$0xff]
                %282 = vst [vmem:[%s280] sm:$0xff] %v281
                %v283 = vld [vmem:[%s279 + $0x8] sm:$0xff]
                %284 = vst [vmem:[%s280 + $0x8] sm:$0xff] %v283
                %v285 = vld [vmem:[%s279 + $0x20] sm:$0xff]
                %286 = vst [vmem:[%s280 + $0x10] sm:$0xff] %v285
                %v287 = vld [vmem:[%s279 + $0x28] sm:$0xff]
                %288 = vst [vmem:[%s280 + $0x18] sm:$0xff] %v287
              $region41: #{_lambda_.7} parent=35 // loop_footer
                %s278 = sadd.s32 1, %s274
              $region42: #{_lambda_.7} parent=35 // loop_footer_branch
                %273 = sbr.rel target = $region38
              $region43: #{_lambda_.7} parent=35 // loop_exit
                _
            $region36: #{_lambda_.7} parent=31 // pred_fallthru
              _
            // Predicated region
            $region44: #{_lambda_.7} parent=31 // pred_check
              _
            $region45: #{_lambda_.7} parent=31 // pred_check_branch
              %290 = sbr.rel target = $region47
            $region46: #{_lambda_.7} parent=31 // pred_region
              _
            $region47: #{_lambda_.7} parent=31 // pred_fallthru
              _
          $region32: #{_lambda_.7} parent=27 // pred_fallthru
            _
          %291 = vnop
        $region28: #{_lambda_.7} parent=23 // pred_fallthru
          _
        // Predicated region
        $region48: #{_lambda_.7} parent=23 // pred_check
          %p292 = pneg %p74
        $region49: #{_lambda_.7} parent=23 // pred_check_branch
          %294 = sbr.rel (%p292) target = $region51
        $region50: #{_lambda_.7} parent=23 // pred_region
          %s295 = smul.u32 2, %s22
          %p296 = scmp.lt.s32.totalorder %s21, 1
          %s297 = scalar_select %p296, %s21, 1
          %p298 = scmp.lt.s32.totalorder %s295, 1
          %s299 = scalar_select %p298, %s295, 1
          %s300 = smul.addr %s297, 2
          %s301 = sadd.s32 %s299, %s300
          %s302 = smul.addr %s301, 8
          %s303 = scalar_lea.vmem %s1, %s302
          %s304 = smul.u32 2, %s22
        $region51: #{_lambda_.7} parent=23 // pred_fallthru
          _
        // Predicated region
        $region52: #{_lambda_.7} parent=23 // pred_check
          %p305 = pneg %p102
        $region53: #{_lambda_.7} parent=23 // pred_check_branch
          %307 = sbr.rel (%p305) target = $region55
        $region54: #{_lambda_.7} parent=23 // pred_region
          %s308 = smul.u32 16, %s22
          %p309 = scmp.lt.s32.totalorder %s21, 1
          %s310 = scalar_select %p309, %s21, 1
          %p311 = scmp.lt.s32.totalorder %s308, 15
          %s312 = scalar_select %p311, %s308, 15
          %s313 = smul.addr %s312, 2
          %s314 = smul.addr %s310, 32
          %s315 = sadd.s32 %s313, %s314
          %s316 = smul.addr %s315, 4
          %s317 = scalar_lea.vmem %s2, %s316
          %s318 = smul.u32 16, %s22
        $region55: #{_lambda_.7} parent=23 // pred_fallthru
          _
        // Predicated region
        $region56: #{_lambda_.7} parent=23 // pred_check
          %p319 = pneg %p172
        $region57: #{_lambda_.7} parent=23 // pred_check_branch
          %321 = sbr.rel (%p319) target = $region59
        $region58: #{_lambda_.7} parent=23 // pred_region
          %s322 = smul.u32 2, %s22
          %p323 = scmp.lt.s32.totalorder %s21, 1
          %s324 = scalar_select %p323, %s21, 1
          %p325 = scmp.lt.s32.totalorder %s322, 1
          %s326 = scalar_select %p325, %s322, 1
          %s327 = smul.addr %s324, 2
          %s328 = sadd.s32 %s326, %s327
          %s329 = smul.addr %s328, 8
          %s330 = scalar_lea.vmem %s5, %s329
          %s331 = smul.u32 2, %s22
        $region59: #{_lambda_.7} parent=23 // pred_fallthru
          _
      $region24: #{_lambda_.7} parent=5 // pred_fallthru
        _
      %p332 = scmp.le.s32.totalorder 1, %s14
      %p333 = scmp.lt.s32.totalorder %s14, 3
      %p334 = pnand %p332, %p333
      %p335 = pneg %p334
      // Predicated region
      $region60: #{_lambda_.7} parent=5 // pred_check
        _
      $region61: #{_lambda_.7} parent=5 // pred_check_branch
        %337 = sbr.rel (%p334) target = $region63
      $region62: #{_lambda_.7} parent=5 // pred_region
        %s338 = ssub.s32 %s14, 1
        %s339 = sand.u32 %s39, 1
        %s340 = sand.u32 %s39, 1
        %s341 = smul.addr %s340, 32
        %s342 = scalar_lea.vmem [#allocation2], %s341
        // Predicated region
        $region64: #{_lambda_.7} parent=62 // pred_check
          %p343 = pneg %p52
        $region65: #{_lambda_.7} parent=62 // pred_check_branch
          %345 = sbr.rel (%p343) target = $region67
        $region66: #{_lambda_.7} parent=62 // pred_region
          _
        $region67: #{_lambda_.7} parent=62 // pred_fallthru
          _
        %s346 = sand.u32 %s39, 1
        %s347 = sand.u32 %s39, 1
        %s348 = smul.addr %s347, 32
        %s349 = scalar_lea.vmem [#allocation2], %s348
        %p350 = pneg %p52
        %p351 = pneg %p49
        %s352 = smul.u32 2, %s24
        %p353 = scmp.lt.s32.totalorder %s23, 1
        %s354 = scalar_select %p353, %s23, 1
        %p355 = scmp.lt.s32.totalorder %s352, 1
        %s356 = scalar_select %p355, %s352, 1
        %s357 = smul.addr %s354, 2
        %s358 = sadd.s32 %s356, %s357
        %s359 = smul.addr %s358, 8
        %s360 = scalar_lea.vmem %s1, %s359
        %p361 = pneg %p80
        %p362 = pneg %p77
        %s363 = smul.u32 16, %s24
        %p364 = scmp.lt.s32.totalorder %s23, 1
        %s365 = scalar_select %p364, %s23, 1
        %p366 = scmp.lt.s32.totalorder %s363, 15
        %s367 = scalar_select %p366, %s363, 15
        %s368 = smul.addr %s367, 2
        %s369 = smul.addr %s365, 32
        %s370 = sadd.s32 %s368, %s369
        %s371 = smul.addr %s370, 4
        %s372 = scalar_lea.vmem %s2, %s371
        %p373 = pneg %p108
        %p374 = pneg %p105
        %p375 = pneg %p129
        %p376 = pneg %p126
        %p377 = pneg %p150
        %p378 = pneg %p147
        %s379 = smul.u32 2, %s24
        %p380 = scmp.lt.s32.totalorder %s23, 1
        %s381 = scalar_select %p380, %s23, 1
        %p382 = scmp.lt.s32.totalorder %s379, 1
        %s383 = scalar_select %p382, %s379, 1
        %s384 = smul.addr %s381, 2
        %s385 = sadd.s32 %s383, %s384
        %s386 = smul.addr %s385, 8
        %s387 = scalar_lea.vmem %s5, %s386
        %p388 = pneg %p178
        %p389 = pneg %p175
        %p390 = pneg %p206
        %p391 = pneg %p203
        %s392 = smul.u32 2, %s24
        %p393 = scmp.lt.s32.totalorder %s23, 1
        %s394 = scalar_select %p393, %s23, 1
        %p395 = scmp.lt.s32.totalorder %s392, 1
        %s396 = scalar_select %p395, %s392, 1
        %s397 = smul.addr %s394, 2
        %s398 = sadd.s32 %s396, %s397
        %s399 = smul.addr %s398, 8
        %s400 = scalar_lea.vmem %s6, %s399
        %p401 = pneg %p234
        %p402 = pneg %p231
        %s403 = smul.u32 16, %s24
        %p404 = scmp.lt.s32.totalorder %s23, 1
        %s405 = scalar_select %p404, %s23, 1
        %p406 = scmp.lt.s32.totalorder %s403, 15
        %s407 = scalar_select %p406, %s403, 15
        %s408 = smul.addr %s407, 2
        %s409 = smul.addr %s405, 32
        %s410 = sadd.s32 %s408, %s409
        %s411 = smul.addr %s410, 4
        %s412 = scalar_lea.vmem %s7, %s411
        %s413 = smul.u32 2, %s24
        %p414 = scmp.lt.s32.totalorder %s23, 1
        %s415 = scalar_select %p414, %s23, 1
        %p416 = scmp.lt.s32.totalorder %s413, 1
        %s417 = scalar_select %p416, %s413, 1
        %s418 = smul.addr %s415, 2
        %s419 = sadd.s32 %s417, %s418
        %s420 = smul.addr %s419, 8
        %s421 = scalar_lea.vmem %s1, %s420
        %s422 = smul.u32 2, %s24
        %s423 = smul.u32 16, %s24
        %p424 = scmp.lt.s32.totalorder %s23, 1
        %s425 = scalar_select %p424, %s23, 1
        %p426 = scmp.lt.s32.totalorder %s423, 15
        %s427 = scalar_select %p426, %s423, 15
        %s428 = smul.addr %s427, 2
        %s429 = smul.addr %s425, 32
        %s430 = sadd.s32 %s428, %s429
        %s431 = smul.addr %s430, 4
        %s432 = scalar_lea.vmem %s2, %s431
        %s433 = smul.u32 16, %s24
        %s434 = smul.u32 2, %s24
        %p435 = scmp.lt.s32.totalorder %s23, 1
        %s436 = scalar_select %p435, %s23, 1
        %p437 = scmp.lt.s32.totalorder %s434, 1
        %s438 = scalar_select %p437, %s434, 1
        %s439 = smul.addr %s436, 2
        %s440 = sadd.s32 %s438, %s439
        %s441 = smul.addr %s440, 8
        %s442 = scalar_lea.vmem %s5, %s441
        %s443 = smul.u32 2, %s24
        %s444 = smul.u32 2, %s24
        %p445 = scmp.lt.s32.totalorder %s23, 1
        %s446 = scalar_select %p445, %s23, 1
        %p447 = scmp.lt.s32.totalorder %s444, 1
        %s448 = scalar_select %p447, %s444, 1
        %s449 = smul.addr %s446, 2
        %s450 = sadd.s32 %s448, %s449
        %s451 = smul.addr %s450, 8
        %s452 = scalar_lea.vmem %s6, %s451
        %s453 = smul.u32 2, %s24
        %s454 = smul.u32 16, %s24
        %p455 = scmp.lt.s32.totalorder %s23, 1
        %s456 = scalar_select %p455, %s23, 1
        %p457 = scmp.lt.s32.totalorder %s454, 15
        %s458 = scalar_select %p457, %s454, 15
        %s459 = smul.addr %s458, 2
        %s460 = smul.addr %s456, 32
        %s461 = sadd.s32 %s459, %s460
        %s462 = smul.addr %s461, 4
        %s463 = scalar_lea.vmem %s7, %s462
        %s464 = smul.u32 16, %s24
        %s466 = smul.u32 %s24, 16
        %v467 = vld [vmem:[%s342 + $0x8] sm:$0xff]
        %v468 = vld [vmem:[%s342 + $0x18] sm:$0xff]
        %s469 = sshra.s32 %s466, 3
        %s470 = sand.u32 %s466, 7
        %s471 = smul.u32 %s469, 2
        %s472 = smul.addr %s471, 8
        %s473 = scalar_lea.vmem %s342, %s472 [#allocation2]
        %v474 = vld [vmem:[%s473] sm:$0xff]
        %v475 = vld [vmem:[%s473 + $0x10] sm:$0xff]
        %v476 = vld [vmem:[%s432] sm:$0xf]
        %v477 = vld [vmem:[%s432 + $0x4] sm:$0xf]
        %v478 = vld [vmem:[%s432 + $0x8] sm:$0xf]
        %v479 = vld [vmem:[%s432 + $0xc] sm:$0xf]
        %v480 = vld [vmem:[%s432 + $0x10] sm:$0xf]
        %v481 = vld [vmem:[%s432 + $0x14] sm:$0xf]
        %v482 = vld [vmem:[%s432 + $0x18] sm:$0xf]
        %v483 = vld [vmem:[%s432 + $0x1c] sm:$0xf]
        %v484 = vld [vmem:[%s432 + $0x20] sm:$0xf]
        %v485 = vld [vmem:[%s432 + $0x24] sm:$0xf]
        %v486 = vld [vmem:[%s432 + $0x28] sm:$0xf]
        %v487 = vld [vmem:[%s432 + $0x2c] sm:$0xf]
        %v488 = vld [vmem:[%s432 + $0x30] sm:$0xf]
        %v489 = vld [vmem:[%s432 + $0x34] sm:$0xf]
        %v490 = vld [vmem:[%s432 + $0x38] sm:$0xf]
        %v491 = vld [vmem:[%s432 + $0x3c] sm:$0xf]
        %v492 = vld [vmem:[%s432 + $0x40] sm:$0xf]
        %v493 = vld [vmem:[%s432 + $0x44] sm:$0xf]
        %v494 = vld [vmem:[%s432 + $0x48] sm:$0xf]
        %v495 = vld [vmem:[%s432 + $0x4c] sm:$0xf]
        %v496 = vld [vmem:[%s432 + $0x50] sm:$0xf]
        %v497 = vld [vmem:[%s432 + $0x54] sm:$0xf]
        %v498 = vld [vmem:[%s432 + $0x58] sm:$0xf]
        %v499 = vld [vmem:[%s432 + $0x5c] sm:$0xf]
        %v500 = vld [vmem:[%s432 + $0x60] sm:$0xf]
        %v501 = vld [vmem:[%s432 + $0x64] sm:$0xf]
        %v502 = vld [vmem:[%s432 + $0x68] sm:$0xf]
        %v503 = vld [vmem:[%s432 + $0x6c] sm:$0xf]
        %v504 = vld [vmem:[%s432 + $0x70] sm:$0xf]
        %v505 = vld [vmem:[%s432 + $0x74] sm:$0xf]
        %v506 = vld [vmem:[%s432 + $0x78] sm:$0xf]
        %v507 = vld [vmem:[%s432 + $0x7c] sm:$0xf]
        %v508 = vld [vmem:[%s3] sm:$0xf]
        %v509 = vld [vmem:[%s3 + $0x4] sm:$0xf]
        %v510 = vld [vmem:[%s3 + $0x8] sm:$0xf]
        %v511 = vld [vmem:[%s3 + $0xc] sm:$0xf]
        %v512 = vld [vmem:[%s3 + $0x10] sm:$0xf]
        %v513 = vld [vmem:[%s3 + $0x14] sm:$0xf]
        %v514 = vld [vmem:[%s3 + $0x18] sm:$0xf]
        %v515 = vld [vmem:[%s3 + $0x1c] sm:$0xf]
        %v516 = vld [vmem:[%s3 + $0x20] sm:$0xf]
        %v517 = vld [vmem:[%s3 + $0x24] sm:$0xf]
        %v518 = vld [vmem:[%s3 + $0x28] sm:$0xf]
        %v519 = vld [vmem:[%s3 + $0x2c] sm:$0xf]
        %v520 = vld [vmem:[%s3 + $0x30] sm:$0xf]
        %v521 = vld [vmem:[%s3 + $0x34] sm:$0xf]
        %v522 = vld [vmem:[%s3 + $0x38] sm:$0xf]
        %v523 = vld [vmem:[%s3 + $0x3c] sm:$0xf]
        %v556 = vunpack.c.l.b16 %v476
        %v557 = vunpack.c.l.b16 %v477
        %v558 = vunpack.c.l.b16 %v478
        %v559 = vunpack.c.l.b16 %v479
        %v560 = vunpack.c.l.b16 %v480
        %v561 = vunpack.c.l.b16 %v481
        %v562 = vunpack.c.l.b16 %v482
        %v563 = vunpack.c.l.b16 %v483
        %v564 = vunpack.c.l.b16 %v484
        %v565 = vunpack.c.l.b16 %v485
        %v566 = vunpack.c.l.b16 %v486
        %v567 = vunpack.c.l.b16 %v487
        %v568 = vunpack.c.l.b16 %v488
        %v569 = vunpack.c.l.b16 %v489
        %v570 = vunpack.c.l.b16 %v490
        %v571 = vunpack.c.l.b16 %v491
        %v572 = vunpack.c.l.b16 %v492
        %v573 = vunpack.c.l.b16 %v493
        %v574 = vunpack.c.l.b16 %v494
        %v575 = vunpack.c.l.b16 %v495
        %v576 = vunpack.c.l.b16 %v496
        %v577 = vunpack.c.l.b16 %v497
        %v578 = vunpack.c.l.b16 %v498
        %v579 = vunpack.c.l.b16 %v499
        %v580 = vunpack.c.l.b16 %v500
        %v581 = vunpack.c.l.b16 %v501
        %v582 = vunpack.c.l.b16 %v502
        %v583 = vunpack.c.l.b16 %v503
        %v584 = vunpack.c.l.b16 %v504
        %v585 = vunpack.c.l.b16 %v505
        %v586 = vunpack.c.l.b16 %v506
        %v587 = vunpack.c.l.b16 %v507
        %v588 = vpack.c.b16 %v557, %v556
        %v589 = vpack.c.b16 %v559, %v558
        %v590 = vpack.c.b16 %v561, %v560
        %v591 = vpack.c.b16 %v563, %v562
        %v592 = vpack.c.b16 %v565, %v564
        %v593 = vpack.c.b16 %v567, %v566
        %v594 = vpack.c.b16 %v569, %v568
        %v595 = vpack.c.b16 %v571, %v570
        %v596 = vpack.c.b16 %v573, %v572
        %v597 = vpack.c.b16 %v575, %v574
        %v598 = vpack.c.b16 %v577, %v576
        %v599 = vpack.c.b16 %v579, %v578
        %v600 = vpack.c.b16 %v581, %v580
        %v601 = vpack.c.b16 %v583, %v582
        %v602 = vpack.c.b16 %v585, %v584
        %v603 = vpack.c.b16 %v587, %v586
        %v636 = vunpack.c.l.b16 %v508
        %v637 = vunpack.c.l.b16 %v509
        %v638 = vunpack.c.l.b16 %v510
        %v639 = vunpack.c.l.b16 %v511
        %v640 = vunpack.c.l.b16 %v512
        %v641 = vunpack.c.l.b16 %v513
        %v642 = vunpack.c.l.b16 %v514
        %v643 = vunpack.c.l.b16 %v515
        %v644 = vunpack.c.l.b16 %v516
        %v645 = vunpack.c.l.b16 %v517
        %v646 = vunpack.c.l.b16 %v518
        %v647 = vunpack.c.l.b16 %v519
        %v648 = vunpack.c.l.b16 %v520
        %v649 = vunpack.c.l.b16 %v521
        %v650 = vunpack.c.l.b16 %v522
        %v651 = vunpack.c.l.b16 %v523
        %v652 = vpack.c.b16 %v637, %v636
        %v653 = vpack.c.b16 %v639, %v638
        %v654 = vpack.c.b16 %v641, %v640
        %v655 = vpack.c.b16 %v643, %v642
        %v656 = vpack.c.b16 %v645, %v644
        %v657 = vpack.c.b16 %v647, %v646
        %v658 = vpack.c.b16 %v649, %v648
        %v659 = vpack.c.b16 %v651, %v650
        %668 = vmatprep.subr.bf16.mxu0 0
        %669 = vmatpush1.bf16.msra.mxu0 %v659
        %670 = vmatprep.subr.bf16.mxu0 0
        %671 = vmatpush1.bf16.msra.mxu0 %v658
        %672 = vmatprep.subr.bf16.mxu0 0
        %673 = vmatpush1.bf16.msra.mxu0 %v657
        %674 = vmatprep.subr.bf16.mxu0 0
        %675 = vmatpush1.bf16.msra.mxu0 %v656
        %676 = vmatprep.subr.bf16.mxu0 0
        %677 = vmatpush1.bf16.msra.mxu0 %v655
        %678 = vmatprep.subr.bf16.mxu0 0
        %679 = vmatpush1.bf16.msra.mxu0 %v654
        %680 = vmatprep.subr.bf16.mxu0 0
        %681 = vmatpush1.bf16.msra.mxu0 %v653
        %682 = vmatprep.subr.bf16.mxu0 0
        %683 = vmatpush1.bf16.msra.mxu0 %v652
        %684 = vmatprep.subr.bf16.mxu0 0
        %685 = vmatpush2.bf16.msra.mxu0 0
        %686 = vmatprep.subr.bf16.mxu0 0
        %687 = vmatpush2.bf16.msra.mxu0 0
        %688 = vmatprep.subr.bf16.mxu0 0
        %689 = vmatpush2.bf16.msra.mxu0 0
        %690 = vmatprep.subr.bf16.mxu0 0
        %691 = vmatpush2.bf16.msra.mxu0 0
        %692 = vmatprep.subr.bf16.mxu0 0
        %693 = vmatpush2.bf16.msra.mxu0 0
        %694 = vmatprep.subr.bf16.mxu0 0
        %695 = vmatpush2.bf16.msra.mxu0 0
        %696 = vmatprep.subr.bf16.mxu0 0
        %697 = vmatpush2.bf16.msra.mxu0 0
        %698 = vmatprep.subr.bf16.mxu0 0
        %699 = vmatpush2.bf16.msra.mxu0 0
        %700 = vmatprep.mubr.bf16.mxu0 0
        %701 = vmatmul.mubr.bf16.gmra.mxu0 %v588
        %v702 = vpop.f32.mrf.mxu0
        %v703 = vadd.f32 0.0, %v702
        %v704 = vpop.f32.mrf.mxu0
        %v705 = vpop.f32.mrf.mxu0
        %v706 = vadd.f32 0.0, %v705
        %v707 = vpop.f32.mrf.mxu0
        %708 = vmatprep.mubr.bf16.mxu0 0
        %709 = vmatmul.mubr.bf16.gmra.mxu0 %v589
        %v710 = vpop.f32.mrf.mxu0
        %v711 = vadd.f32 0.0, %v710
        %v712 = vpop.f32.mrf.mxu0
        %v713 = vpop.f32.mrf.mxu0
        %v714 = vadd.f32 0.0, %v713
        %v715 = vpop.f32.mrf.mxu0
        %716 = vmatprep.mubr.bf16.mxu0 0
        %717 = vmatmul.mubr.bf16.gmra.mxu0 %v590
        %v718 = vpop.f32.mrf.mxu0
        %v719 = vadd.f32 0.0, %v718
        %v720 = vpop.f32.mrf.mxu0
        %v721 = vpop.f32.mrf.mxu0
        %v722 = vadd.f32 0.0, %v721
        %v723 = vpop.f32.mrf.mxu0
        %724 = vmatprep.mubr.bf16.mxu0 0
        %725 = vmatmul.mubr.bf16.gmra.mxu0 %v591
        %v726 = vpop.f32.mrf.mxu0
        %v727 = vadd.f32 0.0, %v726
        %v728 = vpop.f32.mrf.mxu0
        %v729 = vpop.f32.mrf.mxu0
        %v730 = vadd.f32 0.0, %v729
        %v731 = vpop.f32.mrf.mxu0
        %732 = vmatprep.mubr.bf16.mxu0 0
        %733 = vmatmul.mubr.bf16.gmra.mxu0 %v592
        %v734 = vpop.f32.mrf.mxu0
        %v735 = vadd.f32 0.0, %v734
        %v736 = vpop.f32.mrf.mxu0
        %v737 = vpop.f32.mrf.mxu0
        %v738 = vadd.f32 0.0, %v737
        %v739 = vpop.f32.mrf.mxu0
        %740 = vmatprep.mubr.bf16.mxu0 0
        %741 = vmatmul.mubr.bf16.gmra.mxu0 %v593
        %v742 = vpop.f32.mrf.mxu0
        %v743 = vadd.f32 0.0, %v742
        %v744 = vpop.f32.mrf.mxu0
        %v745 = vpop.f32.mrf.mxu0
        %v746 = vadd.f32 0.0, %v745
        %v747 = vpop.f32.mrf.mxu0
        %748 = vmatprep.mubr.bf16.mxu0 0
        %749 = vmatmul.mubr.bf16.gmra.mxu0 %v594
        %v750 = vpop.f32.mrf.mxu0
        %v751 = vadd.f32 0.0, %v750
        %v752 = vpop.f32.mrf.mxu0
        %v753 = vpop.f32.mrf.mxu0
        %v754 = vadd.f32 0.0, %v753
        %v755 = vpop.f32.mrf.mxu0
        %756 = vmatprep.mubr.bf16.mxu0 0
        %757 = vmatmul.mubr.bf16.gmra.mxu0 %v595
        %v758 = vpop.f32.mrf.mxu0
        %v759 = vadd.f32 0.0, %v758
        %v760 = vpop.f32.mrf.mxu0
        %v761 = vpop.f32.mrf.mxu0
        %v762 = vadd.f32 0.0, %v761
        %v763 = vpop.f32.mrf.mxu0
        %764 = vmatprep.mubr.bf16.mxu0 0
        %765 = vmatmul.mubr.bf16.gmra.mxu0 %v596
        %v766 = vpop.f32.mrf.mxu0
        %v767 = vadd.f32 0.0, %v766
        %v768 = vpop.f32.mrf.mxu0
        %v769 = vpop.f32.mrf.mxu0
        %v770 = vadd.f32 0.0, %v769
        %v771 = vpop.f32.mrf.mxu0
        %772 = vmatprep.mubr.bf16.mxu0 0
        %773 = vmatmul.mubr.bf16.gmra.mxu0 %v597
        %v774 = vpop.f32.mrf.mxu0
        %v775 = vadd.f32 0.0, %v774
        %v776 = vpop.f32.mrf.mxu0
        %v777 = vpop.f32.mrf.mxu0
        %v778 = vadd.f32 0.0, %v777
        %v779 = vpop.f32.mrf.mxu0
        %780 = vmatprep.mubr.bf16.mxu0 0
        %781 = vmatmul.mubr.bf16.gmra.mxu0 %v598
        %v782 = vpop.f32.mrf.mxu0
        %v783 = vadd.f32 0.0, %v782
        %v784 = vpop.f32.mrf.mxu0
        %v785 = vpop.f32.mrf.mxu0
        %v786 = vadd.f32 0.0, %v785
        %v787 = vpop.f32.mrf.mxu0
        %788 = vmatprep.mubr.bf16.mxu0 0
        %789 = vmatmul.mubr.bf16.gmra.mxu0 %v599
        %v790 = vpop.f32.mrf.mxu0
        %v791 = vadd.f32 0.0, %v790
        %v792 = vpop.f32.mrf.mxu0
        %v793 = vpop.f32.mrf.mxu0
        %v794 = vadd.f32 0.0, %v793
        %v795 = vpop.f32.mrf.mxu0
        %796 = vmatprep.mubr.bf16.mxu0 0
        %797 = vmatmul.mubr.bf16.gmra.mxu0 %v600
        %v798 = vpop.f32.mrf.mxu0
        %v799 = vadd.f32 0.0, %v798
        %v800 = vpop.f32.mrf.mxu0
        %v801 = vpop.f32.mrf.mxu0
        %v802 = vadd.f32 0.0, %v801
        %v803 = vpop.f32.mrf.mxu0
        %804 = vmatprep.mubr.bf16.mxu0 0
        %805 = vmatmul.mubr.bf16.gmra.mxu0 %v601
        %v806 = vpop.f32.mrf.mxu0
        %v807 = vadd.f32 0.0, %v806
        %v808 = vpop.f32.mrf.mxu0
        %v809 = vpop.f32.mrf.mxu0
        %v810 = vadd.f32 0.0, %v809
        %v811 = vpop.f32.mrf.mxu0
        %812 = vmatprep.mubr.bf16.mxu0 0
        %813 = vmatmul.mubr.bf16.gmra.mxu0 %v602
        %v814 = vpop.f32.mrf.mxu0
        %v815 = vadd.f32 0.0, %v814
        %v816 = vpop.f32.mrf.mxu0
        %v817 = vpop.f32.mrf.mxu0
        %v818 = vadd.f32 0.0, %v817
        %v819 = vpop.f32.mrf.mxu0
        %820 = vmatprep.mubr.bf16.mxu0 0
        %821 = vmatmul.mubr.bf16.gmra.mxu0 %v603
        %v822 = vpop.f32.mrf.mxu0
        %v823 = vadd.f32 0.0, %v822
        %v824 = vpop.f32.mrf.mxu0
        %v825 = vpop.f32.mrf.mxu0
        %v826 = vadd.f32 0.0, %v825
        %v827 = vpop.f32.mrf.mxu0
        %828 = vdwg.mxu0
        %v831 = vcombine.high %v474, %v474
        %v833 = vunpack.c.l.s4 1966171168
        %v834 = vunpack.c.0.s8 %v833
        %v835 = vlaneseq
        %v836 = vshrl.u32 %v835, 7
        %v837 = vsub.s32 %v834, %v836
        %v838 = vrot.slane %v474, %v837
        %v840 = vunpack.c.l.s4 1966171168
        %v841 = vunpack.c.0.s8 %v840
        %v842 = vlaneseq
        %v843 = vshrl.u32 %v842, 7
        %v844 = vsub.s32 %v841, %v843
        %v845 = vrot.slane %v831, %v844
        %v846 = vcombine.high %v838, %v838
        %v847 = vcombine.high %v845, %v845
        %v849 = vunpack.c.l.s4 1966171168
        %v850 = vunpack.c.0.s8 %v849
        %v851 = vlaneseq
        %v852 = vshrl.u32 %v851, 7
        %v853 = vsub.s32 %v850, %v852
        %v854 = vrot.slane %v838, %v853
        %v856 = vunpack.c.l.s4 1966171168
        %v857 = vunpack.c.0.s8 %v856
        %v858 = vlaneseq
        %v859 = vshrl.u32 %v858, 7
        %v860 = vsub.s32 %v857, %v859
        %v861 = vrot.slane %v845, %v860
        %v863 = vunpack.c.l.s4 1966171168
        %v864 = vunpack.c.0.s8 %v863
        %v865 = vlaneseq
        %v866 = vshrl.u32 %v865, 7
        %v867 = vsub.s32 %v864, %v866
        %v868 = vrot.slane %v846, %v867
        %v870 = vunpack.c.l.s4 1966171168
        %v871 = vunpack.c.0.s8 %v870
        %v872 = vlaneseq
        %v873 = vshrl.u32 %v872, 7
        %v874 = vsub.s32 %v871, %v873
        %v875 = vrot.slane %v847, %v874
        %v876 = vcombine.high %v854, %v854
        %v877 = vcombine.high %v861, %v861
        %v878 = vcombine.high %v868, %v868
        %v879 = vcombine.high %v875, %v875
        %v880 = vcombine.high %v475, %v475
        %v882 = vunpack.c.l.s4 1966171168
        %v883 = vunpack.c.0.s8 %v882
        %v884 = vlaneseq
        %v885 = vshrl.u32 %v884, 7
        %v886 = vsub.s32 %v883, %v885
        %v887 = vrot.slane %v475, %v886
        %v889 = vunpack.c.l.s4 1966171168
        %v890 = vunpack.c.0.s8 %v889
        %v891 = vlaneseq
        %v892 = vshrl.u32 %v891, 7
        %v893 = vsub.s32 %v890, %v892
        %v894 = vrot.slane %v880, %v893
        %v895 = vcombine.high %v887, %v887
        %v896 = vcombine.high %v894, %v894
        %v898 = vunpack.c.l.s4 1966171168
        %v899 = vunpack.c.0.s8 %v898
        %v900 = vlaneseq
        %v901 = vshrl.u32 %v900, 7
        %v902 = vsub.s32 %v899, %v901
        %v903 = vrot.slane %v887, %v902
        %v905 = vunpack.c.l.s4 1966171168
        %v906 = vunpack.c.0.s8 %v905
        %v907 = vlaneseq
        %v908 = vshrl.u32 %v907, 7
        %v909 = vsub.s32 %v906, %v908
        %v910 = vrot.slane %v894, %v909
        %v912 = vunpack.c.l.s4 1966171168
        %v913 = vunpack.c.0.s8 %v912
        %v914 = vlaneseq
        %v915 = vshrl.u32 %v914, 7
        %v916 = vsub.s32 %v913, %v915
        %v917 = vrot.slane %v895, %v916
        %v919 = vunpack.c.l.s4 1966171168
        %v920 = vunpack.c.0.s8 %v919
        %v921 = vlaneseq
        %v922 = vshrl.u32 %v921, 7
        %v923 = vsub.s32 %v920, %v922
        %v924 = vrot.slane %v896, %v923
        %v925 = vcombine.high %v903, %v903
        %v926 = vcombine.high %v910, %v910
        %v927 = vcombine.high %v917, %v917
        %v928 = vcombine.high %v924, %v924
        %v929 = vlaneseq
        %v930 = vshrl.u32 %v929, 7
        %v931 = vsub.s32 0, %v930
        %v932 = vrot.slane %v854, %v931
        %v933 = vlaneseq
        %v934 = vshrl.u32 %v933, 7
        %v935 = vsub.s32 0, %v934
        %v936 = vrot.slane %v868, %v935
        %v937 = vlaneseq
        %v938 = vshrl.u32 %v937, 7
        %v939 = vsub.s32 0, %v938
        %v940 = vrot.slane %v876, %v939
        %v941 = vlaneseq
        %v942 = vshrl.u32 %v941, 7
        %v943 = vsub.s32 0, %v942
        %v944 = vrot.slane %v878, %v943
        %v945 = vlaneseq
        %v946 = vshrl.u32 %v945, 7
        %v947 = vsub.s32 0, %v946
        %v948 = vrot.slane %v861, %v947
        %v949 = vlaneseq
        %v950 = vshrl.u32 %v949, 7
        %v951 = vsub.s32 0, %v950
        %v952 = vrot.slane %v875, %v951
        %v953 = vlaneseq
        %v954 = vshrl.u32 %v953, 7
        %v955 = vsub.s32 0, %v954
        %v956 = vrot.slane %v877, %v955
        %v957 = vlaneseq
        %v958 = vshrl.u32 %v957, 7
        %v959 = vsub.s32 0, %v958
        %v960 = vrot.slane %v879, %v959
        %v961 = vlaneseq
        %v962 = vshrl.u32 %v961, 7
        %v963 = vsub.s32 0, %v962
        %v964 = vrot.slane %v903, %v963
        %v965 = vlaneseq
        %v966 = vshrl.u32 %v965, 7
        %v967 = vsub.s32 0, %v966
        %v968 = vrot.slane %v917, %v967
        %v969 = vlaneseq
        %v970 = vshrl.u32 %v969, 7
        %v971 = vsub.s32 0, %v970
        %v972 = vrot.slane %v925, %v971
        %v973 = vlaneseq
        %v974 = vshrl.u32 %v973, 7
        %v975 = vsub.s32 0, %v974
        %v976 = vrot.slane %v927, %v975
        %v977 = vlaneseq
        %v978 = vshrl.u32 %v977, 7
        %v979 = vsub.s32 0, %v978
        %v980 = vrot.slane %v910, %v979
        %v981 = vlaneseq
        %v982 = vshrl.u32 %v981, 7
        %v983 = vsub.s32 0, %v982
        %v984 = vrot.slane %v924, %v983
        %v985 = vlaneseq
        %v986 = vshrl.u32 %v985, 7
        %v987 = vsub.s32 0, %v986
        %v988 = vrot.slane %v926, %v987
        %v989 = vlaneseq
        %v990 = vshrl.u32 %v989, 7
        %v991 = vsub.s32 0, %v990
        %v992 = vrot.slane %v928, %v991
        %v1009 = vadd.f32 %v703, %v932
        %v1010 = vadd.f32 %v706, %v932
        %v1011 = vadd.f32 %v711, %v936
        %v1012 = vadd.f32 %v714, %v936
        %v1013 = vadd.f32 %v719, %v940
        %v1014 = vadd.f32 %v722, %v940
        %v1015 = vadd.f32 %v727, %v944
        %v1016 = vadd.f32 %v730, %v944
        %v1017 = vadd.f32 %v735, %v948
        %v1018 = vadd.f32 %v738, %v948
        %v1019 = vadd.f32 %v743, %v952
        %v1020 = vadd.f32 %v746, %v952
        %v1021 = vadd.f32 %v751, %v956
        %v1022 = vadd.f32 %v754, %v956
        %v1023 = vadd.f32 %v759, %v960
        %v1024 = vadd.f32 %v762, %v960
        %v1025 = vadd.f32 %v767, %v964
        %v1026 = vadd.f32 %v770, %v964
        %v1027 = vadd.f32 %v775, %v968
        %v1028 = vadd.f32 %v778, %v968
        %v1029 = vadd.f32 %v783, %v972
        %v1030 = vadd.f32 %v786, %v972
        %v1031 = vadd.f32 %v791, %v976
        %v1032 = vadd.f32 %v794, %v976
        %v1033 = vadd.f32 %v799, %v980
        %v1034 = vadd.f32 %v802, %v980
        %v1035 = vadd.f32 %v807, %v984
        %v1036 = vadd.f32 %v810, %v984
        %v1037 = vadd.f32 %v815, %v988
        %v1038 = vadd.f32 %v818, %v988
        %v1039 = vadd.f32 %v823, %v992
        %v1040 = vadd.f32 %v826, %v992
        %v1041 = vadd.f32 %v1009, %v467
        %v1042 = vadd.f32 %v1010, %v468
        %v1043 = vadd.f32 %v1011, %v467
        %v1044 = vadd.f32 %v1012, %v468
        %v1045 = vadd.f32 %v1013, %v467
        %v1046 = vadd.f32 %v1014, %v468
        %v1047 = vadd.f32 %v1015, %v467
        %v1048 = vadd.f32 %v1016, %v468
        %v1049 = vadd.f32 %v1017, %v467
        %v1050 = vadd.f32 %v1018, %v468
        %v1051 = vadd.f32 %v1019, %v467
        %v1052 = vadd.f32 %v1020, %v468
        %v1053 = vadd.f32 %v1021, %v467
        %v1054 = vadd.f32 %v1022, %v468
        %v1055 = vadd.f32 %v1023, %v467
        %v1056 = vadd.f32 %v1024, %v468
        %v1057 = vadd.f32 %v1025, %v467
        %v1058 = vadd.f32 %v1026, %v468
        %v1059 = vadd.f32 %v1027, %v467
        %v1060 = vadd.f32 %v1028, %v468
        %v1061 = vadd.f32 %v1029, %v467
        %v1062 = vadd.f32 %v1030, %v468
        %v1063 = vadd.f32 %v1031, %v467
        %v1064 = vadd.f32 %v1032, %v468
        %v1065 = vadd.f32 %v1033, %v467
        %v1066 = vadd.f32 %v1034, %v468
        %v1067 = vadd.f32 %v1035, %v467
        %v1068 = vadd.f32 %v1036, %v468
        %v1069 = vadd.f32 %v1037, %v467
        %v1070 = vadd.f32 %v1038, %v468
        %v1071 = vadd.f32 %v1039, %v467
        %v1072 = vadd.f32 %v1040, %v468
        %v1073 = vunpack.c.l.bf16 %v476
        %v1074 = vunpack.c.l.bf16 %v477
        %v1075 = vunpack.c.l.bf16 %v478
        %v1076 = vunpack.c.l.bf16 %v479
        %v1077 = vunpack.c.l.bf16 %v480
        %v1078 = vunpack.c.l.bf16 %v481
        %v1079 = vunpack.c.l.bf16 %v482
        %v1080 = vunpack.c.l.bf16 %v483
        %v1081 = vunpack.c.l.bf16 %v484
        %v1082 = vunpack.c.l.bf16 %v485
        %v1083 = vunpack.c.l.bf16 %v486
        %v1084 = vunpack.c.l.bf16 %v487
        %v1085 = vunpack.c.l.bf16 %v488
        %v1086 = vunpack.c.l.bf16 %v489
        %v1087 = vunpack.c.l.bf16 %v490
        %v1088 = vunpack.c.l.bf16 %v491
        %v1089 = vunpack.c.l.bf16 %v492
        %v1090 = vunpack.c.l.bf16 %v493
        %v1091 = vunpack.c.l.bf16 %v494
        %v1092 = vunpack.c.l.bf16 %v495
        %v1093 = vunpack.c.l.bf16 %v496
        %v1094 = vunpack.c.l.bf16 %v497
        %v1095 = vunpack.c.l.bf16 %v498
        %v1096 = vunpack.c.l.bf16 %v499
        %v1097 = vunpack.c.l.bf16 %v500
        %v1098 = vunpack.c.l.bf16 %v501
        %v1099 = vunpack.c.l.bf16 %v502
        %v1100 = vunpack.c.l.bf16 %v503
        %v1101 = vunpack.c.l.bf16 %v504
        %v1102 = vunpack.c.l.bf16 %v505
        %v1103 = vunpack.c.l.bf16 %v506
        %v1104 = vunpack.c.l.bf16 %v507
        %v1105 = vld [vmem:[%s4] sm:$0x1]
        %v1106 = vlaneseq
        %v1107 = vshrl.u32 %v1106, 7
        %v1108 = vsub.s32 0, %v1107
        %v1109 = vrot.slane %v1105, %v1108
        %v1110 = vmul.f32 %v1041, %v1109
        %v1111 = vmul.f32 %v1042, %v1109
        %v1112 = vmul.f32 %v1043, %v1109
        %v1113 = vmul.f32 %v1044, %v1109
        %v1114 = vmul.f32 %v1045, %v1109
        %v1115 = vmul.f32 %v1046, %v1109
        %v1116 = vmul.f32 %v1047, %v1109
        %v1117 = vmul.f32 %v1048, %v1109
        %v1118 = vmul.f32 %v1049, %v1109
        %v1119 = vmul.f32 %v1050, %v1109
        %v1120 = vmul.f32 %v1051, %v1109
        %v1121 = vmul.f32 %v1052, %v1109
        %v1122 = vmul.f32 %v1053, %v1109
        %v1123 = vmul.f32 %v1054, %v1109
        %v1124 = vmul.f32 %v1055, %v1109
        %v1125 = vmul.f32 %v1056, %v1109
        %v1126 = vmul.f32 %v1057, %v1109
        %v1127 = vmul.f32 %v1058, %v1109
        %v1128 = vmul.f32 %v1059, %v1109
        %v1129 = vmul.f32 %v1060, %v1109
        %v1130 = vmul.f32 %v1061, %v1109
        %v1131 = vmul.f32 %v1062, %v1109
        %v1132 = vmul.f32 %v1063, %v1109
        %v1133 = vmul.f32 %v1064, %v1109
        %v1134 = vmul.f32 %v1065, %v1109
        %v1135 = vmul.f32 %v1066, %v1109
        %v1136 = vmul.f32 %v1067, %v1109
        %v1137 = vmul.f32 %v1068, %v1109
        %v1138 = vmul.f32 %v1069, %v1109
        %v1139 = vmul.f32 %v1070, %v1109
        %v1140 = vmul.f32 %v1071, %v1109
        %v1141 = vmul.f32 %v1072, %v1109
        %v1142 = vld [vmem:[%s4 + $0x1] sm:$0x1]
        %v1143 = vlaneseq
        %v1144 = vshrl.u32 %v1143, 7
        %v1145 = vsub.s32 0, %v1144
        %v1146 = vrot.slane %v1142, %v1145
        %v1147 = vadd.f32 %v1110, %v1146
        %v1148 = vadd.f32 %v1111, %v1146
        %v1149 = vadd.f32 %v1112, %v1146
        %v1150 = vadd.f32 %v1113, %v1146
        %v1151 = vadd.f32 %v1114, %v1146
        %v1152 = vadd.f32 %v1115, %v1146
        %v1153 = vadd.f32 %v1116, %v1146
        %v1154 = vadd.f32 %v1117, %v1146
        %v1155 = vadd.f32 %v1118, %v1146
        %v1156 = vadd.f32 %v1119, %v1146
        %v1157 = vadd.f32 %v1120, %v1146
        %v1158 = vadd.f32 %v1121, %v1146
        %v1159 = vadd.f32 %v1122, %v1146
        %v1160 = vadd.f32 %v1123, %v1146
        %v1161 = vadd.f32 %v1124, %v1146
        %v1162 = vadd.f32 %v1125, %v1146
        %v1163 = vadd.f32 %v1126, %v1146
        %v1164 = vadd.f32 %v1127, %v1146
        %v1165 = vadd.f32 %v1128, %v1146
        %v1166 = vadd.f32 %v1129, %v1146
        %v1167 = vadd.f32 %v1130, %v1146
        %v1168 = vadd.f32 %v1131, %v1146
        %v1169 = vadd.f32 %v1132, %v1146
        %v1170 = vadd.f32 %v1133, %v1146
        %v1171 = vadd.f32 %v1134, %v1146
        %v1172 = vadd.f32 %v1135, %v1146
        %v1173 = vadd.f32 %v1136, %v1146
        %v1174 = vadd.f32 %v1137, %v1146
        %v1175 = vadd.f32 %v1138, %v1146
        %v1176 = vadd.f32 %v1139, %v1146
        %v1177 = vadd.f32 %v1140, %v1146
        %v1178 = vadd.f32 %v1141, %v1146
        %v1179 = vmax.f32 %v1147, 0.0
        %v1180 = vmax.f32 %v1148, 0.0
        %v1181 = vmax.f32 %v1149, 0.0
        %v1182 = vmax.f32 %v1150, 0.0
        %v1183 = vmax.f32 %v1151, 0.0
        %v1184 = vmax.f32 %v1152, 0.0
        %v1185 = vmax.f32 %v1153, 0.0
        %v1186 = vmax.f32 %v1154, 0.0
        %v1187 = vmax.f32 %v1155, 0.0
        %v1188 = vmax.f32 %v1156, 0.0
        %v1189 = vmax.f32 %v1157, 0.0
        %v1190 = vmax.f32 %v1158, 0.0
        %v1191 = vmax.f32 %v1159, 0.0
        %v1192 = vmax.f32 %v1160, 0.0
        %v1193 = vmax.f32 %v1161, 0.0
        %v1194 = vmax.f32 %v1162, 0.0
        %v1195 = vmax.f32 %v1163, 0.0
        %v1196 = vmax.f32 %v1164, 0.0
        %v1197 = vmax.f32 %v1165, 0.0
        %v1198 = vmax.f32 %v1166, 0.0
        %v1199 = vmax.f32 %v1167, 0.0
        %v1200 = vmax.f32 %v1168, 0.0
        %v1201 = vmax.f32 %v1169, 0.0
        %v1202 = vmax.f32 %v1170, 0.0
        %v1203 = vmax.f32 %v1171, 0.0
        %v1204 = vmax.f32 %v1172, 0.0
        %v1205 = vmax.f32 %v1173, 0.0
        %v1206 = vmax.f32 %v1174, 0.0
        %v1207 = vmax.f32 %v1175, 0.0
        %v1208 = vmax.f32 %v1176, 0.0
        %v1209 = vmax.f32 %v1177, 0.0
        %v1210 = vmax.f32 %v1178, 0.0
        %v1211 = vadd.f32 %v1073, %v1179
        %v1212 = vadd.f32 %v1074, %v1180
        %v1213 = vadd.f32 %v1075, %v1181
        %v1214 = vadd.f32 %v1076, %v1182
        %v1215 = vadd.f32 %v1077, %v1183
        %v1216 = vadd.f32 %v1078, %v1184
        %v1217 = vadd.f32 %v1079, %v1185
        %v1218 = vadd.f32 %v1080, %v1186
        %v1219 = vadd.f32 %v1081, %v1187
        %v1220 = vadd.f32 %v1082, %v1188
        %v1221 = vadd.f32 %v1083, %v1189
        %v1222 = vadd.f32 %v1084, %v1190
        %v1223 = vadd.f32 %v1085, %v1191
        %v1224 = vadd.f32 %v1086, %v1192
        %v1225 = vadd.f32 %v1087, %v1193
        %v1226 = vadd.f32 %v1088, %v1194
        %v1227 = vadd.f32 %v1089, %v1195
        %v1228 = vadd.f32 %v1090, %v1196
        %v1229 = vadd.f32 %v1091, %v1197
        %v1230 = vadd.f32 %v1092, %v1198
        %v1231 = vadd.f32 %v1093, %v1199
        %v1232 = vadd.f32 %v1094, %v1200
        %v1233 = vadd.f32 %v1095, %v1201
        %v1234 = vadd.f32 %v1096, %v1202
        %v1235 = vadd.f32 %v1097, %v1203
        %v1236 = vadd.f32 %v1098, %v1204
        %v1237 = vadd.f32 %v1099, %v1205
        %v1238 = vadd.f32 %v1100, %v1206
        %v1239 = vadd.f32 %v1101, %v1207
        %v1240 = vadd.f32 %v1102, %v1208
        %v1241 = vadd.f32 %v1103, %v1209
        %v1242 = vadd.f32 %v1104, %v1210
        %v1243 = vld [vmem:[%s421] sm:$0xff]
        %v1244 = vld [vmem:[%s421 + $0x8] sm:$0xff]
        %v1245 = vld [vmem:[%s442] sm:$0xff]
        %v1246 = vld [vmem:[%s442 + $0x8] sm:$0xff]
        %v1247 = vld [vmem:[%s4 + $0x2] sm:$0x1]
        %v1248 = vlaneseq
        %v1249 = vshrl.u32 %v1248, 7
        %v1250 = vsub.s32 0, %v1249
        %v1251 = vrot.slane %v1247, %v1250
        %v1252 = vmul.f32 %v1245, %v1251
        %v1253 = vmul.f32 %v1246, %v1251
        %v1254 = vld [vmem:[%s4 + $0x3] sm:$0x1]
        %v1255 = vlaneseq
        %v1256 = vshrl.u32 %v1255, 7
        %v1257 = vsub.s32 0, %v1256
        %v1258 = vrot.slane %v1254, %v1257
        %v1259 = vadd.f32 %v1252, %v1258
        %v1260 = vadd.f32 %v1253, %v1258
        %v1261 = vmax.f32 %v1259, 0.0
        %v1262 = vmax.f32 %v1260, 0.0
        %v1263 = vadd.f32 %v1243, %v1261
        %v1264 = vadd.f32 %v1244, %v1262
        %v1265 = vlaneseq
        %v1266 = vshrl.u32 %v1265, 7
        %v1267 = vadd.s32 %v1266, 8
        %vm1268 = vcmp.lt.s32.totalorder %v1266, 12
        %vm1269 = vcmp.lt.s32.totalorder %v1267, 12
        %v1270 = vstv %s466
        %v1271 = vadd.s32 %v1270, 1
        %v1272 = vadd.s32 %v1270, 2
        %v1273 = vadd.s32 %v1270, 3
        %v1274 = vadd.s32 %v1270, 4
        %v1275 = vadd.s32 %v1270, 5
        %v1276 = vadd.s32 %v1270, 6
        %v1277 = vadd.s32 %v1270, 7
        %v1278 = vadd.s32 %v1270, 8
        %v1279 = vadd.s32 %v1270, 9
        %v1280 = vadd.s32 %v1270, 10
        %v1281 = vadd.s32 %v1270, 11
        %v1282 = vadd.s32 %v1270, 12
        %v1283 = vadd.s32 %v1270, 13
        %v1284 = vadd.s32 %v1270, 14
        %v1285 = vadd.s32 %v1270, 15
        %vm1286 = vcmp.lt.s32.totalorder %v1270, 12
        %vm1287 = vcmp.lt.s32.totalorder %v1271, 12
        %vm1288 = vcmp.lt.s32.totalorder %v1272, 12
        %vm1289 = vcmp.lt.s32.totalorder %v1273, 12
        %vm1290 = vcmp.lt.s32.totalorder %v1274, 12
        %vm1291 = vcmp.lt.s32.totalorder %v1275, 12
        %vm1292 = vcmp.lt.s32.totalorder %v1276, 12
        %vm1293 = vcmp.lt.s32.totalorder %v1277, 12
        %vm1294 = vcmp.lt.s32.totalorder %v1278, 12
        %vm1295 = vcmp.lt.s32.totalorder %v1279, 12
        %vm1296 = vcmp.lt.s32.totalorder %v1280, 12
        %vm1297 = vcmp.lt.s32.totalorder %v1281, 12
        %vm1298 = vcmp.lt.s32.totalorder %v1282, 12
        %vm1299 = vcmp.lt.s32.totalorder %v1283, 12
        %vm1300 = vcmp.lt.s32.totalorder %v1284, 12
        %vm1301 = vcmp.lt.s32.totalorder %v1285, 12
        %v1302 = vsel %vm1286, 1, 0
        %v1303 = vsel %vm1287, 1, 0
        %v1304 = vsel %vm1288, 1, 0
        %v1305 = vsel %vm1289, 1, 0
        %v1306 = vsel %vm1290, 1, 0
        %v1307 = vsel %vm1291, 1, 0
        %v1308 = vsel %vm1292, 1, 0
        %v1309 = vsel %vm1293, 1, 0
        %v1310 = vsel %vm1294, 1, 0
        %v1311 = vsel %vm1295, 1, 0
        %v1312 = vsel %vm1296, 1, 0
        %v1313 = vsel %vm1297, 1, 0
        %v1314 = vsel %vm1298, 1, 0
        %v1315 = vsel %vm1299, 1, 0
        %v1316 = vsel %vm1300, 1, 0
        %v1317 = vsel %vm1301, 1, 0
        %vm1318 = vcmp.eq.s32.totalorder %v1302, 1
        %vm1319 = vcmp.eq.s32.totalorder %v1303, 1
        %vm1320 = vcmp.eq.s32.totalorder %v1304, 1
        %vm1321 = vcmp.eq.s32.totalorder %v1305, 1
        %vm1322 = vcmp.eq.s32.totalorder %v1306, 1
        %vm1323 = vcmp.eq.s32.totalorder %v1307, 1
        %vm1324 = vcmp.eq.s32.totalorder %v1308, 1
        %vm1325 = vcmp.eq.s32.totalorder %v1309, 1
        %vm1326 = vcmp.eq.s32.totalorder %v1310, 1
        %vm1327 = vcmp.eq.s32.totalorder %v1311, 1
        %vm1328 = vcmp.eq.s32.totalorder %v1312, 1
        %vm1329 = vcmp.eq.s32.totalorder %v1313, 1
        %vm1330 = vcmp.eq.s32.totalorder %v1314, 1
        %vm1331 = vcmp.eq.s32.totalorder %v1315, 1
        %vm1332 = vcmp.eq.s32.totalorder %v1316, 1
        %vm1333 = vcmp.eq.s32.totalorder %v1317, 1
        %v1334 = vsel %vm1268, 1, 0
        %v1335 = vsel %vm1269, 1, 0
        %vm1336 = vcmp.eq.s32.totalorder %v1334, 1
        %vm1337 = vcmp.eq.s32.totalorder %v1335, 1
        %vm1338 = vmand %vm1318, %vm1336
        %vm1339 = vmand %vm1318, %vm1337
        %vm1340 = vmand %vm1319, %vm1336
        %vm1341 = vmand %vm1319, %vm1337
        %vm1342 = vmand %vm1320, %vm1336
        %vm1343 = vmand %vm1320, %vm1337
        %vm1344 = vmand %vm1321, %vm1336
        %vm1345 = vmand %vm1321, %vm1337
        %vm1346 = vmand %vm1322, %vm1336
        %vm1347 = vmand %vm1322, %vm1337
        %vm1348 = vmand %vm1323, %vm1336
        %vm1349 = vmand %vm1323, %vm1337
        %vm1350 = vmand %vm1324, %vm1336
        %vm1351 = vmand %vm1324, %vm1337
        %vm1352 = vmand %vm1325, %vm1336
        %vm1353 = vmand %vm1325, %vm1337
        %vm1354 = vmand %vm1326, %vm1336
        %vm1355 = vmand %vm1326, %vm1337
        %vm1356 = vmand %vm1327, %vm1336
        %vm1357 = vmand %vm1327, %vm1337
        %vm1358 = vmand %vm1328, %vm1336
        %vm1359 = vmand %vm1328, %vm1337
        %vm1360 = vmand %vm1329, %vm1336
        %vm1361 = vmand %vm1329, %vm1337
        %vm1362 = vmand %vm1330, %vm1336
        %vm1363 = vmand %vm1330, %vm1337
        %vm1364 = vmand %vm1331, %vm1336
        %vm1365 = vmand %vm1331, %vm1337
        %vm1366 = vmand %vm1332, %vm1336
        %vm1367 = vmand %vm1332, %vm1337
        %vm1368 = vmand %vm1333, %vm1336
        %vm1369 = vmand %vm1333, %vm1337
        %v1370 = vsel %vm1338, 1, 0
        %v1371 = vsel %vm1339, 1, 0
        %v1372 = vsel %vm1340, 1, 0
        %v1373 = vsel %vm1341, 1, 0
        %v1374 = vsel %vm1342, 1, 0
        %v1375 = vsel %vm1343, 1, 0
        %v1376 = vsel %vm1344, 1, 0
        %v1377 = vsel %vm1345, 1, 0
        %v1378 = vsel %vm1346, 1, 0
        %v1379 = vsel %vm1347, 1, 0
        %v1380 = vsel %vm1348, 1, 0
        %v1381 = vsel %vm1349, 1, 0
        %v1382 = vsel %vm1350, 1, 0
        %v1383 = vsel %vm1351, 1, 0
        %v1384 = vsel %vm1352, 1, 0
        %v1385 = vsel %vm1353, 1, 0
        %v1386 = vsel %vm1354, 1, 0
        %v1387 = vsel %vm1355, 1, 0
        %v1388 = vsel %vm1356, 1, 0
        %v1389 = vsel %vm1357, 1, 0
        %v1390 = vsel %vm1358, 1, 0
        %v1391 = vsel %vm1359, 1, 0
        %v1392 = vsel %vm1360, 1, 0
        %v1393 = vsel %vm1361, 1, 0
        %v1394 = vsel %vm1362, 1, 0
        %v1395 = vsel %vm1363, 1, 0
        %v1396 = vsel %vm1364, 1, 0
        %v1397 = vsel %vm1365, 1, 0
        %v1398 = vsel %vm1366, 1, 0
        %v1399 = vsel %vm1367, 1, 0
        %v1400 = vsel %vm1368, 1, 0
        %v1401 = vsel %vm1369, 1, 0
        %vm1402 = vcmp.eq.s32.totalorder %v1370, 1
        %vm1403 = vcmp.eq.s32.totalorder %v1371, 1
        %vm1404 = vcmp.eq.s32.totalorder %v1372, 1
        %vm1405 = vcmp.eq.s32.totalorder %v1373, 1
        %vm1406 = vcmp.eq.s32.totalorder %v1374, 1
        %vm1407 = vcmp.eq.s32.totalorder %v1375, 1
        %vm1408 = vcmp.eq.s32.totalorder %v1376, 1
        %vm1409 = vcmp.eq.s32.totalorder %v1377, 1
        %vm1410 = vcmp.eq.s32.totalorder %v1378, 1
        %vm1411 = vcmp.eq.s32.totalorder %v1379, 1
        %vm1412 = vcmp.eq.s32.totalorder %v1380, 1
        %vm1413 = vcmp.eq.s32.totalorder %v1381, 1
        %vm1414 = vcmp.eq.s32.totalorder %v1382, 1
        %vm1415 = vcmp.eq.s32.totalorder %v1383, 1
        %vm1416 = vcmp.eq.s32.totalorder %v1384, 1
        %vm1417 = vcmp.eq.s32.totalorder %v1385, 1
        %vm1418 = vcmp.eq.s32.totalorder %v1386, 1
        %vm1419 = vcmp.eq.s32.totalorder %v1387, 1
        %vm1420 = vcmp.eq.s32.totalorder %v1388, 1
        %vm1421 = vcmp.eq.s32.totalorder %v1389, 1
        %vm1422 = vcmp.eq.s32.totalorder %v1390, 1
        %vm1423 = vcmp.eq.s32.totalorder %v1391, 1
        %vm1424 = vcmp.eq.s32.totalorder %v1392, 1
        %vm1425 = vcmp.eq.s32.totalorder %v1393, 1
        %vm1426 = vcmp.eq.s32.totalorder %v1394, 1
        %vm1427 = vcmp.eq.s32.totalorder %v1395, 1
        %vm1428 = vcmp.eq.s32.totalorder %v1396, 1
        %vm1429 = vcmp.eq.s32.totalorder %v1397, 1
        %vm1430 = vcmp.eq.s32.totalorder %v1398, 1
        %vm1431 = vcmp.eq.s32.totalorder %v1399, 1
        %vm1432 = vcmp.eq.s32.totalorder %v1400, 1
        %vm1433 = vcmp.eq.s32.totalorder %v1401, 1
        %v1434 = vsel %vm1402, %v1211, 0.0
        %v1435 = vsel %vm1403, %v1212, 0.0
        %v1436 = vsel %vm1404, %v1213, 0.0
        %v1437 = vsel %vm1405, %v1214, 0.0
        %v1438 = vsel %vm1406, %v1215, 0.0
        %v1439 = vsel %vm1407, %v1216, 0.0
        %v1440 = vsel %vm1408, %v1217, 0.0
        %v1441 = vsel %vm1409, %v1218, 0.0
        %v1442 = vsel %vm1410, %v1219, 0.0
        %v1443 = vsel %vm1411, %v1220, 0.0
        %v1444 = vsel %vm1412, %v1221, 0.0
        %v1445 = vsel %vm1413, %v1222, 0.0
        %v1446 = vsel %vm1414, %v1223, 0.0
        %v1447 = vsel %vm1415, %v1224, 0.0
        %v1448 = vsel %vm1416, %v1225, 0.0
        %v1449 = vsel %vm1417, %v1226, 0.0
        %v1450 = vsel %vm1418, %v1227, 0.0
        %v1451 = vsel %vm1419, %v1228, 0.0
        %v1452 = vsel %vm1420, %v1229, 0.0
        %v1453 = vsel %vm1421, %v1230, 0.0
        %v1454 = vsel %vm1422, %v1231, 0.0
        %v1455 = vsel %vm1423, %v1232, 0.0
        %v1456 = vsel %vm1424, %v1233, 0.0
        %v1457 = vsel %vm1425, %v1234, 0.0
        %v1458 = vsel %vm1426, %v1235, 0.0
        %v1459 = vsel %vm1427, %v1236, 0.0
        %v1460 = vsel %vm1428, %v1237, 0.0
        %v1461 = vsel %vm1429, %v1238, 0.0
        %v1462 = vsel %vm1430, %v1239, 0.0
        %v1463 = vsel %vm1431, %v1240, 0.0
        %v1464 = vsel %vm1432, %v1241, 0.0
        %v1465 = vsel %vm1433, %v1242, 0.0
        %v1466 = vadd.s32 %v1266, %v1270
        %v1467 = vadd.s32 %v1267, %v1270
        %vm1468 = vcmp.lt.s32.totalorder %v1466, 12
        %vm1469 = vcmp.lt.s32.totalorder %v1467, 12
        %v1470 = vsel %vm1468, 1, 0
        %v1471 = vsel %vm1469, 1, 0
        %vm1472 = vcmp.eq.s32.totalorder %v1470, 1
        %vm1473 = vcmp.eq.s32.totalorder %v1471, 1
        %v1474 = vsel %vm1472, %v1263, 0.0
        %v1475 = vsel %vm1473, %v1264, 0.0
        %v1476 = vpack.c.bf16 %v1435, %v1434
        %v1477 = vpack.c.bf16 %v1437, %v1436
        %v1478 = vpack.c.bf16 %v1439, %v1438
        %v1479 = vpack.c.bf16 %v1441, %v1440
        %v1480 = vpack.c.bf16 %v1443, %v1442
        %v1481 = vpack.c.bf16 %v1445, %v1444
        %v1482 = vpack.c.bf16 %v1447, %v1446
        %v1483 = vpack.c.bf16 %v1449, %v1448
        %v1484 = vpack.c.bf16 %v1451, %v1450
        %v1485 = vpack.c.bf16 %v1453, %v1452
        %v1486 = vpack.c.bf16 %v1455, %v1454
        %v1487 = vpack.c.bf16 %v1457, %v1456
        %v1488 = vpack.c.bf16 %v1459, %v1458
        %v1489 = vpack.c.bf16 %v1461, %v1460
        %v1490 = vpack.c.bf16 %v1463, %v1462
        %v1491 = vpack.c.bf16 %v1465, %v1464
        %v1508 = vunpack.c.l.b16 %v1476
        %v1509 = vunpack.c.h.b16 %v1476
        %v1510 = vunpack.c.l.b16 %v1477
        %v1511 = vunpack.c.h.b16 %v1477
        %v1512 = vunpack.c.l.b16 %v1478
        %v1513 = vunpack.c.h.b16 %v1478
        %v1514 = vunpack.c.l.b16 %v1479
        %v1515 = vunpack.c.h.b16 %v1479
        %v1516 = vunpack.c.l.b16 %v1480
        %v1517 = vunpack.c.h.b16 %v1480
        %v1518 = vunpack.c.l.b16 %v1481
        %v1519 = vunpack.c.h.b16 %v1481
        %v1520 = vunpack.c.l.b16 %v1482
        %v1521 = vunpack.c.h.b16 %v1482
        %v1522 = vunpack.c.l.b16 %v1483
        %v1523 = vunpack.c.h.b16 %v1483
        %v1524 = vunpack.c.l.b16 %v1484
        %v1525 = vunpack.c.h.b16 %v1484
        %v1526 = vunpack.c.l.b16 %v1485
        %v1527 = vunpack.c.h.b16 %v1485
        %v1528 = vunpack.c.l.b16 %v1486
        %v1529 = vunpack.c.h.b16 %v1486
        %v1530 = vunpack.c.l.b16 %v1487
        %v1531 = vunpack.c.h.b16 %v1487
        %v1532 = vunpack.c.l.b16 %v1488
        %v1533 = vunpack.c.h.b16 %v1488
        %v1534 = vunpack.c.l.b16 %v1489
        %v1535 = vunpack.c.h.b16 %v1489
        %v1536 = vunpack.c.l.b16 %v1490
        %v1537 = vunpack.c.h.b16 %v1490
        %v1538 = vunpack.c.l.b16 %v1491
        %v1539 = vunpack.c.h.b16 %v1491
        %v1540 = vpack.c.b16 %v1508, %v1508
        %v1541 = vpack.c.b16 %v1509, %v1509
        %v1542 = vpack.c.b16 %v1510, %v1510
        %v1543 = vpack.c.b16 %v1511, %v1511
        %v1544 = vpack.c.b16 %v1512, %v1512
        %v1545 = vpack.c.b16 %v1513, %v1513
        %v1546 = vpack.c.b16 %v1514, %v1514
        %v1547 = vpack.c.b16 %v1515, %v1515
        %v1548 = vpack.c.b16 %v1516, %v1516
        %v1549 = vpack.c.b16 %v1517, %v1517
        %v1550 = vpack.c.b16 %v1518, %v1518
        %v1551 = vpack.c.b16 %v1519, %v1519
        %v1552 = vpack.c.b16 %v1520, %v1520
        %v1553 = vpack.c.b16 %v1521, %v1521
        %v1554 = vpack.c.b16 %v1522, %v1522
        %v1555 = vpack.c.b16 %v1523, %v1523
        %v1556 = vpack.c.b16 %v1524, %v1524
        %v1557 = vpack.c.b16 %v1525, %v1525
        %v1558 = vpack.c.b16 %v1526, %v1526
        %v1559 = vpack.c.b16 %v1527, %v1527
        %v1560 = vpack.c.b16 %v1528, %v1528
        %v1561 = vpack.c.b16 %v1529, %v1529
        %v1562 = vpack.c.b16 %v1530, %v1530
        %v1563 = vpack.c.b16 %v1531, %v1531
        %v1564 = vpack.c.b16 %v1532, %v1532
        %v1565 = vpack.c.b16 %v1533, %v1533
        %v1566 = vpack.c.b16 %v1534, %v1534
        %v1567 = vpack.c.b16 %v1535, %v1535
        %v1568 = vpack.c.b16 %v1536, %v1536
        %v1569 = vpack.c.b16 %v1537, %v1537
        %v1570 = vpack.c.b16 %v1538, %v1538
        %v1571 = vpack.c.b16 %v1539, %v1539
        %1604 = vst [vmem:[%s463] sm:$0xf] %v1540
        %1605 = vst [vmem:[%s463 + $0x4] sm:$0xf] %v1541
        %1606 = vst [vmem:[%s463 + $0x8] sm:$0xf] %v1542
        %1607 = vst [vmem:[%s463 + $0xc] sm:$0xf] %v1543
        %1608 = vst [vmem:[%s463 + $0x10] sm:$0xf] %v1544
        %1609 = vst [vmem:[%s463 + $0x14] sm:$0xf] %v1545
        %1610 = vst [vmem:[%s463 + $0x18] sm:$0xf] %v1546
        %1611 = vst [vmem:[%s463 + $0x1c] sm:$0xf] %v1547
        %1612 = vst [vmem:[%s463 + $0x20] sm:$0xf] %v1548
        %1613 = vst [vmem:[%s463 + $0x24] sm:$0xf] %v1549
        %1614 = vst [vmem:[%s463 + $0x28] sm:$0xf] %v1550
        %1615 = vst [vmem:[%s463 + $0x2c] sm:$0xf] %v1551
        %1616 = vst [vmem:[%s463 + $0x30] sm:$0xf] %v1552
        %1617 = vst [vmem:[%s463 + $0x34] sm:$0xf] %v1553
        %1618 = vst [vmem:[%s463 + $0x38] sm:$0xf] %v1554
        %1619 = vst [vmem:[%s463 + $0x3c] sm:$0xf] %v1555
        %1620 = vst [vmem:[%s463 + $0x40] sm:$0xf] %v1556
        %1621 = vst [vmem:[%s463 + $0x44] sm:$0xf] %v1557
        %1622 = vst [vmem:[%s463 + $0x48] sm:$0xf] %v1558
        %1623 = vst [vmem:[%s463 + $0x4c] sm:$0xf] %v1559
        %1624 = vst [vmem:[%s463 + $0x50] sm:$0xf] %v1560
        %1625 = vst [vmem:[%s463 + $0x54] sm:$0xf] %v1561
        %1626 = vst [vmem:[%s463 + $0x58] sm:$0xf] %v1562
        %1627 = vst [vmem:[%s463 + $0x5c] sm:$0xf] %v1563
        %1628 = vst [vmem:[%s463 + $0x60] sm:$0xf] %v1564
        %1629 = vst [vmem:[%s463 + $0x64] sm:$0xf] %v1565
        %1630 = vst [vmem:[%s463 + $0x68] sm:$0xf] %v1566
        %1631 = vst [vmem:[%s463 + $0x6c] sm:$0xf] %v1567
        %1632 = vst [vmem:[%s463 + $0x70] sm:$0xf] %v1568
        %1633 = vst [vmem:[%s463 + $0x74] sm:$0xf] %v1569
        %1634 = vst [vmem:[%s463 + $0x78] sm:$0xf] %v1570
        %1635 = vst [vmem:[%s463 + $0x7c] sm:$0xf] %v1571
        %1636 = vst [vmem:[%s452] sm:$0xff] %v1474
        %1637 = vst [vmem:[%s452 + $0x8] sm:$0xff] %v1475
        %s1638 = smul.u32 2, %s24
        %p1639 = scmp.lt.s32.totalorder %s23, 1
        %s1640 = scalar_select %p1639, %s23, 1
        %p1641 = scmp.lt.s32.totalorder %s1638, 1
        %s1642 = scalar_select %p1641, %s1638, 1
        %s1643 = smul.addr %s1640, 2
        %s1644 = sadd.s32 %s1642, %s1643
        %s1645 = smul.addr %s1644, 8
        %s1646 = scalar_lea.vmem %s6, %s1645
        %s1647 = smul.u32 16, %s24
        %p1648 = scmp.lt.s32.totalorder %s23, 1
        %s1649 = scalar_select %p1648, %s23, 1
        %p1650 = scmp.lt.s32.totalorder %s1647, 15
        %s1651 = scalar_select %p1650, %s1647, 15
        %s1652 = smul.addr %s1651, 2
        %s1653 = smul.addr %s1649, 32
        %s1654 = sadd.s32 %s1652, %s1653
        %s1655 = smul.addr %s1654, 4
        %s1656 = scalar_lea.vmem %s7, %s1655
        // Predicated region
        $region68: #{_lambda_.7} parent=62 // pred_check
          %p1657 = pneg %p203
        $region69: #{_lambda_.7} parent=62 // pred_check_branch
          %1659 = sbr.rel (%p1657) target = $region71
        $region70: #{_lambda_.7} parent=62 // pred_region
          %s1660 = smul.u32 2, %s24
        $region71: #{_lambda_.7} parent=62 // pred_fallthru
          _
        // Predicated region
        $region72: #{_lambda_.7} parent=62 // pred_check
          %p1661 = pneg %p231
        $region73: #{_lambda_.7} parent=62 // pred_check_branch
          %1663 = sbr.rel (%p1661) target = $region75
        $region74: #{_lambda_.7} parent=62 // pred_region
          %s1664 = smul.u32 16, %s24
        $region75: #{_lambda_.7} parent=62 // pred_fallthru
          _
      $region63: #{_lambda_.7} parent=5 // pred_fallthru
        _
      %p1665 = scmp.le.s32.totalorder 2, %s14
      // Predicated region
      $region76: #{_lambda_.7} parent=5 // pred_check
        %p1666 = pneg %p1665
      $region77: #{_lambda_.7} parent=5 // pred_check_branch
        %1668 = sbr.rel (%p1666) target = $region79
      $region78: #{_lambda_.7} parent=5 // pred_region
        %s1669 = ssub.s32 %s14, 2
        // Predicated region
        $region80: #{_lambda_.7} parent=78 // pred_check
          %p1670 = pneg %p209
        $region81: #{_lambda_.7} parent=78 // pred_check_branch
          %1672 = sbr.rel (%p1670) target = $region83
        $region82: #{_lambda_.7} parent=78 // pred_region
          %s1673 = smul.u32 2, %s26
          %p1674 = scmp.lt.s32.totalorder %s25, 1
          %s1675 = scalar_select %p1674, %s25, 1
          %p1676 = scmp.lt.s32.totalorder %s1673, 1
          %s1677 = scalar_select %p1676, %s1673, 1
          %s1678 = smul.addr %s1675, 2
          %s1679 = sadd.s32 %s1677, %s1678
          %s1680 = smul.addr %s1679, 8
          %s1681 = scalar_lea.vmem %s6, %s1680
        $region83: #{_lambda_.7} parent=78 // pred_fallthru
          _
        // Predicated region
        $region84: #{_lambda_.7} parent=78 // pred_check
          %p1682 = pneg %p237
        $region85: #{_lambda_.7} parent=78 // pred_check_branch
          %1684 = sbr.rel (%p1682) target = $region87
        $region86: #{_lambda_.7} parent=78 // pred_region
          %s1685 = smul.u32 16, %s26
          %p1686 = scmp.lt.s32.totalorder %s25, 1
          %s1687 = scalar_select %p1686, %s25, 1
          %p1688 = scmp.lt.s32.totalorder %s1685, 15
          %s1689 = scalar_select %p1688, %s1685, 15
          %s1690 = smul.addr %s1689, 2
          %s1691 = smul.addr %s1687, 32
          %s1692 = sadd.s32 %s1690, %s1691
          %s1693 = smul.addr %s1692, 4
          %s1694 = scalar_lea.vmem %s7, %s1693
        $region87: #{_lambda_.7} parent=78 // pred_fallthru
          _
      $region79: #{_lambda_.7} parent=5 // pred_fallthru
        _
    $region6: #{_lambda_.7} parent=1 // loop_footer
      %s18 = sadd.s32 1, %s14
    $region7: #{_lambda_.7} parent=1 // loop_footer_branch
      %13 = sbr.rel target = $region3
    $region8: #{_lambda_.7} parent=1 // loop_exit
      _

// kernel: _lambda_.6
$region0: #{_lambda_.6}
  #allocation0 [shape = 'u32[]', space=smem, size = 0x4, offset = 0x4, fixed_abs, tag = 'smem constant byte address 0x4 - core index']
  #allocation1 [shape = 'u32[144,128]{1,0:T(1,128)}', space=vmem, size = 0x12000, scoped, tag = 'internal scratch']
  %s0 = inlined_call_operand.vmem [shape: f32[2,16,512], index: 0, kind: input, shape index: {}]
  %s1 = inlined_call_operand.vmem [shape: bf16[2,16,16,128], index: 1, kind: input, shape index: {}]
  %s2 = inlined_call_operand.vmem [shape: bf16[128,128], index: 2, kind: input, shape index: {}]
  %s3 = inlined_call_operand.vmem [shape: f32[2,16,128], index: 3, kind: output, shape index: {0}]
  %s4 = inlined_call_operand.vmem [shape: f32[2,1,4,128], index: 4, kind: output, shape index: {1}]
  %5 = xla_tuple %s3, %s4
  %s6 = sld [smem:[#allocation0]]
  $region53: #{_lambda_.6} parent=0
    _
  %s8 = ssub.s32 1, %s6
  %s9 = scalar_select 0, %s8, %s6
  loop: start=0, step=1, limit=4
  $region2: #{_lambda_.6} parent=0 // loop_pre_header
    _
  $region3: #{_lambda_.6} parent=0 // loop_header
    %s11 = sphi 0, %s15
    %p12 = scmp.ge.s32.totalorder %s11, 4
    %s18 = sphi 0, %s30
    %s19 = sphi 0, %s26
    %s20 = sphi 0, %s18
    %s21 = sphi 0, %s19
    %s22 = sphi 0, %s20
    %s23 = sphi 0, %s21
    %s33 = sphi 0, %s35
    %s36 = sphi 0, %s33
    %s37 = sphi 0, %s36
    %s53 = sphi 0, %s37
    %s61 = sphi 0, %s63
    %s64 = sphi 0, %s61
    %s65 = sphi 0, %s64
    %s81 = sphi 0, %s65
    %s85 = sphi 0, %s85
    %s87 = sphi 0, %s85
    %s88 = sphi 0, %s87
    %s102 = sphi 0, %s88
    %s110 = sphi 0, %s112
    %s113 = sphi 0, %s110
    %s114 = sphi 0, %s113
    %s130 = sphi 0, %s114
    %s138 = sphi 0, %s140
    %s141 = sphi 0, %s138
    %s142 = sphi 0, %s141
    %s158 = sphi 0, %s142
  $region4: #{_lambda_.6} parent=0 // loop_header_branch
    %14 = sbr.rel (%p12) target = $region8
  $region5: #{_lambda_.6} parent=0 // loop_body
    %s16 = ssub.s32 %s11, 1
    %s17 = ssub.s32 %s11, 2
    %s24 = sadd.s32 1, %s19
    %p25 = scmp.ge.s32.totalorder %s24, 1
    %s26 = scalar_select %p25, 0, %s24
    %s27 = sadd.s32 1, %s18
    %s28 = scalar_select %p25, %s27, %s18
    %p29 = scmp.ge.s32.totalorder %s28, 2
    %s30 = scalar_select %p29, 0, %s28
    %s31 = ssub.s32 %s18, %s30
    %p32 = scmp.eq.s32.totalorder %s31, 0
    %s34 = sadd.s32 %s33, 1
    %s35 = scalar_select %p32, %s33, %s34
    %p38 = pneg %p32
    %p39 = scmp.eq.s32.totalorder %s11, 1
    %p40 = por %p38, %p39
    %p41 = scmp.ne.s32.totalorder %s33, %s36
    %p42 = scmp.eq.s32.totalorder %s11, 0
    %p43 = por %p41, %p42
    %p44 = scmp.ne.s32.totalorder %s33, %s36
    %p45 = scmp.eq.s32.totalorder %s16, 1
    %p46 = por %p44, %p45
    %p47 = scmp.ne.s32.totalorder %s36, %s37
    %p48 = scmp.eq.s32.totalorder %s16, 0
    %p49 = por %p47, %p48
    %p50 = scmp.ne.s32.totalorder %s36, %s37
    %p51 = scmp.eq.s32.totalorder %s17, 1
    %p52 = por %p50, %p51
    %p54 = scmp.ne.s32.totalorder %s37, %s53
    %p55 = scmp.eq.s32.totalorder %s17, 0
    %p56 = por %p54, %p55
    %s57 = ssub.s32 %s18, %s30
    %s58 = ssub.s32 %s19, %s26
    %s59 = sor.u32 %s57, %s58
    %p60 = scmp.eq.s32.totalorder %s59, 0
    %s62 = sadd.s32 %s61, 1
    %s63 = scalar_select %p60, %s61, %s62
    %p66 = pneg %p60
    %p67 = scmp.eq.s32.totalorder %s11, 1
    %p68 = por %p66, %p67
    %p69 = scmp.ne.s32.totalorder %s61, %s64
    %p70 = scmp.eq.s32.totalorder %s11, 0
    %p71 = por %p69, %p70
    %p72 = scmp.ne.s32.totalorder %s61, %s64
    %p73 = scmp.eq.s32.totalorder %s16, 1
    %p74 = por %p72, %p73
    %p75 = scmp.ne.s32.totalorder %s64, %s65
    %p76 = scmp.eq.s32.totalorder %s16, 0
    %p77 = por %p75, %p76
    %p78 = scmp.ne.s32.totalorder %s64, %s65
    %p79 = scmp.eq.s32.totalorder %s17, 1
    %p80 = por %p78, %p79
    %p82 = scmp.ne.s32.totalorder %s65, %s81
    %p83 = scmp.eq.s32.totalorder %s17, 0
    %p84 = por %p82, %p83
    %s86 = sadd.s32 %s85, 1
    %p89 = scmp.eq.s32.totalorder %s11, 1
    %p90 = scmp.ne.s32.totalorder %s85, %s87
    %p91 = scmp.eq.s32.totalorder %s11, 0
    %p92 = por %p90, %p91
    %p93 = scmp.ne.s32.totalorder %s85, %s87
    %p94 = scmp.eq.s32.totalorder %s16, 1
    %p95 = por %p93, %p94
    %p96 = scmp.ne.s32.totalorder %s87, %s88
    %p97 = scmp.eq.s32.totalorder %s16, 0
    %p98 = por %p96, %p97
    %p99 = scmp.ne.s32.totalorder %s87, %s88
    %p100 = scmp.eq.s32.totalorder %s17, 1
    %p101 = por %p99, %p100
    %p103 = scmp.ne.s32.totalorder %s88, %s102
    %p104 = scmp.eq.s32.totalorder %s17, 0
    %p105 = por %p103, %p104
    %s106 = ssub.s32 %s18, %s30
    %s107 = ssub.s32 %s19, %s26
    %s108 = sor.u32 %s106, %s107
    %p109 = scmp.eq.s32.totalorder %s108, 0
    %s111 = sadd.s32 %s110, 1
    %s112 = scalar_select %p109, %s110, %s111
    %p115 = pneg %p109
    %p116 = scmp.eq.s32.totalorder %s11, 1
    %p117 = por %p115, %p116
    %p118 = scmp.ne.s32.totalorder %s110, %s113
    %p119 = scmp.eq.s32.totalorder %s11, 0
    %p120 = por %p118, %p119
    %p121 = scmp.ne.s32.totalorder %s110, %s113
    %p122 = scmp.eq.s32.totalorder %s16, 1
    %p123 = por %p121, %p122
    %p124 = scmp.ne.s32.totalorder %s113, %s114
    %p125 = scmp.eq.s32.totalorder %s16, 0
    %p126 = por %p124, %p125
    %p127 = scmp.ne.s32.totalorder %s113, %s114
    %p128 = scmp.eq.s32.totalorder %s17, 1
    %p129 = por %p127, %p128
    %p131 = scmp.ne.s32.totalorder %s114, %s130
    %p132 = scmp.eq.s32.totalorder %s17, 0
    %p133 = por %p131, %p132
    %s134 = ssub.s32 %s18, %s30
    %s135 = ssub.s32 %s19, %s26
    %s136 = sor.u32 %s134, %s135
    %p137 = scmp.eq.s32.totalorder %s136, 0
    %s139 = sadd.s32 %s138, 1
    %s140 = scalar_select %p137, %s138, %s139
    %p143 = pneg %p137
    %p144 = scmp.eq.s32.totalorder %s11, 1
    %p145 = por %p143, %p144
    %p146 = scmp.ne.s32.totalorder %s138, %s141
    %p147 = scmp.eq.s32.totalorder %s11, 0
    %p148 = por %p146, %p147
    %p149 = scmp.ne.s32.totalorder %s138, %s141
    %p150 = scmp.eq.s32.totalorder %s16, 1
    %p151 = por %p149, %p150
    %p152 = scmp.ne.s32.totalorder %s141, %s142
    %p153 = scmp.eq.s32.totalorder %s16, 0
    %p154 = por %p152, %p153
    %p155 = scmp.ne.s32.totalorder %s141, %s142
    %p156 = scmp.eq.s32.totalorder %s17, 1
    %p157 = por %p155, %p156
    %p159 = scmp.ne.s32.totalorder %s142, %s158
    %p160 = scmp.eq.s32.totalorder %s17, 0
    %p161 = por %p159, %p160
    %p162 = scmp.le.s32.totalorder 1, %s11
    %p163 = scmp.lt.s32.totalorder %s11, 3
    %p164 = pnand %p162, %p163
    %p165 = pneg %p164
    // Predicated region
    $region9: #{_lambda_.6} parent=5 // pred_check
      _
    $region10: #{_lambda_.6} parent=5 // pred_check_branch
      %167 = sbr.rel (%p164) target = $region12
    $region11: #{_lambda_.6} parent=5 // pred_region
      %s168 = ssub.s32 %s11, 1
      // Predicated region
      $region13: #{_lambda_.6} parent=11 // pred_check
        %p169 = pneg %p98
      $region14: #{_lambda_.6} parent=11 // pred_check_branch
        %171 = sbr.rel (%p169) target = $region16
      $region15: #{_lambda_.6} parent=11 // pred_region
        _
      $region16: #{_lambda_.6} parent=11 // pred_fallthru
        _
    $region12: #{_lambda_.6} parent=5 // pred_fallthru
      _
    %p172 = scmp.lt.s32.totalorder %s11, 2
    // Predicated region
    $region17: #{_lambda_.6} parent=5 // pred_check
      %p173 = pneg %p172
    $region18: #{_lambda_.6} parent=5 // pred_check_branch
      %175 = sbr.rel (%p173) target = $region20
    $region19: #{_lambda_.6} parent=5 // pred_region
      // Predicated region
      $region21: #{_lambda_.6} parent=19 // pred_check
        %p176 = pneg %p43
      $region22: #{_lambda_.6} parent=19 // pred_check_branch
        %178 = sbr.rel (%p176) target = $region24
      $region23: #{_lambda_.6} parent=19 // pred_region
        %p179 = scmp.lt.s32.totalorder %s18, 1
        %s180 = scalar_select %p179, %s18, 1
        %s181 = smul.addr %s180, 8
        %s182 = smul.addr %s181, 8
        %s183 = scalar_lea.vmem %s0, %s182
      $region24: #{_lambda_.6} parent=19 // pred_fallthru
        _
      // Predicated region
      $region25: #{_lambda_.6} parent=19 // pred_check
        %p184 = pneg %p71
      $region26: #{_lambda_.6} parent=19 // pred_check_branch
        %186 = sbr.rel (%p184) target = $region28
      $region27: #{_lambda_.6} parent=19 // pred_region
        %s187 = smul.u32 16, %s19
        %p188 = scmp.lt.s32.totalorder %s18, 1
        %s189 = scalar_select %p188, %s18, 1
        %p190 = scmp.lt.s32.totalorder %s187, 15
        %s191 = scalar_select %p190, %s187, 15
        %s192 = smul.addr %s191, 2
        %s193 = smul.addr %s189, 32
        %s194 = sadd.s32 %s192, %s193
        %s195 = smul.addr %s194, 4
        %s196 = scalar_lea.vmem %s1, %s195
        %s197 = smul.u32 16, %s19
      $region28: #{_lambda_.6} parent=19 // pred_fallthru
        _
    $region20: #{_lambda_.6} parent=5 // pred_fallthru
      _
    %p198 = scmp.le.s32.totalorder 1, %s11
    %p199 = scmp.lt.s32.totalorder %s11, 3
    %p200 = pnand %p198, %p199
    %p201 = pneg %p200
    // Predicated region
    $region29: #{_lambda_.6} parent=5 // pred_check
      _
    $region30: #{_lambda_.6} parent=5 // pred_check_branch
      %203 = sbr.rel (%p200) target = $region32
    $region31: #{_lambda_.6} parent=5 // pred_region
      %s204 = ssub.s32 %s11, 1
      %p205 = scmp.lt.s32.totalorder %s20, 1
      %s206 = scalar_select %p205, %s20, 1
      %s207 = smul.addr %s206, 8
      %s208 = smul.addr %s207, 8
      %s209 = scalar_lea.vmem %s0, %s208
      %p210 = pneg %p49
      %p211 = pneg %p46
      %s212 = smul.u32 16, %s21
      %p213 = scmp.lt.s32.totalorder %s20, 1
      %s214 = scalar_select %p213, %s20, 1
      %p215 = scmp.lt.s32.totalorder %s212, 15
      %s216 = scalar_select %p215, %s212, 15
      %s217 = smul.addr %s216, 2
      %s218 = smul.addr %s214, 32
      %s219 = sadd.s32 %s217, %s218
      %s220 = smul.addr %s219, 4
      %s221 = scalar_lea.vmem %s1, %s220
      %p222 = pneg %p77
      %p223 = pneg %p74
      %p224 = pneg %p98
      %p225 = pneg %p95
      %p226 = pneg %p126
      %p227 = pneg %p123
      %s228 = smul.u32 2, %s21
      %p229 = scmp.lt.s32.totalorder %s20, 1
      %s230 = scalar_select %p229, %s20, 1
      %p231 = scmp.lt.s32.totalorder %s228, 1
      %s232 = scalar_select %p231, %s228, 1
      %s233 = smul.addr %s230, 2
      %s234 = sadd.s32 %s232, %s233
      %s235 = smul.addr %s234, 8
      %s236 = scalar_lea.vmem %s3, %s235
      %p237 = pneg %p154
      %p238 = pneg %p151
      %p239 = scmp.lt.s32.totalorder %s20, 1
      %s240 = scalar_select %p239, %s20, 1
      %p241 = scmp.lt.s32.totalorder %s21, 0
      %s242 = scalar_select %p241, %s21, 0
      %s243 = sadd.s32 %s242, %s240
      %s244 = smul.addr %s243, 4
      %s245 = scalar_lea.vmem %s4, %s244
      %p246 = scmp.lt.s32.totalorder %s20, 1
      %s247 = scalar_select %p246, %s20, 1
      %s248 = smul.addr %s247, 8
      %s249 = smul.addr %s248, 8
      %s250 = scalar_lea.vmem %s0, %s249
      %s251 = smul.u32 16, %s21
      %p252 = scmp.lt.s32.totalorder %s20, 1
      %s253 = scalar_select %p252, %s20, 1
      %p254 = scmp.lt.s32.totalorder %s251, 15
      %s255 = scalar_select %p254, %s251, 15
      %s256 = smul.addr %s255, 2
      %s257 = smul.addr %s253, 32
      %s258 = sadd.s32 %s256, %s257
      %s259 = smul.addr %s258, 4
      %s260 = scalar_lea.vmem %s1, %s259
      %s261 = smul.u32 16, %s21
      %s262 = smul.u32 2, %s21
      %p263 = scmp.lt.s32.totalorder %s20, 1
      %s264 = scalar_select %p263, %s20, 1
      %p265 = scmp.lt.s32.totalorder %s262, 1
      %s266 = scalar_select %p265, %s262, 1
      %s267 = smul.addr %s264, 2
      %s268 = sadd.s32 %s266, %s267
      %s269 = smul.addr %s268, 8
      %s270 = scalar_lea.vmem %s3, %s269
      %s271 = smul.u32 2, %s21
      %p272 = scmp.lt.s32.totalorder %s20, 1
      %s273 = scalar_select %p272, %s20, 1
      %p274 = scmp.lt.s32.totalorder %s21, 0
      %s275 = scalar_select %p274, %s21, 0
      %s276 = sadd.s32 %s275, %s273
      %s277 = smul.addr %s276, 4
      %s278 = scalar_lea.vmem %s4, %s277
      %s280 = smul.u32 %s21, 16
      %v281 = vld [vmem:[%s250 + $0x8] sm:$0xff]
      %v282 = vld [vmem:[%s250 + $0x18] sm:$0xff]
      %v283 = vld [vmem:[%s250 + $0x28] sm:$0xff]
      %v284 = vld [vmem:[%s250 + $0x38] sm:$0xff]
      %s285 = sshra.s32 %s280, 3
      %s286 = sand.u32 %s280, 7
      %s287 = smul.u32 %s285, 4
      %s288 = smul.addr %s287, 8
      %s289 = scalar_lea.vmem %s250, %s288
      %v290 = vld [vmem:[%s289] sm:$0xff]
      %v291 = vld [vmem:[%s289 + $0x10] sm:$0xff]
      %v292 = vld [vmem:[%s289 + $0x20] sm:$0xff]
      %v293 = vld [vmem:[%s289 + $0x30] sm:$0xff]
      %v294 = vld [vmem:[%s260] sm:$0xf]
      %v295 = vld [vmem:[%s260 + $0x4] sm:$0xf]
      %v296 = vld [vmem:[%s260 + $0x8] sm:$0xf]
      %v297 = vld [vmem:[%s260 + $0xc] sm:$0xf]
      %v298 = vld [vmem:[%s260 + $0x10] sm:$0xf]
      %v299 = vld [vmem:[%s260 + $0x14] sm:$0xf]
      %v300 = vld [vmem:[%s260 + $0x18] sm:$0xf]
      %v301 = vld [vmem:[%s260 + $0x1c] sm:$0xf]
      %v302 = vld [vmem:[%s260 + $0x20] sm:$0xf]
      %v303 = vld [vmem:[%s260 + $0x24] sm:$0xf]
      %v304 = vld [vmem:[%s260 + $0x28] sm:$0xf]
      %v305 = vld [vmem:[%s260 + $0x2c] sm:$0xf]
      %v306 = vld [vmem:[%s260 + $0x30] sm:$0xf]
      %v307 = vld [vmem:[%s260 + $0x34] sm:$0xf]
      %v308 = vld [vmem:[%s260 + $0x38] sm:$0xf]
      %v309 = vld [vmem:[%s260 + $0x3c] sm:$0xf]
      %v310 = vld [vmem:[%s260 + $0x40] sm:$0xf]
      %v311 = vld [vmem:[%s260 + $0x44] sm:$0xf]
      %v312 = vld [vmem:[%s260 + $0x48] sm:$0xf]
      %v313 = vld [vmem:[%s260 + $0x4c] sm:$0xf]
      %v314 = vld [vmem:[%s260 + $0x50] sm:$0xf]
      %v315 = vld [vmem:[%s260 + $0x54] sm:$0xf]
      %v316 = vld [vmem:[%s260 + $0x58] sm:$0xf]
      %v317 = vld [vmem:[%s260 + $0x5c] sm:$0xf]
      %v318 = vld [vmem:[%s260 + $0x60] sm:$0xf]
      %v319 = vld [vmem:[%s260 + $0x64] sm:$0xf]
      %v320 = vld [vmem:[%s260 + $0x68] sm:$0xf]
      %v321 = vld [vmem:[%s260 + $0x6c] sm:$0xf]
      %v322 = vld [vmem:[%s260 + $0x70] sm:$0xf]
      %v323 = vld [vmem:[%s260 + $0x74] sm:$0xf]
      %v324 = vld [vmem:[%s260 + $0x78] sm:$0xf]
      %v325 = vld [vmem:[%s260 + $0x7c] sm:$0xf]
      %v326 = vld [vmem:[%s2] sm:$0xf]
      %v327 = vld [vmem:[%s2 + $0x4] sm:$0xf]
      %v328 = vld [vmem:[%s2 + $0x8] sm:$0xf]
      %v329 = vld [vmem:[%s2 + $0xc] sm:$0xf]
      %v330 = vld [vmem:[%s2 + $0x10] sm:$0xf]
      %v331 = vld [vmem:[%s2 + $0x14] sm:$0xf]
      %v332 = vld [vmem:[%s2 + $0x18] sm:$0xf]
      %v333 = vld [vmem:[%s2 + $0x1c] sm:$0xf]
      %v334 = vld [vmem:[%s2 + $0x20] sm:$0xf]
      %v335 = vld [vmem:[%s2 + $0x24] sm:$0xf]
      %v336 = vld [vmem:[%s2 + $0x28] sm:$0xf]
      %v337 = vld [vmem:[%s2 + $0x2c] sm:$0xf]
      %v338 = vld [vmem:[%s2 + $0x30] sm:$0xf]
      %v339 = vld [vmem:[%s2 + $0x34] sm:$0xf]
      %v340 = vld [vmem:[%s2 + $0x38] sm:$0xf]
      %v341 = vld [vmem:[%s2 + $0x3c] sm:$0xf]
      %v374 = vunpack.c.l.b16 %v294
      %v375 = vunpack.c.l.b16 %v295
      %v376 = vunpack.c.l.b16 %v296
      %v377 = vunpack.c.l.b16 %v297
      %v378 = vunpack.c.l.b16 %v298
      %v379 = vunpack.c.l.b16 %v299
      %v380 = vunpack.c.l.b16 %v300
      %v381 = vunpack.c.l.b16 %v301
      %v382 = vunpack.c.l.b16 %v302
      %v383 = vunpack.c.l.b16 %v303
      %v384 = vunpack.c.l.b16 %v304
      %v385 = vunpack.c.l.b16 %v305
      %v386 = vunpack.c.l.b16 %v306
      %v387 = vunpack.c.l.b16 %v307
      %v388 = vunpack.c.l.b16 %v308
      %v389 = vunpack.c.l.b16 %v309
      %v390 = vunpack.c.l.b16 %v310
      %v391 = vunpack.c.l.b16 %v311
      %v392 = vunpack.c.l.b16 %v312
      %v393 = vunpack.c.l.b16 %v313
      %v394 = vunpack.c.l.b16 %v314
      %v395 = vunpack.c.l.b16 %v315
      %v396 = vunpack.c.l.b16 %v316
      %v397 = vunpack.c.l.b16 %v317
      %v398 = vunpack.c.l.b16 %v318
      %v399 = vunpack.c.l.b16 %v319
      %v400 = vunpack.c.l.b16 %v320
      %v401 = vunpack.c.l.b16 %v321
      %v402 = vunpack.c.l.b16 %v322
      %v403 = vunpack.c.l.b16 %v323
      %v404 = vunpack.c.l.b16 %v324
      %v405 = vunpack.c.l.b16 %v325
      %v406 = vpack.c.b16 %v375, %v374
      %v407 = vpack.c.b16 %v377, %v376
      %v408 = vpack.c.b16 %v379, %v378
      %v409 = vpack.c.b16 %v381, %v380
      %v410 = vpack.c.b16 %v383, %v382
      %v411 = vpack.c.b16 %v385, %v384
      %v412 = vpack.c.b16 %v387, %v386
      %v413 = vpack.c.b16 %v389, %v388
      %v414 = vpack.c.b16 %v391, %v390
      %v415 = vpack.c.b16 %v393, %v392
      %v416 = vpack.c.b16 %v395, %v394
      %v417 = vpack.c.b16 %v397, %v396
      %v418 = vpack.c.b16 %v399, %v398
      %v419 = vpack.c.b16 %v401, %v400
      %v420 = vpack.c.b16 %v403, %v402
      %v421 = vpack.c.b16 %v405, %v404
      %v454 = vunpack.c.l.b16 %v326
      %v455 = vunpack.c.l.b16 %v327
      %v456 = vunpack.c.l.b16 %v328
      %v457 = vunpack.c.l.b16 %v329
      %v458 = vunpack.c.l.b16 %v330
      %v459 = vunpack.c.l.b16 %v331
      %v460 = vunpack.c.l.b16 %v332
      %v461 = vunpack.c.l.b16 %v333
      %v462 = vunpack.c.l.b16 %v334
      %v463 = vunpack.c.l.b16 %v335
      %v464 = vunpack.c.l.b16 %v336
      %v465 = vunpack.c.l.b16 %v337
      %v466 = vunpack.c.l.b16 %v338
      %v467 = vunpack.c.l.b16 %v339
      %v468 = vunpack.c.l.b16 %v340
      %v469 = vunpack.c.l.b16 %v341
      %v470 = vpack.c.b16 %v455, %v454
      %v471 = vpack.c.b16 %v457, %v456
      %v472 = vpack.c.b16 %v459, %v458
      %v473 = vpack.c.b16 %v461, %v460
      %v474 = vpack.c.b16 %v463, %v462
      %v475 = vpack.c.b16 %v465, %v464
      %v476 = vpack.c.b16 %v467, %v466
      %v477 = vpack.c.b16 %v469, %v468
      %486 = vmatprep.subr.bf16.mxu0 0
      %487 = vmatpush1.bf16.msra.mxu0 %v477
      %488 = vmatprep.subr.bf16.mxu0 0
      %489 = vmatpush1.bf16.msra.mxu0 %v476
      %490 = vmatprep.subr.bf16.mxu0 0
      %491 = vmatpush1.bf16.msra.mxu0 %v475
      %492 = vmatprep.subr.bf16.mxu0 0
      %493 = vmatpush1.bf16.msra.mxu0 %v474
      %494 = vmatprep.subr.bf16.mxu0 0
      %495 = vmatpush1.bf16.msra.mxu0 %v473
      %496 = vmatprep.subr.bf16.mxu0 0
      %497 = vmatpush1.bf16.msra.mxu0 %v472
      %498 = vmatprep.subr.bf16.mxu0 0
      %499 = vmatpush1.bf16.msra.mxu0 %v471
      %500 = vmatprep.subr.bf16.mxu0 0
      %501 = vmatpush1.bf16.msra.mxu0 %v470
      %502 = vmatprep.subr.bf16.mxu0 0
      %503 = vmatpush2.bf16.msra.mxu0 0
      %504 = vmatprep.subr.bf16.mxu0 0
      %505 = vmatpush2.bf16.msra.mxu0 0
      %506 = vmatprep.subr.bf16.mxu0 0
      %507 = vmatpush2.bf16.msra.mxu0 0
      %508 = vmatprep.subr.bf16.mxu0 0
      %509 = vmatpush2.bf16.msra.mxu0 0
      %510 = vmatprep.subr.bf16.mxu0 0
      %511 = vmatpush2.bf16.msra.mxu0 0
      %512 = vmatprep.subr.bf16.mxu0 0
      %513 = vmatpush2.bf16.msra.mxu0 0
      %514 = vmatprep.subr.bf16.mxu0 0
      %515 = vmatpush2.bf16.msra.mxu0 0
      %516 = vmatprep.subr.bf16.mxu0 0
      %517 = vmatpush2.bf16.msra.mxu0 0
      %518 = vmatprep.mubr.bf16.mxu0 0
      %519 = vmatmul.mubr.bf16.gmra.mxu0 %v406
      %v520 = vpop.f32.mrf.mxu0
      %v521 = vadd.f32 0.0, %v520
      %v522 = vpop.f32.mrf.mxu0
      %v523 = vpop.f32.mrf.mxu0
      %v524 = vadd.f32 0.0, %v523
      %v525 = vpop.f32.mrf.mxu0
      %526 = vmatprep.mubr.bf16.mxu0 0
      %527 = vmatmul.mubr.bf16.gmra.mxu0 %v407
      %v528 = vpop.f32.mrf.mxu0
      %v529 = vadd.f32 0.0, %v528
      %v530 = vpop.f32.mrf.mxu0
      %v531 = vpop.f32.mrf.mxu0
      %v532 = vadd.f32 0.0, %v531
      %v533 = vpop.f32.mrf.mxu0
      %534 = vmatprep.mubr.bf16.mxu0 0
      %535 = vmatmul.mubr.bf16.gmra.mxu0 %v408
      %v536 = vpop.f32.mrf.mxu0
      %v537 = vadd.f32 0.0, %v536
      %v538 = vpop.f32.mrf.mxu0
      %v539 = vpop.f32.mrf.mxu0
      %v540 = vadd.f32 0.0, %v539
      %v541 = vpop.f32.mrf.mxu0
      %542 = vmatprep.mubr.bf16.mxu0 0
      %543 = vmatmul.mubr.bf16.gmra.mxu0 %v409
      %v544 = vpop.f32.mrf.mxu0
      %v545 = vadd.f32 0.0, %v544
      %v546 = vpop.f32.mrf.mxu0
      %v547 = vpop.f32.mrf.mxu0
      %v548 = vadd.f32 0.0, %v547
      %v549 = vpop.f32.mrf.mxu0
      %550 = vmatprep.mubr.bf16.mxu0 0
      %551 = vmatmul.mubr.bf16.gmra.mxu0 %v410
      %v552 = vpop.f32.mrf.mxu0
      %v553 = vadd.f32 0.0, %v552
      %v554 = vpop.f32.mrf.mxu0
      %v555 = vpop.f32.mrf.mxu0
      %v556 = vadd.f32 0.0, %v555
      %v557 = vpop.f32.mrf.mxu0
      %558 = vmatprep.mubr.bf16.mxu0 0
      %559 = vmatmul.mubr.bf16.gmra.mxu0 %v411
      %v560 = vpop.f32.mrf.mxu0
      %v561 = vadd.f32 0.0, %v560
      %v562 = vpop.f32.mrf.mxu0
      %v563 = vpop.f32.mrf.mxu0
      %v564 = vadd.f32 0.0, %v563
      %v565 = vpop.f32.mrf.mxu0
      %566 = vmatprep.mubr.bf16.mxu0 0
      %567 = vmatmul.mubr.bf16.gmra.mxu0 %v412
      %v568 = vpop.f32.mrf.mxu0
      %v569 = vadd.f32 0.0, %v568
      %v570 = vpop.f32.mrf.mxu0
      %v571 = vpop.f32.mrf.mxu0
      %v572 = vadd.f32 0.0, %v571
      %v573 = vpop.f32.mrf.mxu0
      %574 = vmatprep.mubr.bf16.mxu0 0
      %575 = vmatmul.mubr.bf16.gmra.mxu0 %v413
      %v576 = vpop.f32.mrf.mxu0
      %v577 = vadd.f32 0.0, %v576
      %v578 = vpop.f32.mrf.mxu0
      %v579 = vpop.f32.mrf.mxu0
      %v580 = vadd.f32 0.0, %v579
      %v581 = vpop.f32.mrf.mxu0
      %582 = vmatprep.mubr.bf16.mxu0 0
      %583 = vmatmul.mubr.bf16.gmra.mxu0 %v414
      %v584 = vpop.f32.mrf.mxu0
      %v585 = vadd.f32 0.0, %v584
      %v586 = vpop.f32.mrf.mxu0
      %v587 = vpop.f32.mrf.mxu0
      %v588 = vadd.f32 0.0, %v587
      %v589 = vpop.f32.mrf.mxu0
      %590 = vmatprep.mubr.bf16.mxu0 0
      %591 = vmatmul.mubr.bf16.gmra.mxu0 %v415
      %v592 = vpop.f32.mrf.mxu0
      %v593 = vadd.f32 0.0, %v592
      %v594 = vpop.f32.mrf.mxu0
      %v595 = vpop.f32.mrf.mxu0
      %v596 = vadd.f32 0.0, %v595
      %v597 = vpop.f32.mrf.mxu0
      %598 = vmatprep.mubr.bf16.mxu0 0
      %599 = vmatmul.mubr.bf16.gmra.mxu0 %v416
      %v600 = vpop.f32.mrf.mxu0
      %v601 = vadd.f32 0.0, %v600
      %v602 = vpop.f32.mrf.mxu0
      %v603 = vpop.f32.mrf.mxu0
      %v604 = vadd.f32 0.0, %v603
      %v605 = vpop.f32.mrf.mxu0
      %606 = vmatprep.mubr.bf16.mxu0 0
      %607 = vmatmul.mubr.bf16.gmra.mxu0 %v417
      %v608 = vpop.f32.mrf.mxu0
      %v609 = vadd.f32 0.0, %v608
      %v610 = vpop.f32.mrf.mxu0
      %v611 = vpop.f32.mrf.mxu0
      %v612 = vadd.f32 0.0, %v611
      %v613 = vpop.f32.mrf.mxu0
      %614 = vmatprep.mubr.bf16.mxu0 0
      %615 = vmatmul.mubr.bf16.gmra.mxu0 %v418
      %v616 = vpop.f32.mrf.mxu0
      %v617 = vadd.f32 0.0, %v616
      %v618 = vpop.f32.mrf.mxu0
      %v619 = vpop.f32.mrf.mxu0
      %v620 = vadd.f32 0.0, %v619
      %v621 = vpop.f32.mrf.mxu0
      %622 = vmatprep.mubr.bf16.mxu0 0
      %623 = vmatmul.mubr.bf16.gmra.mxu0 %v419
      %v624 = vpop.f32.mrf.mxu0
      %v625 = vadd.f32 0.0, %v624
      %v626 = vpop.f32.mrf.mxu0
      %v627 = vpop.f32.mrf.mxu0
      %v628 = vadd.f32 0.0, %v627
      %v629 = vpop.f32.mrf.mxu0
      %630 = vmatprep.mubr.bf16.mxu0 0
      %631 = vmatmul.mubr.bf16.gmra.mxu0 %v420
      %v632 = vpop.f32.mrf.mxu0
      %v633 = vadd.f32 0.0, %v632
      %v634 = vpop.f32.mrf.mxu0
      %v635 = vpop.f32.mrf.mxu0
      %v636 = vadd.f32 0.0, %v635
      %v637 = vpop.f32.mrf.mxu0
      %638 = vmatprep.mubr.bf16.mxu0 0
      %639 = vmatmul.mubr.bf16.gmra.mxu0 %v421
      %v640 = vpop.f32.mrf.mxu0
      %v641 = vadd.f32 0.0, %v640
      %v642 = vpop.f32.mrf.mxu0
      %v643 = vpop.f32.mrf.mxu0
      %v644 = vadd.f32 0.0, %v643
      %v645 = vpop.f32.mrf.mxu0
      %646 = vdwg.mxu0
      %v649 = vcombine.high %v290, %v290
      %v651 = vunpack.c.l.s4 1966171168
      %v652 = vunpack.c.0.s8 %v651
      %v653 = vlaneseq
      %v654 = vshrl.u32 %v653, 7
      %v655 = vsub.s32 %v652, %v654
      %v656 = vrot.slane %v290, %v655
      %v658 = vunpack.c.l.s4 1966171168
      %v659 = vunpack.c.0.s8 %v658
      %v660 = vlaneseq
      %v661 = vshrl.u32 %v660, 7
      %v662 = vsub.s32 %v659, %v661
      %v663 = vrot.slane %v649, %v662
      %v664 = vcombine.high %v656, %v656
      %v665 = vcombine.high %v663, %v663
      %v667 = vunpack.c.l.s4 1966171168
      %v668 = vunpack.c.0.s8 %v667
      %v669 = vlaneseq
      %v670 = vshrl.u32 %v669, 7
      %v671 = vsub.s32 %v668, %v670
      %v672 = vrot.slane %v656, %v671
      %v674 = vunpack.c.l.s4 1966171168
      %v675 = vunpack.c.0.s8 %v674
      %v676 = vlaneseq
      %v677 = vshrl.u32 %v676, 7
      %v678 = vsub.s32 %v675, %v677
      %v679 = vrot.slane %v663, %v678
      %v681 = vunpack.c.l.s4 1966171168
      %v682 = vunpack.c.0.s8 %v681
      %v683 = vlaneseq
      %v684 = vshrl.u32 %v683, 7
      %v685 = vsub.s32 %v682, %v684
      %v686 = vrot.slane %v664, %v685
      %v688 = vunpack.c.l.s4 1966171168
      %v689 = vunpack.c.0.s8 %v688
      %v690 = vlaneseq
      %v691 = vshrl.u32 %v690, 7
      %v692 = vsub.s32 %v689, %v691
      %v693 = vrot.slane %v665, %v692
      %v694 = vcombine.high %v672, %v672
      %v695 = vcombine.high %v679, %v679
      %v696 = vcombine.high %v686, %v686
      %v697 = vcombine.high %v693, %v693
      %v698 = vcombine.high %v292, %v292
      %v700 = vunpack.c.l.s4 1966171168
      %v701 = vunpack.c.0.s8 %v700
      %v702 = vlaneseq
      %v703 = vshrl.u32 %v702, 7
      %v704 = vsub.s32 %v701, %v703
      %v705 = vrot.slane %v292, %v704
      %v707 = vunpack.c.l.s4 1966171168
      %v708 = vunpack.c.0.s8 %v707
      %v709 = vlaneseq
      %v710 = vshrl.u32 %v709, 7
      %v711 = vsub.s32 %v708, %v710
      %v712 = vrot.slane %v698, %v711
      %v713 = vcombine.high %v705, %v705
      %v714 = vcombine.high %v712, %v712
      %v716 = vunpack.c.l.s4 1966171168
      %v717 = vunpack.c.0.s8 %v716
      %v718 = vlaneseq
      %v719 = vshrl.u32 %v718, 7
      %v720 = vsub.s32 %v717, %v719
      %v721 = vrot.slane %v705, %v720
      %v723 = vunpack.c.l.s4 1966171168
      %v724 = vunpack.c.0.s8 %v723
      %v725 = vlaneseq
      %v726 = vshrl.u32 %v725, 7
      %v727 = vsub.s32 %v724, %v726
      %v728 = vrot.slane %v712, %v727
      %v730 = vunpack.c.l.s4 1966171168
      %v731 = vunpack.c.0.s8 %v730
      %v732 = vlaneseq
      %v733 = vshrl.u32 %v732, 7
      %v734 = vsub.s32 %v731, %v733
      %v735 = vrot.slane %v713, %v734
      %v737 = vunpack.c.l.s4 1966171168
      %v738 = vunpack.c.0.s8 %v737
      %v739 = vlaneseq
      %v740 = vshrl.u32 %v739, 7
      %v741 = vsub.s32 %v738, %v740
      %v742 = vrot.slane %v714, %v741
      %v743 = vcombine.high %v721, %v721
      %v744 = vcombine.high %v728, %v728
      %v745 = vcombine.high %v735, %v735
      %v746 = vcombine.high %v742, %v742
      %v747 = vlaneseq
      %v748 = vshrl.u32 %v747, 7
      %v749 = vsub.s32 0, %v748
      %v750 = vrot.slane %v672, %v749
      %v751 = vlaneseq
      %v752 = vshrl.u32 %v751, 7
      %v753 = vsub.s32 0, %v752
      %v754 = vrot.slane %v686, %v753
      %v755 = vlaneseq
      %v756 = vshrl.u32 %v755, 7
      %v757 = vsub.s32 0, %v756
      %v758 = vrot.slane %v694, %v757
      %v759 = vlaneseq
      %v760 = vshrl.u32 %v759, 7
      %v761 = vsub.s32 0, %v760
      %v762 = vrot.slane %v696, %v761
      %v763 = vlaneseq
      %v764 = vshrl.u32 %v763, 7
      %v765 = vsub.s32 0, %v764
      %v766 = vrot.slane %v679, %v765
      %v767 = vlaneseq
      %v768 = vshrl.u32 %v767, 7
      %v769 = vsub.s32 0, %v768
      %v770 = vrot.slane %v693, %v769
      %v771 = vlaneseq
      %v772 = vshrl.u32 %v771, 7
      %v773 = vsub.s32 0, %v772
      %v774 = vrot.slane %v695, %v773
      %v775 = vlaneseq
      %v776 = vshrl.u32 %v775, 7
      %v777 = vsub.s32 0, %v776
      %v778 = vrot.slane %v697, %v777
      %v779 = vlaneseq
      %v780 = vshrl.u32 %v779, 7
      %v781 = vsub.s32 0, %v780
      %v782 = vrot.slane %v721, %v781
      %v783 = vlaneseq
      %v784 = vshrl.u32 %v783, 7
      %v785 = vsub.s32 0, %v784
      %v786 = vrot.slane %v735, %v785
      %v787 = vlaneseq
      %v788 = vshrl.u32 %v787, 7
      %v789 = vsub.s32 0, %v788
      %v790 = vrot.slane %v743, %v789
      %v791 = vlaneseq
      %v792 = vshrl.u32 %v791, 7
      %v793 = vsub.s32 0, %v792
      %v794 = vrot.slane %v745, %v793
      %v795 = vlaneseq
      %v796 = vshrl.u32 %v795, 7
      %v797 = vsub.s32 0, %v796
      %v798 = vrot.slane %v728, %v797
      %v799 = vlaneseq
      %v800 = vshrl.u32 %v799, 7
      %v801 = vsub.s32 0, %v800
      %v802 = vrot.slane %v742, %v801
      %v803 = vlaneseq
      %v804 = vshrl.u32 %v803, 7
      %v805 = vsub.s32 0, %v804
      %v806 = vrot.slane %v744, %v805
      %v807 = vlaneseq
      %v808 = vshrl.u32 %v807, 7
      %v809 = vsub.s32 0, %v808
      %v810 = vrot.slane %v746, %v809
      %v827 = vadd.f32 %v521, %v750
      %v828 = vadd.f32 %v524, %v750
      %v829 = vadd.f32 %v529, %v754
      %v830 = vadd.f32 %v532, %v754
      %v831 = vadd.f32 %v537, %v758
      %v832 = vadd.f32 %v540, %v758
      %v833 = vadd.f32 %v545, %v762
      %v834 = vadd.f32 %v548, %v762
      %v835 = vadd.f32 %v553, %v766
      %v836 = vadd.f32 %v556, %v766
      %v837 = vadd.f32 %v561, %v770
      %v838 = vadd.f32 %v564, %v770
      %v839 = vadd.f32 %v569, %v774
      %v840 = vadd.f32 %v572, %v774
      %v841 = vadd.f32 %v577, %v778
      %v842 = vadd.f32 %v580, %v778
      %v843 = vadd.f32 %v585, %v782
      %v844 = vadd.f32 %v588, %v782
      %v845 = vadd.f32 %v593, %v786
      %v846 = vadd.f32 %v596, %v786
      %v847 = vadd.f32 %v601, %v790
      %v848 = vadd.f32 %v604, %v790
      %v849 = vadd.f32 %v609, %v794
      %v850 = vadd.f32 %v612, %v794
      %v851 = vadd.f32 %v617, %v798
      %v852 = vadd.f32 %v620, %v798
      %v853 = vadd.f32 %v625, %v802
      %v854 = vadd.f32 %v628, %v802
      %v855 = vadd.f32 %v633, %v806
      %v856 = vadd.f32 %v636, %v806
      %v857 = vadd.f32 %v641, %v810
      %v858 = vadd.f32 %v644, %v810
      %v859 = vadd.f32 %v827, %v281
      %v860 = vadd.f32 %v828, %v283
      %v861 = vadd.f32 %v829, %v281
      %v862 = vadd.f32 %v830, %v283
      %v863 = vadd.f32 %v831, %v281
      %v864 = vadd.f32 %v832, %v283
      %v865 = vadd.f32 %v833, %v281
      %v866 = vadd.f32 %v834, %v283
      %v867 = vadd.f32 %v835, %v281
      %v868 = vadd.f32 %v836, %v283
      %v869 = vadd.f32 %v837, %v281
      %v870 = vadd.f32 %v838, %v283
      %v871 = vadd.f32 %v839, %v281
      %v872 = vadd.f32 %v840, %v283
      %v873 = vadd.f32 %v841, %v281
      %v874 = vadd.f32 %v842, %v283
      %v875 = vadd.f32 %v843, %v281
      %v876 = vadd.f32 %v844, %v283
      %v877 = vadd.f32 %v845, %v281
      %v878 = vadd.f32 %v846, %v283
      %v879 = vadd.f32 %v847, %v281
      %v880 = vadd.f32 %v848, %v283
      %v881 = vadd.f32 %v849, %v281
      %v882 = vadd.f32 %v850, %v283
      %v883 = vadd.f32 %v851, %v281
      %v884 = vadd.f32 %v852, %v283
      %v885 = vadd.f32 %v853, %v281
      %v886 = vadd.f32 %v854, %v283
      %v887 = vadd.f32 %v855, %v281
      %v888 = vadd.f32 %v856, %v283
      %v889 = vadd.f32 %v857, %v281
      %v890 = vadd.f32 %v858, %v283
      %v891 = vxor.u32 %v859, 2147483648
      %v892 = vxor.u32 %v860, 2147483648
      %v893 = vxor.u32 %v861, 2147483648
      %v894 = vxor.u32 %v862, 2147483648
      %v895 = vxor.u32 %v863, 2147483648
      %v896 = vxor.u32 %v864, 2147483648
      %v897 = vxor.u32 %v865, 2147483648
      %v898 = vxor.u32 %v866, 2147483648
      %v899 = vxor.u32 %v867, 2147483648
      %v900 = vxor.u32 %v868, 2147483648
      %v901 = vxor.u32 %v869, 2147483648
      %v902 = vxor.u32 %v870, 2147483648
      %v903 = vxor.u32 %v871, 2147483648
      %v904 = vxor.u32 %v872, 2147483648
      %v905 = vxor.u32 %v873, 2147483648
      %v906 = vxor.u32 %v874, 2147483648
      %v907 = vxor.u32 %v875, 2147483648
      %v908 = vxor.u32 %v876, 2147483648
      %v909 = vxor.u32 %v877, 2147483648
      %v910 = vxor.u32 %v878, 2147483648
      %v911 = vxor.u32 %v879, 2147483648
      %v912 = vxor.u32 %v880, 2147483648
      %v913 = vxor.u32 %v881, 2147483648
      %v914 = vxor.u32 %v882, 2147483648
      %v915 = vxor.u32 %v883, 2147483648
      %v916 = vxor.u32 %v884, 2147483648
      %v917 = vxor.u32 %v885, 2147483648
      %v918 = vxor.u32 %v886, 2147483648
      %v919 = vxor.u32 %v887, 2147483648
      %v920 = vxor.u32 %v888, 2147483648
      %v921 = vxor.u32 %v889, 2147483648
      %v922 = vxor.u32 %v890, 2147483648
      %v923 = vmul.f32 %v891, 1.442695
      %v924 = vpow.pop %v923
      %v925 = vmul.f32 %v892, 1.442695
      %v926 = vpow.pop %v925
      %v927 = vmul.f32 %v893, 1.442695
      %v928 = vpow.pop %v927
      %v929 = vmul.f32 %v894, 1.442695
      %v930 = vpow.pop %v929
      %v931 = vmul.f32 %v895, 1.442695
      %v932 = vpow.pop %v931
      %v933 = vmul.f32 %v896, 1.442695
      %v934 = vpow.pop %v933
      %v935 = vmul.f32 %v897, 1.442695
      %v936 = vpow.pop %v935
      %v937 = vmul.f32 %v898, 1.442695
      %v938 = vpow.pop %v937
      %v939 = vmul.f32 %v899, 1.442695
      %v940 = vpow.pop %v939
      %v941 = vmul.f32 %v900, 1.442695
      %v942 = vpow.pop %v941
      %v943 = vmul.f32 %v901, 1.442695
      %v944 = vpow.pop %v943
      %v945 = vmul.f32 %v902, 1.442695
      %v946 = vpow.pop %v945
      %v947 = vmul.f32 %v903, 1.442695
      %v948 = vpow.pop %v947
      %v949 = vmul.f32 %v904, 1.442695
      %v950 = vpow.pop %v949
      %v951 = vmul.f32 %v905, 1.442695
      %v952 = vpow.pop %v951
      %v953 = vmul.f32 %v906, 1.442695
      %v954 = vpow.pop %v953
      %v955 = vmul.f32 %v907, 1.442695
      %v956 = vpow.pop %v955
      %v957 = vmul.f32 %v908, 1.442695
      %v958 = vpow.pop %v957
      %v959 = vmul.f32 %v909, 1.442695
      %v960 = vpow.pop %v959
      %v961 = vmul.f32 %v910, 1.442695
      %v962 = vpow.pop %v961
      %v963 = vmul.f32 %v911, 1.442695
      %v964 = vpow.pop %v963
      %v965 = vmul.f32 %v912, 1.442695
      %v966 = vpow.pop %v965
      %v967 = vmul.f32 %v913, 1.442695
      %v968 = vpow.pop %v967
      %v969 = vmul.f32 %v914, 1.442695
      %v970 = vpow.pop %v969
      %v971 = vmul.f32 %v915, 1.442695
      %v972 = vpow.pop %v971
      %v973 = vmul.f32 %v916, 1.442695
      %v974 = vpow.pop %v973
      %v975 = vmul.f32 %v917, 1.442695
      %v976 = vpow.pop %v975
      %v977 = vmul.f32 %v918, 1.442695
      %v978 = vpow.pop %v977
      %v979 = vmul.f32 %v919, 1.442695
      %v980 = vpow.pop %v979
      %v981 = vmul.f32 %v920, 1.442695
      %v982 = vpow.pop %v981
      %v983 = vmul.f32 %v921, 1.442695
      %v984 = vpow.pop %v983
      %v985 = vmul.f32 %v922, 1.442695
      %v986 = vpow.pop %v985
      %v987 = vadd.f32 %v924, 1.0
      %v988 = vadd.f32 %v926, 1.0
      %v989 = vadd.f32 %v928, 1.0
      %v990 = vadd.f32 %v930, 1.0
      %v991 = vadd.f32 %v932, 1.0
      %v992 = vadd.f32 %v934, 1.0
      %v993 = vadd.f32 %v936, 1.0
      %v994 = vadd.f32 %v938, 1.0
      %v995 = vadd.f32 %v940, 1.0
      %v996 = vadd.f32 %v942, 1.0
      %v997 = vadd.f32 %v944, 1.0
      %v998 = vadd.f32 %v946, 1.0
      %v999 = vadd.f32 %v948, 1.0
      %v1000 = vadd.f32 %v950, 1.0
      %v1001 = vadd.f32 %v952, 1.0
      %v1002 = vadd.f32 %v954, 1.0
      %v1003 = vadd.f32 %v956, 1.0
      %v1004 = vadd.f32 %v958, 1.0
      %v1005 = vadd.f32 %v960, 1.0
      %v1006 = vadd.f32 %v962, 1.0
      %v1007 = vadd.f32 %v964, 1.0
      %v1008 = vadd.f32 %v966, 1.0
      %v1009 = vadd.f32 %v968, 1.0
      %v1010 = vadd.f32 %v970, 1.0
      %v1011 = vadd.f32 %v972, 1.0
      %v1012 = vadd.f32 %v974, 1.0
      %v1013 = vadd.f32 %v976, 1.0
      %v1014 = vadd.f32 %v978, 1.0
      %v1015 = vadd.f32 %v980, 1.0
      %v1016 = vadd.f32 %v982, 1.0
      %v1017 = vadd.f32 %v984, 1.0
      %v1018 = vadd.f32 %v986, 1.0
      %v1019 = vrcp.pop %v987
      %v1020 = vmul.f32 1.0, %v1019
      %v1021 = vrcp.pop %v988
      %v1022 = vmul.f32 1.0, %v1021
      %v1023 = vrcp.pop %v989
      %v1024 = vmul.f32 1.0, %v1023
      %v1025 = vrcp.pop %v990
      %v1026 = vmul.f32 1.0, %v1025
      %v1027 = vrcp.pop %v991
      %v1028 = vmul.f32 1.0, %v1027
      %v1029 = vrcp.pop %v992
      %v1030 = vmul.f32 1.0, %v1029
      %v1031 = vrcp.pop %v993
      %v1032 = vmul.f32 1.0, %v1031
      %v1033 = vrcp.pop %v994
      %v1034 = vmul.f32 1.0, %v1033
      %v1035 = vrcp.pop %v995
      %v1036 = vmul.f32 1.0, %v1035
      %v1037 = vrcp.pop %v996
      %v1038 = vmul.f32 1.0, %v1037
      %v1039 = vrcp.pop %v997
      %v1040 = vmul.f32 1.0, %v1039
      %v1041 = vrcp.pop %v998
      %v1042 = vmul.f32 1.0, %v1041
      %v1043 = vrcp.pop %v999
      %v1044 = vmul.f32 1.0, %v1043
      %v1045 = vrcp.pop %v1000
      %v1046 = vmul.f32 1.0, %v1045
      %v1047 = vrcp.pop %v1001
      %v1048 = vmul.f32 1.0, %v1047
      %v1049 = vrcp.pop %v1002
      %v1050 = vmul.f32 1.0, %v1049
      %v1051 = vrcp.pop %v1003
      %v1052 = vmul.f32 1.0, %v1051
      %v1053 = vrcp.pop %v1004
      %v1054 = vmul.f32 1.0, %v1053
      %v1055 = vrcp.pop %v1005
      %v1056 = vmul.f32 1.0, %v1055
      %v1057 = vrcp.pop %v1006
      %v1058 = vmul.f32 1.0, %v1057
      %v1059 = vrcp.pop %v1007
      %v1060 = vmul.f32 1.0, %v1059
      %v1061 = vrcp.pop %v1008
      %v1062 = vmul.f32 1.0, %v1061
      %v1063 = vrcp.pop %v1009
      %v1064 = vmul.f32 1.0, %v1063
      %v1065 = vrcp.pop %v1010
      %v1066 = vmul.f32 1.0, %v1065
      %v1067 = vrcp.pop %v1011
      %v1068 = vmul.f32 1.0, %v1067
      %v1069 = vrcp.pop %v1012
      %v1070 = vmul.f32 1.0, %v1069
      %v1071 = vrcp.pop %v1013
      %v1072 = vmul.f32 1.0, %v1071
      %v1073 = vrcp.pop %v1014
      %v1074 = vmul.f32 1.0, %v1073
      %v1075 = vrcp.pop %v1015
      %v1076 = vmul.f32 1.0, %v1075
      %v1077 = vrcp.pop %v1016
      %v1078 = vmul.f32 1.0, %v1077
      %v1079 = vrcp.pop %v1017
      %v1080 = vmul.f32 1.0, %v1079
      %v1081 = vrcp.pop %v1018
      %v1082 = vmul.f32 1.0, %v1081
      %v1083 = vlaneseq
      %v1084 = vshrl.u32 %v1083, 7
      %v1085 = vadd.s32 %v1084, 8
      %vm1086 = vcmp.lt.s32.totalorder %v1084, 12
      %vm1087 = vcmp.lt.s32.totalorder %v1085, 12
      %v1088 = vstv %s280
      %v1089 = vadd.s32 %v1088, 1
      %v1090 = vadd.s32 %v1088, 2
      %v1091 = vadd.s32 %v1088, 3
      %v1092 = vadd.s32 %v1088, 4
      %v1093 = vadd.s32 %v1088, 5
      %v1094 = vadd.s32 %v1088, 6
      %v1095 = vadd.s32 %v1088, 7
      %v1096 = vadd.s32 %v1088, 8
      %v1097 = vadd.s32 %v1088, 9
      %v1098 = vadd.s32 %v1088, 10
      %v1099 = vadd.s32 %v1088, 11
      %v1100 = vadd.s32 %v1088, 12
      %v1101 = vadd.s32 %v1088, 13
      %v1102 = vadd.s32 %v1088, 14
      %v1103 = vadd.s32 %v1088, 15
      %vm1104 = vcmp.lt.s32.totalorder %v1088, 12
      %vm1105 = vcmp.lt.s32.totalorder %v1089, 12
      %vm1106 = vcmp.lt.s32.totalorder %v1090, 12
      %vm1107 = vcmp.lt.s32.totalorder %v1091, 12
      %vm1108 = vcmp.lt.s32.totalorder %v1092, 12
      %vm1109 = vcmp.lt.s32.totalorder %v1093, 12
      %vm1110 = vcmp.lt.s32.totalorder %v1094, 12
      %vm1111 = vcmp.lt.s32.totalorder %v1095, 12
      %vm1112 = vcmp.lt.s32.totalorder %v1096, 12
      %vm1113 = vcmp.lt.s32.totalorder %v1097, 12
      %vm1114 = vcmp.lt.s32.totalorder %v1098, 12
      %vm1115 = vcmp.lt.s32.totalorder %v1099, 12
      %vm1116 = vcmp.lt.s32.totalorder %v1100, 12
      %vm1117 = vcmp.lt.s32.totalorder %v1101, 12
      %vm1118 = vcmp.lt.s32.totalorder %v1102, 12
      %vm1119 = vcmp.lt.s32.totalorder %v1103, 12
      %v1120 = vsel %vm1086, 1, 0
      %v1121 = vsel %vm1087, 1, 0
      %vm1122 = vcmp.eq.s32.totalorder %v1120, 1
      %vm1123 = vcmp.eq.s32.totalorder %v1121, 1
      %v1124 = vsel %vm1122, %v1020, 0.0
      %v1125 = vsel %vm1123, %v1022, 0.0
      %v1126 = vsel %vm1122, %v1024, 0.0
      %v1127 = vsel %vm1123, %v1026, 0.0
      %v1128 = vsel %vm1122, %v1028, 0.0
      %v1129 = vsel %vm1123, %v1030, 0.0
      %v1130 = vsel %vm1122, %v1032, 0.0
      %v1131 = vsel %vm1123, %v1034, 0.0
      %v1132 = vsel %vm1122, %v1036, 0.0
      %v1133 = vsel %vm1123, %v1038, 0.0
      %v1134 = vsel %vm1122, %v1040, 0.0
      %v1135 = vsel %vm1123, %v1042, 0.0
      %v1136 = vsel %vm1122, %v1044, 0.0
      %v1137 = vsel %vm1123, %v1046, 0.0
      %v1138 = vsel %vm1122, %v1048, 0.0
      %v1139 = vsel %vm1123, %v1050, 0.0
      %v1140 = vsel %vm1122, %v1052, 0.0
      %v1141 = vsel %vm1123, %v1054, 0.0
      %v1142 = vsel %vm1122, %v1056, 0.0
      %v1143 = vsel %vm1123, %v1058, 0.0
      %v1144 = vsel %vm1122, %v1060, 0.0
      %v1145 = vsel %vm1123, %v1062, 0.0
      %v1146 = vsel %vm1122, %v1064, 0.0
      %v1147 = vsel %vm1123, %v1066, 0.0
      %v1148 = vsel %vm1122, %v1068, 0.0
      %v1149 = vsel %vm1123, %v1070, 0.0
      %v1150 = vsel %vm1122, %v1072, 0.0
      %v1151 = vsel %vm1123, %v1074, 0.0
      %v1152 = vsel %vm1122, %v1076, 0.0
      %v1153 = vsel %vm1123, %v1078, 0.0
      %v1154 = vsel %vm1122, %v1080, 0.0
      %v1155 = vsel %vm1123, %v1082, 0.0
      %v1156 = vmul.f32 %v1124, %v282
      %v1157 = vmul.f32 %v1125, %v284
      %v1158 = vmul.f32 %v1126, %v282
      %v1159 = vmul.f32 %v1127, %v284
      %v1160 = vmul.f32 %v1128, %v282
      %v1161 = vmul.f32 %v1129, %v284
      %v1162 = vmul.f32 %v1130, %v282
      %v1163 = vmul.f32 %v1131, %v284
      %v1164 = vmul.f32 %v1132, %v282
      %v1165 = vmul.f32 %v1133, %v284
      %v1166 = vmul.f32 %v1134, %v282
      %v1167 = vmul.f32 %v1135, %v284
      %v1168 = vmul.f32 %v1136, %v282
      %v1169 = vmul.f32 %v1137, %v284
      %v1170 = vmul.f32 %v1138, %v282
      %v1171 = vmul.f32 %v1139, %v284
      %v1172 = vmul.f32 %v1140, %v282
      %v1173 = vmul.f32 %v1141, %v284
      %v1174 = vmul.f32 %v1142, %v282
      %v1175 = vmul.f32 %v1143, %v284
      %v1176 = vmul.f32 %v1144, %v282
      %v1177 = vmul.f32 %v1145, %v284
      %v1178 = vmul.f32 %v1146, %v282
      %v1179 = vmul.f32 %v1147, %v284
      %v1180 = vmul.f32 %v1148, %v282
      %v1181 = vmul.f32 %v1149, %v284
      %v1182 = vmul.f32 %v1150, %v282
      %v1183 = vmul.f32 %v1151, %v284
      %v1184 = vmul.f32 %v1152, %v282
      %v1185 = vmul.f32 %v1153, %v284
      %v1186 = vmul.f32 %v1154, %v282
      %v1187 = vmul.f32 %v1155, %v284
      %v1188 = vadd.f32 %v1156, %v1157
      %v1189 = vrot.slane %v1188, 4
      %v1190 = vadd.f32 %v1188, %v1189
      %v1191 = vrot.slane %v1190, 2
      %v1192 = vadd.f32 %v1190, %v1191
      %v1193 = vrot.slane %v1192, 1
      %v1194 = vadd.f32 %v1192, %v1193
      %v1195 = vadd.f32 %v1158, %v1159
      %v1196 = vrot.slane %v1195, 4
      %v1197 = vadd.f32 %v1195, %v1196
      %v1198 = vrot.slane %v1197, 2
      %v1199 = vadd.f32 %v1197, %v1198
      %v1200 = vrot.slane %v1199, 1
      %v1201 = vadd.f32 %v1199, %v1200
      %v1202 = vadd.f32 %v1160, %v1161
      %v1203 = vrot.slane %v1202, 4
      %v1204 = vadd.f32 %v1202, %v1203
      %v1205 = vrot.slane %v1204, 2
      %v1206 = vadd.f32 %v1204, %v1205
      %v1207 = vrot.slane %v1206, 1
      %v1208 = vadd.f32 %v1206, %v1207
      %v1209 = vadd.f32 %v1162, %v1163
      %v1210 = vrot.slane %v1209, 4
      %v1211 = vadd.f32 %v1209, %v1210
      %v1212 = vrot.slane %v1211, 2
      %v1213 = vadd.f32 %v1211, %v1212
      %v1214 = vrot.slane %v1213, 1
      %v1215 = vadd.f32 %v1213, %v1214
      %v1216 = vadd.f32 %v1164, %v1165
      %v1217 = vrot.slane %v1216, 4
      %v1218 = vadd.f32 %v1216, %v1217
      %v1219 = vrot.slane %v1218, 2
      %v1220 = vadd.f32 %v1218, %v1219
      %v1221 = vrot.slane %v1220, 1
      %v1222 = vadd.f32 %v1220, %v1221
      %v1223 = vadd.f32 %v1166, %v1167
      %v1224 = vrot.slane %v1223, 4
      %v1225 = vadd.f32 %v1223, %v1224
      %v1226 = vrot.slane %v1225, 2
      %v1227 = vadd.f32 %v1225, %v1226
      %v1228 = vrot.slane %v1227, 1
      %v1229 = vadd.f32 %v1227, %v1228
      %v1230 = vadd.f32 %v1168, %v1169
      %v1231 = vrot.slane %v1230, 4
      %v1232 = vadd.f32 %v1230, %v1231
      %v1233 = vrot.slane %v1232, 2
      %v1234 = vadd.f32 %v1232, %v1233
      %v1235 = vrot.slane %v1234, 1
      %v1236 = vadd.f32 %v1234, %v1235
      %v1237 = vadd.f32 %v1170, %v1171
      %v1238 = vrot.slane %v1237, 4
      %v1239 = vadd.f32 %v1237, %v1238
      %v1240 = vrot.slane %v1239, 2
      %v1241 = vadd.f32 %v1239, %v1240
      %v1242 = vrot.slane %v1241, 1
      %v1243 = vadd.f32 %v1241, %v1242
      %v1244 = vadd.f32 %v1172, %v1173
      %v1245 = vrot.slane %v1244, 4
      %v1246 = vadd.f32 %v1244, %v1245
      %v1247 = vrot.slane %v1246, 2
      %v1248 = vadd.f32 %v1246, %v1247
      %v1249 = vrot.slane %v1248, 1
      %v1250 = vadd.f32 %v1248, %v1249
      %v1251 = vadd.f32 %v1174, %v1175
      %v1252 = vrot.slane %v1251, 4
      %v1253 = vadd.f32 %v1251, %v1252
      %v1254 = vrot.slane %v1253, 2
      %v1255 = vadd.f32 %v1253, %v1254
      %v1256 = vrot.slane %v1255, 1
      %v1257 = vadd.f32 %v1255, %v1256
      %v1258 = vadd.f32 %v1176, %v1177
      %v1259 = vrot.slane %v1258, 4
      %v1260 = vadd.f32 %v1258, %v1259
      %v1261 = vrot.slane %v1260, 2
      %v1262 = vadd.f32 %v1260, %v1261
      %v1263 = vrot.slane %v1262, 1
      %v1264 = vadd.f32 %v1262, %v1263
      %v1265 = vadd.f32 %v1178, %v1179
      %v1266 = vrot.slane %v1265, 4
      %v1267 = vadd.f32 %v1265, %v1266
      %v1268 = vrot.slane %v1267, 2
      %v1269 = vadd.f32 %v1267, %v1268
      %v1270 = vrot.slane %v1269, 1
      %v1271 = vadd.f32 %v1269, %v1270
      %v1272 = vadd.f32 %v1180, %v1181
      %v1273 = vrot.slane %v1272, 4
      %v1274 = vadd.f32 %v1272, %v1273
      %v1275 = vrot.slane %v1274, 2
      %v1276 = vadd.f32 %v1274, %v1275
      %v1277 = vrot.slane %v1276, 1
      %v1278 = vadd.f32 %v1276, %v1277
      %v1279 = vadd.f32 %v1182, %v1183
      %v1280 = vrot.slane %v1279, 4
      %v1281 = vadd.f32 %v1279, %v1280
      %v1282 = vrot.slane %v1281, 2
      %v1283 = vadd.f32 %v1281, %v1282
      %v1284 = vrot.slane %v1283, 1
      %v1285 = vadd.f32 %v1283, %v1284
      %v1286 = vadd.f32 %v1184, %v1185
      %v1287 = vrot.slane %v1286, 4
      %v1288 = vadd.f32 %v1286, %v1287
      %v1289 = vrot.slane %v1288, 2
      %v1290 = vadd.f32 %v1288, %v1289
      %v1291 = vrot.slane %v1290, 1
      %v1292 = vadd.f32 %v1290, %v1291
      %v1293 = vadd.f32 %v1186, %v1187
      %v1294 = vrot.slane %v1293, 4
      %v1295 = vadd.f32 %v1293, %v1294
      %v1296 = vrot.slane %v1295, 2
      %v1297 = vadd.f32 %v1295, %v1296
      %v1298 = vrot.slane %v1297, 1
      %v1299 = vadd.f32 %v1297, %v1298
      %v1300 = vadd.f32 %v1124, %v1125
      %v1301 = vrot.slane %v1300, 4
      %v1302 = vadd.f32 %v1300, %v1301
      %v1303 = vrot.slane %v1302, 2
      %v1304 = vadd.f32 %v1302, %v1303
      %v1305 = vrot.slane %v1304, 1
      %v1306 = vadd.f32 %v1304, %v1305
      %v1307 = vadd.f32 %v1126, %v1127
      %v1308 = vrot.slane %v1307, 4
      %v1309 = vadd.f32 %v1307, %v1308
      %v1310 = vrot.slane %v1309, 2
      %v1311 = vadd.f32 %v1309, %v1310
      %v1312 = vrot.slane %v1311, 1
      %v1313 = vadd.f32 %v1311, %v1312
      %v1314 = vadd.f32 %v1128, %v1129
      %v1315 = vrot.slane %v1314, 4
      %v1316 = vadd.f32 %v1314, %v1315
      %v1317 = vrot.slane %v1316, 2
      %v1318 = vadd.f32 %v1316, %v1317
      %v1319 = vrot.slane %v1318, 1
      %v1320 = vadd.f32 %v1318, %v1319
      %v1321 = vadd.f32 %v1130, %v1131
      %v1322 = vrot.slane %v1321, 4
      %v1323 = vadd.f32 %v1321, %v1322
      %v1324 = vrot.slane %v1323, 2
      %v1325 = vadd.f32 %v1323, %v1324
      %v1326 = vrot.slane %v1325, 1
      %v1327 = vadd.f32 %v1325, %v1326
      %v1328 = vadd.f32 %v1132, %v1133
      %v1329 = vrot.slane %v1328, 4
      %v1330 = vadd.f32 %v1328, %v1329
      %v1331 = vrot.slane %v1330, 2
      %v1332 = vadd.f32 %v1330, %v1331
      %v1333 = vrot.slane %v1332, 1
      %v1334 = vadd.f32 %v1332, %v1333
      %v1335 = vadd.f32 %v1134, %v1135
      %v1336 = vrot.slane %v1335, 4
      %v1337 = vadd.f32 %v1335, %v1336
      %v1338 = vrot.slane %v1337, 2
      %v1339 = vadd.f32 %v1337, %v1338
      %v1340 = vrot.slane %v1339, 1
      %v1341 = vadd.f32 %v1339, %v1340
      %v1342 = vadd.f32 %v1136, %v1137
      %v1343 = vrot.slane %v1342, 4
      %v1344 = vadd.f32 %v1342, %v1343
      %v1345 = vrot.slane %v1344, 2
      %v1346 = vadd.f32 %v1344, %v1345
      %v1347 = vrot.slane %v1346, 1
      %v1348 = vadd.f32 %v1346, %v1347
      %v1349 = vadd.f32 %v1138, %v1139
      %v1350 = vrot.slane %v1349, 4
      %v1351 = vadd.f32 %v1349, %v1350
      %v1352 = vrot.slane %v1351, 2
      %v1353 = vadd.f32 %v1351, %v1352
      %v1354 = vrot.slane %v1353, 1
      %v1355 = vadd.f32 %v1353, %v1354
      %v1356 = vadd.f32 %v1140, %v1141
      %v1357 = vrot.slane %v1356, 4
      %v1358 = vadd.f32 %v1356, %v1357
      %v1359 = vrot.slane %v1358, 2
      %v1360 = vadd.f32 %v1358, %v1359
      %v1361 = vrot.slane %v1360, 1
      %v1362 = vadd.f32 %v1360, %v1361
      %v1363 = vadd.f32 %v1142, %v1143
      %v1364 = vrot.slane %v1363, 4
      %v1365 = vadd.f32 %v1363, %v1364
      %v1366 = vrot.slane %v1365, 2
      %v1367 = vadd.f32 %v1365, %v1366
      %v1368 = vrot.slane %v1367, 1
      %v1369 = vadd.f32 %v1367, %v1368
      %v1370 = vadd.f32 %v1144, %v1145
      %v1371 = vrot.slane %v1370, 4
      %v1372 = vadd.f32 %v1370, %v1371
      %v1373 = vrot.slane %v1372, 2
      %v1374 = vadd.f32 %v1372, %v1373
      %v1375 = vrot.slane %v1374, 1
      %v1376 = vadd.f32 %v1374, %v1375
      %v1377 = vadd.f32 %v1146, %v1147
      %v1378 = vrot.slane %v1377, 4
      %v1379 = vadd.f32 %v1377, %v1378
      %v1380 = vrot.slane %v1379, 2
      %v1381 = vadd.f32 %v1379, %v1380
      %v1382 = vrot.slane %v1381, 1
      %v1383 = vadd.f32 %v1381, %v1382
      %v1384 = vadd.f32 %v1148, %v1149
      %v1385 = vrot.slane %v1384, 4
      %v1386 = vadd.f32 %v1384, %v1385
      %v1387 = vrot.slane %v1386, 2
      %v1388 = vadd.f32 %v1386, %v1387
      %v1389 = vrot.slane %v1388, 1
      %v1390 = vadd.f32 %v1388, %v1389
      %v1391 = vadd.f32 %v1150, %v1151
      %v1392 = vrot.slane %v1391, 4
      %v1393 = vadd.f32 %v1391, %v1392
      %v1394 = vrot.slane %v1393, 2
      %v1395 = vadd.f32 %v1393, %v1394
      %v1396 = vrot.slane %v1395, 1
      %v1397 = vadd.f32 %v1395, %v1396
      %v1398 = vadd.f32 %v1152, %v1153
      %v1399 = vrot.slane %v1398, 4
      %v1400 = vadd.f32 %v1398, %v1399
      %v1401 = vrot.slane %v1400, 2
      %v1402 = vadd.f32 %v1400, %v1401
      %v1403 = vrot.slane %v1402, 1
      %v1404 = vadd.f32 %v1402, %v1403
      %v1405 = vadd.f32 %v1154, %v1155
      %v1406 = vrot.slane %v1405, 4
      %v1407 = vadd.f32 %v1405, %v1406
      %v1408 = vrot.slane %v1407, 2
      %v1409 = vadd.f32 %v1407, %v1408
      %v1410 = vrot.slane %v1409, 1
      %v1411 = vadd.f32 %v1409, %v1410
      %v1412 = vadd.f32 %v1306, 1e-20
      %v1413 = vadd.f32 %v1313, 1e-20
      %v1414 = vadd.f32 %v1320, 1e-20
      %v1415 = vadd.f32 %v1327, 1e-20
      %v1416 = vadd.f32 %v1334, 1e-20
      %v1417 = vadd.f32 %v1341, 1e-20
      %v1418 = vadd.f32 %v1348, 1e-20
      %v1419 = vadd.f32 %v1355, 1e-20
      %v1420 = vadd.f32 %v1362, 1e-20
      %v1421 = vadd.f32 %v1369, 1e-20
      %v1422 = vadd.f32 %v1376, 1e-20
      %v1423 = vadd.f32 %v1383, 1e-20
      %v1424 = vadd.f32 %v1390, 1e-20
      %v1425 = vadd.f32 %v1397, 1e-20
      %v1426 = vadd.f32 %v1404, 1e-20
      %v1427 = vadd.f32 %v1411, 1e-20
      %v1428 = vrcp.pop %v1412
      %v1429 = vmul.f32 %v1194, %v1428
      %v1430 = vrcp.pop %v1413
      %v1431 = vmul.f32 %v1201, %v1430
      %v1432 = vrcp.pop %v1414
      %v1433 = vmul.f32 %v1208, %v1432
      %v1434 = vrcp.pop %v1415
      %v1435 = vmul.f32 %v1215, %v1434
      %v1436 = vrcp.pop %v1416
      %v1437 = vmul.f32 %v1222, %v1436
      %v1438 = vrcp.pop %v1417
      %v1439 = vmul.f32 %v1229, %v1438
      %v1440 = vrcp.pop %v1418
      %v1441 = vmul.f32 %v1236, %v1440
      %v1442 = vrcp.pop %v1419
      %v1443 = vmul.f32 %v1243, %v1442
      %v1444 = vrcp.pop %v1420
      %v1445 = vmul.f32 %v1250, %v1444
      %v1446 = vrcp.pop %v1421
      %v1447 = vmul.f32 %v1257, %v1446
      %v1448 = vrcp.pop %v1422
      %v1449 = vmul.f32 %v1264, %v1448
      %v1450 = vrcp.pop %v1423
      %v1451 = vmul.f32 %v1271, %v1450
      %v1452 = vrcp.pop %v1424
      %v1453 = vmul.f32 %v1278, %v1452
      %v1454 = vrcp.pop %v1425
      %v1455 = vmul.f32 %v1285, %v1454
      %v1456 = vrcp.pop %v1426
      %v1457 = vmul.f32 %v1292, %v1456
      %v1458 = vrcp.pop %v1427
      %v1459 = vmul.f32 %v1299, %v1458
      %vm1476 = vcmask 1041409
      %v1477 = vsel %vm1476, %v1431, %v1429
      %vm1478 = vcmask 1042434
      %v1479 = vsel %vm1478, %v1433, %v1477
      %vm1480 = vcmask 1043459
      %v1481 = vsel %vm1480, %v1435, %v1479
      %vm1482 = vcmask 1044484
      %v1483 = vsel %vm1482, %v1437, %v1481
      %vm1484 = vcmask 1045509
      %v1485 = vsel %vm1484, %v1439, %v1483
      %vm1486 = vcmask 1046534
      %v1487 = vsel %vm1486, %v1441, %v1485
      %vm1488 = vcmask 1047559
      %v1489 = vsel %vm1488, %v1443, %v1487
      %v1490 = vsel %vm1476, %v1447, %v1445
      %v1491 = vsel %vm1478, %v1449, %v1490
      %v1492 = vsel %vm1480, %v1451, %v1491
      %v1493 = vsel %vm1482, %v1453, %v1492
      %v1494 = vsel %vm1484, %v1455, %v1493
      %v1495 = vsel %vm1486, %v1457, %v1494
      %v1496 = vsel %vm1488, %v1459, %v1495
      %v1499 = vadd.f32 %v291, %v1489
      %v1500 = vadd.f32 %v293, %v1496
      %1501 = vst [vmem:[%s270] sm:$0xff] %v1499
      %1502 = vst [vmem:[%s270 + $0x8] sm:$0xff] %v1500
      %v1503 = vsel %vm1104, 1, 0
      %v1504 = vsel %vm1105, 1, 0
      %v1505 = vsel %vm1106, 1, 0
      %v1506 = vsel %vm1107, 1, 0
      %v1507 = vsel %vm1108, 1, 0
      %v1508 = vsel %vm1109, 1, 0
      %v1509 = vsel %vm1110, 1, 0
      %v1510 = vsel %vm1111, 1, 0
      %v1511 = vsel %vm1112, 1, 0
      %v1512 = vsel %vm1113, 1, 0
      %v1513 = vsel %vm1114, 1, 0
      %v1514 = vsel %vm1115, 1, 0
      %v1515 = vsel %vm1116, 1, 0
      %v1516 = vsel %vm1117, 1, 0
      %v1517 = vsel %vm1118, 1, 0
      %v1518 = vsel %vm1119, 1, 0
      %vm1519 = vcmp.eq.s32.totalorder %v1503, 1
      %vm1520 = vcmp.eq.s32.totalorder %v1504, 1
      %vm1521 = vcmp.eq.s32.totalorder %v1505, 1
      %vm1522 = vcmp.eq.s32.totalorder %v1506, 1
      %vm1523 = vcmp.eq.s32.totalorder %v1507, 1
      %vm1524 = vcmp.eq.s32.totalorder %v1508, 1
      %vm1525 = vcmp.eq.s32.totalorder %v1509, 1
      %vm1526 = vcmp.eq.s32.totalorder %v1510, 1
      %vm1527 = vcmp.eq.s32.totalorder %v1511, 1
      %vm1528 = vcmp.eq.s32.totalorder %v1512, 1
      %vm1529 = vcmp.eq.s32.totalorder %v1513, 1
      %vm1530 = vcmp.eq.s32.totalorder %v1514, 1
      %vm1531 = vcmp.eq.s32.totalorder %v1515, 1
      %vm1532 = vcmp.eq.s32.totalorder %v1516, 1
      %vm1533 = vcmp.eq.s32.totalorder %v1517, 1
      %vm1534 = vcmp.eq.s32.totalorder %v1518, 1
      %vm1535 = vmand %vm1519, %vm1122
      %vm1536 = vmand %vm1519, %vm1123
      %vm1537 = vmand %vm1520, %vm1122
      %vm1538 = vmand %vm1520, %vm1123
      %vm1539 = vmand %vm1521, %vm1122
      %vm1540 = vmand %vm1521, %vm1123
      %vm1541 = vmand %vm1522, %vm1122
      %vm1542 = vmand %vm1522, %vm1123
      %vm1543 = vmand %vm1523, %vm1122
      %vm1544 = vmand %vm1523, %vm1123
      %vm1545 = vmand %vm1524, %vm1122
      %vm1546 = vmand %vm1524, %vm1123
      %vm1547 = vmand %vm1525, %vm1122
      %vm1548 = vmand %vm1525, %vm1123
      %vm1549 = vmand %vm1526, %vm1122
      %vm1550 = vmand %vm1526, %vm1123
      %vm1551 = vmand %vm1527, %vm1122
      %vm1552 = vmand %vm1527, %vm1123
      %vm1553 = vmand %vm1528, %vm1122
      %vm1554 = vmand %vm1528, %vm1123
      %vm1555 = vmand %vm1529, %vm1122
      %vm1556 = vmand %vm1529, %vm1123
      %vm1557 = vmand %vm1530, %vm1122
      %vm1558 = vmand %vm1530, %vm1123
      %vm1559 = vmand %vm1531, %vm1122
      %vm1560 = vmand %vm1531, %vm1123
      %vm1561 = vmand %vm1532, %vm1122
      %vm1562 = vmand %vm1532, %vm1123
      %vm1563 = vmand %vm1533, %vm1122
      %vm1564 = vmand %vm1533, %vm1123
      %vm1565 = vmand %vm1534, %vm1122
      %vm1566 = vmand %vm1534, %vm1123
      %v1567 = vsel %vm1535, 1, 0
      %v1568 = vsel %vm1536, 1, 0
      %v1569 = vsel %vm1537, 1, 0
      %v1570 = vsel %vm1538, 1, 0
      %v1571 = vsel %vm1539, 1, 0
      %v1572 = vsel %vm1540, 1, 0
      %v1573 = vsel %vm1541, 1, 0
      %v1574 = vsel %vm1542, 1, 0
      %v1575 = vsel %vm1543, 1, 0
      %v1576 = vsel %vm1544, 1, 0
      %v1577 = vsel %vm1545, 1, 0
      %v1578 = vsel %vm1546, 1, 0
      %v1579 = vsel %vm1547, 1, 0
      %v1580 = vsel %vm1548, 1, 0
      %v1581 = vsel %vm1549, 1, 0
      %v1582 = vsel %vm1550, 1, 0
      %v1583 = vsel %vm1551, 1, 0
      %v1584 = vsel %vm1552, 1, 0
      %v1585 = vsel %vm1553, 1, 0
      %v1586 = vsel %vm1554, 1, 0
      %v1587 = vsel %vm1555, 1, 0
      %v1588 = vsel %vm1556, 1, 0
      %v1589 = vsel %vm1557, 1, 0
      %v1590 = vsel %vm1558, 1, 0
      %v1591 = vsel %vm1559, 1, 0
      %v1592 = vsel %vm1560, 1, 0
      %v1593 = vsel %vm1561, 1, 0
      %v1594 = vsel %vm1562, 1, 0
      %v1595 = vsel %vm1563, 1, 0
      %v1596 = vsel %vm1564, 1, 0
      %v1597 = vsel %vm1565, 1, 0
      %v1598 = vsel %vm1566, 1, 0
      %vm1599 = vcmp.eq.s32.totalorder %v1567, 1
      %vm1600 = vcmp.eq.s32.totalorder %v1568, 1
      %vm1601 = vcmp.eq.s32.totalorder %v1569, 1
      %vm1602 = vcmp.eq.s32.totalorder %v1570, 1
      %vm1603 = vcmp.eq.s32.totalorder %v1571, 1
      %vm1604 = vcmp.eq.s32.totalorder %v1572, 1
      %vm1605 = vcmp.eq.s32.totalorder %v1573, 1
      %vm1606 = vcmp.eq.s32.totalorder %v1574, 1
      %vm1607 = vcmp.eq.s32.totalorder %v1575, 1
      %vm1608 = vcmp.eq.s32.totalorder %v1576, 1
      %vm1609 = vcmp.eq.s32.totalorder %v1577, 1
      %vm1610 = vcmp.eq.s32.totalorder %v1578, 1
      %vm1611 = vcmp.eq.s32.totalorder %v1579, 1
      %vm1612 = vcmp.eq.s32.totalorder %v1580, 1
      %vm1613 = vcmp.eq.s32.totalorder %v1581, 1
      %vm1614 = vcmp.eq.s32.totalorder %v1582, 1
      %vm1615 = vcmp.eq.s32.totalorder %v1583, 1
      %vm1616 = vcmp.eq.s32.totalorder %v1584, 1
      %vm1617 = vcmp.eq.s32.totalorder %v1585, 1
      %vm1618 = vcmp.eq.s32.totalorder %v1586, 1
      %vm1619 = vcmp.eq.s32.totalorder %v1587, 1
      %vm1620 = vcmp.eq.s32.totalorder %v1588, 1
      %vm1621 = vcmp.eq.s32.totalorder %v1589, 1
      %vm1622 = vcmp.eq.s32.totalorder %v1590, 1
      %vm1623 = vcmp.eq.s32.totalorder %v1591, 1
      %vm1624 = vcmp.eq.s32.totalorder %v1592, 1
      %vm1625 = vcmp.eq.s32.totalorder %v1593, 1
      %vm1626 = vcmp.eq.s32.totalorder %v1594, 1
      %vm1627 = vcmp.eq.s32.totalorder %v1595, 1
      %vm1628 = vcmp.eq.s32.totalorder %v1596, 1
      %vm1629 = vcmp.eq.s32.totalorder %v1597, 1
      %vm1630 = vcmp.eq.s32.totalorder %v1598, 1
      %v1631 = vsel %vm1599, %v859, 0.0
      %v1632 = vsel %vm1600, %v860, 0.0
      %v1633 = vsel %vm1601, %v861, 0.0
      %v1634 = vsel %vm1602, %v862, 0.0
      %v1635 = vsel %vm1603, %v863, 0.0
      %v1636 = vsel %vm1604, %v864, 0.0
      %v1637 = vsel %vm1605, %v865, 0.0
      %v1638 = vsel %vm1606, %v866, 0.0
      %v1639 = vsel %vm1607, %v867, 0.0
      %v1640 = vsel %vm1608, %v868, 0.0
      %v1641 = vsel %vm1609, %v869, 0.0
      %v1642 = vsel %vm1610, %v870, 0.0
      %v1643 = vsel %vm1611, %v871, 0.0
      %v1644 = vsel %vm1612, %v872, 0.0
      %v1645 = vsel %vm1613, %v873, 0.0
      %v1646 = vsel %vm1614, %v874, 0.0
      %v1647 = vsel %vm1615, %v875, 0.0
      %v1648 = vsel %vm1616, %v876, 0.0
      %v1649 = vsel %vm1617, %v877, 0.0
      %v1650 = vsel %vm1618, %v878, 0.0
      %v1651 = vsel %vm1619, %v879, 0.0
      %v1652 = vsel %vm1620, %v880, 0.0
      %v1653 = vsel %vm1621, %v881, 0.0
      %v1654 = vsel %vm1622, %v882, 0.0
      %v1655 = vsel %vm1623, %v883, 0.0
      %v1656 = vsel %vm1624, %v884, 0.0
      %v1657 = vsel %vm1625, %v885, 0.0
      %v1658 = vsel %vm1626, %v886, 0.0
      %v1659 = vsel %vm1627, %v887, 0.0
      %v1660 = vsel %vm1628, %v888, 0.0
      %v1661 = vsel %vm1629, %v889, 0.0
      %v1662 = vsel %vm1630, %v890, 0.0
      %v1663 = vadd.s32 %v1084, %v1088
      %v1664 = vadd.s32 %v1085, %v1088
      %vm1665 = vcmp.lt.s32.totalorder %v1663, 12
      %vm1666 = vcmp.lt.s32.totalorder %v1664, 12
      %v1667 = vsel %vm1665, 1, 0
      %v1668 = vsel %vm1666, 1, 0
      %vm1669 = vcmp.eq.s32.totalorder %v1667, 1
      %vm1670 = vcmp.eq.s32.totalorder %v1668, 1
      %v1671 = vsel %vm1669, %v1499, 0.0
      %v1672 = vsel %vm1670, %v1500, 0.0
      %1673 = vmatprep.subr.mxu0 0.0
      %1674 = vmatpush1.msra.mxu0 %v1646
      %1675 = vmatprep.subr.mxu0 0.0
      %1676 = vmatpush1.msra.mxu0 %v1645
      %1677 = vmatprep.subr.mxu0 0.0
      %1678 = vmatpush1.msra.mxu0 %v1644
      %1679 = vmatprep.subr.mxu0 0.0
      %1680 = vmatpush1.msra.mxu0 %v1643
      %1681 = vmatprep.subr.mxu0 0.0
      %1682 = vmatpush1.msra.mxu0 %v1642
      %1683 = vmatprep.subr.mxu0 0.0
      %1684 = vmatpush1.msra.mxu0 %v1641
      %1685 = vmatprep.subr.mxu0 0.0
      %1686 = vmatpush1.msra.mxu0 %v1640
      %1687 = vmatprep.subr.mxu0 0.0
      %1688 = vmatpush1.msra.mxu0 %v1639
      %1689 = vmatprep.subr.mxu0 0.0
      %1690 = vmatpush1.msra.mxu0 %v1638
      %1691 = vmatprep.subr.mxu0 0.0
      %1692 = vmatpush1.msra.mxu0 %v1637
      %1693 = vmatprep.subr.mxu0 0.0
      %1694 = vmatpush1.msra.mxu0 %v1636
      %1695 = vmatprep.subr.mxu0 0.0
      %1696 = vmatpush1.msra.mxu0 %v1635
      %1697 = vmatprep.subr.mxu0 0.0
      %1698 = vmatpush1.msra.mxu0 %v1634
      %1699 = vmatprep.subr.mxu0 0.0
      %1700 = vmatpush1.msra.mxu0 %v1633
      %1701 = vmatprep.subr.mxu0 0.0
      %1702 = vmatpush1.msra.mxu0 %v1632
      %1703 = vmatprep.subr.mxu0 0.0
      %1704 = vmatpush1.msra.mxu0 %v1631
      %1705 = vmatprep.subr.mxu0 0.0
      %1706 = vmatpush2.msra.mxu0 %v1662
      %1707 = vmatprep.subr.mxu0 0.0
      %1708 = vmatpush2.msra.mxu0 %v1661
      %1709 = vmatprep.subr.mxu0 0.0
      %1710 = vmatpush2.msra.mxu0 %v1660
      %1711 = vmatprep.subr.mxu0 0.0
      %1712 = vmatpush2.msra.mxu0 %v1659
      %1713 = vmatprep.subr.mxu0 0.0
      %1714 = vmatpush2.msra.mxu0 %v1658
      %1715 = vmatprep.subr.mxu0 0.0
      %1716 = vmatpush2.msra.mxu0 %v1657
      %1717 = vmatprep.subr.mxu0 0.0
      %1718 = vmatpush2.msra.mxu0 %v1656
      %1719 = vmatprep.subr.mxu0 0.0
      %1720 = vmatpush2.msra.mxu0 %v1655
      %1721 = vmatprep.subr.mxu0 0.0
      %1722 = vmatpush2.msra.mxu0 %v1654
      %1723 = vmatprep.subr.mxu0 0.0
      %1724 = vmatpush2.msra.mxu0 %v1653
      %1725 = vmatprep.subr.mxu0 0.0
      %1726 = vmatpush2.msra.mxu0 %v1652
      %1727 = vmatprep.subr.mxu0 0.0
      %1728 = vmatpush2.msra.mxu0 %v1651
      %1729 = vmatprep.subr.mxu0 0.0
      %1730 = vmatpush2.msra.mxu0 %v1650
      %1731 = vmatprep.subr.mxu0 0.0
      %1732 = vmatpush2.msra.mxu0 %v1649
      %1733 = vmatprep.subr.mxu0 0.0
      %1734 = vmatpush2.msra.mxu0 %v1648
      %1735 = vmatprep.subr.mxu0 0.0
      %1736 = vmatpush2.msra.mxu0 %v1647
      %1737 = vmatprep.mubr.f32.mxu0 1.0
      %1738 = vmatmul.mubr.f32.gmra.mxu0 1.0
      %v1739 = vpop.f32.mrf.mxu0
      %v1740 = vadd.f32 0.0, %v1739
      %v1741 = vpop.f32.mrf.mxu0
      %1742 = vdwg.mxu0
      %v1743 = vmul.f32 %v1631, %v1631
      %v1744 = vmul.f32 %v1632, %v1632
      %v1745 = vmul.f32 %v1633, %v1633
      %v1746 = vmul.f32 %v1634, %v1634
      %v1747 = vmul.f32 %v1635, %v1635
      %v1748 = vmul.f32 %v1636, %v1636
      %v1749 = vmul.f32 %v1637, %v1637
      %v1750 = vmul.f32 %v1638, %v1638
      %v1751 = vmul.f32 %v1639, %v1639
      %v1752 = vmul.f32 %v1640, %v1640
      %v1753 = vmul.f32 %v1641, %v1641
      %v1754 = vmul.f32 %v1642, %v1642
      %v1755 = vmul.f32 %v1643, %v1643
      %v1756 = vmul.f32 %v1644, %v1644
      %v1757 = vmul.f32 %v1645, %v1645
      %v1758 = vmul.f32 %v1646, %v1646
      %v1759 = vmul.f32 %v1647, %v1647
      %v1760 = vmul.f32 %v1648, %v1648
      %v1761 = vmul.f32 %v1649, %v1649
      %v1762 = vmul.f32 %v1650, %v1650
      %v1763 = vmul.f32 %v1651, %v1651
      %v1764 = vmul.f32 %v1652, %v1652
      %v1765 = vmul.f32 %v1653, %v1653
      %v1766 = vmul.f32 %v1654, %v1654
      %v1767 = vmul.f32 %v1655, %v1655
      %v1768 = vmul.f32 %v1656, %v1656
      %v1769 = vmul.f32 %v1657, %v1657
      %v1770 = vmul.f32 %v1658, %v1658
      %v1771 = vmul.f32 %v1659, %v1659
      %v1772 = vmul.f32 %v1660, %v1660
      %v1773 = vmul.f32 %v1661, %v1661
      %v1774 = vmul.f32 %v1662, %v1662
      %1775 = vmatprep.subr.mxu0 0.0
      %1776 = vmatpush1.msra.mxu0 %v1758
      %1777 = vmatprep.subr.mxu0 0.0
      %1778 = vmatpush1.msra.mxu0 %v1757
      %1779 = vmatprep.subr.mxu0 0.0
      %1780 = vmatpush1.msra.mxu0 %v1756
      %1781 = vmatprep.subr.mxu0 0.0
      %1782 = vmatpush1.msra.mxu0 %v1755
      %1783 = vmatprep.subr.mxu0 0.0
      %1784 = vmatpush1.msra.mxu0 %v1754
      %1785 = vmatprep.subr.mxu0 0.0
      %1786 = vmatpush1.msra.mxu0 %v1753
      %1787 = vmatprep.subr.mxu0 0.0
      %1788 = vmatpush1.msra.mxu0 %v1752
      %1789 = vmatprep.subr.mxu0 0.0
      %1790 = vmatpush1.msra.mxu0 %v1751
      %1791 = vmatprep.subr.mxu0 0.0
      %1792 = vmatpush1.msra.mxu0 %v1750
      %1793 = vmatprep.subr.mxu0 0.0
      %1794 = vmatpush1.msra.mxu0 %v1749
      %1795 = vmatprep.subr.mxu0 0.0
      %1796 = vmatpush1.msra.mxu0 %v1748
      %1797 = vmatprep.subr.mxu0 0.0
      %1798 = vmatpush1.msra.mxu0 %v1747
      %1799 = vmatprep.subr.mxu0 0.0
      %1800 = vmatpush1.msra.mxu0 %v1746
      %1801 = vmatprep.subr.mxu0 0.0
      %1802 = vmatpush1.msra.mxu0 %v1745
      %1803 = vmatprep.subr.mxu0 0.0
      %1804 = vmatpush1.msra.mxu0 %v1744
      %1805 = vmatprep.subr.mxu0 0.0
      %1806 = vmatpush1.msra.mxu0 %v1743
      %1807 = vmatprep.subr.mxu0 0.0
      %1808 = vmatpush2.msra.mxu0 %v1774
      %1809 = vmatprep.subr.mxu0 0.0
      %1810 = vmatpush2.msra.mxu0 %v1773
      %1811 = vmatprep.subr.mxu0 0.0
      %1812 = vmatpush2.msra.mxu0 %v1772
      %1813 = vmatprep.subr.mxu0 0.0
      %1814 = vmatpush2.msra.mxu0 %v1771
      %1815 = vmatprep.subr.mxu0 0.0
      %1816 = vmatpush2.msra.mxu0 %v1770
      %1817 = vmatprep.subr.mxu0 0.0
      %1818 = vmatpush2.msra.mxu0 %v1769
      %1819 = vmatprep.subr.mxu0 0.0
      %1820 = vmatpush2.msra.mxu0 %v1768
      %1821 = vmatprep.subr.mxu0 0.0
      %1822 = vmatpush2.msra.mxu0 %v1767
      %1823 = vmatprep.subr.mxu0 0.0
      %1824 = vmatpush2.msra.mxu0 %v1766
      %1825 = vmatprep.subr.mxu0 0.0
      %1826 = vmatpush2.msra.mxu0 %v1765
      %1827 = vmatprep.subr.mxu0 0.0
      %1828 = vmatpush2.msra.mxu0 %v1764
      %1829 = vmatprep.subr.mxu0 0.0
      %1830 = vmatpush2.msra.mxu0 %v1763
      %1831 = vmatprep.subr.mxu0 0.0
      %1832 = vmatpush2.msra.mxu0 %v1762
      %1833 = vmatprep.subr.mxu0 0.0
      %1834 = vmatpush2.msra.mxu0 %v1761
      %1835 = vmatprep.subr.mxu0 0.0
      %1836 = vmatpush2.msra.mxu0 %v1760
      %1837 = vmatprep.subr.mxu0 0.0
      %1838 = vmatpush2.msra.mxu0 %v1759
      %1839 = vmatprep.mubr.f32.mxu0 1.0
      %1840 = vmatmul.mubr.f32.gmra.mxu0 1.0
      %v1841 = vpop.f32.mrf.mxu0
      %v1842 = vadd.f32 0.0, %v1841
      %v1843 = vpop.f32.mrf.mxu0
      %1844 = vdwg.mxu0
      %v1845 = vadd.f32 %v1671, %v1672
      %v1846 = vrot.slane %v1845, 4
      %v1847 = vadd.f32 %v1845, %v1846
      %v1848 = vrot.slane %v1847, 2
      %v1849 = vadd.f32 %v1847, %v1848
      %v1850 = vrot.slane %v1849, 1
      %v1851 = vadd.f32 %v1849, %v1850
      %v1852 = vmul.f32 %v1671, %v1671
      %v1853 = vmul.f32 %v1672, %v1672
      %v1854 = vadd.f32 %v1852, %v1853
      %v1855 = vrot.slane %v1854, 4
      %v1856 = vadd.f32 %v1854, %v1855
      %v1857 = vrot.slane %v1856, 2
      %v1858 = vadd.f32 %v1856, %v1857
      %v1859 = vrot.slane %v1858, 1
      %v1860 = vadd.f32 %v1858, %v1859
      %v1862 = vrot.slane %v1842, 7
      %vm1864 = vcmask 1040384
      %v1865 = vsel %vm1864, %v1740, %v1862
      %vm1866 = vcmask 1041408
      %v1867 = vsel %vm1866, %v1865, %v1851
      %vm1868 = vcmask 1042432
      %v1869 = vsel %vm1868, %v1867, %v1860
      %1870 = vst [vmem:[%s278] sm:$0xf] %v1869
      %s1871 = smul.u32 2, %s21
      %p1872 = scmp.lt.s32.totalorder %s20, 1
      %s1873 = scalar_select %p1872, %s20, 1
      %p1874 = scmp.lt.s32.totalorder %s1871, 1
      %s1875 = scalar_select %p1874, %s1871, 1
      %s1876 = smul.addr %s1873, 2
      %s1877 = sadd.s32 %s1875, %s1876
      %s1878 = smul.addr %s1877, 8
      %s1879 = scalar_lea.vmem %s3, %s1878
      %p1880 = scmp.lt.s32.totalorder %s20, 1
      %s1881 = scalar_select %p1880, %s20, 1
      %p1882 = scmp.lt.s32.totalorder %s21, 0
      %s1883 = scalar_select %p1882, %s21, 0
      %s1884 = sadd.s32 %s1883, %s1881
      %s1885 = smul.addr %s1884, 4
      %s1886 = scalar_lea.vmem %s4, %s1885
      // Predicated region
      $region33: #{_lambda_.6} parent=31 // pred_check
        %p1887 = pneg %p123
      $region34: #{_lambda_.6} parent=31 // pred_check_branch
        %1889 = sbr.rel (%p1887) target = $region36
      $region35: #{_lambda_.6} parent=31 // pred_region
        %s1890 = smul.u32 2, %s21
      $region36: #{_lambda_.6} parent=31 // pred_fallthru
        _
      // Predicated region
      $region37: #{_lambda_.6} parent=31 // pred_check
        %p1891 = pneg %p151
      $region38: #{_lambda_.6} parent=31 // pred_check_branch
        %1893 = sbr.rel (%p1891) target = $region40
      $region39: #{_lambda_.6} parent=31 // pred_region
        _
      $region40: #{_lambda_.6} parent=31 // pred_fallthru
        _
    $region32: #{_lambda_.6} parent=5 // pred_fallthru
      _
    %p1894 = scmp.le.s32.totalorder 2, %s11
    // Predicated region
    $region41: #{_lambda_.6} parent=5 // pred_check
      %p1895 = pneg %p1894
    $region42: #{_lambda_.6} parent=5 // pred_check_branch
      %1897 = sbr.rel (%p1895) target = $region44
    $region43: #{_lambda_.6} parent=5 // pred_region
      %s1898 = ssub.s32 %s11, 2
      // Predicated region
      $region45: #{_lambda_.6} parent=43 // pred_check
        %p1899 = pneg %p129
      $region46: #{_lambda_.6} parent=43 // pred_check_branch
        %1901 = sbr.rel (%p1899) target = $region48
      $region47: #{_lambda_.6} parent=43 // pred_region
        %s1902 = smul.u32 2, %s23
        %p1903 = scmp.lt.s32.totalorder %s22, 1
        %s1904 = scalar_select %p1903, %s22, 1
        %p1905 = scmp.lt.s32.totalorder %s1902, 1
        %s1906 = scalar_select %p1905, %s1902, 1
        %s1907 = smul.addr %s1904, 2
        %s1908 = sadd.s32 %s1906, %s1907
        %s1909 = smul.addr %s1908, 8
        %s1910 = scalar_lea.vmem %s3, %s1909
      $region48: #{_lambda_.6} parent=43 // pred_fallthru
        _
      // Predicated region
      $region49: #{_lambda_.6} parent=43 // pred_check
        %p1911 = pneg %p157
      $region50: #{_lambda_.6} parent=43 // pred_check_branch
        %1913 = sbr.rel (%p1911) target = $region52
      $region51: #{_lambda_.6} parent=43 // pred_region
        %p1914 = scmp.lt.s32.totalorder %s22, 1
        %s1915 = scalar_select %p1914, %s22, 1
        %p1916 = scmp.lt.s32.totalorder %s23, 0
        %s1917 = scalar_select %p1916, %s23, 0
        %s1918 = sadd.s32 %s1917, %s1915
        %s1919 = smul.addr %s1918, 4
        %s1920 = scalar_lea.vmem %s4, %s1919
      $region52: #{_lambda_.6} parent=43 // pred_fallthru
        _
    $region44: #{_lambda_.6} parent=5 // pred_fallthru
      _
  $region6: #{_lambda_.6} parent=0 // loop_footer
    %s15 = sadd.s32 1, %s11
  $region7: #{_lambda_.6} parent=0 // loop_footer_branch
    %10 = sbr.rel target = $region3
  $region8: #{_lambda_.6} parent=0 // loop_exit
    _

// kernel: _lambda_.10
$region0: #{_lambda_.10}
  #allocation0 [shape = 'u32[]', space=smem, size = 0x4, offset = 0x4, fixed_abs, tag = 'smem constant byte address 0x4 - core index']
  #allocation1 [shape = 'u32[144,128]{1,0:T(1,128)}', space=vmem, size = 0x12000, scoped, tag = 'internal scratch']
  %s0 = inlined_call_operand.vmem [shape: f32[2,16,512], index: 0, kind: input, shape index: {}]
  %s1 = inlined_call_operand.vmem [shape: bf16[2,16,16,128], index: 1, kind: input, shape index: {}]
  %s2 = inlined_call_operand.vmem [shape: bf16[128,128], index: 2, kind: input, shape index: {}]
  %s3 = inlined_call_operand.hbm [shape: f32[2,16,128], index: 3, kind: output, shape index: {0}]
  %s4 = inlined_call_operand.vmem [shape: f32[2,1,4,128], index: 4, kind: output, shape index: {1}]
  %5 = xla_tuple %s3, %s4
  %s6 = sld [smem:[#allocation0]]
  $region53: #{_lambda_.10} parent=0
    _
  %s8 = ssub.s32 1, %s6
  %s9 = scalar_select 0, %s8, %s6
  $region1: #{_lambda_.10} parent=0
    #allocation2 [shape = 'u8[16384]{0}', space=vmem, size = 0x4000, scoped, tag = 'output window, operand 0']
    #allocation3 [shape = 's32[2]{0}', space=sflag, size = 0x8, scoped, tag = 'scoped memory for _lambda_.10']
    %10 = vsyncpa [#allocation3], 0
    %s11 = scalar_lea.sflag [#allocation3], 1
    %12 = vsyncpa %s11, 0
    loop: start=0, step=1, limit=4
    $region2: #{_lambda_.10} parent=1 // loop_pre_header
      _
    $region3: #{_lambda_.10} parent=1 // loop_header
      %s14 = sphi 0, %s18
      %p15 = scmp.ge.s32.totalorder %s14, 4
      %s21 = sphi 0, %s33
      %s22 = sphi 0, %s29
      %s23 = sphi 0, %s21
      %s24 = sphi 0, %s22
      %s25 = sphi 0, %s23
      %s26 = sphi 0, %s24
      %s36 = sphi 0, %s38
      %s39 = sphi 0, %s36
      %s40 = sphi 0, %s39
      %s56 = sphi 0, %s40
      %s64 = sphi 0, %s66
      %s67 = sphi 0, %s64
      %s68 = sphi 0, %s67
      %s84 = sphi 0, %s68
      %s88 = sphi 0, %s88
      %s90 = sphi 0, %s88
      %s91 = sphi 0, %s90
      %s105 = sphi 0, %s91
      %s113 = sphi 0, %s115
      %s116 = sphi 0, %s113
      %s117 = sphi 0, %s116
      %s133 = sphi 0, %s117
      %s141 = sphi 0, %s143
      %s144 = sphi 0, %s141
      %s145 = sphi 0, %s144
      %s161 = sphi 0, %s145
    $region4: #{_lambda_.10} parent=1 // loop_header_branch
      %17 = sbr.rel (%p15) target = $region8
    $region5: #{_lambda_.10} parent=1 // loop_body
      %s19 = ssub.s32 %s14, 1
      %s20 = ssub.s32 %s14, 2
      %s27 = sadd.s32 1, %s22
      %p28 = scmp.ge.s32.totalorder %s27, 1
      %s29 = scalar_select %p28, 0, %s27
      %s30 = sadd.s32 1, %s21
      %s31 = scalar_select %p28, %s30, %s21
      %p32 = scmp.ge.s32.totalorder %s31, 2
      %s33 = scalar_select %p32, 0, %s31
      %s34 = ssub.s32 %s21, %s33
      %p35 = scmp.eq.s32.totalorder %s34, 0
      %s37 = sadd.s32 %s36, 1
      %s38 = scalar_select %p35, %s36, %s37
      %p41 = pneg %p35
      %p42 = scmp.eq.s32.totalorder %s14, 1
      %p43 = por %p41, %p42
      %p44 = scmp.ne.s32.totalorder %s36, %s39
      %p45 = scmp.eq.s32.totalorder %s14, 0
      %p46 = por %p44, %p45
      %p47 = scmp.ne.s32.totalorder %s36, %s39
      %p48 = scmp.eq.s32.totalorder %s19, 1
      %p49 = por %p47, %p48
      %p50 = scmp.ne.s32.totalorder %s39, %s40
      %p51 = scmp.eq.s32.totalorder %s19, 0
      %p52 = por %p50, %p51
      %p53 = scmp.ne.s32.totalorder %s39, %s40
      %p54 = scmp.eq.s32.totalorder %s20, 1
      %p55 = por %p53, %p54
      %p57 = scmp.ne.s32.totalorder %s40, %s56
      %p58 = scmp.eq.s32.totalorder %s20, 0
      %p59 = por %p57, %p58
      %s60 = ssub.s32 %s21, %s33
      %s61 = ssub.s32 %s22, %s29
      %s62 = sor.u32 %s60, %s61
      %p63 = scmp.eq.s32.totalorder %s62, 0
      %s65 = sadd.s32 %s64, 1
      %s66 = scalar_select %p63, %s64, %s65
      %p69 = pneg %p63
      %p70 = scmp.eq.s32.totalorder %s14, 1
      %p71 = por %p69, %p70
      %p72 = scmp.ne.s32.totalorder %s64, %s67
      %p73 = scmp.eq.s32.totalorder %s14, 0
      %p74 = por %p72, %p73
      %p75 = scmp.ne.s32.totalorder %s64, %s67
      %p76 = scmp.eq.s32.totalorder %s19, 1
      %p77 = por %p75, %p76
      %p78 = scmp.ne.s32.totalorder %s67, %s68
      %p79 = scmp.eq.s32.totalorder %s19, 0
      %p80 = por %p78, %p79
      %p81 = scmp.ne.s32.totalorder %s67, %s68
      %p82 = scmp.eq.s32.totalorder %s20, 1
      %p83 = por %p81, %p82
      %p85 = scmp.ne.s32.totalorder %s68, %s84
      %p86 = scmp.eq.s32.totalorder %s20, 0
      %p87 = por %p85, %p86
      %s89 = sadd.s32 %s88, 1
      %p92 = scmp.eq.s32.totalorder %s14, 1
      %p93 = scmp.ne.s32.totalorder %s88, %s90
      %p94 = scmp.eq.s32.totalorder %s14, 0
      %p95 = por %p93, %p94
      %p96 = scmp.ne.s32.totalorder %s88, %s90
      %p97 = scmp.eq.s32.totalorder %s19, 1
      %p98 = por %p96, %p97
      %p99 = scmp.ne.s32.totalorder %s90, %s91
      %p100 = scmp.eq.s32.totalorder %s19, 0
      %p101 = por %p99, %p100
      %p102 = scmp.ne.s32.totalorder %s90, %s91
      %p103 = scmp.eq.s32.totalorder %s20, 1
      %p104 = por %p102, %p103
      %p106 = scmp.ne.s32.totalorder %s91, %s105
      %p107 = scmp.eq.s32.totalorder %s20, 0
      %p108 = por %p106, %p107
      %s109 = ssub.s32 %s21, %s33
      %s110 = ssub.s32 %s22, %s29
      %s111 = sor.u32 %s109, %s110
      %p112 = scmp.eq.s32.totalorder %s111, 0
      %s114 = sadd.s32 %s113, 1
      %s115 = scalar_select %p112, %s113, %s114
      %p118 = pneg %p112
      %p119 = scmp.eq.s32.totalorder %s14, 1
      %p120 = por %p118, %p119
      %p121 = scmp.ne.s32.totalorder %s113, %s116
      %p122 = scmp.eq.s32.totalorder %s14, 0
      %p123 = por %p121, %p122
      %p124 = scmp.ne.s32.totalorder %s113, %s116
      %p125 = scmp.eq.s32.totalorder %s19, 1
      %p126 = por %p124, %p125
      %p127 = scmp.ne.s32.totalorder %s116, %s117
      %p128 = scmp.eq.s32.totalorder %s19, 0
      %p129 = por %p127, %p128
      %p130 = scmp.ne.s32.totalorder %s116, %s117
      %p131 = scmp.eq.s32.totalorder %s20, 1
      %p132 = por %p130, %p131
      %p134 = scmp.ne.s32.totalorder %s117, %s133
      %p135 = scmp.eq.s32.totalorder %s20, 0
      %p136 = por %p134, %p135
      %s137 = ssub.s32 %s21, %s33
      %s138 = ssub.s32 %s22, %s29
      %s139 = sor.u32 %s137, %s138
      %p140 = scmp.eq.s32.totalorder %s139, 0
      %s142 = sadd.s32 %s141, 1
      %s143 = scalar_select %p140, %s141, %s142
      %p146 = pneg %p140
      %p147 = scmp.eq.s32.totalorder %s14, 1
      %p148 = por %p146, %p147
      %p149 = scmp.ne.s32.totalorder %s141, %s144
      %p150 = scmp.eq.s32.totalorder %s14, 0
      %p151 = por %p149, %p150
      %p152 = scmp.ne.s32.totalorder %s141, %s144
      %p153 = scmp.eq.s32.totalorder %s19, 1
      %p154 = por %p152, %p153
      %p155 = scmp.ne.s32.totalorder %s144, %s145
      %p156 = scmp.eq.s32.totalorder %s19, 0
      %p157 = por %p155, %p156
      %p158 = scmp.ne.s32.totalorder %s144, %s145
      %p159 = scmp.eq.s32.totalorder %s20, 1
      %p160 = por %p158, %p159
      %p162 = scmp.ne.s32.totalorder %s145, %s161
      %p163 = scmp.eq.s32.totalorder %s20, 0
      %p164 = por %p162, %p163
      %p165 = scmp.le.s32.totalorder 1, %s14
      %p166 = scmp.lt.s32.totalorder %s14, 3
      %p167 = pnand %p165, %p166
      %p168 = pneg %p167
      // Predicated region
      $region9: #{_lambda_.10} parent=5 // pred_check
        _
      $region10: #{_lambda_.10} parent=5 // pred_check_branch
        %170 = sbr.rel (%p167) target = $region12
      $region11: #{_lambda_.10} parent=5 // pred_region
        %s171 = ssub.s32 %s14, 1
        // Predicated region
        $region13: #{_lambda_.10} parent=11 // pred_check
          %p172 = pneg %p101
        $region14: #{_lambda_.10} parent=11 // pred_check_branch
          %174 = sbr.rel (%p172) target = $region16
        $region15: #{_lambda_.10} parent=11 // pred_region
          _
        $region16: #{_lambda_.10} parent=11 // pred_fallthru
          _
      $region12: #{_lambda_.10} parent=5 // pred_fallthru
        _
      %p175 = scmp.lt.s32.totalorder %s14, 2
      // Predicated region
      $region17: #{_lambda_.10} parent=5 // pred_check
        %p176 = pneg %p175
      $region18: #{_lambda_.10} parent=5 // pred_check_branch
        %178 = sbr.rel (%p176) target = $region20
      $region19: #{_lambda_.10} parent=5 // pred_region
        // Predicated region
        $region21: #{_lambda_.10} parent=19 // pred_check
          %p179 = pneg %p46
        $region22: #{_lambda_.10} parent=19 // pred_check_branch
          %181 = sbr.rel (%p179) target = $region24
        $region23: #{_lambda_.10} parent=19 // pred_region
          %p182 = scmp.lt.s32.totalorder %s21, 1
          %s183 = scalar_select %p182, %s21, 1
          %s184 = smul.addr %s183, 8
          %s185 = smul.addr %s184, 8
          %s186 = scalar_lea.vmem %s0, %s185
        $region24: #{_lambda_.10} parent=19 // pred_fallthru
          _
        // Predicated region
        $region25: #{_lambda_.10} parent=19 // pred_check
          %p187 = pneg %p74
        $region26: #{_lambda_.10} parent=19 // pred_check_branch
          %189 = sbr.rel (%p187) target = $region28
        $region27: #{_lambda_.10} parent=19 // pred_region
          %s190 = smul.u32 16, %s22
          %p191 = scmp.lt.s32.totalorder %s21, 1
          %s192 = scalar_select %p191, %s21, 1
          %p193 = scmp.lt.s32.totalorder %s190, 15
          %s194 = scalar_select %p193, %s190, 15
          %s195 = smul.addr %s194, 2
          %s196 = smul.addr %s192, 32
          %s197 = sadd.s32 %s195, %s196
          %s198 = smul.addr %s197, 4
          %s199 = scalar_lea.vmem %s1, %s198
          %s200 = smul.u32 16, %s22
        $region28: #{_lambda_.10} parent=19 // pred_fallthru
          _
      $region20: #{_lambda_.10} parent=5 // pred_fallthru
        _
      %p201 = scmp.le.s32.totalorder 1, %s14
      %p202 = scmp.lt.s32.totalorder %s14, 3
      %p203 = pnand %p201, %p202
      %p204 = pneg %p203
      // Predicated region
      $region29: #{_lambda_.10} parent=5 // pred_check
        _
      $region30: #{_lambda_.10} parent=5 // pred_check_branch
        %206 = sbr.rel (%p203) target = $region32
      $region31: #{_lambda_.10} parent=5 // pred_region
        %s207 = ssub.s32 %s14, 1
        %p208 = scmp.lt.s32.totalorder %s23, 1
        %s209 = scalar_select %p208, %s23, 1
        %s210 = smul.addr %s209, 8
        %s211 = smul.addr %s210, 8
        %s212 = scalar_lea.vmem %s0, %s211
        %p213 = pneg %p52
        %p214 = pneg %p49
        %s215 = smul.u32 16, %s24
        %p216 = scmp.lt.s32.totalorder %s23, 1
        %s217 = scalar_select %p216, %s23, 1
        %p218 = scmp.lt.s32.totalorder %s215, 15
        %s219 = scalar_select %p218, %s215, 15
        %s220 = smul.addr %s219, 2
        %s221 = smul.addr %s217, 32
        %s222 = sadd.s32 %s220, %s221
        %s223 = smul.addr %s222, 4
        %s224 = scalar_lea.vmem %s1, %s223
        %p225 = pneg %p80
        %p226 = pneg %p77
        %p227 = pneg %p101
        %p228 = pneg %p98
        %p229 = pneg %p129
        %p230 = pneg %p126
        %s231 = sand.u32 %s116, 1
        %s232 = scalar_lea.sflag [#allocation3], %s231
        %s233 = sand.u32 %s116, 1
        %s234 = smul.addr %s233, 16
        %s235 = scalar_lea.vmem [#allocation2], %s234
        %p236 = pneg %p157
        %p237 = pneg %p154
        %p238 = scmp.lt.s32.totalorder %s23, 1
        %s239 = scalar_select %p238, %s23, 1
        %p240 = scmp.lt.s32.totalorder %s24, 0
        %s241 = scalar_select %p240, %s24, 0
        %s242 = sadd.s32 %s241, %s239
        %s243 = smul.addr %s242, 4
        %s244 = scalar_lea.vmem %s4, %s243
        %p245 = scmp.lt.s32.totalorder %s23, 1
        %s246 = scalar_select %p245, %s23, 1
        %s247 = smul.addr %s246, 8
        %s248 = smul.addr %s247, 8
        %s249 = scalar_lea.vmem %s0, %s248
        %s250 = smul.u32 16, %s24
        %p251 = scmp.lt.s32.totalorder %s23, 1
        %s252 = scalar_select %p251, %s23, 1
        %p253 = scmp.lt.s32.totalorder %s250, 15
        %s254 = scalar_select %p253, %s250, 15
        %s255 = smul.addr %s254, 2
        %s256 = smul.addr %s252, 32
        %s257 = sadd.s32 %s255, %s256
        %s258 = smul.addr %s257, 4
        %s259 = scalar_lea.vmem %s1, %s258
        %s260 = smul.u32 16, %s24
        %s261 = smul.u32 2, %s24
        %p262 = scmp.lt.s32.totalorder %s23, 1
        %s263 = scalar_select %p262, %s23, 1
        %p264 = scmp.lt.s32.totalorder %s24, 0
        %s265 = scalar_select %p264, %s24, 0
        %s266 = sadd.s32 %s265, %s263
        %s267 = smul.addr %s266, 4
        %s268 = scalar_lea.vmem %s4, %s267
        %s270 = smul.u32 %s24, 16
        %v271 = vld [vmem:[%s249 + $0x8] sm:$0xff]
        %v272 = vld [vmem:[%s249 + $0x18] sm:$0xff]
        %v273 = vld [vmem:[%s249 + $0x28] sm:$0xff]
        %v274 = vld [vmem:[%s249 + $0x38] sm:$0xff]
        %s275 = sshra.s32 %s270, 3
        %s276 = sand.u32 %s270, 7
        %s277 = smul.u32 %s275, 4
        %s278 = smul.addr %s277, 8
        %s279 = scalar_lea.vmem %s249, %s278
        %v280 = vld [vmem:[%s279] sm:$0xff]
        %v281 = vld [vmem:[%s279 + $0x10] sm:$0xff]
        %v282 = vld [vmem:[%s279 + $0x20] sm:$0xff]
        %v283 = vld [vmem:[%s279 + $0x30] sm:$0xff]
        %v284 = vld [vmem:[%s259] sm:$0xf]
        %v285 = vld [vmem:[%s259 + $0x4] sm:$0xf]
        %v286 = vld [vmem:[%s259 + $0x8] sm:$0xf]
        %v287 = vld [vmem:[%s259 + $0xc] sm:$0xf]
        %v288 = vld [vmem:[%s259 + $0x10] sm:$0xf]
        %v289 = vld [vmem:[%s259 + $0x14] sm:$0xf]
        %v290 = vld [vmem:[%s259 + $0x18] sm:$0xf]
        %v291 = vld [vmem:[%s259 + $0x1c] sm:$0xf]
        %v292 = vld [vmem:[%s259 + $0x20] sm:$0xf]
        %v293 = vld [vmem:[%s259 + $0x24] sm:$0xf]
        %v294 = vld [vmem:[%s259 + $0x28] sm:$0xf]
        %v295 = vld [vmem:[%s259 + $0x2c] sm:$0xf]
        %v296 = vld [vmem:[%s259 + $0x30] sm:$0xf]
        %v297 = vld [vmem:[%s259 + $0x34] sm:$0xf]
        %v298 = vld [vmem:[%s259 + $0x38] sm:$0xf]
        %v299 = vld [vmem:[%s259 + $0x3c] sm:$0xf]
        %v300 = vld [vmem:[%s259 + $0x40] sm:$0xf]
        %v301 = vld [vmem:[%s259 + $0x44] sm:$0xf]
        %v302 = vld [vmem:[%s259 + $0x48] sm:$0xf]
        %v303 = vld [vmem:[%s259 + $0x4c] sm:$0xf]
        %v304 = vld [vmem:[%s259 + $0x50] sm:$0xf]
        %v305 = vld [vmem:[%s259 + $0x54] sm:$0xf]
        %v306 = vld [vmem:[%s259 + $0x58] sm:$0xf]
        %v307 = vld [vmem:[%s259 + $0x5c] sm:$0xf]
        %v308 = vld [vmem:[%s259 + $0x60] sm:$0xf]
        %v309 = vld [vmem:[%s259 + $0x64] sm:$0xf]
        %v310 = vld [vmem:[%s259 + $0x68] sm:$0xf]
        %v311 = vld [vmem:[%s259 + $0x6c] sm:$0xf]
        %v312 = vld [vmem:[%s259 + $0x70] sm:$0xf]
        %v313 = vld [vmem:[%s259 + $0x74] sm:$0xf]
        %v314 = vld [vmem:[%s259 + $0x78] sm:$0xf]
        %v315 = vld [vmem:[%s259 + $0x7c] sm:$0xf]
        %v316 = vld [vmem:[%s2] sm:$0xf]
        %v317 = vld [vmem:[%s2 + $0x4] sm:$0xf]
        %v318 = vld [vmem:[%s2 + $0x8] sm:$0xf]
        %v319 = vld [vmem:[%s2 + $0xc] sm:$0xf]
        %v320 = vld [vmem:[%s2 + $0x10] sm:$0xf]
        %v321 = vld [vmem:[%s2 + $0x14] sm:$0xf]
        %v322 = vld [vmem:[%s2 + $0x18] sm:$0xf]
        %v323 = vld [vmem:[%s2 + $0x1c] sm:$0xf]
        %v324 = vld [vmem:[%s2 + $0x20] sm:$0xf]
        %v325 = vld [vmem:[%s2 + $0x24] sm:$0xf]
        %v326 = vld [vmem:[%s2 + $0x28] sm:$0xf]
        %v327 = vld [vmem:[%s2 + $0x2c] sm:$0xf]
        %v328 = vld [vmem:[%s2 + $0x30] sm:$0xf]
        %v329 = vld [vmem:[%s2 + $0x34] sm:$0xf]
        %v330 = vld [vmem:[%s2 + $0x38] sm:$0xf]
        %v331 = vld [vmem:[%s2 + $0x3c] sm:$0xf]
        %v364 = vunpack.c.l.b16 %v284
        %v365 = vunpack.c.l.b16 %v285
        %v366 = vunpack.c.l.b16 %v286
        %v367 = vunpack.c.l.b16 %v287
        %v368 = vunpack.c.l.b16 %v288
        %v369 = vunpack.c.l.b16 %v289
        %v370 = vunpack.c.l.b16 %v290
        %v371 = vunpack.c.l.b16 %v291
        %v372 = vunpack.c.l.b16 %v292
        %v373 = vunpack.c.l.b16 %v293
        %v374 = vunpack.c.l.b16 %v294
        %v375 = vunpack.c.l.b16 %v295
        %v376 = vunpack.c.l.b16 %v296
        %v377 = vunpack.c.l.b16 %v297
        %v378 = vunpack.c.l.b16 %v298
        %v379 = vunpack.c.l.b16 %v299
        %v380 = vunpack.c.l.b16 %v300
        %v381 = vunpack.c.l.b16 %v301
        %v382 = vunpack.c.l.b16 %v302
        %v383 = vunpack.c.l.b16 %v303
        %v384 = vunpack.c.l.b16 %v304
        %v385 = vunpack.c.l.b16 %v305
        %v386 = vunpack.c.l.b16 %v306
        %v387 = vunpack.c.l.b16 %v307
        %v388 = vunpack.c.l.b16 %v308
        %v389 = vunpack.c.l.b16 %v309
        %v390 = vunpack.c.l.b16 %v310
        %v391 = vunpack.c.l.b16 %v311
        %v392 = vunpack.c.l.b16 %v312
        %v393 = vunpack.c.l.b16 %v313
        %v394 = vunpack.c.l.b16 %v314
        %v395 = vunpack.c.l.b16 %v315
        %v396 = vpack.c.b16 %v365, %v364
        %v397 = vpack.c.b16 %v367, %v366
        %v398 = vpack.c.b16 %v369, %v368
        %v399 = vpack.c.b16 %v371, %v370
        %v400 = vpack.c.b16 %v373, %v372
        %v401 = vpack.c.b16 %v375, %v374
        %v402 = vpack.c.b16 %v377, %v376
        %v403 = vpack.c.b16 %v379, %v378
        %v404 = vpack.c.b16 %v381, %v380
        %v405 = vpack.c.b16 %v383, %v382
        %v406 = vpack.c.b16 %v385, %v384
        %v407 = vpack.c.b16 %v387, %v386
        %v408 = vpack.c.b16 %v389, %v388
        %v409 = vpack.c.b16 %v391, %v390
        %v410 = vpack.c.b16 %v393, %v392
        %v411 = vpack.c.b16 %v395, %v394
        %v444 = vunpack.c.l.b16 %v316
        %v445 = vunpack.c.l.b16 %v317
        %v446 = vunpack.c.l.b16 %v318
        %v447 = vunpack.c.l.b16 %v319
        %v448 = vunpack.c.l.b16 %v320
        %v449 = vunpack.c.l.b16 %v321
        %v450 = vunpack.c.l.b16 %v322
        %v451 = vunpack.c.l.b16 %v323
        %v452 = vunpack.c.l.b16 %v324
        %v453 = vunpack.c.l.b16 %v325
        %v454 = vunpack.c.l.b16 %v326
        %v455 = vunpack.c.l.b16 %v327
        %v456 = vunpack.c.l.b16 %v328
        %v457 = vunpack.c.l.b16 %v329
        %v458 = vunpack.c.l.b16 %v330
        %v459 = vunpack.c.l.b16 %v331
        %v460 = vpack.c.b16 %v445, %v444
        %v461 = vpack.c.b16 %v447, %v446
        %v462 = vpack.c.b16 %v449, %v448
        %v463 = vpack.c.b16 %v451, %v450
        %v464 = vpack.c.b16 %v453, %v452
        %v465 = vpack.c.b16 %v455, %v454
        %v466 = vpack.c.b16 %v457, %v456
        %v467 = vpack.c.b16 %v459, %v458
        %476 = vmatprep.subr.bf16.mxu0 0
        %477 = vmatpush1.bf16.msra.mxu0 %v467
        %478 = vmatprep.subr.bf16.mxu0 0
        %479 = vmatpush1.bf16.msra.mxu0 %v466
        %480 = vmatprep.subr.bf16.mxu0 0
        %481 = vmatpush1.bf16.msra.mxu0 %v465
        %482 = vmatprep.subr.bf16.mxu0 0
        %483 = vmatpush1.bf16.msra.mxu0 %v464
        %484 = vmatprep.subr.bf16.mxu0 0
        %485 = vmatpush1.bf16.msra.mxu0 %v463
        %486 = vmatprep.subr.bf16.mxu0 0
        %487 = vmatpush1.bf16.msra.mxu0 %v462
        %488 = vmatprep.subr.bf16.mxu0 0
        %489 = vmatpush1.bf16.msra.mxu0 %v461
        %490 = vmatprep.subr.bf16.mxu0 0
        %491 = vmatpush1.bf16.msra.mxu0 %v460
        %492 = vmatprep.subr.bf16.mxu0 0
        %493 = vmatpush2.bf16.msra.mxu0 0
        %494 = vmatprep.subr.bf16.mxu0 0
        %495 = vmatpush2.bf16.msra.mxu0 0
        %496 = vmatprep.subr.bf16.mxu0 0
        %497 = vmatpush2.bf16.msra.mxu0 0
        %498 = vmatprep.subr.bf16.mxu0 0
        %499 = vmatpush2.bf16.msra.mxu0 0
        %500 = vmatprep.subr.bf16.mxu0 0
        %501 = vmatpush2.bf16.msra.mxu0 0
        %502 = vmatprep.subr.bf16.mxu0 0
        %503 = vmatpush2.bf16.msra.mxu0 0
        %504 = vmatprep.subr.bf16.mxu0 0
        %505 = vmatpush2.bf16.msra.mxu0 0
        %506 = vmatprep.subr.bf16.mxu0 0
        %507 = vmatpush2.bf16.msra.mxu0 0
        %508 = vmatprep.mubr.bf16.mxu0 0
        %509 = vmatmul.mubr.bf16.gmra.mxu0 %v396
        %v510 = vpop.f32.mrf.mxu0
        %v511 = vadd.f32 0.0, %v510
        %v512 = vpop.f32.mrf.mxu0
        %v513 = vpop.f32.mrf.mxu0
        %v514 = vadd.f32 0.0, %v513
        %v515 = vpop.f32.mrf.mxu0
        %516 = vmatprep.mubr.bf16.mxu0 0
        %517 = vmatmul.mubr.bf16.gmra.mxu0 %v397
        %v518 = vpop.f32.mrf.mxu0
        %v519 = vadd.f32 0.0, %v518
        %v520 = vpop.f32.mrf.mxu0
        %v521 = vpop.f32.mrf.mxu0
        %v522 = vadd.f32 0.0, %v521
        %v523 = vpop.f32.mrf.mxu0
        %524 = vmatprep.mubr.bf16.mxu0 0
        %525 = vmatmul.mubr.bf16.gmra.mxu0 %v398
        %v526 = vpop.f32.mrf.mxu0
        %v527 = vadd.f32 0.0, %v526
        %v528 = vpop.f32.mrf.mxu0
        %v529 = vpop.f32.mrf.mxu0
        %v530 = vadd.f32 0.0, %v529
        %v531 = vpop.f32.mrf.mxu0
        %532 = vmatprep.mubr.bf16.mxu0 0
        %533 = vmatmul.mubr.bf16.gmra.mxu0 %v399
        %v534 = vpop.f32.mrf.mxu0
        %v535 = vadd.f32 0.0, %v534
        %v536 = vpop.f32.mrf.mxu0
        %v537 = vpop.f32.mrf.mxu0
        %v538 = vadd.f32 0.0, %v537
        %v539 = vpop.f32.mrf.mxu0
        %540 = vmatprep.mubr.bf16.mxu0 0
        %541 = vmatmul.mubr.bf16.gmra.mxu0 %v400
        %v542 = vpop.f32.mrf.mxu0
        %v543 = vadd.f32 0.0, %v542
        %v544 = vpop.f32.mrf.mxu0
        %v545 = vpop.f32.mrf.mxu0
        %v546 = vadd.f32 0.0, %v545
        %v547 = vpop.f32.mrf.mxu0
        %548 = vmatprep.mubr.bf16.mxu0 0
        %549 = vmatmul.mubr.bf16.gmra.mxu0 %v401
        %v550 = vpop.f32.mrf.mxu0
        %v551 = vadd.f32 0.0, %v550
        %v552 = vpop.f32.mrf.mxu0
        %v553 = vpop.f32.mrf.mxu0
        %v554 = vadd.f32 0.0, %v553
        %v555 = vpop.f32.mrf.mxu0
        %556 = vmatprep.mubr.bf16.mxu0 0
        %557 = vmatmul.mubr.bf16.gmra.mxu0 %v402
        %v558 = vpop.f32.mrf.mxu0
        %v559 = vadd.f32 0.0, %v558
        %v560 = vpop.f32.mrf.mxu0
        %v561 = vpop.f32.mrf.mxu0
        %v562 = vadd.f32 0.0, %v561
        %v563 = vpop.f32.mrf.mxu0
        %564 = vmatprep.mubr.bf16.mxu0 0
        %565 = vmatmul.mubr.bf16.gmra.mxu0 %v403
        %v566 = vpop.f32.mrf.mxu0
        %v567 = vadd.f32 0.0, %v566
        %v568 = vpop.f32.mrf.mxu0
        %v569 = vpop.f32.mrf.mxu0
        %v570 = vadd.f32 0.0, %v569
        %v571 = vpop.f32.mrf.mxu0
        %572 = vmatprep.mubr.bf16.mxu0 0
        %573 = vmatmul.mubr.bf16.gmra.mxu0 %v404
        %v574 = vpop.f32.mrf.mxu0
        %v575 = vadd.f32 0.0, %v574
        %v576 = vpop.f32.mrf.mxu0
        %v577 = vpop.f32.mrf.mxu0
        %v578 = vadd.f32 0.0, %v577
        %v579 = vpop.f32.mrf.mxu0
        %580 = vmatprep.mubr.bf16.mxu0 0
        %581 = vmatmul.mubr.bf16.gmra.mxu0 %v405
        %v582 = vpop.f32.mrf.mxu0
        %v583 = vadd.f32 0.0, %v582
        %v584 = vpop.f32.mrf.mxu0
        %v585 = vpop.f32.mrf.mxu0
        %v586 = vadd.f32 0.0, %v585
        %v587 = vpop.f32.mrf.mxu0
        %588 = vmatprep.mubr.bf16.mxu0 0
        %589 = vmatmul.mubr.bf16.gmra.mxu0 %v406
        %v590 = vpop.f32.mrf.mxu0
        %v591 = vadd.f32 0.0, %v590
        %v592 = vpop.f32.mrf.mxu0
        %v593 = vpop.f32.mrf.mxu0
        %v594 = vadd.f32 0.0, %v593
        %v595 = vpop.f32.mrf.mxu0
        %596 = vmatprep.mubr.bf16.mxu0 0
        %597 = vmatmul.mubr.bf16.gmra.mxu0 %v407
        %v598 = vpop.f32.mrf.mxu0
        %v599 = vadd.f32 0.0, %v598
        %v600 = vpop.f32.mrf.mxu0
        %v601 = vpop.f32.mrf.mxu0
        %v602 = vadd.f32 0.0, %v601
        %v603 = vpop.f32.mrf.mxu0
        %604 = vmatprep.mubr.bf16.mxu0 0
        %605 = vmatmul.mubr.bf16.gmra.mxu0 %v408
        %v606 = vpop.f32.mrf.mxu0
        %v607 = vadd.f32 0.0, %v606
        %v608 = vpop.f32.mrf.mxu0
        %v609 = vpop.f32.mrf.mxu0
        %v610 = vadd.f32 0.0, %v609
        %v611 = vpop.f32.mrf.mxu0
        %612 = vmatprep.mubr.bf16.mxu0 0
        %613 = vmatmul.mubr.bf16.gmra.mxu0 %v409
        %v614 = vpop.f32.mrf.mxu0
        %v615 = vadd.f32 0.0, %v614
        %v616 = vpop.f32.mrf.mxu0
        %v617 = vpop.f32.mrf.mxu0
        %v618 = vadd.f32 0.0, %v617
        %v619 = vpop.f32.mrf.mxu0
        %620 = vmatprep.mubr.bf16.mxu0 0
        %621 = vmatmul.mubr.bf16.gmra.mxu0 %v410
        %v622 = vpop.f32.mrf.mxu0
        %v623 = vadd.f32 0.0, %v622
        %v624 = vpop.f32.mrf.mxu0
        %v625 = vpop.f32.mrf.mxu0
        %v626 = vadd.f32 0.0, %v625
        %v627 = vpop.f32.mrf.mxu0
        %628 = vmatprep.mubr.bf16.mxu0 0
        %629 = vmatmul.mubr.bf16.gmra.mxu0 %v411
        %v630 = vpop.f32.mrf.mxu0
        %v631 = vadd.f32 0.0, %v630
        %v632 = vpop.f32.mrf.mxu0
        %v633 = vpop.f32.mrf.mxu0
        %v634 = vadd.f32 0.0, %v633
        %v635 = vpop.f32.mrf.mxu0
        %636 = vdwg.mxu0
        %v639 = vcombine.high %v280, %v280
        %v641 = vunpack.c.l.s4 1966171168
        %v642 = vunpack.c.0.s8 %v641
        %v643 = vlaneseq
        %v644 = vshrl.u32 %v643, 7
        %v645 = vsub.s32 %v642, %v644
        %v646 = vrot.slane %v280, %v645
        %v648 = vunpack.c.l.s4 1966171168
        %v649 = vunpack.c.0.s8 %v648
        %v650 = vlaneseq
        %v651 = vshrl.u32 %v650, 7
        %v652 = vsub.s32 %v649, %v651
        %v653 = vrot.slane %v639, %v652
        %v654 = vcombine.high %v646, %v646
        %v655 = vcombine.high %v653, %v653
        %v657 = vunpack.c.l.s4 1966171168
        %v658 = vunpack.c.0.s8 %v657
        %v659 = vlaneseq
        %v660 = vshrl.u32 %v659, 7
        %v661 = vsub.s32 %v658, %v660
        %v662 = vrot.slane %v646, %v661
        %v664 = vunpack.c.l.s4 1966171168
        %v665 = vunpack.c.0.s8 %v664
        %v666 = vlaneseq
        %v667 = vshrl.u32 %v666, 7
        %v668 = vsub.s32 %v665, %v667
        %v669 = vrot.slane %v653, %v668
        %v671 = vunpack.c.l.s4 1966171168
        %v672 = vunpack.c.0.s8 %v671
        %v673 = vlaneseq
        %v674 = vshrl.u32 %v673, 7
        %v675 = vsub.s32 %v672, %v674
        %v676 = vrot.slane %v654, %v675
        %v678 = vunpack.c.l.s4 1966171168
        %v679 = vunpack.c.0.s8 %v678
        %v680 = vlaneseq
        %v681 = vshrl.u32 %v680, 7
        %v682 = vsub.s32 %v679, %v681
        %v683 = vrot.slane %v655, %v682
        %v684 = vcombine.high %v662, %v662
        %v685 = vcombine.high %v669, %v669
        %v686 = vcombine.high %v676, %v676
        %v687 = vcombine.high %v683, %v683
        %v688 = vcombine.high %v282, %v282
        %v690 = vunpack.c.l.s4 1966171168
        %v691 = vunpack.c.0.s8 %v690
        %v692 = vlaneseq
        %v693 = vshrl.u32 %v692, 7
        %v694 = vsub.s32 %v691, %v693
        %v695 = vrot.slane %v282, %v694
        %v697 = vunpack.c.l.s4 1966171168
        %v698 = vunpack.c.0.s8 %v697
        %v699 = vlaneseq
        %v700 = vshrl.u32 %v699, 7
        %v701 = vsub.s32 %v698, %v700
        %v702 = vrot.slane %v688, %v701
        %v703 = vcombine.high %v695, %v695
        %v704 = vcombine.high %v702, %v702
        %v706 = vunpack.c.l.s4 1966171168
        %v707 = vunpack.c.0.s8 %v706
        %v708 = vlaneseq
        %v709 = vshrl.u32 %v708, 7
        %v710 = vsub.s32 %v707, %v709
        %v711 = vrot.slane %v695, %v710
        %v713 = vunpack.c.l.s4 1966171168
        %v714 = vunpack.c.0.s8 %v713
        %v715 = vlaneseq
        %v716 = vshrl.u32 %v715, 7
        %v717 = vsub.s32 %v714, %v716
        %v718 = vrot.slane %v702, %v717
        %v720 = vunpack.c.l.s4 1966171168
        %v721 = vunpack.c.0.s8 %v720
        %v722 = vlaneseq
        %v723 = vshrl.u32 %v722, 7
        %v724 = vsub.s32 %v721, %v723
        %v725 = vrot.slane %v703, %v724
        %v727 = vunpack.c.l.s4 1966171168
        %v728 = vunpack.c.0.s8 %v727
        %v729 = vlaneseq
        %v730 = vshrl.u32 %v729, 7
        %v731 = vsub.s32 %v728, %v730
        %v732 = vrot.slane %v704, %v731
        %v733 = vcombine.high %v711, %v711
        %v734 = vcombine.high %v718, %v718
        %v735 = vcombine.high %v725, %v725
        %v736 = vcombine.high %v732, %v732
        %v737 = vlaneseq
        %v738 = vshrl.u32 %v737, 7
        %v739 = vsub.s32 0, %v738
        %v740 = vrot.slane %v662, %v739
        %v741 = vlaneseq
        %v742 = vshrl.u32 %v741, 7
        %v743 = vsub.s32 0, %v742
        %v744 = vrot.slane %v676, %v743
        %v745 = vlaneseq
        %v746 = vshrl.u32 %v745, 7
        %v747 = vsub.s32 0, %v746
        %v748 = vrot.slane %v684, %v747
        %v749 = vlaneseq
        %v750 = vshrl.u32 %v749, 7
        %v751 = vsub.s32 0, %v750
        %v752 = vrot.slane %v686, %v751
        %v753 = vlaneseq
        %v754 = vshrl.u32 %v753, 7
        %v755 = vsub.s32 0, %v754
        %v756 = vrot.slane %v669, %v755
        %v757 = vlaneseq
        %v758 = vshrl.u32 %v757, 7
        %v759 = vsub.s32 0, %v758
        %v760 = vrot.slane %v683, %v759
        %v761 = vlaneseq
        %v762 = vshrl.u32 %v761, 7
        %v763 = vsub.s32 0, %v762
        %v764 = vrot.slane %v685, %v763
        %v765 = vlaneseq
        %v766 = vshrl.u32 %v765, 7
        %v767 = vsub.s32 0, %v766
        %v768 = vrot.slane %v687, %v767
        %v769 = vlaneseq
        %v770 = vshrl.u32 %v769, 7
        %v771 = vsub.s32 0, %v770
        %v772 = vrot.slane %v711, %v771
        %v773 = vlaneseq
        %v774 = vshrl.u32 %v773, 7
        %v775 = vsub.s32 0, %v774
        %v776 = vrot.slane %v725, %v775
        %v777 = vlaneseq
        %v778 = vshrl.u32 %v777, 7
        %v779 = vsub.s32 0, %v778
        %v780 = vrot.slane %v733, %v779
        %v781 = vlaneseq
        %v782 = vshrl.u32 %v781, 7
        %v783 = vsub.s32 0, %v782
        %v784 = vrot.slane %v735, %v783
        %v785 = vlaneseq
        %v786 = vshrl.u32 %v785, 7
        %v787 = vsub.s32 0, %v786
        %v788 = vrot.slane %v718, %v787
        %v789 = vlaneseq
        %v790 = vshrl.u32 %v789, 7
        %v791 = vsub.s32 0, %v790
        %v792 = vrot.slane %v732, %v791
        %v793 = vlaneseq
        %v794 = vshrl.u32 %v793, 7
        %v795 = vsub.s32 0, %v794
        %v796 = vrot.slane %v734, %v795
        %v797 = vlaneseq
        %v798 = vshrl.u32 %v797, 7
        %v799 = vsub.s32 0, %v798
        %v800 = vrot.slane %v736, %v799
        %v817 = vadd.f32 %v511, %v740
        %v818 = vadd.f32 %v514, %v740
        %v819 = vadd.f32 %v519, %v744
        %v820 = vadd.f32 %v522, %v744
        %v821 = vadd.f32 %v527, %v748
        %v822 = vadd.f32 %v530, %v748
        %v823 = vadd.f32 %v535, %v752
        %v824 = vadd.f32 %v538, %v752
        %v825 = vadd.f32 %v543, %v756
        %v826 = vadd.f32 %v546, %v756
        %v827 = vadd.f32 %v551, %v760
        %v828 = vadd.f32 %v554, %v760
        %v829 = vadd.f32 %v559, %v764
        %v830 = vadd.f32 %v562, %v764
        %v831 = vadd.f32 %v567, %v768
        %v832 = vadd.f32 %v570, %v768
        %v833 = vadd.f32 %v575, %v772
        %v834 = vadd.f32 %v578, %v772
        %v835 = vadd.f32 %v583, %v776
        %v836 = vadd.f32 %v586, %v776
        %v837 = vadd.f32 %v591, %v780
        %v838 = vadd.f32 %v594, %v780
        %v839 = vadd.f32 %v599, %v784
        %v840 = vadd.f32 %v602, %v784
        %v841 = vadd.f32 %v607, %v788
        %v842 = vadd.f32 %v610, %v788
        %v843 = vadd.f32 %v615, %v792
        %v844 = vadd.f32 %v618, %v792
        %v845 = vadd.f32 %v623, %v796
        %v846 = vadd.f32 %v626, %v796
        %v847 = vadd.f32 %v631, %v800
        %v848 = vadd.f32 %v634, %v800
        %v849 = vadd.f32 %v817, %v271
        %v850 = vadd.f32 %v818, %v273
        %v851 = vadd.f32 %v819, %v271
        %v852 = vadd.f32 %v820, %v273
        %v853 = vadd.f32 %v821, %v271
        %v854 = vadd.f32 %v822, %v273
        %v855 = vadd.f32 %v823, %v271
        %v856 = vadd.f32 %v824, %v273
        %v857 = vadd.f32 %v825, %v271
        %v858 = vadd.f32 %v826, %v273
        %v859 = vadd.f32 %v827, %v271
        %v860 = vadd.f32 %v828, %v273
        %v861 = vadd.f32 %v829, %v271
        %v862 = vadd.f32 %v830, %v273
        %v863 = vadd.f32 %v831, %v271
        %v864 = vadd.f32 %v832, %v273
        %v865 = vadd.f32 %v833, %v271
        %v866 = vadd.f32 %v834, %v273
        %v867 = vadd.f32 %v835, %v271
        %v868 = vadd.f32 %v836, %v273
        %v869 = vadd.f32 %v837, %v271
        %v870 = vadd.f32 %v838, %v273
        %v871 = vadd.f32 %v839, %v271
        %v872 = vadd.f32 %v840, %v273
        %v873 = vadd.f32 %v841, %v271
        %v874 = vadd.f32 %v842, %v273
        %v875 = vadd.f32 %v843, %v271
        %v876 = vadd.f32 %v844, %v273
        %v877 = vadd.f32 %v845, %v271
        %v878 = vadd.f32 %v846, %v273
        %v879 = vadd.f32 %v847, %v271
        %v880 = vadd.f32 %v848, %v273
        %v881 = vxor.u32 %v849, 2147483648
        %v882 = vxor.u32 %v850, 2147483648
        %v883 = vxor.u32 %v851, 2147483648
        %v884 = vxor.u32 %v852, 2147483648
        %v885 = vxor.u32 %v853, 2147483648
        %v886 = vxor.u32 %v854, 2147483648
        %v887 = vxor.u32 %v855, 2147483648
        %v888 = vxor.u32 %v856, 2147483648
        %v889 = vxor.u32 %v857, 2147483648
        %v890 = vxor.u32 %v858, 2147483648
        %v891 = vxor.u32 %v859, 2147483648
        %v892 = vxor.u32 %v860, 2147483648
        %v893 = vxor.u32 %v861, 2147483648
        %v894 = vxor.u32 %v862, 2147483648
        %v895 = vxor.u32 %v863, 2147483648
        %v896 = vxor.u32 %v864, 2147483648
        %v897 = vxor.u32 %v865, 2147483648
        %v898 = vxor.u32 %v866, 2147483648
        %v899 = vxor.u32 %v867, 2147483648
        %v900 = vxor.u32 %v868, 2147483648
        %v901 = vxor.u32 %v869, 2147483648
        %v902 = vxor.u32 %v870, 2147483648
        %v903 = vxor.u32 %v871, 2147483648
        %v904 = vxor.u32 %v872, 2147483648
        %v905 = vxor.u32 %v873, 2147483648
        %v906 = vxor.u32 %v874, 2147483648
        %v907 = vxor.u32 %v875, 2147483648
        %v908 = vxor.u32 %v876, 2147483648
        %v909 = vxor.u32 %v877, 2147483648
        %v910 = vxor.u32 %v878, 2147483648
        %v911 = vxor.u32 %v879, 2147483648
        %v912 = vxor.u32 %v880, 2147483648
        %v913 = vmul.f32 %v881, 1.442695
        %v914 = vpow.pop %v913
        %v915 = vmul.f32 %v882, 1.442695
        %v916 = vpow.pop %v915
        %v917 = vmul.f32 %v883, 1.442695
        %v918 = vpow.pop %v917
        %v919 = vmul.f32 %v884, 1.442695
        %v920 = vpow.pop %v919
        %v921 = vmul.f32 %v885, 1.442695
        %v922 = vpow.pop %v921
        %v923 = vmul.f32 %v886, 1.442695
        %v924 = vpow.pop %v923
        %v925 = vmul.f32 %v887, 1.442695
        %v926 = vpow.pop %v925
        %v927 = vmul.f32 %v888, 1.442695
        %v928 = vpow.pop %v927
        %v929 = vmul.f32 %v889, 1.442695
        %v930 = vpow.pop %v929
        %v931 = vmul.f32 %v890, 1.442695
        %v932 = vpow.pop %v931
        %v933 = vmul.f32 %v891, 1.442695
        %v934 = vpow.pop %v933
        %v935 = vmul.f32 %v892, 1.442695
        %v936 = vpow.pop %v935
        %v937 = vmul.f32 %v893, 1.442695
        %v938 = vpow.pop %v937
        %v939 = vmul.f32 %v894, 1.442695
        %v940 = vpow.pop %v939
        %v941 = vmul.f32 %v895, 1.442695
        %v942 = vpow.pop %v941
        %v943 = vmul.f32 %v896, 1.442695
        %v944 = vpow.pop %v943
        %v945 = vmul.f32 %v897, 1.442695
        %v946 = vpow.pop %v945
        %v947 = vmul.f32 %v898, 1.442695
        %v948 = vpow.pop %v947
        %v949 = vmul.f32 %v899, 1.442695
        %v950 = vpow.pop %v949
        %v951 = vmul.f32 %v900, 1.442695
        %v952 = vpow.pop %v951
        %v953 = vmul.f32 %v901, 1.442695
        %v954 = vpow.pop %v953
        %v955 = vmul.f32 %v902, 1.442695
        %v956 = vpow.pop %v955
        %v957 = vmul.f32 %v903, 1.442695
        %v958 = vpow.pop %v957
        %v959 = vmul.f32 %v904, 1.442695
        %v960 = vpow.pop %v959
        %v961 = vmul.f32 %v905, 1.442695
        %v962 = vpow.pop %v961
        %v963 = vmul.f32 %v906, 1.442695
        %v964 = vpow.pop %v963
        %v965 = vmul.f32 %v907, 1.442695
        %v966 = vpow.pop %v965
        %v967 = vmul.f32 %v908, 1.442695
        %v968 = vpow.pop %v967
        %v969 = vmul.f32 %v909, 1.442695
        %v970 = vpow.pop %v969
        %v971 = vmul.f32 %v910, 1.442695
        %v972 = vpow.pop %v971
        %v973 = vmul.f32 %v911, 1.442695
        %v974 = vpow.pop %v973
        %v975 = vmul.f32 %v912, 1.442695
        %v976 = vpow.pop %v975
        %v977 = vadd.f32 %v914, 1.0
        %v978 = vadd.f32 %v916, 1.0
        %v979 = vadd.f32 %v918, 1.0
        %v980 = vadd.f32 %v920, 1.0
        %v981 = vadd.f32 %v922, 1.0
        %v982 = vadd.f32 %v924, 1.0
        %v983 = vadd.f32 %v926, 1.0
        %v984 = vadd.f32 %v928, 1.0
        %v985 = vadd.f32 %v930, 1.0
        %v986 = vadd.f32 %v932, 1.0
        %v987 = vadd.f32 %v934, 1.0
        %v988 = vadd.f32 %v936, 1.0
        %v989 = vadd.f32 %v938, 1.0
        %v990 = vadd.f32 %v940, 1.0
        %v991 = vadd.f32 %v942, 1.0
        %v992 = vadd.f32 %v944, 1.0
        %v993 = vadd.f32 %v946, 1.0
        %v994 = vadd.f32 %v948, 1.0
        %v995 = vadd.f32 %v950, 1.0
        %v996 = vadd.f32 %v952, 1.0
        %v997 = vadd.f32 %v954, 1.0
        %v998 = vadd.f32 %v956, 1.0
        %v999 = vadd.f32 %v958, 1.0
        %v1000 = vadd.f32 %v960, 1.0
        %v1001 = vadd.f32 %v962, 1.0
        %v1002 = vadd.f32 %v964, 1.0
        %v1003 = vadd.f32 %v966, 1.0
        %v1004 = vadd.f32 %v968, 1.0
        %v1005 = vadd.f32 %v970, 1.0
        %v1006 = vadd.f32 %v972, 1.0
        %v1007 = vadd.f32 %v974, 1.0
        %v1008 = vadd.f32 %v976, 1.0
        %v1009 = vrcp.pop %v977
        %v1010 = vmul.f32 1.0, %v1009
        %v1011 = vrcp.pop %v978
        %v1012 = vmul.f32 1.0, %v1011
        %v1013 = vrcp.pop %v979
        %v1014 = vmul.f32 1.0, %v1013
        %v1015 = vrcp.pop %v980
        %v1016 = vmul.f32 1.0, %v1015
        %v1017 = vrcp.pop %v981
        %v1018 = vmul.f32 1.0, %v1017
        %v1019 = vrcp.pop %v982
        %v1020 = vmul.f32 1.0, %v1019
        %v1021 = vrcp.pop %v983
        %v1022 = vmul.f32 1.0, %v1021
        %v1023 = vrcp.pop %v984
        %v1024 = vmul.f32 1.0, %v1023
        %v1025 = vrcp.pop %v985
        %v1026 = vmul.f32 1.0, %v1025
        %v1027 = vrcp.pop %v986
        %v1028 = vmul.f32 1.0, %v1027
        %v1029 = vrcp.pop %v987
        %v1030 = vmul.f32 1.0, %v1029
        %v1031 = vrcp.pop %v988
        %v1032 = vmul.f32 1.0, %v1031
        %v1033 = vrcp.pop %v989
        %v1034 = vmul.f32 1.0, %v1033
        %v1035 = vrcp.pop %v990
        %v1036 = vmul.f32 1.0, %v1035
        %v1037 = vrcp.pop %v991
        %v1038 = vmul.f32 1.0, %v1037
        %v1039 = vrcp.pop %v992
        %v1040 = vmul.f32 1.0, %v1039
        %v1041 = vrcp.pop %v993
        %v1042 = vmul.f32 1.0, %v1041
        %v1043 = vrcp.pop %v994
        %v1044 = vmul.f32 1.0, %v1043
        %v1045 = vrcp.pop %v995
        %v1046 = vmul.f32 1.0, %v1045
        %v1047 = vrcp.pop %v996
        %v1048 = vmul.f32 1.0, %v1047
        %v1049 = vrcp.pop %v997
        %v1050 = vmul.f32 1.0, %v1049
        %v1051 = vrcp.pop %v998
        %v1052 = vmul.f32 1.0, %v1051
        %v1053 = vrcp.pop %v999
        %v1054 = vmul.f32 1.0, %v1053
        %v1055 = vrcp.pop %v1000
        %v1056 = vmul.f32 1.0, %v1055
        %v1057 = vrcp.pop %v1001
        %v1058 = vmul.f32 1.0, %v1057
        %v1059 = vrcp.pop %v1002
        %v1060 = vmul.f32 1.0, %v1059
        %v1061 = vrcp.pop %v1003
        %v1062 = vmul.f32 1.0, %v1061
        %v1063 = vrcp.pop %v1004
        %v1064 = vmul.f32 1.0, %v1063
        %v1065 = vrcp.pop %v1005
        %v1066 = vmul.f32 1.0, %v1065
        %v1067 = vrcp.pop %v1006
        %v1068 = vmul.f32 1.0, %v1067
        %v1069 = vrcp.pop %v1007
        %v1070 = vmul.f32 1.0, %v1069
        %v1071 = vrcp.pop %v1008
        %v1072 = vmul.f32 1.0, %v1071
        %v1073 = vlaneseq
        %v1074 = vshrl.u32 %v1073, 7
        %v1075 = vadd.s32 %v1074, 8
        %vm1076 = vcmp.lt.s32.totalorder %v1074, 12
        %vm1077 = vcmp.lt.s32.totalorder %v1075, 12
        %v1078 = vstv %s270
        %v1079 = vadd.s32 %v1078, 1
        %v1080 = vadd.s32 %v1078, 2
        %v1081 = vadd.s32 %v1078, 3
        %v1082 = vadd.s32 %v1078, 4
        %v1083 = vadd.s32 %v1078, 5
        %v1084 = vadd.s32 %v1078, 6
        %v1085 = vadd.s32 %v1078, 7
        %v1086 = vadd.s32 %v1078, 8
        %v1087 = vadd.s32 %v1078, 9
        %v1088 = vadd.s32 %v1078, 10
        %v1089 = vadd.s32 %v1078, 11
        %v1090 = vadd.s32 %v1078, 12
        %v1091 = vadd.s32 %v1078, 13
        %v1092 = vadd.s32 %v1078, 14
        %v1093 = vadd.s32 %v1078, 15
        %vm1094 = vcmp.lt.s32.totalorder %v1078, 12
        %vm1095 = vcmp.lt.s32.totalorder %v1079, 12
        %vm1096 = vcmp.lt.s32.totalorder %v1080, 12
        %vm1097 = vcmp.lt.s32.totalorder %v1081, 12
        %vm1098 = vcmp.lt.s32.totalorder %v1082, 12
        %vm1099 = vcmp.lt.s32.totalorder %v1083, 12
        %vm1100 = vcmp.lt.s32.totalorder %v1084, 12
        %vm1101 = vcmp.lt.s32.totalorder %v1085, 12
        %vm1102 = vcmp.lt.s32.totalorder %v1086, 12
        %vm1103 = vcmp.lt.s32.totalorder %v1087, 12
        %vm1104 = vcmp.lt.s32.totalorder %v1088, 12
        %vm1105 = vcmp.lt.s32.totalorder %v1089, 12
        %vm1106 = vcmp.lt.s32.totalorder %v1090, 12
        %vm1107 = vcmp.lt.s32.totalorder %v1091, 12
        %vm1108 = vcmp.lt.s32.totalorder %v1092, 12
        %vm1109 = vcmp.lt.s32.totalorder %v1093, 12
        %v1110 = vsel %vm1076, 1, 0
        %v1111 = vsel %vm1077, 1, 0
        %vm1112 = vcmp.eq.s32.totalorder %v1110, 1
        %vm1113 = vcmp.eq.s32.totalorder %v1111, 1
        %v1114 = vsel %vm1112, %v1010, 0.0
        %v1115 = vsel %vm1113, %v1012, 0.0
        %v1116 = vsel %vm1112, %v1014, 0.0
        %v1117 = vsel %vm1113, %v1016, 0.0
        %v1118 = vsel %vm1112, %v1018, 0.0
        %v1119 = vsel %vm1113, %v1020, 0.0
        %v1120 = vsel %vm1112, %v1022, 0.0
        %v1121 = vsel %vm1113, %v1024, 0.0
        %v1122 = vsel %vm1112, %v1026, 0.0
        %v1123 = vsel %vm1113, %v1028, 0.0
        %v1124 = vsel %vm1112, %v1030, 0.0
        %v1125 = vsel %vm1113, %v1032, 0.0
        %v1126 = vsel %vm1112, %v1034, 0.0
        %v1127 = vsel %vm1113, %v1036, 0.0
        %v1128 = vsel %vm1112, %v1038, 0.0
        %v1129 = vsel %vm1113, %v1040, 0.0
        %v1130 = vsel %vm1112, %v1042, 0.0
        %v1131 = vsel %vm1113, %v1044, 0.0
        %v1132 = vsel %vm1112, %v1046, 0.0
        %v1133 = vsel %vm1113, %v1048, 0.0
        %v1134 = vsel %vm1112, %v1050, 0.0
        %v1135 = vsel %vm1113, %v1052, 0.0
        %v1136 = vsel %vm1112, %v1054, 0.0
        %v1137 = vsel %vm1113, %v1056, 0.0
        %v1138 = vsel %vm1112, %v1058, 0.0
        %v1139 = vsel %vm1113, %v1060, 0.0
        %v1140 = vsel %vm1112, %v1062, 0.0
        %v1141 = vsel %vm1113, %v1064, 0.0
        %v1142 = vsel %vm1112, %v1066, 0.0
        %v1143 = vsel %vm1113, %v1068, 0.0
        %v1144 = vsel %vm1112, %v1070, 0.0
        %v1145 = vsel %vm1113, %v1072, 0.0
        %v1146 = vmul.f32 %v1114, %v272
        %v1147 = vmul.f32 %v1115, %v274
        %v1148 = vmul.f32 %v1116, %v272
        %v1149 = vmul.f32 %v1117, %v274
        %v1150 = vmul.f32 %v1118, %v272
        %v1151 = vmul.f32 %v1119, %v274
        %v1152 = vmul.f32 %v1120, %v272
        %v1153 = vmul.f32 %v1121, %v274
        %v1154 = vmul.f32 %v1122, %v272
        %v1155 = vmul.f32 %v1123, %v274
        %v1156 = vmul.f32 %v1124, %v272
        %v1157 = vmul.f32 %v1125, %v274
        %v1158 = vmul.f32 %v1126, %v272
        %v1159 = vmul.f32 %v1127, %v274
        %v1160 = vmul.f32 %v1128, %v272
        %v1161 = vmul.f32 %v1129, %v274
        %v1162 = vmul.f32 %v1130, %v272
        %v1163 = vmul.f32 %v1131, %v274
        %v1164 = vmul.f32 %v1132, %v272
        %v1165 = vmul.f32 %v1133, %v274
        %v1166 = vmul.f32 %v1134, %v272
        %v1167 = vmul.f32 %v1135, %v274
        %v1168 = vmul.f32 %v1136, %v272
        %v1169 = vmul.f32 %v1137, %v274
        %v1170 = vmul.f32 %v1138, %v272
        %v1171 = vmul.f32 %v1139, %v274
        %v1172 = vmul.f32 %v1140, %v272
        %v1173 = vmul.f32 %v1141, %v274
        %v1174 = vmul.f32 %v1142, %v272
        %v1175 = vmul.f32 %v1143, %v274
        %v1176 = vmul.f32 %v1144, %v272
        %v1177 = vmul.f32 %v1145, %v274
        %v1178 = vadd.f32 %v1146, %v1147
        %v1179 = vrot.slane %v1178, 4
        %v1180 = vadd.f32 %v1178, %v1179
        %v1181 = vrot.slane %v1180, 2
        %v1182 = vadd.f32 %v1180, %v1181
        %v1183 = vrot.slane %v1182, 1
        %v1184 = vadd.f32 %v1182, %v1183
        %v1185 = vadd.f32 %v1148, %v1149
        %v1186 = vrot.slane %v1185, 4
        %v1187 = vadd.f32 %v1185, %v1186
        %v1188 = vrot.slane %v1187, 2
        %v1189 = vadd.f32 %v1187, %v1188
        %v1190 = vrot.slane %v1189, 1
        %v1191 = vadd.f32 %v1189, %v1190
        %v1192 = vadd.f32 %v1150, %v1151
        %v1193 = vrot.slane %v1192, 4
        %v1194 = vadd.f32 %v1192, %v1193
        %v1195 = vrot.slane %v1194, 2
        %v1196 = vadd.f32 %v1194, %v1195
        %v1197 = vrot.slane %v1196, 1
        %v1198 = vadd.f32 %v1196, %v1197
        %v1199 = vadd.f32 %v1152, %v1153
        %v1200 = vrot.slane %v1199, 4
        %v1201 = vadd.f32 %v1199, %v1200
        %v1202 = vrot.slane %v1201, 2
        %v1203 = vadd.f32 %v1201, %v1202
        %v1204 = vrot.slane %v1203, 1
        %v1205 = vadd.f32 %v1203, %v1204
        %v1206 = vadd.f32 %v1154, %v1155
        %v1207 = vrot.slane %v1206, 4
        %v1208 = vadd.f32 %v1206, %v1207
        %v1209 = vrot.slane %v1208, 2
        %v1210 = vadd.f32 %v1208, %v1209
        %v1211 = vrot.slane %v1210, 1
        %v1212 = vadd.f32 %v1210, %v1211
        %v1213 = vadd.f32 %v1156, %v1157
        %v1214 = vrot.slane %v1213, 4
        %v1215 = vadd.f32 %v1213, %v1214
        %v1216 = vrot.slane %v1215, 2
        %v1217 = vadd.f32 %v1215, %v1216
        %v1218 = vrot.slane %v1217, 1
        %v1219 = vadd.f32 %v1217, %v1218
        %v1220 = vadd.f32 %v1158, %v1159
        %v1221 = vrot.slane %v1220, 4
        %v1222 = vadd.f32 %v1220, %v1221
        %v1223 = vrot.slane %v1222, 2
        %v1224 = vadd.f32 %v1222, %v1223
        %v1225 = vrot.slane %v1224, 1
        %v1226 = vadd.f32 %v1224, %v1225
        %v1227 = vadd.f32 %v1160, %v1161
        %v1228 = vrot.slane %v1227, 4
        %v1229 = vadd.f32 %v1227, %v1228
        %v1230 = vrot.slane %v1229, 2
        %v1231 = vadd.f32 %v1229, %v1230
        %v1232 = vrot.slane %v1231, 1
        %v1233 = vadd.f32 %v1231, %v1232
        %v1234 = vadd.f32 %v1162, %v1163
        %v1235 = vrot.slane %v1234, 4
        %v1236 = vadd.f32 %v1234, %v1235
        %v1237 = vrot.slane %v1236, 2
        %v1238 = vadd.f32 %v1236, %v1237
        %v1239 = vrot.slane %v1238, 1
        %v1240 = vadd.f32 %v1238, %v1239
        %v1241 = vadd.f32 %v1164, %v1165
        %v1242 = vrot.slane %v1241, 4
        %v1243 = vadd.f32 %v1241, %v1242
        %v1244 = vrot.slane %v1243, 2
        %v1245 = vadd.f32 %v1243, %v1244
        %v1246 = vrot.slane %v1245, 1
        %v1247 = vadd.f32 %v1245, %v1246
        %v1248 = vadd.f32 %v1166, %v1167
        %v1249 = vrot.slane %v1248, 4
        %v1250 = vadd.f32 %v1248, %v1249
        %v1251 = vrot.slane %v1250, 2
        %v1252 = vadd.f32 %v1250, %v1251
        %v1253 = vrot.slane %v1252, 1
        %v1254 = vadd.f32 %v1252, %v1253
        %v1255 = vadd.f32 %v1168, %v1169
        %v1256 = vrot.slane %v1255, 4
        %v1257 = vadd.f32 %v1255, %v1256
        %v1258 = vrot.slane %v1257, 2
        %v1259 = vadd.f32 %v1257, %v1258
        %v1260 = vrot.slane %v1259, 1
        %v1261 = vadd.f32 %v1259, %v1260
        %v1262 = vadd.f32 %v1170, %v1171
        %v1263 = vrot.slane %v1262, 4
        %v1264 = vadd.f32 %v1262, %v1263
        %v1265 = vrot.slane %v1264, 2
        %v1266 = vadd.f32 %v1264, %v1265
        %v1267 = vrot.slane %v1266, 1
        %v1268 = vadd.f32 %v1266, %v1267
        %v1269 = vadd.f32 %v1172, %v1173
        %v1270 = vrot.slane %v1269, 4
        %v1271 = vadd.f32 %v1269, %v1270
        %v1272 = vrot.slane %v1271, 2
        %v1273 = vadd.f32 %v1271, %v1272
        %v1274 = vrot.slane %v1273, 1
        %v1275 = vadd.f32 %v1273, %v1274
        %v1276 = vadd.f32 %v1174, %v1175
        %v1277 = vrot.slane %v1276, 4
        %v1278 = vadd.f32 %v1276, %v1277
        %v1279 = vrot.slane %v1278, 2
        %v1280 = vadd.f32 %v1278, %v1279
        %v1281 = vrot.slane %v1280, 1
        %v1282 = vadd.f32 %v1280, %v1281
        %v1283 = vadd.f32 %v1176, %v1177
        %v1284 = vrot.slane %v1283, 4
        %v1285 = vadd.f32 %v1283, %v1284
        %v1286 = vrot.slane %v1285, 2
        %v1287 = vadd.f32 %v1285, %v1286
        %v1288 = vrot.slane %v1287, 1
        %v1289 = vadd.f32 %v1287, %v1288
        %v1290 = vadd.f32 %v1114, %v1115
        %v1291 = vrot.slane %v1290, 4
        %v1292 = vadd.f32 %v1290, %v1291
        %v1293 = vrot.slane %v1292, 2
        %v1294 = vadd.f32 %v1292, %v1293
        %v1295 = vrot.slane %v1294, 1
        %v1296 = vadd.f32 %v1294, %v1295
        %v1297 = vadd.f32 %v1116, %v1117
        %v1298 = vrot.slane %v1297, 4
        %v1299 = vadd.f32 %v1297, %v1298
        %v1300 = vrot.slane %v1299, 2
        %v1301 = vadd.f32 %v1299, %v1300
        %v1302 = vrot.slane %v1301, 1
        %v1303 = vadd.f32 %v1301, %v1302
        %v1304 = vadd.f32 %v1118, %v1119
        %v1305 = vrot.slane %v1304, 4
        %v1306 = vadd.f32 %v1304, %v1305
        %v1307 = vrot.slane %v1306, 2
        %v1308 = vadd.f32 %v1306, %v1307
        %v1309 = vrot.slane %v1308, 1
        %v1310 = vadd.f32 %v1308, %v1309
        %v1311 = vadd.f32 %v1120, %v1121
        %v1312 = vrot.slane %v1311, 4
        %v1313 = vadd.f32 %v1311, %v1312
        %v1314 = vrot.slane %v1313, 2
        %v1315 = vadd.f32 %v1313, %v1314
        %v1316 = vrot.slane %v1315, 1
        %v1317 = vadd.f32 %v1315, %v1316
        %v1318 = vadd.f32 %v1122, %v1123
        %v1319 = vrot.slane %v1318, 4
        %v1320 = vadd.f32 %v1318, %v1319
        %v1321 = vrot.slane %v1320, 2
        %v1322 = vadd.f32 %v1320, %v1321
        %v1323 = vrot.slane %v1322, 1
        %v1324 = vadd.f32 %v1322, %v1323
        %v1325 = vadd.f32 %v1124, %v1125
        %v1326 = vrot.slane %v1325, 4
        %v1327 = vadd.f32 %v1325, %v1326
        %v1328 = vrot.slane %v1327, 2
        %v1329 = vadd.f32 %v1327, %v1328
        %v1330 = vrot.slane %v1329, 1
        %v1331 = vadd.f32 %v1329, %v1330
        %v1332 = vadd.f32 %v1126, %v1127
        %v1333 = vrot.slane %v1332, 4
        %v1334 = vadd.f32 %v1332, %v1333
        %v1335 = vrot.slane %v1334, 2
        %v1336 = vadd.f32 %v1334, %v1335
        %v1337 = vrot.slane %v1336, 1
        %v1338 = vadd.f32 %v1336, %v1337
        %v1339 = vadd.f32 %v1128, %v1129
        %v1340 = vrot.slane %v1339, 4
        %v1341 = vadd.f32 %v1339, %v1340
        %v1342 = vrot.slane %v1341, 2
        %v1343 = vadd.f32 %v1341, %v1342
        %v1344 = vrot.slane %v1343, 1
        %v1345 = vadd.f32 %v1343, %v1344
        %v1346 = vadd.f32 %v1130, %v1131
        %v1347 = vrot.slane %v1346, 4
        %v1348 = vadd.f32 %v1346, %v1347
        %v1349 = vrot.slane %v1348, 2
        %v1350 = vadd.f32 %v1348, %v1349
        %v1351 = vrot.slane %v1350, 1
        %v1352 = vadd.f32 %v1350, %v1351
        %v1353 = vadd.f32 %v1132, %v1133
        %v1354 = vrot.slane %v1353, 4
        %v1355 = vadd.f32 %v1353, %v1354
        %v1356 = vrot.slane %v1355, 2
        %v1357 = vadd.f32 %v1355, %v1356
        %v1358 = vrot.slane %v1357, 1
        %v1359 = vadd.f32 %v1357, %v1358
        %v1360 = vadd.f32 %v1134, %v1135
        %v1361 = vrot.slane %v1360, 4
        %v1362 = vadd.f32 %v1360, %v1361
        %v1363 = vrot.slane %v1362, 2
        %v1364 = vadd.f32 %v1362, %v1363
        %v1365 = vrot.slane %v1364, 1
        %v1366 = vadd.f32 %v1364, %v1365
        %v1367 = vadd.f32 %v1136, %v1137
        %v1368 = vrot.slane %v1367, 4
        %v1369 = vadd.f32 %v1367, %v1368
        %v1370 = vrot.slane %v1369, 2
        %v1371 = vadd.f32 %v1369, %v1370
        %v1372 = vrot.slane %v1371, 1
        %v1373 = vadd.f32 %v1371, %v1372
        %v1374 = vadd.f32 %v1138, %v1139
        %v1375 = vrot.slane %v1374, 4
        %v1376 = vadd.f32 %v1374, %v1375
        %v1377 = vrot.slane %v1376, 2
        %v1378 = vadd.f32 %v1376, %v1377
        %v1379 = vrot.slane %v1378, 1
        %v1380 = vadd.f32 %v1378, %v1379
        %v1381 = vadd.f32 %v1140, %v1141
        %v1382 = vrot.slane %v1381, 4
        %v1383 = vadd.f32 %v1381, %v1382
        %v1384 = vrot.slane %v1383, 2
        %v1385 = vadd.f32 %v1383, %v1384
        %v1386 = vrot.slane %v1385, 1
        %v1387 = vadd.f32 %v1385, %v1386
        %v1388 = vadd.f32 %v1142, %v1143
        %v1389 = vrot.slane %v1388, 4
        %v1390 = vadd.f32 %v1388, %v1389
        %v1391 = vrot.slane %v1390, 2
        %v1392 = vadd.f32 %v1390, %v1391
        %v1393 = vrot.slane %v1392, 1
        %v1394 = vadd.f32 %v1392, %v1393
        %v1395 = vadd.f32 %v1144, %v1145
        %v1396 = vrot.slane %v1395, 4
        %v1397 = vadd.f32 %v1395, %v1396
        %v1398 = vrot.slane %v1397, 2
        %v1399 = vadd.f32 %v1397, %v1398
        %v1400 = vrot.slane %v1399, 1
        %v1401 = vadd.f32 %v1399, %v1400
        %v1402 = vadd.f32 %v1296, 1e-20
        %v1403 = vadd.f32 %v1303, 1e-20
        %v1404 = vadd.f32 %v1310, 1e-20
        %v1405 = vadd.f32 %v1317, 1e-20
        %v1406 = vadd.f32 %v1324, 1e-20
        %v1407 = vadd.f32 %v1331, 1e-20
        %v1408 = vadd.f32 %v1338, 1e-20
        %v1409 = vadd.f32 %v1345, 1e-20
        %v1410 = vadd.f32 %v1352, 1e-20
        %v1411 = vadd.f32 %v1359, 1e-20
        %v1412 = vadd.f32 %v1366, 1e-20
        %v1413 = vadd.f32 %v1373, 1e-20
        %v1414 = vadd.f32 %v1380, 1e-20
        %v1415 = vadd.f32 %v1387, 1e-20
        %v1416 = vadd.f32 %v1394, 1e-20
        %v1417 = vadd.f32 %v1401, 1e-20
        %v1418 = vrcp.pop %v1402
        %v1419 = vmul.f32 %v1184, %v1418
        %v1420 = vrcp.pop %v1403
        %v1421 = vmul.f32 %v1191, %v1420
        %v1422 = vrcp.pop %v1404
        %v1423 = vmul.f32 %v1198, %v1422
        %v1424 = vrcp.pop %v1405
        %v1425 = vmul.f32 %v1205, %v1424
        %v1426 = vrcp.pop %v1406
        %v1427 = vmul.f32 %v1212, %v1426
        %v1428 = vrcp.pop %v1407
        %v1429 = vmul.f32 %v1219, %v1428
        %v1430 = vrcp.pop %v1408
        %v1431 = vmul.f32 %v1226, %v1430
        %v1432 = vrcp.pop %v1409
        %v1433 = vmul.f32 %v1233, %v1432
        %v1434 = vrcp.pop %v1410
        %v1435 = vmul.f32 %v1240, %v1434
        %v1436 = vrcp.pop %v1411
        %v1437 = vmul.f32 %v1247, %v1436
        %v1438 = vrcp.pop %v1412
        %v1439 = vmul.f32 %v1254, %v1438
        %v1440 = vrcp.pop %v1413
        %v1441 = vmul.f32 %v1261, %v1440
        %v1442 = vrcp.pop %v1414
        %v1443 = vmul.f32 %v1268, %v1442
        %v1444 = vrcp.pop %v1415
        %v1445 = vmul.f32 %v1275, %v1444
        %v1446 = vrcp.pop %v1416
        %v1447 = vmul.f32 %v1282, %v1446
        %v1448 = vrcp.pop %v1417
        %v1449 = vmul.f32 %v1289, %v1448
        %vm1466 = vcmask 1041409
        %v1467 = vsel %vm1466, %v1421, %v1419
        %vm1468 = vcmask 1042434
        %v1469 = vsel %vm1468, %v1423, %v1467
        %vm1470 = vcmask 1043459
        %v1471 = vsel %vm1470, %v1425, %v1469
        %vm1472 = vcmask 1044484
        %v1473 = vsel %vm1472, %v1427, %v1471
        %vm1474 = vcmask 1045509
        %v1475 = vsel %vm1474, %v1429, %v1473
        %vm1476 = vcmask 1046534
        %v1477 = vsel %vm1476, %v1431, %v1475
        %vm1478 = vcmask 1047559
        %v1479 = vsel %vm1478, %v1433, %v1477
        %v1480 = vsel %vm1466, %v1437, %v1435
        %v1481 = vsel %vm1468, %v1439, %v1480
        %v1482 = vsel %vm1470, %v1441, %v1481
        %v1483 = vsel %vm1472, %v1443, %v1482
        %v1484 = vsel %vm1474, %v1445, %v1483
        %v1485 = vsel %vm1476, %v1447, %v1484
        %v1486 = vsel %vm1478, %v1449, %v1485
        %v1489 = vadd.f32 %v281, %v1479
        %v1490 = vadd.f32 %v283, %v1486
        %1491 = vst [vmem:[%s235] sm:$0xff] %v1489
        %1492 = vst [vmem:[%s235 + $0x8] sm:$0xff] %v1490
        %v1493 = vsel %vm1094, 1, 0
        %v1494 = vsel %vm1095, 1, 0
        %v1495 = vsel %vm1096, 1, 0
        %v1496 = vsel %vm1097, 1, 0
        %v1497 = vsel %vm1098, 1, 0
        %v1498 = vsel %vm1099, 1, 0
        %v1499 = vsel %vm1100, 1, 0
        %v1500 = vsel %vm1101, 1, 0
        %v1501 = vsel %vm1102, 1, 0
        %v1502 = vsel %vm1103, 1, 0
        %v1503 = vsel %vm1104, 1, 0
        %v1504 = vsel %vm1105, 1, 0
        %v1505 = vsel %vm1106, 1, 0
        %v1506 = vsel %vm1107, 1, 0
        %v1507 = vsel %vm1108, 1, 0
        %v1508 = vsel %vm1109, 1, 0
        %vm1509 = vcmp.eq.s32.totalorder %v1493, 1
        %vm1510 = vcmp.eq.s32.totalorder %v1494, 1
        %vm1511 = vcmp.eq.s32.totalorder %v1495, 1
        %vm1512 = vcmp.eq.s32.totalorder %v1496, 1
        %vm1513 = vcmp.eq.s32.totalorder %v1497, 1
        %vm1514 = vcmp.eq.s32.totalorder %v1498, 1
        %vm1515 = vcmp.eq.s32.totalorder %v1499, 1
        %vm1516 = vcmp.eq.s32.totalorder %v1500, 1
        %vm1517 = vcmp.eq.s32.totalorder %v1501, 1
        %vm1518 = vcmp.eq.s32.totalorder %v1502, 1
        %vm1519 = vcmp.eq.s32.totalorder %v1503, 1
        %vm1520 = vcmp.eq.s32.totalorder %v1504, 1
        %vm1521 = vcmp.eq.s32.totalorder %v1505, 1
        %vm1522 = vcmp.eq.s32.totalorder %v1506, 1
        %vm1523 = vcmp.eq.s32.totalorder %v1507, 1
        %vm1524 = vcmp.eq.s32.totalorder %v1508, 1
        %vm1525 = vmand %vm1509, %vm1112
        %vm1526 = vmand %vm1509, %vm1113
        %vm1527 = vmand %vm1510, %vm1112
        %vm1528 = vmand %vm1510, %vm1113
        %vm1529 = vmand %vm1511, %vm1112
        %vm1530 = vmand %vm1511, %vm1113
        %vm1531 = vmand %vm1512, %vm1112
        %vm1532 = vmand %vm1512, %vm1113
        %vm1533 = vmand %vm1513, %vm1112
        %vm1534 = vmand %vm1513, %vm1113
        %vm1535 = vmand %vm1514, %vm1112
        %vm1536 = vmand %vm1514, %vm1113
        %vm1537 = vmand %vm1515, %vm1112
        %vm1538 = vmand %vm1515, %vm1113
        %vm1539 = vmand %vm1516, %vm1112
        %vm1540 = vmand %vm1516, %vm1113
        %vm1541 = vmand %vm1517, %vm1112
        %vm1542 = vmand %vm1517, %vm1113
        %vm1543 = vmand %vm1518, %vm1112
        %vm1544 = vmand %vm1518, %vm1113
        %vm1545 = vmand %vm1519, %vm1112
        %vm1546 = vmand %vm1519, %vm1113
        %vm1547 = vmand %vm1520, %vm1112
        %vm1548 = vmand %vm1520, %vm1113
        %vm1549 = vmand %vm1521, %vm1112
        %vm1550 = vmand %vm1521, %vm1113
        %vm1551 = vmand %vm1522, %vm1112
        %vm1552 = vmand %vm1522, %vm1113
        %vm1553 = vmand %vm1523, %vm1112
        %vm1554 = vmand %vm1523, %vm1113
        %vm1555 = vmand %vm1524, %vm1112
        %vm1556 = vmand %vm1524, %vm1113
        %v1557 = vsel %vm1525, 1, 0
        %v1558 = vsel %vm1526, 1, 0
        %v1559 = vsel %vm1527, 1, 0
        %v1560 = vsel %vm1528, 1, 0
        %v1561 = vsel %vm1529, 1, 0
        %v1562 = vsel %vm1530, 1, 0
        %v1563 = vsel %vm1531, 1, 0
        %v1564 = vsel %vm1532, 1, 0
        %v1565 = vsel %vm1533, 1, 0
        %v1566 = vsel %vm1534, 1, 0
        %v1567 = vsel %vm1535, 1, 0
        %v1568 = vsel %vm1536, 1, 0
        %v1569 = vsel %vm1537, 1, 0
        %v1570 = vsel %vm1538, 1, 0
        %v1571 = vsel %vm1539, 1, 0
        %v1572 = vsel %vm1540, 1, 0
        %v1573 = vsel %vm1541, 1, 0
        %v1574 = vsel %vm1542, 1, 0
        %v1575 = vsel %vm1543, 1, 0
        %v1576 = vsel %vm1544, 1, 0
        %v1577 = vsel %vm1545, 1, 0
        %v1578 = vsel %vm1546, 1, 0
        %v1579 = vsel %vm1547, 1, 0
        %v1580 = vsel %vm1548, 1, 0
        %v1581 = vsel %vm1549, 1, 0
        %v1582 = vsel %vm1550, 1, 0
        %v1583 = vsel %vm1551, 1, 0
        %v1584 = vsel %vm1552, 1, 0
        %v1585 = vsel %vm1553, 1, 0
        %v1586 = vsel %vm1554, 1, 0
        %v1587 = vsel %vm1555, 1, 0
        %v1588 = vsel %vm1556, 1, 0
        %vm1589 = vcmp.eq.s32.totalorder %v1557, 1
        %vm1590 = vcmp.eq.s32.totalorder %v1558, 1
        %vm1591 = vcmp.eq.s32.totalorder %v1559, 1
        %vm1592 = vcmp.eq.s32.totalorder %v1560, 1
        %vm1593 = vcmp.eq.s32.totalorder %v1561, 1
        %vm1594 = vcmp.eq.s32.totalorder %v1562, 1
        %vm1595 = vcmp.eq.s32.totalorder %v1563, 1
        %vm1596 = vcmp.eq.s32.totalorder %v1564, 1
        %vm1597 = vcmp.eq.s32.totalorder %v1565, 1
        %vm1598 = vcmp.eq.s32.totalorder %v1566, 1
        %vm1599 = vcmp.eq.s32.totalorder %v1567, 1
        %vm1600 = vcmp.eq.s32.totalorder %v1568, 1
        %vm1601 = vcmp.eq.s32.totalorder %v1569, 1
        %vm1602 = vcmp.eq.s32.totalorder %v1570, 1
        %vm1603 = vcmp.eq.s32.totalorder %v1571, 1
        %vm1604 = vcmp.eq.s32.totalorder %v1572, 1
        %vm1605 = vcmp.eq.s32.totalorder %v1573, 1
        %vm1606 = vcmp.eq.s32.totalorder %v1574, 1
        %vm1607 = vcmp.eq.s32.totalorder %v1575, 1
        %vm1608 = vcmp.eq.s32.totalorder %v1576, 1
        %vm1609 = vcmp.eq.s32.totalorder %v1577, 1
        %vm1610 = vcmp.eq.s32.totalorder %v1578, 1
        %vm1611 = vcmp.eq.s32.totalorder %v1579, 1
        %vm1612 = vcmp.eq.s32.totalorder %v1580, 1
        %vm1613 = vcmp.eq.s32.totalorder %v1581, 1
        %vm1614 = vcmp.eq.s32.totalorder %v1582, 1
        %vm1615 = vcmp.eq.s32.totalorder %v1583, 1
        %vm1616 = vcmp.eq.s32.totalorder %v1584, 1
        %vm1617 = vcmp.eq.s32.totalorder %v1585, 1
        %vm1618 = vcmp.eq.s32.totalorder %v1586, 1
        %vm1619 = vcmp.eq.s32.totalorder %v1587, 1
        %vm1620 = vcmp.eq.s32.totalorder %v1588, 1
        %v1621 = vsel %vm1589, %v849, 0.0
        %v1622 = vsel %vm1590, %v850, 0.0
        %v1623 = vsel %vm1591, %v851, 0.0
        %v1624 = vsel %vm1592, %v852, 0.0
        %v1625 = vsel %vm1593, %v853, 0.0
        %v1626 = vsel %vm1594, %v854, 0.0
        %v1627 = vsel %vm1595, %v855, 0.0
        %v1628 = vsel %vm1596, %v856, 0.0
        %v1629 = vsel %vm1597, %v857, 0.0
        %v1630 = vsel %vm1598, %v858, 0.0
        %v1631 = vsel %vm1599, %v859, 0.0
        %v1632 = vsel %vm1600, %v860, 0.0
        %v1633 = vsel %vm1601, %v861, 0.0
        %v1634 = vsel %vm1602, %v862, 0.0
        %v1635 = vsel %vm1603, %v863, 0.0
        %v1636 = vsel %vm1604, %v864, 0.0
        %v1637 = vsel %vm1605, %v865, 0.0
        %v1638 = vsel %vm1606, %v866, 0.0
        %v1639 = vsel %vm1607, %v867, 0.0
        %v1640 = vsel %vm1608, %v868, 0.0
        %v1641 = vsel %vm1609, %v869, 0.0
        %v1642 = vsel %vm1610, %v870, 0.0
        %v1643 = vsel %vm1611, %v871, 0.0
        %v1644 = vsel %vm1612, %v872, 0.0
        %v1645 = vsel %vm1613, %v873, 0.0
        %v1646 = vsel %vm1614, %v874, 0.0
        %v1647 = vsel %vm1615, %v875, 0.0
        %v1648 = vsel %vm1616, %v876, 0.0
        %v1649 = vsel %vm1617, %v877, 0.0
        %v1650 = vsel %vm1618, %v878, 0.0
        %v1651 = vsel %vm1619, %v879, 0.0
        %v1652 = vsel %vm1620, %v880, 0.0
        %v1653 = vadd.s32 %v1074, %v1078
        %v1654 = vadd.s32 %v1075, %v1078
        %vm1655 = vcmp.lt.s32.totalorder %v1653, 12
        %vm1656 = vcmp.lt.s32.totalorder %v1654, 12
        %v1657 = vsel %vm1655, 1, 0
        %v1658 = vsel %vm1656, 1, 0
        %vm1659 = vcmp.eq.s32.totalorder %v1657, 1
        %vm1660 = vcmp.eq.s32.totalorder %v1658, 1
        %v1661 = vsel %vm1659, %v1489, 0.0
        %v1662 = vsel %vm1660, %v1490, 0.0
        %1663 = vmatprep.subr.mxu0 0.0
        %1664 = vmatpush1.msra.mxu0 %v1636
        %1665 = vmatprep.subr.mxu0 0.0
        %1666 = vmatpush1.msra.mxu0 %v1635
        %1667 = vmatprep.subr.mxu0 0.0
        %1668 = vmatpush1.msra.mxu0 %v1634
        %1669 = vmatprep.subr.mxu0 0.0
        %1670 = vmatpush1.msra.mxu0 %v1633
        %1671 = vmatprep.subr.mxu0 0.0
        %1672 = vmatpush1.msra.mxu0 %v1632
        %1673 = vmatprep.subr.mxu0 0.0
        %1674 = vmatpush1.msra.mxu0 %v1631
        %1675 = vmatprep.subr.mxu0 0.0
        %1676 = vmatpush1.msra.mxu0 %v1630
        %1677 = vmatprep.subr.mxu0 0.0
        %1678 = vmatpush1.msra.mxu0 %v1629
        %1679 = vmatprep.subr.mxu0 0.0
        %1680 = vmatpush1.msra.mxu0 %v1628
        %1681 = vmatprep.subr.mxu0 0.0
        %1682 = vmatpush1.msra.mxu0 %v1627
        %1683 = vmatprep.subr.mxu0 0.0
        %1684 = vmatpush1.msra.mxu0 %v1626
        %1685 = vmatprep.subr.mxu0 0.0
        %1686 = vmatpush1.msra.mxu0 %v1625
        %1687 = vmatprep.subr.mxu0 0.0
        %1688 = vmatpush1.msra.mxu0 %v1624
        %1689 = vmatprep.subr.mxu0 0.0
        %1690 = vmatpush1.msra.mxu0 %v1623
        %1691 = vmatprep.subr.mxu0 0.0
        %1692 = vmatpush1.msra.mxu0 %v1622
        %1693 = vmatprep.subr.mxu0 0.0
        %1694 = vmatpush1.msra.mxu0 %v1621
        %1695 = vmatprep.subr.mxu0 0.0
        %1696 = vmatpush2.msra.mxu0 %v1652
        %1697 = vmatprep.subr.mxu0 0.0
        %1698 = vmatpush2.msra.mxu0 %v1651
        %1699 = vmatprep.subr.mxu0 0.0
        %1700 = vmatpush2.msra.mxu0 %v1650
        %1701 = vmatprep.subr.mxu0 0.0
        %1702 = vmatpush2.msra.mxu0 %v1649
        %1703 = vmatprep.subr.mxu0 0.0
        %1704 = vmatpush2.msra.mxu0 %v1648
        %1705 = vmatprep.subr.mxu0 0.0
        %1706 = vmatpush2.msra.mxu0 %v1647
        %1707 = vmatprep.subr.mxu0 0.0
        %1708 = vmatpush2.msra.mxu0 %v1646
        %1709 = vmatprep.subr.mxu0 0.0
        %1710 = vmatpush2.msra.mxu0 %v1645
        %1711 = vmatprep.subr.mxu0 0.0
        %1712 = vmatpush2.msra.mxu0 %v1644
        %1713 = vmatprep.subr.mxu0 0.0
        %1714 = vmatpush2.msra.mxu0 %v1643
        %1715 = vmatprep.subr.mxu0 0.0
        %1716 = vmatpush2.msra.mxu0 %v1642
        %1717 = vmatprep.subr.mxu0 0.0
        %1718 = vmatpush2.msra.mxu0 %v1641
        %1719 = vmatprep.subr.mxu0 0.0
        %1720 = vmatpush2.msra.mxu0 %v1640
        %1721 = vmatprep.subr.mxu0 0.0
        %1722 = vmatpush2.msra.mxu0 %v1639
        %1723 = vmatprep.subr.mxu0 0.0
        %1724 = vmatpush2.msra.mxu0 %v1638
        %1725 = vmatprep.subr.mxu0 0.0
        %1726 = vmatpush2.msra.mxu0 %v1637
        %1727 = vmatprep.mubr.f32.mxu0 1.0
        %1728 = vmatmul.mubr.f32.gmra.mxu0 1.0
        %v1729 = vpop.f32.mrf.mxu0
        %v1730 = vadd.f32 0.0, %v1729
        %v1731 = vpop.f32.mrf.mxu0
        %1732 = vdwg.mxu0
        %v1733 = vmul.f32 %v1621, %v1621
        %v1734 = vmul.f32 %v1622, %v1622
        %v1735 = vmul.f32 %v1623, %v1623
        %v1736 = vmul.f32 %v1624, %v1624
        %v1737 = vmul.f32 %v1625, %v1625
        %v1738 = vmul.f32 %v1626, %v1626
        %v1739 = vmul.f32 %v1627, %v1627
        %v1740 = vmul.f32 %v1628, %v1628
        %v1741 = vmul.f32 %v1629, %v1629
        %v1742 = vmul.f32 %v1630, %v1630
        %v1743 = vmul.f32 %v1631, %v1631
        %v1744 = vmul.f32 %v1632, %v1632
        %v1745 = vmul.f32 %v1633, %v1633
        %v1746 = vmul.f32 %v1634, %v1634
        %v1747 = vmul.f32 %v1635, %v1635
        %v1748 = vmul.f32 %v1636, %v1636
        %v1749 = vmul.f32 %v1637, %v1637
        %v1750 = vmul.f32 %v1638, %v1638
        %v1751 = vmul.f32 %v1639, %v1639
        %v1752 = vmul.f32 %v1640, %v1640
        %v1753 = vmul.f32 %v1641, %v1641
        %v1754 = vmul.f32 %v1642, %v1642
        %v1755 = vmul.f32 %v1643, %v1643
        %v1756 = vmul.f32 %v1644, %v1644
        %v1757 = vmul.f32 %v1645, %v1645
        %v1758 = vmul.f32 %v1646, %v1646
        %v1759 = vmul.f32 %v1647, %v1647
        %v1760 = vmul.f32 %v1648, %v1648
        %v1761 = vmul.f32 %v1649, %v1649
        %v1762 = vmul.f32 %v1650, %v1650
        %v1763 = vmul.f32 %v1651, %v1651
        %v1764 = vmul.f32 %v1652, %v1652
        %1765 = vmatprep.subr.mxu0 0.0
        %1766 = vmatpush1.msra.mxu0 %v1748
        %1767 = vmatprep.subr.mxu0 0.0
        %1768 = vmatpush1.msra.mxu0 %v1747
        %1769 = vmatprep.subr.mxu0 0.0
        %1770 = vmatpush1.msra.mxu0 %v1746
        %1771 = vmatprep.subr.mxu0 0.0
        %1772 = vmatpush1.msra.mxu0 %v1745
        %1773 = vmatprep.subr.mxu0 0.0
        %1774 = vmatpush1.msra.mxu0 %v1744
        %1775 = vmatprep.subr.mxu0 0.0
        %1776 = vmatpush1.msra.mxu0 %v1743
        %1777 = vmatprep.subr.mxu0 0.0
        %1778 = vmatpush1.msra.mxu0 %v1742
        %1779 = vmatprep.subr.mxu0 0.0
        %1780 = vmatpush1.msra.mxu0 %v1741
        %1781 = vmatprep.subr.mxu0 0.0
        %1782 = vmatpush1.msra.mxu0 %v1740
        %1783 = vmatprep.subr.mxu0 0.0
        %1784 = vmatpush1.msra.mxu0 %v1739
        %1785 = vmatprep.subr.mxu0 0.0
        %1786 = vmatpush1.msra.mxu0 %v1738
        %1787 = vmatprep.subr.mxu0 0.0
        %1788 = vmatpush1.msra.mxu0 %v1737
        %1789 = vmatprep.subr.mxu0 0.0
        %1790 = vmatpush1.msra.mxu0 %v1736
        %1791 = vmatprep.subr.mxu0 0.0
        %1792 = vmatpush1.msra.mxu0 %v1735
        %1793 = vmatprep.subr.mxu0 0.0
        %1794 = vmatpush1.msra.mxu0 %v1734
        %1795 = vmatprep.subr.mxu0 0.0
        %1796 = vmatpush1.msra.mxu0 %v1733
        %1797 = vmatprep.subr.mxu0 0.0
        %1798 = vmatpush2.msra.mxu0 %v1764
        %1799 = vmatprep.subr.mxu0 0.0
        %1800 = vmatpush2.msra.mxu0 %v1763
        %1801 = vmatprep.subr.mxu0 0.0
        %1802 = vmatpush2.msra.mxu0 %v1762
        %1803 = vmatprep.subr.mxu0 0.0
        %1804 = vmatpush2.msra.mxu0 %v1761
        %1805 = vmatprep.subr.mxu0 0.0
        %1806 = vmatpush2.msra.mxu0 %v1760
        %1807 = vmatprep.subr.mxu0 0.0
        %1808 = vmatpush2.msra.mxu0 %v1759
        %1809 = vmatprep.subr.mxu0 0.0
        %1810 = vmatpush2.msra.mxu0 %v1758
        %1811 = vmatprep.subr.mxu0 0.0
        %1812 = vmatpush2.msra.mxu0 %v1757
        %1813 = vmatprep.subr.mxu0 0.0
        %1814 = vmatpush2.msra.mxu0 %v1756
        %1815 = vmatprep.subr.mxu0 0.0
        %1816 = vmatpush2.msra.mxu0 %v1755
        %1817 = vmatprep.subr.mxu0 0.0
        %1818 = vmatpush2.msra.mxu0 %v1754
        %1819 = vmatprep.subr.mxu0 0.0
        %1820 = vmatpush2.msra.mxu0 %v1753
        %1821 = vmatprep.subr.mxu0 0.0
        %1822 = vmatpush2.msra.mxu0 %v1752
        %1823 = vmatprep.subr.mxu0 0.0
        %1824 = vmatpush2.msra.mxu0 %v1751
        %1825 = vmatprep.subr.mxu0 0.0
        %1826 = vmatpush2.msra.mxu0 %v1750
        %1827 = vmatprep.subr.mxu0 0.0
        %1828 = vmatpush2.msra.mxu0 %v1749
        %1829 = vmatprep.mubr.f32.mxu0 1.0
        %1830 = vmatmul.mubr.f32.gmra.mxu0 1.0
        %v1831 = vpop.f32.mrf.mxu0
        %v1832 = vadd.f32 0.0, %v1831
        %v1833 = vpop.f32.mrf.mxu0
        %1834 = vdwg.mxu0
        %v1835 = vadd.f32 %v1661, %v1662
        %v1836 = vrot.slane %v1835, 4
        %v1837 = vadd.f32 %v1835, %v1836
        %v1838 = vrot.slane %v1837, 2
        %v1839 = vadd.f32 %v1837, %v1838
        %v1840 = vrot.slane %v1839, 1
        %v1841 = vadd.f32 %v1839, %v1840
        %v1842 = vmul.f32 %v1661, %v1661
        %v1843 = vmul.f32 %v1662, %v1662
        %v1844 = vadd.f32 %v1842, %v1843
        %v1845 = vrot.slane %v1844, 4
        %v1846 = vadd.f32 %v1844, %v1845
        %v1847 = vrot.slane %v1846, 2
        %v1848 = vadd.f32 %v1846, %v1847
        %v1849 = vrot.slane %v1848, 1
        %v1850 = vadd.f32 %v1848, %v1849
        %v1852 = vrot.slane %v1832, 7
        %vm1854 = vcmask 1040384
        %v1855 = vsel %vm1854, %v1730, %v1852
        %vm1856 = vcmask 1041408
        %v1857 = vsel %vm1856, %v1855, %v1841
        %vm1858 = vcmask 1042432
        %v1859 = vsel %vm1858, %v1857, %v1850
        %1860 = vst [vmem:[%s268] sm:$0xf] %v1859
        %s1861 = sand.u32 %s116, 1
        %s1862 = scalar_lea.sflag [#allocation3], %s1861
        %s1863 = sand.u32 %s116, 1
        %s1864 = smul.addr %s1863, 16
        %s1865 = scalar_lea.vmem [#allocation2], %s1864
        %p1866 = scmp.lt.s32.totalorder %s23, 1
        %s1867 = scalar_select %p1866, %s23, 1
        %p1868 = scmp.lt.s32.totalorder %s24, 0
        %s1869 = scalar_select %p1868, %s24, 0
        %s1870 = sadd.s32 %s1869, %s1867
        %s1871 = smul.addr %s1870, 4
        %s1872 = scalar_lea.vmem %s4, %s1871
        // Predicated region
        $region33: #{_lambda_.10} parent=31 // pred_check
          %p1873 = pneg %p126
        $region34: #{_lambda_.10} parent=31 // pred_check_branch
          %1875 = sbr.rel (%p1873) target = $region36
        $region35: #{_lambda_.10} parent=31 // pred_region
          %s1876 = smul.u32 2, %s24
          %s1878 = ssub.s32 256, 256
          %1879 = vsyncadd %s1862, %s1878
          %s1880 = smul.addr %s23, 2
          %s1881 = sadd.s32 %s1876, %s1880
          %s1882 = smul.addr %s1881, 128
          %s1883 = scalar_lea.hbm %s3, %s1882
          %s1884 = sshll.u32 %s1865, 4
          %s1885 = int_to_ptr.vmem [resolvable:$true] %s1884
          %1890 = dma.vmem_to_hbm [thread:$0]  %s1885, 256, %s1883, %s1862, 128, 128, 8
        $region36: #{_lambda_.10} parent=31 // pred_fallthru
          _
        // Predicated region
        $region37: #{_lambda_.10} parent=31 // pred_check
          %p1891 = pneg %p154
        $region38: #{_lambda_.10} parent=31 // pred_check_branch
          %1893 = sbr.rel (%p1891) target = $region40
        $region39: #{_lambda_.10} parent=31 // pred_region
          _
        $region40: #{_lambda_.10} parent=31 // pred_fallthru
          _
      $region32: #{_lambda_.10} parent=5 // pred_fallthru
        _
      %p1894 = scmp.le.s32.totalorder 2, %s14
      // Predicated region
      $region41: #{_lambda_.10} parent=5 // pred_check
        %p1895 = pneg %p1894
      $region42: #{_lambda_.10} parent=5 // pred_check_branch
        %1897 = sbr.rel (%p1895) target = $region44
      $region43: #{_lambda_.10} parent=5 // pred_region
        %s1898 = ssub.s32 %s14, 2
        // Predicated region
        $region45: #{_lambda_.10} parent=43 // pred_check
          %p1899 = pneg %p132
        $region46: #{_lambda_.10} parent=43 // pred_check_branch
          %1901 = sbr.rel (%p1899) target = $region48
        $region47: #{_lambda_.10} parent=43 // pred_region
          %s1902 = sand.u32 %s117, 1
          %s1903 = scalar_lea.sflag [#allocation3], %s1902
          %s1904 = sand.u32 %s117, 1
          %s1905 = smul.addr %s1904, 16
          %s1906 = scalar_lea.vmem [#allocation2], %s1905
          %1907 = dma.done %s1903, 256
        $region48: #{_lambda_.10} parent=43 // pred_fallthru
          _
        // Predicated region
        $region49: #{_lambda_.10} parent=43 // pred_check
          %p1908 = pneg %p160
        $region50: #{_lambda_.10} parent=43 // pred_check_branch
          %1910 = sbr.rel (%p1908) target = $region52
        $region51: #{_lambda_.10} parent=43 // pred_region
          %p1911 = scmp.lt.s32.totalorder %s25, 1
          %s1912 = scalar_select %p1911, %s25, 1
          %p1913 = scmp.lt.s32.totalorder %s26, 0
          %s1914 = scalar_select %p1913, %s26, 0
          %s1915 = sadd.s32 %s1914, %s1912
          %s1916 = smul.addr %s1915, 4
          %s1917 = scalar_lea.vmem %s4, %s1916
        $region52: #{_lambda_.10} parent=43 // pred_fallthru
          _
      $region44: #{_lambda_.10} parent=5 // pred_fallthru
        _
    $region6: #{_lambda_.10} parent=1 // loop_footer
      %s18 = sadd.s32 1, %s14
    $region7: #{_lambda_.10} parent=1 // loop_footer_branch
      %13 = sbr.rel target = $region3
    $region8: #{_lambda_.10} parent=1 // loop_exit
      _
    %1918 = vsyncpa [#allocation3], 1
    %s1919 = scalar_lea.sflag [#allocation3], 1
    %1920 = vsyncpa %s1919, 1

// kernel: _lambda_.11
$region0: #{_lambda_.11}
  #allocation0 [shape = 'u32[]', space=smem, size = 0x4, offset = 0x4, fixed_abs, tag = 'smem constant byte address 0x4 - core index']
  #allocation1 [shape = 'u32[144,128]{1,0:T(1,128)}', space=vmem, size = 0x12000, scoped, tag = 'internal scratch']
  %s0 = inlined_call_operand.vmem [shape: f32[2,16,512], index: 0, kind: input, shape index: {}]
  %s1 = inlined_call_operand.vmem [shape: bf16[2,16,16,128], index: 1, kind: input, shape index: {}]
  %s2 = inlined_call_operand.vmem [shape: bf16[128,128], index: 2, kind: input, shape index: {}]
  %s3 = inlined_call_operand.vmem [shape: f32[4,128], index: 3, kind: input, shape index: {}]
  %s4 = inlined_call_operand.vmem [shape: bf16[2,128,128], index: 4, kind: input, shape index: {}]
  %s5 = inlined_call_operand.vmem [shape: f32[2,128], index: 5, kind: input, shape index: {}]
  %s6 = inlined_call_operand.vmem [shape: bf16[128,128], index: 6, kind: input, shape index: {}]
  %s7 = inlined_call_operand.vmem [shape: f32[1,128], index: 7, kind: input, shape index: {}]
  %s8 = inlined_call_operand.vmem [shape: f32[2,16,16,2], index: 8, kind: output, shape index: {}]
  %s9 = sld [smem:[#allocation0]]
  $region88: #{_lambda_.11} parent=0
    _
  %s11 = ssub.s32 1, %s9
  %s12 = scalar_select 0, %s11, %s9
  $region1: #{_lambda_.11} parent=0
    #allocation2 [shape = 'u8[32768]{0}', space=vmem, size = 0x8000, scoped, tag = 'input window, operand 0']
    loop: start=0, step=1, limit=4
    $region2: #{_lambda_.11} parent=1 // loop_pre_header
      _
    $region3: #{_lambda_.11} parent=1 // loop_header
      %s14 = sphi 0, %s18
      %p15 = scmp.ge.s32.totalorder %s14, 4
      %s21 = sphi 0, %s33
      %s22 = sphi 0, %s29
      %s23 = sphi 0, %s21
      %s24 = sphi 0, %s22
      %s25 = sphi 0, %s23
      %s26 = sphi 0, %s24
      %s36 = sphi 0, %s38
      %s39 = sphi 0, %s36
      %s40 = sphi 0, %s39
      %s56 = sphi 0, %s40
      %s64 = sphi 0, %s66
      %s67 = sphi 0, %s64
      %s68 = sphi 0, %s67
      %s84 = sphi 0, %s68
      %s88 = sphi 0, %s88
      %s90 = sphi 0, %s88
      %s91 = sphi 0, %s90
      %s105 = sphi 0, %s91
      %s109 = sphi 0, %s109
      %s111 = sphi 0, %s109
      %s112 = sphi 0, %s111
      %s126 = sphi 0, %s112
      %s130 = sphi 0, %s130
      %s132 = sphi 0, %s130
      %s133 = sphi 0, %s132
      %s147 = sphi 0, %s133
      %s151 = sphi 0, %s151
      %s153 = sphi 0, %s151
      %s154 = sphi 0, %s153
      %s168 = sphi 0, %s154
      %s172 = sphi 0, %s172
      %s174 = sphi 0, %s172
      %s175 = sphi 0, %s174
      %s189 = sphi 0, %s175
      %s193 = sphi 0, %s193
      %s195 = sphi 0, %s193
      %s196 = sphi 0, %s195
      %s210 = sphi 0, %s196
      %s218 = sphi 0, %s220
      %s221 = sphi 0, %s218
      %s222 = sphi 0, %s221
      %s238 = sphi 0, %s222
    $region4: #{_lambda_.11} parent=1 // loop_header_branch
      %17 = sbr.rel (%p15) target = $region8
    $region5: #{_lambda_.11} parent=1 // loop_body
      %s19 = ssub.s32 %s14, 1
      %s20 = ssub.s32 %s14, 2
      %s27 = sadd.s32 1, %s22
      %p28 = scmp.ge.s32.totalorder %s27, 1
      %s29 = scalar_select %p28, 0, %s27
      %s30 = sadd.s32 1, %s21
      %s31 = scalar_select %p28, %s30, %s21
      %p32 = scmp.ge.s32.totalorder %s31, 2
      %s33 = scalar_select %p32, 0, %s31
      %s34 = ssub.s32 %s21, %s33
      %p35 = scmp.eq.s32.totalorder %s34, 0
      %s37 = sadd.s32 %s36, 1
      %s38 = scalar_select %p35, %s36, %s37
      %p41 = pneg %p35
      %p42 = scmp.eq.s32.totalorder %s14, 1
      %p43 = por %p41, %p42
      %p44 = scmp.ne.s32.totalorder %s36, %s39
      %p45 = scmp.eq.s32.totalorder %s14, 0
      %p46 = por %p44, %p45
      %p47 = scmp.ne.s32.totalorder %s36, %s39
      %p48 = scmp.eq.s32.totalorder %s19, 1
      %p49 = por %p47, %p48
      %p50 = scmp.ne.s32.totalorder %s39, %s40
      %p51 = scmp.eq.s32.totalorder %s19, 0
      %p52 = por %p50, %p51
      %p53 = scmp.ne.s32.totalorder %s39, %s40
      %p54 = scmp.eq.s32.totalorder %s20, 1
      %p55 = por %p53, %p54
      %p57 = scmp.ne.s32.totalorder %s40, %s56
      %p58 = scmp.eq.s32.totalorder %s20, 0
      %p59 = por %p57, %p58
      %s60 = ssub.s32 %s21, %s33
      %s61 = ssub.s32 %s22, %s29
      %s62 = sor.u32 %s60, %s61
      %p63 = scmp.eq.s32.totalorder %s62, 0
      %s65 = sadd.s32 %s64, 1
      %s66 = scalar_select %p63, %s64, %s65
      %p69 = pneg %p63
      %p70 = scmp.eq.s32.totalorder %s14, 1
      %p71 = por %p69, %p70
      %p72 = scmp.ne.s32.totalorder %s64, %s67
      %p73 = scmp.eq.s32.totalorder %s14, 0
      %p74 = por %p72, %p73
      %p75 = scmp.ne.s32.totalorder %s64, %s67
      %p76 = scmp.eq.s32.totalorder %s19, 1
      %p77 = por %p75, %p76
      %p78 = scmp.ne.s32.totalorder %s67, %s68
      %p79 = scmp.eq.s32.totalorder %s19, 0
      %p80 = por %p78, %p79
      %p81 = scmp.ne.s32.totalorder %s67, %s68
      %p82 = scmp.eq.s32.totalorder %s20, 1
      %p83 = por %p81, %p82
      %p85 = scmp.ne.s32.totalorder %s68, %s84
      %p86 = scmp.eq.s32.totalorder %s20, 0
      %p87 = por %p85, %p86
      %s89 = sadd.s32 %s88, 1
      %p92 = scmp.eq.s32.totalorder %s14, 1
      %p93 = scmp.ne.s32.totalorder %s88, %s90
      %p94 = scmp.eq.s32.totalorder %s14, 0
      %p95 = por %p93, %p94
      %p96 = scmp.ne.s32.totalorder %s88, %s90
      %p97 = scmp.eq.s32.totalorder %s19, 1
      %p98 = por %p96, %p97
      %p99 = scmp.ne.s32.totalorder %s90, %s91
      %p100 = scmp.eq.s32.totalorder %s19, 0
      %p101 = por %p99, %p100
      %p102 = scmp.ne.s32.totalorder %s90, %s91
      %p103 = scmp.eq.s32.totalorder %s20, 1
      %p104 = por %p102, %p103
      %p106 = scmp.ne.s32.totalorder %s91, %s105
      %p107 = scmp.eq.s32.totalorder %s20, 0
      %p108 = por %p106, %p107
      %s110 = sadd.s32 %s109, 1
      %p113 = scmp.eq.s32.totalorder %s14, 1
      %p114 = scmp.ne.s32.totalorder %s109, %s111
      %p115 = scmp.eq.s32.totalorder %s14, 0
      %p116 = por %p114, %p115
      %p117 = scmp.ne.s32.totalorder %s109, %s111
      %p118 = scmp.eq.s32.totalorder %s19, 1
      %p119 = por %p117, %p118
      %p120 = scmp.ne.s32.totalorder %s111, %s112
      %p121 = scmp.eq.s32.totalorder %s19, 0
      %p122 = por %p120, %p121
      %p123 = scmp.ne.s32.totalorder %s111, %s112
      %p124 = scmp.eq.s32.totalorder %s20, 1
      %p125 = por %p123, %p124
      %p127 = scmp.ne.s32.totalorder %s112, %s126
      %p128 = scmp.eq.s32.totalorder %s20, 0
      %p129 = por %p127, %p128
      %s131 = sadd.s32 %s130, 1
      %p134 = scmp.eq.s32.totalorder %s14, 1
      %p135 = scmp.ne.s32.totalorder %s130, %s132
      %p136 = scmp.eq.s32.totalorder %s14, 0
      %p137 = por %p135, %p136
      %p138 = scmp.ne.s32.totalorder %s130, %s132
      %p139 = scmp.eq.s32.totalorder %s19, 1
      %p140 = por %p138, %p139
      %p141 = scmp.ne.s32.totalorder %s132, %s133
      %p142 = scmp.eq.s32.totalorder %s19, 0
      %p143 = por %p141, %p142
      %p144 = scmp.ne.s32.totalorder %s132, %s133
      %p145 = scmp.eq.s32.totalorder %s20, 1
      %p146 = por %p144, %p145
      %p148 = scmp.ne.s32.totalorder %s133, %s147
      %p149 = scmp.eq.s32.totalorder %s20, 0
      %p150 = por %p148, %p149
      %s152 = sadd.s32 %s151, 1
      %p155 = scmp.eq.s32.totalorder %s14, 1
      %p156 = scmp.ne.s32.totalorder %s151, %s153
      %p157 = scmp.eq.s32.totalorder %s14, 0
      %p158 = por %p156, %p157
      %p159 = scmp.ne.s32.totalorder %s151, %s153
      %p160 = scmp.eq.s32.totalorder %s19, 1
      %p161 = por %p159, %p160
      %p162 = scmp.ne.s32.totalorder %s153, %s154
      %p163 = scmp.eq.s32.totalorder %s19, 0
      %p164 = por %p162, %p163
      %p165 = scmp.ne.s32.totalorder %s153, %s154
      %p166 = scmp.eq.s32.totalorder %s20, 1
      %p167 = por %p165, %p166
      %p169 = scmp.ne.s32.totalorder %s154, %s168
      %p170 = scmp.eq.s32.totalorder %s20, 0
      %p171 = por %p169, %p170
      %s173 = sadd.s32 %s172, 1
      %p176 = scmp.eq.s32.totalorder %s14, 1
      %p177 = scmp.ne.s32.totalorder %s172, %s174
      %p178 = scmp.eq.s32.totalorder %s14, 0
      %p179 = por %p177, %p178
      %p180 = scmp.ne.s32.totalorder %s172, %s174
      %p181 = scmp.eq.s32.totalorder %s19, 1
      %p182 = por %p180, %p181
      %p183 = scmp.ne.s32.totalorder %s174, %s175
      %p184 = scmp.eq.s32.totalorder %s19, 0
      %p185 = por %p183, %p184
      %p186 = scmp.ne.s32.totalorder %s174, %s175
      %p187 = scmp.eq.s32.totalorder %s20, 1
      %p188 = por %p186, %p187
      %p190 = scmp.ne.s32.totalorder %s175, %s189
      %p191 = scmp.eq.s32.totalorder %s20, 0
      %p192 = por %p190, %p191
      %s194 = sadd.s32 %s193, 1
      %p197 = scmp.eq.s32.totalorder %s14, 1
      %p198 = scmp.ne.s32.totalorder %s193, %s195
      %p199 = scmp.eq.s32.totalorder %s14, 0
      %p200 = por %p198, %p199
      %p201 = scmp.ne.s32.totalorder %s193, %s195
      %p202 = scmp.eq.s32.totalorder %s19, 1
      %p203 = por %p201, %p202
      %p204 = scmp.ne.s32.totalorder %s195, %s196
      %p205 = scmp.eq.s32.totalorder %s19, 0
      %p206 = por %p204, %p205
      %p207 = scmp.ne.s32.totalorder %s195, %s196
      %p208 = scmp.eq.s32.totalorder %s20, 1
      %p209 = por %p207, %p208
      %p211 = scmp.ne.s32.totalorder %s196, %s210
      %p212 = scmp.eq.s32.totalorder %s20, 0
      %p213 = por %p211, %p212
      %s214 = ssub.s32 %s21, %s33
      %s215 = ssub.s32 %s22, %s29
      %s216 = sor.u32 %s214, %s215
      %p217 = scmp.eq.s32.totalorder %s216, 0
      %s219 = sadd.s32 %s218, 1
      %s220 = scalar_select %p217, %s218, %s219
      %p223 = pneg %p217
      %p224 = scmp.eq.s32.totalorder %s14, 1
      %p225 = por %p223, %p224
      %p226 = scmp.ne.s32.totalorder %s218, %s221
      %p227 = scmp.eq.s32.totalorder %s14, 0
      %p228 = por %p226, %p227
      %p229 = scmp.ne.s32.totalorder %s218, %s221
      %p230 = scmp.eq.s32.totalorder %s19, 1
      %p231 = por %p229, %p230
      %p232 = scmp.ne.s32.totalorder %s221, %s222
      %p233 = scmp.eq.s32.totalorder %s19, 0
      %p234 = por %p232, %p233
      %p235 = scmp.ne.s32.totalorder %s221, %s222
      %p236 = scmp.eq.s32.totalorder %s20, 1
      %p237 = por %p235, %p236
      %p239 = scmp.ne.s32.totalorder %s222, %s238
      %p240 = scmp.eq.s32.totalorder %s20, 0
      %p241 = por %p239, %p240
      %p242 = scmp.le.s32.totalorder 1, %s14
      %p243 = scmp.lt.s32.totalorder %s14, 3
      %p244 = pnand %p242, %p243
      %p245 = pneg %p244
      // Predicated region
      $region9: #{_lambda_.11} parent=5 // pred_check
        _
      $region10: #{_lambda_.11} parent=5 // pred_check_branch
        %247 = sbr.rel (%p244) target = $region12
      $region11: #{_lambda_.11} parent=5 // pred_region
        %s248 = ssub.s32 %s14, 1
        // Predicated region
        $region13: #{_lambda_.11} parent=11 // pred_check
          %p249 = pneg %p101
        $region14: #{_lambda_.11} parent=11 // pred_check_branch
          %251 = sbr.rel (%p249) target = $region16
        $region15: #{_lambda_.11} parent=11 // pred_region
          _
        $region16: #{_lambda_.11} parent=11 // pred_fallthru
          _
        // Predicated region
        $region17: #{_lambda_.11} parent=11 // pred_check
          %p252 = pneg %p122
        $region18: #{_lambda_.11} parent=11 // pred_check_branch
          %254 = sbr.rel (%p252) target = $region20
        $region19: #{_lambda_.11} parent=11 // pred_region
          _
        $region20: #{_lambda_.11} parent=11 // pred_fallthru
          _
        // Predicated region
        $region21: #{_lambda_.11} parent=11 // pred_check
          %p255 = pneg %p143
        $region22: #{_lambda_.11} parent=11 // pred_check_branch
          %257 = sbr.rel (%p255) target = $region24
        $region23: #{_lambda_.11} parent=11 // pred_region
          _
        $region24: #{_lambda_.11} parent=11 // pred_fallthru
          _
        // Predicated region
        $region25: #{_lambda_.11} parent=11 // pred_check
          %p258 = pneg %p164
        $region26: #{_lambda_.11} parent=11 // pred_check_branch
          %260 = sbr.rel (%p258) target = $region28
        $region27: #{_lambda_.11} parent=11 // pred_region
          _
        $region28: #{_lambda_.11} parent=11 // pred_fallthru
          _
        // Predicated region
        $region29: #{_lambda_.11} parent=11 // pred_check
          %p261 = pneg %p185
        $region30: #{_lambda_.11} parent=11 // pred_check_branch
          %263 = sbr.rel (%p261) target = $region32
        $region31: #{_lambda_.11} parent=11 // pred_region
          _
        $region32: #{_lambda_.11} parent=11 // pred_fallthru
          _
        // Predicated region
        $region33: #{_lambda_.11} parent=11 // pred_check
          %p264 = pneg %p206
        $region34: #{_lambda_.11} parent=11 // pred_check_branch
          %266 = sbr.rel (%p264) target = $region36
        $region35: #{_lambda_.11} parent=11 // pred_region
          _
        $region36: #{_lambda_.11} parent=11 // pred_fallthru
          _
      $region12: #{_lambda_.11} parent=5 // pred_fallthru
        _
      %p267 = scmp.lt.s32.totalorder %s14, 2
      // Predicated region
      $region37: #{_lambda_.11} parent=5 // pred_check
        %p268 = pneg %p267
      $region38: #{_lambda_.11} parent=5 // pred_check_branch
        %270 = sbr.rel (%p268) target = $region40
      $region39: #{_lambda_.11} parent=5 // pred_region
        // Predicated region
        $region41: #{_lambda_.11} parent=39 // pred_check
          %p271 = pneg %p46
        $region42: #{_lambda_.11} parent=39 // pred_check_branch
          %273 = sbr.rel (%p271) target = $region44
        $region43: #{_lambda_.11} parent=39 // pred_region
          %s274 = sand.u32 %s36, 1
          %s275 = sand.u32 %s36, 1
          %s276 = smul.addr %s275, 32
          %s277 = scalar_lea.vmem [#allocation2], %s276
          %s278 = smul.addr %s21, 8
          %s279 = smul.addr %s278, 8
          %s280 = scalar_lea.vmem %s0, %s279
          // Predicated region
          $region45: #{_lambda_.11} parent=43 // pred_check
            _
          $region46: #{_lambda_.11} parent=43 // pred_check_branch
            %282 = sbr.rel (0) target = $region48
          $region47: #{_lambda_.11} parent=43 // pred_region
            // Predicated region
            $region49: #{_lambda_.11} parent=47 // pred_check
              _
            $region50: #{_lambda_.11} parent=47 // pred_check_branch
              %284 = sbr.rel (0) target = $region52
            $region51: #{_lambda_.11} parent=47 // pred_region
              loop: start=0, step=1, limit=1
              $region53: #{_lambda_.11} parent=51 // loop_pre_header
                _
              $region54: #{_lambda_.11} parent=51 // loop_header
                %s286 = sphi 0, %s290
                %p287 = scmp.ge.s32.totalorder %s286, 1
                %s291 = sphi %s280, %s280
                %s292 = sphi %s277, %s277
              $region55: #{_lambda_.11} parent=51 // loop_header_branch
                %289 = sbr.rel (%p287) target = $region59
              $region56: #{_lambda_.11} parent=51 // loop_body
                %v293 = vld [vmem:[%s291] sm:$0xff]
                %294 = vst [vmem:[%s292] sm:$0xff] %v293
                %v295 = vld [vmem:[%s291 + $0x8] sm:$0xff]
                %296 = vst [vmem:[%s292 + $0x8] sm:$0xff] %v295
                %v297 = vld [vmem:[%s291 + $0x20] sm:$0xff]
                %298 = vst [vmem:[%s292 + $0x10] sm:$0xff] %v297
                %v299 = vld [vmem:[%s291 + $0x28] sm:$0xff]
                %300 = vst [vmem:[%s292 + $0x18] sm:$0xff] %v299
              $region57: #{_lambda_.11} parent=51 // loop_footer
                %s290 = sadd.s32 1, %s286
              $region58: #{_lambda_.11} parent=51 // loop_footer_branch
                %285 = sbr.rel target = $region54
              $region59: #{_lambda_.11} parent=51 // loop_exit
                _
            $region52: #{_lambda_.11} parent=47 // pred_fallthru
              _
            // Predicated region
            $region60: #{_lambda_.11} parent=47 // pred_check
              _
            $region61: #{_lambda_.11} parent=47 // pred_check_branch
              %302 = sbr.rel target = $region63
            $region62: #{_lambda_.11} parent=47 // pred_region
              _
            $region63: #{_lambda_.11} parent=47 // pred_fallthru
              _
          $region48: #{_lambda_.11} parent=43 // pred_fallthru
            _
          %303 = vnop
        $region44: #{_lambda_.11} parent=39 // pred_fallthru
          _
        // Predicated region
        $region64: #{_lambda_.11} parent=39 // pred_check
          %p304 = pneg %p74
        $region65: #{_lambda_.11} parent=39 // pred_check_branch
          %306 = sbr.rel (%p304) target = $region67
        $region66: #{_lambda_.11} parent=39 // pred_region
          %s307 = smul.u32 16, %s22
          %p308 = scmp.lt.s32.totalorder %s21, 1
          %s309 = scalar_select %p308, %s21, 1
          %p310 = scmp.lt.s32.totalorder %s307, 15
          %s311 = scalar_select %p310, %s307, 15
          %s312 = smul.addr %s311, 2
          %s313 = smul.addr %s309, 32
          %s314 = sadd.s32 %s312, %s313
          %s315 = smul.addr %s314, 4
          %s316 = scalar_lea.vmem %s1, %s315
          %s317 = smul.u32 16, %s22
        $region67: #{_lambda_.11} parent=39 // pred_fallthru
          _
      $region40: #{_lambda_.11} parent=5 // pred_fallthru
        _
      %p318 = scmp.le.s32.totalorder 1, %s14
      %p319 = scmp.lt.s32.totalorder %s14, 3
      %p320 = pnand %p318, %p319
      %p321 = pneg %p320
      // Predicated region
      $region68: #{_lambda_.11} parent=5 // pred_check
        _
      $region69: #{_lambda_.11} parent=5 // pred_check_branch
        %323 = sbr.rel (%p320) target = $region71
      $region70: #{_lambda_.11} parent=5 // pred_region
        %s324 = ssub.s32 %s14, 1
        %s325 = sand.u32 %s39, 1
        %s326 = sand.u32 %s39, 1
        %s327 = smul.addr %s326, 32
        %s328 = scalar_lea.vmem [#allocation2], %s327
        // Predicated region
        $region72: #{_lambda_.11} parent=70 // pred_check
          %p329 = pneg %p52
        $region73: #{_lambda_.11} parent=70 // pred_check_branch
          %331 = sbr.rel (%p329) target = $region75
        $region74: #{_lambda_.11} parent=70 // pred_region
          _
        $region75: #{_lambda_.11} parent=70 // pred_fallthru
          _
        %s332 = sand.u32 %s39, 1
        %s333 = sand.u32 %s39, 1
        %s334 = smul.addr %s333, 32
        %s335 = scalar_lea.vmem [#allocation2], %s334
        %p336 = pneg %p52
        %p337 = pneg %p49
        %s338 = smul.u32 16, %s24
        %p339 = scmp.lt.s32.totalorder %s23, 1
        %s340 = scalar_select %p339, %s23, 1
        %p341 = scmp.lt.s32.totalorder %s338, 15
        %s342 = scalar_select %p341, %s338, 15
        %s343 = smul.addr %s342, 2
        %s344 = smul.addr %s340, 32
        %s345 = sadd.s32 %s343, %s344
        %s346 = smul.addr %s345, 4
        %s347 = scalar_lea.vmem %s1, %s346
        %p348 = pneg %p80
        %p349 = pneg %p77
        %p350 = pneg %p101
        %p351 = pneg %p98
        %p352 = pneg %p122
        %p353 = pneg %p119
        %p354 = pneg %p143
        %p355 = pneg %p140
        %p356 = pneg %p164
        %p357 = pneg %p161
        %p358 = pneg %p185
        %p359 = pneg %p182
        %p360 = pneg %p206
        %p361 = pneg %p203
        %p362 = pneg %p234
        %p363 = pneg %p231
        %s364 = smul.u32 16, %s24
        %p365 = scmp.lt.s32.totalorder %s23, 1
        %s366 = scalar_select %p365, %s23, 1
        %p367 = scmp.lt.s32.totalorder %s364, 15
        %s368 = scalar_select %p367, %s364, 15
        %s369 = smul.addr %s368, 2
        %s370 = smul.addr %s366, 32
        %s371 = sadd.s32 %s369, %s370
        %s372 = smul.addr %s371, 8
        %s373 = scalar_lea.vmem %s8, %s372
        %s374 = smul.u32 16, %s24
        %p375 = scmp.lt.s32.totalorder %s23, 1
        %s376 = scalar_select %p375, %s23, 1
        %p377 = scmp.lt.s32.totalorder %s374, 15
        %s378 = scalar_select %p377, %s374, 15
        %s379 = smul.addr %s378, 2
        %s380 = smul.addr %s376, 32
        %s381 = sadd.s32 %s379, %s380
        %s382 = smul.addr %s381, 4
        %s383 = scalar_lea.vmem %s1, %s382
        %s384 = smul.u32 16, %s24
        %s385 = smul.u32 16, %s24
        %p386 = scmp.lt.s32.totalorder %s23, 1
        %s387 = scalar_select %p386, %s23, 1
        %p388 = scmp.lt.s32.totalorder %s385, 15
        %s389 = scalar_select %p388, %s385, 15
        %s390 = smul.addr %s389, 2
        %s391 = smul.addr %s387, 32
        %s392 = sadd.s32 %s390, %s391
        %s393 = smul.addr %s392, 8
        %s394 = scalar_lea.vmem %s8, %s393
        %s395 = smul.u32 16, %s24
        %s397 = smul.u32 %s24, 16
        %v398 = vld [vmem:[%s328 + $0x8] sm:$0xff]
        %v399 = vld [vmem:[%s328 + $0x18] sm:$0xff]
        %s400 = sshra.s32 %s397, 3
        %s401 = sand.u32 %s397, 7
        %s402 = smul.u32 %s400, 2
        %s403 = smul.addr %s402, 8
        %s404 = scalar_lea.vmem %s328, %s403 [#allocation2]
        %v405 = vld [vmem:[%s404] sm:$0xff]
        %v406 = vld [vmem:[%s404 + $0x10] sm:$0xff]
        %v407 = vld [vmem:[%s383] sm:$0xf]
        %v408 = vld [vmem:[%s383 + $0x4] sm:$0xf]
        %v409 = vld [vmem:[%s383 + $0x8] sm:$0xf]
        %v410 = vld [vmem:[%s383 + $0xc] sm:$0xf]
        %v411 = vld [vmem:[%s383 + $0x10] sm:$0xf]
        %v412 = vld [vmem:[%s383 + $0x14] sm:$0xf]
        %v413 = vld [vmem:[%s383 + $0x18] sm:$0xf]
        %v414 = vld [vmem:[%s383 + $0x1c] sm:$0xf]
        %v415 = vld [vmem:[%s383 + $0x20] sm:$0xf]
        %v416 = vld [vmem:[%s383 + $0x24] sm:$0xf]
        %v417 = vld [vmem:[%s383 + $0x28] sm:$0xf]
        %v418 = vld [vmem:[%s383 + $0x2c] sm:$0xf]
        %v419 = vld [vmem:[%s383 + $0x30] sm:$0xf]
        %v420 = vld [vmem:[%s383 + $0x34] sm:$0xf]
        %v421 = vld [vmem:[%s383 + $0x38] sm:$0xf]
        %v422 = vld [vmem:[%s383 + $0x3c] sm:$0xf]
        %v423 = vld [vmem:[%s383 + $0x40] sm:$0xf]
        %v424 = vld [vmem:[%s383 + $0x44] sm:$0xf]
        %v425 = vld [vmem:[%s383 + $0x48] sm:$0xf]
        %v426 = vld [vmem:[%s383 + $0x4c] sm:$0xf]
        %v427 = vld [vmem:[%s383 + $0x50] sm:$0xf]
        %v428 = vld [vmem:[%s383 + $0x54] sm:$0xf]
        %v429 = vld [vmem:[%s383 + $0x58] sm:$0xf]
        %v430 = vld [vmem:[%s383 + $0x5c] sm:$0xf]
        %v431 = vld [vmem:[%s383 + $0x60] sm:$0xf]
        %v432 = vld [vmem:[%s383 + $0x64] sm:$0xf]
        %v433 = vld [vmem:[%s383 + $0x68] sm:$0xf]
        %v434 = vld [vmem:[%s383 + $0x6c] sm:$0xf]
        %v435 = vld [vmem:[%s383 + $0x70] sm:$0xf]
        %v436 = vld [vmem:[%s383 + $0x74] sm:$0xf]
        %v437 = vld [vmem:[%s383 + $0x78] sm:$0xf]
        %v438 = vld [vmem:[%s383 + $0x7c] sm:$0xf]
        %v439 = vld [vmem:[%s2] sm:$0xf]
        %v440 = vld [vmem:[%s2 + $0x4] sm:$0xf]
        %v441 = vld [vmem:[%s2 + $0x8] sm:$0xf]
        %v442 = vld [vmem:[%s2 + $0xc] sm:$0xf]
        %v443 = vld [vmem:[%s2 + $0x10] sm:$0xf]
        %v444 = vld [vmem:[%s2 + $0x14] sm:$0xf]
        %v445 = vld [vmem:[%s2 + $0x18] sm:$0xf]
        %v446 = vld [vmem:[%s2 + $0x1c] sm:$0xf]
        %v447 = vld [vmem:[%s2 + $0x20] sm:$0xf]
        %v448 = vld [vmem:[%s2 + $0x24] sm:$0xf]
        %v449 = vld [vmem:[%s2 + $0x28] sm:$0xf]
        %v450 = vld [vmem:[%s2 + $0x2c] sm:$0xf]
        %v451 = vld [vmem:[%s2 + $0x30] sm:$0xf]
        %v452 = vld [vmem:[%s2 + $0x34] sm:$0xf]
        %v453 = vld [vmem:[%s2 + $0x38] sm:$0xf]
        %v454 = vld [vmem:[%s2 + $0x3c] sm:$0xf]
        %v487 = vunpack.c.l.b16 %v407
        %v488 = vunpack.c.l.b16 %v408
        %v489 = vunpack.c.l.b16 %v409
        %v490 = vunpack.c.l.b16 %v410
        %v491 = vunpack.c.l.b16 %v411
        %v492 = vunpack.c.l.b16 %v412
        %v493 = vunpack.c.l.b16 %v413
        %v494 = vunpack.c.l.b16 %v414
        %v495 = vunpack.c.l.b16 %v415
        %v496 = vunpack.c.l.b16 %v416
        %v497 = vunpack.c.l.b16 %v417
        %v498 = vunpack.c.l.b16 %v418
        %v499 = vunpack.c.l.b16 %v419
        %v500 = vunpack.c.l.b16 %v420
        %v501 = vunpack.c.l.b16 %v421
        %v502 = vunpack.c.l.b16 %v422
        %v503 = vunpack.c.l.b16 %v423
        %v504 = vunpack.c.l.b16 %v424
        %v505 = vunpack.c.l.b16 %v425
        %v506 = vunpack.c.l.b16 %v426
        %v507 = vunpack.c.l.b16 %v427
        %v508 = vunpack.c.l.b16 %v428
        %v509 = vunpack.c.l.b16 %v429
        %v510 = vunpack.c.l.b16 %v430
        %v511 = vunpack.c.l.b16 %v431
        %v512 = vunpack.c.l.b16 %v432
        %v513 = vunpack.c.l.b16 %v433
        %v514 = vunpack.c.l.b16 %v434
        %v515 = vunpack.c.l.b16 %v435
        %v516 = vunpack.c.l.b16 %v436
        %v517 = vunpack.c.l.b16 %v437
        %v518 = vunpack.c.l.b16 %v438
        %v519 = vpack.c.b16 %v488, %v487
        %v520 = vpack.c.b16 %v490, %v489
        %v521 = vpack.c.b16 %v492, %v491
        %v522 = vpack.c.b16 %v494, %v493
        %v523 = vpack.c.b16 %v496, %v495
        %v524 = vpack.c.b16 %v498, %v497
        %v525 = vpack.c.b16 %v500, %v499
        %v526 = vpack.c.b16 %v502, %v501
        %v527 = vpack.c.b16 %v504, %v503
        %v528 = vpack.c.b16 %v506, %v505
        %v529 = vpack.c.b16 %v508, %v507
        %v530 = vpack.c.b16 %v510, %v509
        %v531 = vpack.c.b16 %v512, %v511
        %v532 = vpack.c.b16 %v514, %v513
        %v533 = vpack.c.b16 %v516, %v515
        %v534 = vpack.c.b16 %v518, %v517
        %v567 = vunpack.c.l.b16 %v439
        %v568 = vunpack.c.l.b16 %v440
        %v569 = vunpack.c.l.b16 %v441
        %v570 = vunpack.c.l.b16 %v442
        %v571 = vunpack.c.l.b16 %v443
        %v572 = vunpack.c.l.b16 %v444
        %v573 = vunpack.c.l.b16 %v445
        %v574 = vunpack.c.l.b16 %v446
        %v575 = vunpack.c.l.b16 %v447
        %v576 = vunpack.c.l.b16 %v448
        %v577 = vunpack.c.l.b16 %v449
        %v578 = vunpack.c.l.b16 %v450
        %v579 = vunpack.c.l.b16 %v451
        %v580 = vunpack.c.l.b16 %v452
        %v581 = vunpack.c.l.b16 %v453
        %v582 = vunpack.c.l.b16 %v454
        %v583 = vpack.c.b16 %v568, %v567
        %v584 = vpack.c.b16 %v570, %v569
        %v585 = vpack.c.b16 %v572, %v571
        %v586 = vpack.c.b16 %v574, %v573
        %v587 = vpack.c.b16 %v576, %v575
        %v588 = vpack.c.b16 %v578, %v577
        %v589 = vpack.c.b16 %v580, %v579
        %v590 = vpack.c.b16 %v582, %v581
        %599 = vmatprep.subr.bf16.mxu0 0
        %600 = vmatpush1.bf16.msra.mxu0 %v590
        %601 = vmatprep.subr.bf16.mxu0 0
        %602 = vmatpush1.bf16.msra.mxu0 %v589
        %603 = vmatprep.subr.bf16.mxu0 0
        %604 = vmatpush1.bf16.msra.mxu0 %v588
        %605 = vmatprep.subr.bf16.mxu0 0
        %606 = vmatpush1.bf16.msra.mxu0 %v587
        %607 = vmatprep.subr.bf16.mxu0 0
        %608 = vmatpush1.bf16.msra.mxu0 %v586
        %609 = vmatprep.subr.bf16.mxu0 0
        %610 = vmatpush1.bf16.msra.mxu0 %v585
        %611 = vmatprep.subr.bf16.mxu0 0
        %612 = vmatpush1.bf16.msra.mxu0 %v584
        %613 = vmatprep.subr.bf16.mxu0 0
        %614 = vmatpush1.bf16.msra.mxu0 %v583
        %615 = vmatprep.subr.bf16.mxu0 0
        %616 = vmatpush2.bf16.msra.mxu0 0
        %617 = vmatprep.subr.bf16.mxu0 0
        %618 = vmatpush2.bf16.msra.mxu0 0
        %619 = vmatprep.subr.bf16.mxu0 0
        %620 = vmatpush2.bf16.msra.mxu0 0
        %621 = vmatprep.subr.bf16.mxu0 0
        %622 = vmatpush2.bf16.msra.mxu0 0
        %623 = vmatprep.subr.bf16.mxu0 0
        %624 = vmatpush2.bf16.msra.mxu0 0
        %625 = vmatprep.subr.bf16.mxu0 0
        %626 = vmatpush2.bf16.msra.mxu0 0
        %627 = vmatprep.subr.bf16.mxu0 0
        %628 = vmatpush2.bf16.msra.mxu0 0
        %629 = vmatprep.subr.bf16.mxu0 0
        %630 = vmatpush2.bf16.msra.mxu0 0
        %631 = vmatprep.mubr.bf16.mxu0 0
        %632 = vmatmul.mubr.bf16.gmra.mxu0 %v519
        %v633 = vpop.f32.mrf.mxu0
        %v634 = vadd.f32 0.0, %v633
        %v635 = vpop.f32.mrf.mxu0
        %v636 = vpop.f32.mrf.mxu0
        %v637 = vadd.f32 0.0, %v636
        %v638 = vpop.f32.mrf.mxu0
        %639 = vmatprep.mubr.bf16.mxu0 0
        %640 = vmatmul.mubr.bf16.gmra.mxu0 %v520
        %v641 = vpop.f32.mrf.mxu0
        %v642 = vadd.f32 0.0, %v641
        %v643 = vpop.f32.mrf.mxu0
        %v644 = vpop.f32.mrf.mxu0
        %v645 = vadd.f32 0.0, %v644
        %v646 = vpop.f32.mrf.mxu0
        %647 = vmatprep.mubr.bf16.mxu0 0
        %648 = vmatmul.mubr.bf16.gmra.mxu0 %v521
        %v649 = vpop.f32.mrf.mxu0
        %v650 = vadd.f32 0.0, %v649
        %v651 = vpop.f32.mrf.mxu0
        %v652 = vpop.f32.mrf.mxu0
        %v653 = vadd.f32 0.0, %v652
        %v654 = vpop.f32.mrf.mxu0
        %655 = vmatprep.mubr.bf16.mxu0 0
        %656 = vmatmul.mubr.bf16.gmra.mxu0 %v522
        %v657 = vpop.f32.mrf.mxu0
        %v658 = vadd.f32 0.0, %v657
        %v659 = vpop.f32.mrf.mxu0
        %v660 = vpop.f32.mrf.mxu0
        %v661 = vadd.f32 0.0, %v660
        %v662 = vpop.f32.mrf.mxu0
        %663 = vmatprep.mubr.bf16.mxu0 0
        %664 = vmatmul.mubr.bf16.gmra.mxu0 %v523
        %v665 = vpop.f32.mrf.mxu0
        %v666 = vadd.f32 0.0, %v665
        %v667 = vpop.f32.mrf.mxu0
        %v668 = vpop.f32.mrf.mxu0
        %v669 = vadd.f32 0.0, %v668
        %v670 = vpop.f32.mrf.mxu0
        %671 = vmatprep.mubr.bf16.mxu0 0
        %672 = vmatmul.mubr.bf16.gmra.mxu0 %v524
        %v673 = vpop.f32.mrf.mxu0
        %v674 = vadd.f32 0.0, %v673
        %v675 = vpop.f32.mrf.mxu0
        %v676 = vpop.f32.mrf.mxu0
        %v677 = vadd.f32 0.0, %v676
        %v678 = vpop.f32.mrf.mxu0
        %679 = vmatprep.mubr.bf16.mxu0 0
        %680 = vmatmul.mubr.bf16.gmra.mxu0 %v525
        %v681 = vpop.f32.mrf.mxu0
        %v682 = vadd.f32 0.0, %v681
        %v683 = vpop.f32.mrf.mxu0
        %v684 = vpop.f32.mrf.mxu0
        %v685 = vadd.f32 0.0, %v684
        %v686 = vpop.f32.mrf.mxu0
        %687 = vmatprep.mubr.bf16.mxu0 0
        %688 = vmatmul.mubr.bf16.gmra.mxu0 %v526
        %v689 = vpop.f32.mrf.mxu0
        %v690 = vadd.f32 0.0, %v689
        %v691 = vpop.f32.mrf.mxu0
        %v692 = vpop.f32.mrf.mxu0
        %v693 = vadd.f32 0.0, %v692
        %v694 = vpop.f32.mrf.mxu0
        %695 = vmatprep.mubr.bf16.mxu0 0
        %696 = vmatmul.mubr.bf16.gmra.mxu0 %v527
        %v697 = vpop.f32.mrf.mxu0
        %v698 = vadd.f32 0.0, %v697
        %v699 = vpop.f32.mrf.mxu0
        %v700 = vpop.f32.mrf.mxu0
        %v701 = vadd.f32 0.0, %v700
        %v702 = vpop.f32.mrf.mxu0
        %703 = vmatprep.mubr.bf16.mxu0 0
        %704 = vmatmul.mubr.bf16.gmra.mxu0 %v528
        %v705 = vpop.f32.mrf.mxu0
        %v706 = vadd.f32 0.0, %v705
        %v707 = vpop.f32.mrf.mxu0
        %v708 = vpop.f32.mrf.mxu0
        %v709 = vadd.f32 0.0, %v708
        %v710 = vpop.f32.mrf.mxu0
        %711 = vmatprep.mubr.bf16.mxu0 0
        %712 = vmatmul.mubr.bf16.gmra.mxu0 %v529
        %v713 = vpop.f32.mrf.mxu0
        %v714 = vadd.f32 0.0, %v713
        %v715 = vpop.f32.mrf.mxu0
        %v716 = vpop.f32.mrf.mxu0
        %v717 = vadd.f32 0.0, %v716
        %v718 = vpop.f32.mrf.mxu0
        %719 = vmatprep.mubr.bf16.mxu0 0
        %720 = vmatmul.mubr.bf16.gmra.mxu0 %v530
        %v721 = vpop.f32.mrf.mxu0
        %v722 = vadd.f32 0.0, %v721
        %v723 = vpop.f32.mrf.mxu0
        %v724 = vpop.f32.mrf.mxu0
        %v725 = vadd.f32 0.0, %v724
        %v726 = vpop.f32.mrf.mxu0
        %727 = vmatprep.mubr.bf16.mxu0 0
        %728 = vmatmul.mubr.bf16.gmra.mxu0 %v531
        %v729 = vpop.f32.mrf.mxu0
        %v730 = vadd.f32 0.0, %v729
        %v731 = vpop.f32.mrf.mxu0
        %v732 = vpop.f32.mrf.mxu0
        %v733 = vadd.f32 0.0, %v732
        %v734 = vpop.f32.mrf.mxu0
        %735 = vmatprep.mubr.bf16.mxu0 0
        %736 = vmatmul.mubr.bf16.gmra.mxu0 %v532
        %v737 = vpop.f32.mrf.mxu0
        %v738 = vadd.f32 0.0, %v737
        %v739 = vpop.f32.mrf.mxu0
        %v740 = vpop.f32.mrf.mxu0
        %v741 = vadd.f32 0.0, %v740
        %v742 = vpop.f32.mrf.mxu0
        %743 = vmatprep.mubr.bf16.mxu0 0
        %744 = vmatmul.mubr.bf16.gmra.mxu0 %v533
        %v745 = vpop.f32.mrf.mxu0
        %v746 = vadd.f32 0.0, %v745
        %v747 = vpop.f32.mrf.mxu0
        %v748 = vpop.f32.mrf.mxu0
        %v749 = vadd.f32 0.0, %v748
        %v750 = vpop.f32.mrf.mxu0
        %751 = vmatprep.mubr.bf16.mxu0 0
        %752 = vmatmul.mubr.bf16.gmra.mxu0 %v534
        %v753 = vpop.f32.mrf.mxu0
        %v754 = vadd.f32 0.0, %v753
        %v755 = vpop.f32.mrf.mxu0
        %v756 = vpop.f32.mrf.mxu0
        %v757 = vadd.f32 0.0, %v756
        %v758 = vpop.f32.mrf.mxu0
        %759 = vdwg.mxu0
        %v762 = vcombine.high %v405, %v405
        %v764 = vunpack.c.l.s4 1966171168
        %v765 = vunpack.c.0.s8 %v764
        %v766 = vlaneseq
        %v767 = vshrl.u32 %v766, 7
        %v768 = vsub.s32 %v765, %v767
        %v769 = vrot.slane %v405, %v768
        %v771 = vunpack.c.l.s4 1966171168
        %v772 = vunpack.c.0.s8 %v771
        %v773 = vlaneseq
        %v774 = vshrl.u32 %v773, 7
        %v775 = vsub.s32 %v772, %v774
        %v776 = vrot.slane %v762, %v775
        %v777 = vcombine.high %v769, %v769
        %v778 = vcombine.high %v776, %v776
        %v780 = vunpack.c.l.s4 1966171168
        %v781 = vunpack.c.0.s8 %v780
        %v782 = vlaneseq
        %v783 = vshrl.u32 %v782, 7
        %v784 = vsub.s32 %v781, %v783
        %v785 = vrot.slane %v769, %v784
        %v787 = vunpack.c.l.s4 1966171168
        %v788 = vunpack.c.0.s8 %v787
        %v789 = vlaneseq
        %v790 = vshrl.u32 %v789, 7
        %v791 = vsub.s32 %v788, %v790
        %v792 = vrot.slane %v776, %v791
        %v794 = vunpack.c.l.s4 1966171168
        %v795 = vunpack.c.0.s8 %v794
        %v796 = vlaneseq
        %v797 = vshrl.u32 %v796, 7
        %v798 = vsub.s32 %v795, %v797
        %v799 = vrot.slane %v777, %v798
        %v801 = vunpack.c.l.s4 1966171168
        %v802 = vunpack.c.0.s8 %v801
        %v803 = vlaneseq
        %v804 = vshrl.u32 %v803, 7
        %v805 = vsub.s32 %v802, %v804
        %v806 = vrot.slane %v778, %v805
        %v807 = vcombine.high %v785, %v785
        %v808 = vcombine.high %v792, %v792
        %v809 = vcombine.high %v799, %v799
        %v810 = vcombine.high %v806, %v806
        %v811 = vcombine.high %v406, %v406
        %v813 = vunpack.c.l.s4 1966171168
        %v814 = vunpack.c.0.s8 %v813
        %v815 = vlaneseq
        %v816 = vshrl.u32 %v815, 7
        %v817 = vsub.s32 %v814, %v816
        %v818 = vrot.slane %v406, %v817
        %v820 = vunpack.c.l.s4 1966171168
        %v821 = vunpack.c.0.s8 %v820
        %v822 = vlaneseq
        %v823 = vshrl.u32 %v822, 7
        %v824 = vsub.s32 %v821, %v823
        %v825 = vrot.slane %v811, %v824
        %v826 = vcombine.high %v818, %v818
        %v827 = vcombine.high %v825, %v825
        %v829 = vunpack.c.l.s4 1966171168
        %v830 = vunpack.c.0.s8 %v829
        %v831 = vlaneseq
        %v832 = vshrl.u32 %v831, 7
        %v833 = vsub.s32 %v830, %v832
        %v834 = vrot.slane %v818, %v833
        %v836 = vunpack.c.l.s4 1966171168
        %v837 = vunpack.c.0.s8 %v836
        %v838 = vlaneseq
        %v839 = vshrl.u32 %v838, 7
        %v840 = vsub.s32 %v837, %v839
        %v841 = vrot.slane %v825, %v840
        %v843 = vunpack.c.l.s4 1966171168
        %v844 = vunpack.c.0.s8 %v843
        %v845 = vlaneseq
        %v846 = vshrl.u32 %v845, 7
        %v847 = vsub.s32 %v844, %v846
        %v848 = vrot.slane %v826, %v847
        %v850 = vunpack.c.l.s4 1966171168
        %v851 = vunpack.c.0.s8 %v850
        %v852 = vlaneseq
        %v853 = vshrl.u32 %v852, 7
        %v854 = vsub.s32 %v851, %v853
        %v855 = vrot.slane %v827, %v854
        %v856 = vcombine.high %v834, %v834
        %v857 = vcombine.high %v841, %v841
        %v858 = vcombine.high %v848, %v848
        %v859 = vcombine.high %v855, %v855
        %v860 = vlaneseq
        %v861 = vshrl.u32 %v860, 7
        %v862 = vsub.s32 0, %v861
        %v863 = vrot.slane %v785, %v862
        %v864 = vlaneseq
        %v865 = vshrl.u32 %v864, 7
        %v866 = vsub.s32 0, %v865
        %v867 = vrot.slane %v799, %v866
        %v868 = vlaneseq
        %v869 = vshrl.u32 %v868, 7
        %v870 = vsub.s32 0, %v869
        %v871 = vrot.slane %v807, %v870
        %v872 = vlaneseq
        %v873 = vshrl.u32 %v872, 7
        %v874 = vsub.s32 0, %v873
        %v875 = vrot.slane %v809, %v874
        %v876 = vlaneseq
        %v877 = vshrl.u32 %v876, 7
        %v878 = vsub.s32 0, %v877
        %v879 = vrot.slane %v792, %v878
        %v880 = vlaneseq
        %v881 = vshrl.u32 %v880, 7
        %v882 = vsub.s32 0, %v881
        %v883 = vrot.slane %v806, %v882
        %v884 = vlaneseq
        %v885 = vshrl.u32 %v884, 7
        %v886 = vsub.s32 0, %v885
        %v887 = vrot.slane %v808, %v886
        %v888 = vlaneseq
        %v889 = vshrl.u32 %v888, 7
        %v890 = vsub.s32 0, %v889
        %v891 = vrot.slane %v810, %v890
        %v892 = vlaneseq
        %v893 = vshrl.u32 %v892, 7
        %v894 = vsub.s32 0, %v893
        %v895 = vrot.slane %v834, %v894
        %v896 = vlaneseq
        %v897 = vshrl.u32 %v896, 7
        %v898 = vsub.s32 0, %v897
        %v899 = vrot.slane %v848, %v898
        %v900 = vlaneseq
        %v901 = vshrl.u32 %v900, 7
        %v902 = vsub.s32 0, %v901
        %v903 = vrot.slane %v856, %v902
        %v904 = vlaneseq
        %v905 = vshrl.u32 %v904, 7
        %v906 = vsub.s32 0, %v905
        %v907 = vrot.slane %v858, %v906
        %v908 = vlaneseq
        %v909 = vshrl.u32 %v908, 7
        %v910 = vsub.s32 0, %v909
        %v911 = vrot.slane %v841, %v910
        %v912 = vlaneseq
        %v913 = vshrl.u32 %v912, 7
        %v914 = vsub.s32 0, %v913
        %v915 = vrot.slane %v855, %v914
        %v916 = vlaneseq
        %v917 = vshrl.u32 %v916, 7
        %v918 = vsub.s32 0, %v917
        %v919 = vrot.slane %v857, %v918
        %v920 = vlaneseq
        %v921 = vshrl.u32 %v920, 7
        %v922 = vsub.s32 0, %v921
        %v923 = vrot.slane %v859, %v922
        %v940 = vadd.f32 %v634, %v863
        %v941 = vadd.f32 %v637, %v863
        %v942 = vadd.f32 %v642, %v867
        %v943 = vadd.f32 %v645, %v867
        %v944 = vadd.f32 %v650, %v871
        %v945 = vadd.f32 %v653, %v871
        %v946 = vadd.f32 %v658, %v875
        %v947 = vadd.f32 %v661, %v875
        %v948 = vadd.f32 %v666, %v879
        %v949 = vadd.f32 %v669, %v879
        %v950 = vadd.f32 %v674, %v883
        %v951 = vadd.f32 %v677, %v883
        %v952 = vadd.f32 %v682, %v887
        %v953 = vadd.f32 %v685, %v887
        %v954 = vadd.f32 %v690, %v891
        %v955 = vadd.f32 %v693, %v891
        %v956 = vadd.f32 %v698, %v895
        %v957 = vadd.f32 %v701, %v895
        %v958 = vadd.f32 %v706, %v899
        %v959 = vadd.f32 %v709, %v899
        %v960 = vadd.f32 %v714, %v903
        %v961 = vadd.f32 %v717, %v903
        %v962 = vadd.f32 %v722, %v907
        %v963 = vadd.f32 %v725, %v907
        %v964 = vadd.f32 %v730, %v911
        %v965 = vadd.f32 %v733, %v911
        %v966 = vadd.f32 %v738, %v915
        %v967 = vadd.f32 %v741, %v915
        %v968 = vadd.f32 %v746, %v919
        %v969 = vadd.f32 %v749, %v919
        %v970 = vadd.f32 %v754, %v923
        %v971 = vadd.f32 %v757, %v923
        %v972 = vadd.f32 %v940, %v398
        %v973 = vadd.f32 %v941, %v399
        %v974 = vadd.f32 %v942, %v398
        %v975 = vadd.f32 %v943, %v399
        %v976 = vadd.f32 %v944, %v398
        %v977 = vadd.f32 %v945, %v399
        %v978 = vadd.f32 %v946, %v398
        %v979 = vadd.f32 %v947, %v399
        %v980 = vadd.f32 %v948, %v398
        %v981 = vadd.f32 %v949, %v399
        %v982 = vadd.f32 %v950, %v398
        %v983 = vadd.f32 %v951, %v399
        %v984 = vadd.f32 %v952, %v398
        %v985 = vadd.f32 %v953, %v399
        %v986 = vadd.f32 %v954, %v398
        %v987 = vadd.f32 %v955, %v399
        %v988 = vadd.f32 %v956, %v398
        %v989 = vadd.f32 %v957, %v399
        %v990 = vadd.f32 %v958, %v398
        %v991 = vadd.f32 %v959, %v399
        %v992 = vadd.f32 %v960, %v398
        %v993 = vadd.f32 %v961, %v399
        %v994 = vadd.f32 %v962, %v398
        %v995 = vadd.f32 %v963, %v399
        %v996 = vadd.f32 %v964, %v398
        %v997 = vadd.f32 %v965, %v399
        %v998 = vadd.f32 %v966, %v398
        %v999 = vadd.f32 %v967, %v399
        %v1000 = vadd.f32 %v968, %v398
        %v1001 = vadd.f32 %v969, %v399
        %v1002 = vadd.f32 %v970, %v398
        %v1003 = vadd.f32 %v971, %v399
        %v1004 = vunpack.c.l.bf16 %v407
        %v1005 = vunpack.c.l.bf16 %v408
        %v1006 = vunpack.c.l.bf16 %v409
        %v1007 = vunpack.c.l.bf16 %v410
        %v1008 = vunpack.c.l.bf16 %v411
        %v1009 = vunpack.c.l.bf16 %v412
        %v1010 = vunpack.c.l.bf16 %v413
        %v1011 = vunpack.c.l.bf16 %v414
        %v1012 = vunpack.c.l.bf16 %v415
        %v1013 = vunpack.c.l.bf16 %v416
        %v1014 = vunpack.c.l.bf16 %v417
        %v1015 = vunpack.c.l.bf16 %v418
        %v1016 = vunpack.c.l.bf16 %v419
        %v1017 = vunpack.c.l.bf16 %v420
        %v1018 = vunpack.c.l.bf16 %v421
        %v1019 = vunpack.c.l.bf16 %v422
        %v1020 = vunpack.c.l.bf16 %v423
        %v1021 = vunpack.c.l.bf16 %v424
        %v1022 = vunpack.c.l.bf16 %v425
        %v1023 = vunpack.c.l.bf16 %v426
        %v1024 = vunpack.c.l.bf16 %v427
        %v1025 = vunpack.c.l.bf16 %v428
        %v1026 = vunpack.c.l.bf16 %v429
        %v1027 = vunpack.c.l.bf16 %v430
        %v1028 = vunpack.c.l.bf16 %v431
        %v1029 = vunpack.c.l.bf16 %v432
        %v1030 = vunpack.c.l.bf16 %v433
        %v1031 = vunpack.c.l.bf16 %v434
        %v1032 = vunpack.c.l.bf16 %v435
        %v1033 = vunpack.c.l.bf16 %v436
        %v1034 = vunpack.c.l.bf16 %v437
        %v1035 = vunpack.c.l.bf16 %v438
        %v1036 = vld [vmem:[%s3] sm:$0x1]
        %v1037 = vlaneseq
        %v1038 = vshrl.u32 %v1037, 7
        %v1039 = vsub.s32 0, %v1038
        %v1040 = vrot.slane %v1036, %v1039
        %v1041 = vmul.f32 %v972, %v1040
        %v1042 = vmul.f32 %v973, %v1040
        %v1043 = vmul.f32 %v974, %v1040
        %v1044 = vmul.f32 %v975, %v1040
        %v1045 = vmul.f32 %v976, %v1040
        %v1046 = vmul.f32 %v977, %v1040
        %v1047 = vmul.f32 %v978, %v1040
        %v1048 = vmul.f32 %v979, %v1040
        %v1049 = vmul.f32 %v980, %v1040
        %v1050 = vmul.f32 %v981, %v1040
        %v1051 = vmul.f32 %v982, %v1040
        %v1052 = vmul.f32 %v983, %v1040
        %v1053 = vmul.f32 %v984, %v1040
        %v1054 = vmul.f32 %v985, %v1040
        %v1055 = vmul.f32 %v986, %v1040
        %v1056 = vmul.f32 %v987, %v1040
        %v1057 = vmul.f32 %v988, %v1040
        %v1058 = vmul.f32 %v989, %v1040
        %v1059 = vmul.f32 %v990, %v1040
        %v1060 = vmul.f32 %v991, %v1040
        %v1061 = vmul.f32 %v992, %v1040
        %v1062 = vmul.f32 %v993, %v1040
        %v1063 = vmul.f32 %v994, %v1040
        %v1064 = vmul.f32 %v995, %v1040
        %v1065 = vmul.f32 %v996, %v1040
        %v1066 = vmul.f32 %v997, %v1040
        %v1067 = vmul.f32 %v998, %v1040
        %v1068 = vmul.f32 %v999, %v1040
        %v1069 = vmul.f32 %v1000, %v1040
        %v1070 = vmul.f32 %v1001, %v1040
        %v1071 = vmul.f32 %v1002, %v1040
        %v1072 = vmul.f32 %v1003, %v1040
        %v1073 = vld [vmem:[%s3 + $0x1] sm:$0x1]
        %v1074 = vlaneseq
        %v1075 = vshrl.u32 %v1074, 7
        %v1076 = vsub.s32 0, %v1075
        %v1077 = vrot.slane %v1073, %v1076
        %v1078 = vadd.f32 %v1041, %v1077
        %v1079 = vadd.f32 %v1042, %v1077
        %v1080 = vadd.f32 %v1043, %v1077
        %v1081 = vadd.f32 %v1044, %v1077
        %v1082 = vadd.f32 %v1045, %v1077
        %v1083 = vadd.f32 %v1046, %v1077
        %v1084 = vadd.f32 %v1047, %v1077
        %v1085 = vadd.f32 %v1048, %v1077
        %v1086 = vadd.f32 %v1049, %v1077
        %v1087 = vadd.f32 %v1050, %v1077
        %v1088 = vadd.f32 %v1051, %v1077
        %v1089 = vadd.f32 %v1052, %v1077
        %v1090 = vadd.f32 %v1053, %v1077
        %v1091 = vadd.f32 %v1054, %v1077
        %v1092 = vadd.f32 %v1055, %v1077
        %v1093 = vadd.f32 %v1056, %v1077
        %v1094 = vadd.f32 %v1057, %v1077
        %v1095 = vadd.f32 %v1058, %v1077
        %v1096 = vadd.f32 %v1059, %v1077
        %v1097 = vadd.f32 %v1060, %v1077
        %v1098 = vadd.f32 %v1061, %v1077
        %v1099 = vadd.f32 %v1062, %v1077
        %v1100 = vadd.f32 %v1063, %v1077
        %v1101 = vadd.f32 %v1064, %v1077
        %v1102 = vadd.f32 %v1065, %v1077
        %v1103 = vadd.f32 %v1066, %v1077
        %v1104 = vadd.f32 %v1067, %v1077
        %v1105 = vadd.f32 %v1068, %v1077
        %v1106 = vadd.f32 %v1069, %v1077
        %v1107 = vadd.f32 %v1070, %v1077
        %v1108 = vadd.f32 %v1071, %v1077
        %v1109 = vadd.f32 %v1072, %v1077
        %v1110 = vmax.f32 %v1078, 0.0
        %v1111 = vmax.f32 %v1079, 0.0
        %v1112 = vmax.f32 %v1080, 0.0
        %v1113 = vmax.f32 %v1081, 0.0
        %v1114 = vmax.f32 %v1082, 0.0
        %v1115 = vmax.f32 %v1083, 0.0
        %v1116 = vmax.f32 %v1084, 0.0
        %v1117 = vmax.f32 %v1085, 0.0
        %v1118 = vmax.f32 %v1086, 0.0
        %v1119 = vmax.f32 %v1087, 0.0
        %v1120 = vmax.f32 %v1088, 0.0
        %v1121 = vmax.f32 %v1089, 0.0
        %v1122 = vmax.f32 %v1090, 0.0
        %v1123 = vmax.f32 %v1091, 0.0
        %v1124 = vmax.f32 %v1092, 0.0
        %v1125 = vmax.f32 %v1093, 0.0
        %v1126 = vmax.f32 %v1094, 0.0
        %v1127 = vmax.f32 %v1095, 0.0
        %v1128 = vmax.f32 %v1096, 0.0
        %v1129 = vmax.f32 %v1097, 0.0
        %v1130 = vmax.f32 %v1098, 0.0
        %v1131 = vmax.f32 %v1099, 0.0
        %v1132 = vmax.f32 %v1100, 0.0
        %v1133 = vmax.f32 %v1101, 0.0
        %v1134 = vmax.f32 %v1102, 0.0
        %v1135 = vmax.f32 %v1103, 0.0
        %v1136 = vmax.f32 %v1104, 0.0
        %v1137 = vmax.f32 %v1105, 0.0
        %v1138 = vmax.f32 %v1106, 0.0
        %v1139 = vmax.f32 %v1107, 0.0
        %v1140 = vmax.f32 %v1108, 0.0
        %v1141 = vmax.f32 %v1109, 0.0
        %v1142 = vadd.f32 %v1004, %v1110
        %v1143 = vadd.f32 %v1005, %v1111
        %v1144 = vadd.f32 %v1006, %v1112
        %v1145 = vadd.f32 %v1007, %v1113
        %v1146 = vadd.f32 %v1008, %v1114
        %v1147 = vadd.f32 %v1009, %v1115
        %v1148 = vadd.f32 %v1010, %v1116
        %v1149 = vadd.f32 %v1011, %v1117
        %v1150 = vadd.f32 %v1012, %v1118
        %v1151 = vadd.f32 %v1013, %v1119
        %v1152 = vadd.f32 %v1014, %v1120
        %v1153 = vadd.f32 %v1015, %v1121
        %v1154 = vadd.f32 %v1016, %v1122
        %v1155 = vadd.f32 %v1017, %v1123
        %v1156 = vadd.f32 %v1018, %v1124
        %v1157 = vadd.f32 %v1019, %v1125
        %v1158 = vadd.f32 %v1020, %v1126
        %v1159 = vadd.f32 %v1021, %v1127
        %v1160 = vadd.f32 %v1022, %v1128
        %v1161 = vadd.f32 %v1023, %v1129
        %v1162 = vadd.f32 %v1024, %v1130
        %v1163 = vadd.f32 %v1025, %v1131
        %v1164 = vadd.f32 %v1026, %v1132
        %v1165 = vadd.f32 %v1027, %v1133
        %v1166 = vadd.f32 %v1028, %v1134
        %v1167 = vadd.f32 %v1029, %v1135
        %v1168 = vadd.f32 %v1030, %v1136
        %v1169 = vadd.f32 %v1031, %v1137
        %v1170 = vadd.f32 %v1032, %v1138
        %v1171 = vadd.f32 %v1033, %v1139
        %v1172 = vadd.f32 %v1034, %v1140
        %v1173 = vadd.f32 %v1035, %v1141
        %v1174 = vpack.c.bf16 %v1143, %v1142
        %v1175 = vpack.c.bf16 %v1145, %v1144
        %v1176 = vpack.c.bf16 %v1147, %v1146
        %v1177 = vpack.c.bf16 %v1149, %v1148
        %v1178 = vpack.c.bf16 %v1151, %v1150
        %v1179 = vpack.c.bf16 %v1153, %v1152
        %v1180 = vpack.c.bf16 %v1155, %v1154
        %v1181 = vpack.c.bf16 %v1157, %v1156
        %v1182 = vpack.c.bf16 %v1159, %v1158
        %v1183 = vpack.c.bf16 %v1161, %v1160
        %v1184 = vpack.c.bf16 %v1163, %v1162
        %v1185 = vpack.c.bf16 %v1165, %v1164
        %v1186 = vpack.c.bf16 %v1167, %v1166
        %v1187 = vpack.c.bf16 %v1169, %v1168
        %v1188 = vpack.c.bf16 %v1171, %v1170
        %v1189 = vpack.c.bf16 %v1173, %v1172
        %v1190 = vld [vmem:[%s4] sm:$0xf]
        %v1191 = vld [vmem:[%s4 + $0x4] sm:$0xf]
        %v1192 = vld [vmem:[%s4 + $0x8] sm:$0xf]
        %v1193 = vld [vmem:[%s4 + $0xc] sm:$0xf]
        %v1194 = vld [vmem:[%s4 + $0x10] sm:$0xf]
        %v1195 = vld [vmem:[%s4 + $0x14] sm:$0xf]
        %v1196 = vld [vmem:[%s4 + $0x18] sm:$0xf]
        %v1197 = vld [vmem:[%s4 + $0x1c] sm:$0xf]
        %v1198 = vld [vmem:[%s4 + $0x20] sm:$0xf]
        %v1199 = vld [vmem:[%s4 + $0x24] sm:$0xf]
        %v1200 = vld [vmem:[%s4 + $0x28] sm:$0xf]
        %v1201 = vld [vmem:[%s4 + $0x2c] sm:$0xf]
        %v1202 = vld [vmem:[%s4 + $0x30] sm:$0xf]
        %v1203 = vld [vmem:[%s4 + $0x34] sm:$0xf]
        %v1204 = vld [vmem:[%s4 + $0x38] sm:$0xf]
        %v1205 = vld [vmem:[%s4 + $0x3c] sm:$0xf]
        %v1206 = vld [vmem:[%s5] sm:$0x1]
        %v1207 = vlaneseq
        %v1208 = vshrl.u32 %v1207, 7
        %v1209 = vsub.s32 0, %v1208
        %v1210 = vrot.slane %v1206, %v1209
        %v1227 = vunpack.c.l.b16 %v1190
        %v1228 = vunpack.c.l.b16 %v1191
        %v1229 = vunpack.c.l.b16 %v1192
        %v1230 = vunpack.c.l.b16 %v1193
        %v1231 = vunpack.c.l.b16 %v1194
        %v1232 = vunpack.c.l.b16 %v1195
        %v1233 = vunpack.c.l.b16 %v1196
        %v1234 = vunpack.c.l.b16 %v1197
        %v1235 = vunpack.c.l.b16 %v1198
        %v1236 = vunpack.c.l.b16 %v1199
        %v1237 = vunpack.c.l.b16 %v1200
        %v1238 = vunpack.c.l.b16 %v1201
        %v1239 = vunpack.c.l.b16 %v1202
        %v1240 = vunpack.c.l.b16 %v1203
        %v1241 = vunpack.c.l.b16 %v1204
        %v1242 = vunpack.c.l.b16 %v1205
        %v1243 = vpack.c.b16 %v1228, %v1227
        %v1244 = vpack.c.b16 %v1230, %v1229
        %v1245 = vpack.c.b16 %v1232, %v1231
        %v1246 = vpack.c.b16 %v1234, %v1233
        %v1247 = vpack.c.b16 %v1236, %v1235
        %v1248 = vpack.c.b16 %v1238, %v1237
        %v1249 = vpack.c.b16 %v1240, %v1239
        %v1250 = vpack.c.b16 %v1242, %v1241
        %1259 = vmatprep.subr.bf16.mxu0 0
        %1260 = vmatpush1.bf16.msra.mxu0 %v1250
        %1261 = vmatprep.subr.bf16.mxu0 0
        %1262 = vmatpush1.bf16.msra.mxu0 %v1249
        %1263 = vmatprep.subr.bf16.mxu0 0
        %1264 = vmatpush1.bf16.msra.mxu0 %v1248
        %1265 = vmatprep.subr.bf16.mxu0 0
        %1266 = vmatpush1.bf16.msra.mxu0 %v1247
        %1267 = vmatprep.subr.bf16.mxu0 0
        %1268 = vmatpush1.bf16.msra.mxu0 %v1246
        %1269 = vmatprep.subr.bf16.mxu0 0
        %1270 = vmatpush1.bf16.msra.mxu0 %v1245
        %1271 = vmatprep.subr.bf16.mxu0 0
        %1272 = vmatpush1.bf16.msra.mxu0 %v1244
        %1273 = vmatprep.subr.bf16.mxu0 0
        %1274 = vmatpush1.bf16.msra.mxu0 %v1243
        %1275 = vmatprep.subr.bf16.mxu0 0
        %1276 = vmatpush2.bf16.msra.mxu0 0
        %1277 = vmatprep.subr.bf16.mxu0 0
        %1278 = vmatpush2.bf16.msra.mxu0 0
        %1279 = vmatprep.subr.bf16.mxu0 0
        %1280 = vmatpush2.bf16.msra.mxu0 0
        %1281 = vmatprep.subr.bf16.mxu0 0
        %1282 = vmatpush2.bf16.msra.mxu0 0
        %1283 = vmatprep.subr.bf16.mxu0 0
        %1284 = vmatpush2.bf16.msra.mxu0 0
        %1285 = vmatprep.subr.bf16.mxu0 0
        %1286 = vmatpush2.bf16.msra.mxu0 0
        %1287 = vmatprep.subr.bf16.mxu0 0
        %1288 = vmatpush2.bf16.msra.mxu0 0
        %1289 = vmatprep.subr.bf16.mxu0 0
        %1290 = vmatpush2.bf16.msra.mxu0 0
        %1291 = vmatprep.mubr.bf16.mxu0 0
        %1292 = vmatmul.mubr.bf16.gmra.mxu0 %v1174
        %v1293 = vpop.f32.mrf.mxu0
        %v1294 = vadd.f32 %v1210, %v1293
        %v1295 = vpop.f32.mrf.mxu0
        %v1296 = vpop.f32.mrf.mxu0
        %v1297 = vadd.f32 %v1210, %v1296
        %v1298 = vpop.f32.mrf.mxu0
        %1299 = vmatprep.mubr.bf16.mxu0 0
        %1300 = vmatmul.mubr.bf16.gmra.mxu0 %v1175
        %v1301 = vpop.f32.mrf.mxu0
        %v1302 = vadd.f32 %v1210, %v1301
        %v1303 = vpop.f32.mrf.mxu0
        %v1304 = vpop.f32.mrf.mxu0
        %v1305 = vadd.f32 %v1210, %v1304
        %v1306 = vpop.f32.mrf.mxu0
        %1307 = vmatprep.mubr.bf16.mxu0 0
        %1308 = vmatmul.mubr.bf16.gmra.mxu0 %v1176
        %v1309 = vpop.f32.mrf.mxu0
        %v1310 = vadd.f32 %v1210, %v1309
        %v1311 = vpop.f32.mrf.mxu0
        %v1312 = vpop.f32.mrf.mxu0
        %v1313 = vadd.f32 %v1210, %v1312
        %v1314 = vpop.f32.mrf.mxu0
        %1315 = vmatprep.mubr.bf16.mxu0 0
        %1316 = vmatmul.mubr.bf16.gmra.mxu0 %v1177
        %v1317 = vpop.f32.mrf.mxu0
        %v1318 = vadd.f32 %v1210, %v1317
        %v1319 = vpop.f32.mrf.mxu0
        %v1320 = vpop.f32.mrf.mxu0
        %v1321 = vadd.f32 %v1210, %v1320
        %v1322 = vpop.f32.mrf.mxu0
        %1323 = vmatprep.mubr.bf16.mxu0 0
        %1324 = vmatmul.mubr.bf16.gmra.mxu0 %v1178
        %v1325 = vpop.f32.mrf.mxu0
        %v1326 = vadd.f32 %v1210, %v1325
        %v1327 = vpop.f32.mrf.mxu0
        %v1328 = vpop.f32.mrf.mxu0
        %v1329 = vadd.f32 %v1210, %v1328
        %v1330 = vpop.f32.mrf.mxu0
        %1331 = vmatprep.mubr.bf16.mxu0 0
        %1332 = vmatmul.mubr.bf16.gmra.mxu0 %v1179
        %v1333 = vpop.f32.mrf.mxu0
        %v1334 = vadd.f32 %v1210, %v1333
        %v1335 = vpop.f32.mrf.mxu0
        %v1336 = vpop.f32.mrf.mxu0
        %v1337 = vadd.f32 %v1210, %v1336
        %v1338 = vpop.f32.mrf.mxu0
        %1339 = vmatprep.mubr.bf16.mxu0 0
        %1340 = vmatmul.mubr.bf16.gmra.mxu0 %v1180
        %v1341 = vpop.f32.mrf.mxu0
        %v1342 = vadd.f32 %v1210, %v1341
        %v1343 = vpop.f32.mrf.mxu0
        %v1344 = vpop.f32.mrf.mxu0
        %v1345 = vadd.f32 %v1210, %v1344
        %v1346 = vpop.f32.mrf.mxu0
        %1347 = vmatprep.mubr.bf16.mxu0 0
        %1348 = vmatmul.mubr.bf16.gmra.mxu0 %v1181
        %v1349 = vpop.f32.mrf.mxu0
        %v1350 = vadd.f32 %v1210, %v1349
        %v1351 = vpop.f32.mrf.mxu0
        %v1352 = vpop.f32.mrf.mxu0
        %v1353 = vadd.f32 %v1210, %v1352
        %v1354 = vpop.f32.mrf.mxu0
        %1355 = vmatprep.mubr.bf16.mxu0 0
        %1356 = vmatmul.mubr.bf16.gmra.mxu0 %v1182
        %v1357 = vpop.f32.mrf.mxu0
        %v1358 = vadd.f32 %v1210, %v1357
        %v1359 = vpop.f32.mrf.mxu0
        %v1360 = vpop.f32.mrf.mxu0
        %v1361 = vadd.f32 %v1210, %v1360
        %v1362 = vpop.f32.mrf.mxu0
        %1363 = vmatprep.mubr.bf16.mxu0 0
        %1364 = vmatmul.mubr.bf16.gmra.mxu0 %v1183
        %v1365 = vpop.f32.mrf.mxu0
        %v1366 = vadd.f32 %v1210, %v1365
        %v1367 = vpop.f32.mrf.mxu0
        %v1368 = vpop.f32.mrf.mxu0
        %v1369 = vadd.f32 %v1210, %v1368
        %v1370 = vpop.f32.mrf.mxu0
        %1371 = vmatprep.mubr.bf16.mxu0 0
        %1372 = vmatmul.mubr.bf16.gmra.mxu0 %v1184
        %v1373 = vpop.f32.mrf.mxu0
        %v1374 = vadd.f32 %v1210, %v1373
        %v1375 = vpop.f32.mrf.mxu0
        %v1376 = vpop.f32.mrf.mxu0
        %v1377 = vadd.f32 %v1210, %v1376
        %v1378 = vpop.f32.mrf.mxu0
        %1379 = vmatprep.mubr.bf16.mxu0 0
        %1380 = vmatmul.mubr.bf16.gmra.mxu0 %v1185
        %v1381 = vpop.f32.mrf.mxu0
        %v1382 = vadd.f32 %v1210, %v1381
        %v1383 = vpop.f32.mrf.mxu0
        %v1384 = vpop.f32.mrf.mxu0
        %v1385 = vadd.f32 %v1210, %v1384
        %v1386 = vpop.f32.mrf.mxu0
        %1387 = vmatprep.mubr.bf16.mxu0 0
        %1388 = vmatmul.mubr.bf16.gmra.mxu0 %v1186
        %v1389 = vpop.f32.mrf.mxu0
        %v1390 = vadd.f32 %v1210, %v1389
        %v1391 = vpop.f32.mrf.mxu0
        %v1392 = vpop.f32.mrf.mxu0
        %v1393 = vadd.f32 %v1210, %v1392
        %v1394 = vpop.f32.mrf.mxu0
        %1395 = vmatprep.mubr.bf16.mxu0 0
        %1396 = vmatmul.mubr.bf16.gmra.mxu0 %v1187
        %v1397 = vpop.f32.mrf.mxu0
        %v1398 = vadd.f32 %v1210, %v1397
        %v1399 = vpop.f32.mrf.mxu0
        %v1400 = vpop.f32.mrf.mxu0
        %v1401 = vadd.f32 %v1210, %v1400
        %v1402 = vpop.f32.mrf.mxu0
        %1403 = vmatprep.mubr.bf16.mxu0 0
        %1404 = vmatmul.mubr.bf16.gmra.mxu0 %v1188
        %v1405 = vpop.f32.mrf.mxu0
        %v1406 = vadd.f32 %v1210, %v1405
        %v1407 = vpop.f32.mrf.mxu0
        %v1408 = vpop.f32.mrf.mxu0
        %v1409 = vadd.f32 %v1210, %v1408
        %v1410 = vpop.f32.mrf.mxu0
        %1411 = vmatprep.mubr.bf16.mxu0 0
        %1412 = vmatmul.mubr.bf16.gmra.mxu0 %v1189
        %v1413 = vpop.f32.mrf.mxu0
        %v1414 = vadd.f32 %v1210, %v1413
        %v1415 = vpop.f32.mrf.mxu0
        %v1416 = vpop.f32.mrf.mxu0
        %v1417 = vadd.f32 %v1210, %v1416
        %v1418 = vpop.f32.mrf.mxu0
        %1419 = vdwg.mxu0
        %v1420 = vmax.f32 %v1294, 0.0
        %v1421 = vmax.f32 %v1297, 0.0
        %v1422 = vmax.f32 %v1302, 0.0
        %v1423 = vmax.f32 %v1305, 0.0
        %v1424 = vmax.f32 %v1310, 0.0
        %v1425 = vmax.f32 %v1313, 0.0
        %v1426 = vmax.f32 %v1318, 0.0
        %v1427 = vmax.f32 %v1321, 0.0
        %v1428 = vmax.f32 %v1326, 0.0
        %v1429 = vmax.f32 %v1329, 0.0
        %v1430 = vmax.f32 %v1334, 0.0
        %v1431 = vmax.f32 %v1337, 0.0
        %v1432 = vmax.f32 %v1342, 0.0
        %v1433 = vmax.f32 %v1345, 0.0
        %v1434 = vmax.f32 %v1350, 0.0
        %v1435 = vmax.f32 %v1353, 0.0
        %v1436 = vmax.f32 %v1358, 0.0
        %v1437 = vmax.f32 %v1361, 0.0
        %v1438 = vmax.f32 %v1366, 0.0
        %v1439 = vmax.f32 %v1369, 0.0
        %v1440 = vmax.f32 %v1374, 0.0
        %v1441 = vmax.f32 %v1377, 0.0
        %v1442 = vmax.f32 %v1382, 0.0
        %v1443 = vmax.f32 %v1385, 0.0
        %v1444 = vmax.f32 %v1390, 0.0
        %v1445 = vmax.f32 %v1393, 0.0
        %v1446 = vmax.f32 %v1398, 0.0
        %v1447 = vmax.f32 %v1401, 0.0
        %v1448 = vmax.f32 %v1406, 0.0
        %v1449 = vmax.f32 %v1409, 0.0
        %v1450 = vmax.f32 %v1414, 0.0
        %v1451 = vmax.f32 %v1417, 0.0
        %v1452 = vpack.c.bf16 %v1421, %v1420
        %v1453 = vpack.c.bf16 %v1423, %v1422
        %v1454 = vpack.c.bf16 %v1425, %v1424
        %v1455 = vpack.c.bf16 %v1427, %v1426
        %v1456 = vpack.c.bf16 %v1429, %v1428
        %v1457 = vpack.c.bf16 %v1431, %v1430
        %v1458 = vpack.c.bf16 %v1433, %v1432
        %v1459 = vpack.c.bf16 %v1435, %v1434
        %v1460 = vpack.c.bf16 %v1437, %v1436
        %v1461 = vpack.c.bf16 %v1439, %v1438
        %v1462 = vpack.c.bf16 %v1441, %v1440
        %v1463 = vpack.c.bf16 %v1443, %v1442
        %v1464 = vpack.c.bf16 %v1445, %v1444
        %v1465 = vpack.c.bf16 %v1447, %v1446
        %v1466 = vpack.c.bf16 %v1449, %v1448
        %v1467 = vpack.c.bf16 %v1451, %v1450
        %s1468 = scalar_lea.vmem %s4, 64
        %v1469 = vld [vmem:[%s1468] sm:$0xf]
        %v1470 = vld [vmem:[%s1468 + $0x4] sm:$0xf]
        %v1471 = vld [vmem:[%s1468 + $0x8] sm:$0xf]
        %v1472 = vld [vmem:[%s1468 + $0xc] sm:$0xf]
        %v1473 = vld [vmem:[%s1468 + $0x10] sm:$0xf]
        %v1474 = vld [vmem:[%s1468 + $0x14] sm:$0xf]
        %v1475 = vld [vmem:[%s1468 + $0x18] sm:$0xf]
        %v1476 = vld [vmem:[%s1468 + $0x1c] sm:$0xf]
        %v1477 = vld [vmem:[%s1468 + $0x20] sm:$0xf]
        %v1478 = vld [vmem:[%s1468 + $0x24] sm:$0xf]
        %v1479 = vld [vmem:[%s1468 + $0x28] sm:$0xf]
        %v1480 = vld [vmem:[%s1468 + $0x2c] sm:$0xf]
        %v1481 = vld [vmem:[%s1468 + $0x30] sm:$0xf]
        %v1482 = vld [vmem:[%s1468 + $0x34] sm:$0xf]
        %v1483 = vld [vmem:[%s1468 + $0x38] sm:$0xf]
        %v1484 = vld [vmem:[%s1468 + $0x3c] sm:$0xf]
        %v1485 = vld [vmem:[%s5 + $0x1] sm:$0x1]
        %v1486 = vlaneseq
        %v1487 = vshrl.u32 %v1486, 7
        %v1488 = vsub.s32 0, %v1487
        %v1489 = vrot.slane %v1485, %v1488
        %v1506 = vunpack.c.l.b16 %v1469
        %v1507 = vunpack.c.l.b16 %v1470
        %v1508 = vunpack.c.l.b16 %v1471
        %v1509 = vunpack.c.l.b16 %v1472
        %v1510 = vunpack.c.l.b16 %v1473
        %v1511 = vunpack.c.l.b16 %v1474
        %v1512 = vunpack.c.l.b16 %v1475
        %v1513 = vunpack.c.l.b16 %v1476
        %v1514 = vunpack.c.l.b16 %v1477
        %v1515 = vunpack.c.l.b16 %v1478
        %v1516 = vunpack.c.l.b16 %v1479
        %v1517 = vunpack.c.l.b16 %v1480
        %v1518 = vunpack.c.l.b16 %v1481
        %v1519 = vunpack.c.l.b16 %v1482
        %v1520 = vunpack.c.l.b16 %v1483
        %v1521 = vunpack.c.l.b16 %v1484
        %v1522 = vpack.c.b16 %v1507, %v1506
        %v1523 = vpack.c.b16 %v1509, %v1508
        %v1524 = vpack.c.b16 %v1511, %v1510
        %v1525 = vpack.c.b16 %v1513, %v1512
        %v1526 = vpack.c.b16 %v1515, %v1514
        %v1527 = vpack.c.b16 %v1517, %v1516
        %v1528 = vpack.c.b16 %v1519, %v1518
        %v1529 = vpack.c.b16 %v1521, %v1520
        %1538 = vmatprep.subr.bf16.mxu0 0
        %1539 = vmatpush1.bf16.msra.mxu0 %v1529
        %1540 = vmatprep.subr.bf16.mxu0 0
        %1541 = vmatpush1.bf16.msra.mxu0 %v1528
        %1542 = vmatprep.subr.bf16.mxu0 0
        %1543 = vmatpush1.bf16.msra.mxu0 %v1527
        %1544 = vmatprep.subr.bf16.mxu0 0
        %1545 = vmatpush1.bf16.msra.mxu0 %v1526
        %1546 = vmatprep.subr.bf16.mxu0 0
        %1547 = vmatpush1.bf16.msra.mxu0 %v1525
        %1548 = vmatprep.subr.bf16.mxu0 0
        %1549 = vmatpush1.bf16.msra.mxu0 %v1524
        %1550 = vmatprep.subr.bf16.mxu0 0
        %1551 = vmatpush1.bf16.msra.mxu0 %v1523
        %1552 = vmatprep.subr.bf16.mxu0 0
        %1553 = vmatpush1.bf16.msra.mxu0 %v1522
        %1554 = vmatprep.subr.bf16.mxu0 0
        %1555 = vmatpush2.bf16.msra.mxu0 0
        %1556 = vmatprep.subr.bf16.mxu0 0
        %1557 = vmatpush2.bf16.msra.mxu0 0
        %1558 = vmatprep.subr.bf16.mxu0 0
        %1559 = vmatpush2.bf16.msra.mxu0 0
        %1560 = vmatprep.subr.bf16.mxu0 0
        %1561 = vmatpush2.bf16.msra.mxu0 0
        %1562 = vmatprep.subr.bf16.mxu0 0
        %1563 = vmatpush2.bf16.msra.mxu0 0
        %1564 = vmatprep.subr.bf16.mxu0 0
        %1565 = vmatpush2.bf16.msra.mxu0 0
        %1566 = vmatprep.subr.bf16.mxu0 0
        %1567 = vmatpush2.bf16.msra.mxu0 0
        %1568 = vmatprep.subr.bf16.mxu0 0
        %1569 = vmatpush2.bf16.msra.mxu0 0
        %1570 = vmatprep.mubr.bf16.mxu0 0
        %1571 = vmatmul.mubr.bf16.gmra.mxu0 %v1452
        %v1572 = vpop.f32.mrf.mxu0
        %v1573 = vadd.f32 %v1489, %v1572
        %v1574 = vpop.f32.mrf.mxu0
        %v1575 = vpop.f32.mrf.mxu0
        %v1576 = vadd.f32 %v1489, %v1575
        %v1577 = vpop.f32.mrf.mxu0
        %1578 = vmatprep.mubr.bf16.mxu0 0
        %1579 = vmatmul.mubr.bf16.gmra.mxu0 %v1453
        %v1580 = vpop.f32.mrf.mxu0
        %v1581 = vadd.f32 %v1489, %v1580
        %v1582 = vpop.f32.mrf.mxu0
        %v1583 = vpop.f32.mrf.mxu0
        %v1584 = vadd.f32 %v1489, %v1583
        %v1585 = vpop.f32.mrf.mxu0
        %1586 = vmatprep.mubr.bf16.mxu0 0
        %1587 = vmatmul.mubr.bf16.gmra.mxu0 %v1454
        %v1588 = vpop.f32.mrf.mxu0
        %v1589 = vadd.f32 %v1489, %v1588
        %v1590 = vpop.f32.mrf.mxu0
        %v1591 = vpop.f32.mrf.mxu0
        %v1592 = vadd.f32 %v1489, %v1591
        %v1593 = vpop.f32.mrf.mxu0
        %1594 = vmatprep.mubr.bf16.mxu0 0
        %1595 = vmatmul.mubr.bf16.gmra.mxu0 %v1455
        %v1596 = vpop.f32.mrf.mxu0
        %v1597 = vadd.f32 %v1489, %v1596
        %v1598 = vpop.f32.mrf.mxu0
        %v1599 = vpop.f32.mrf.mxu0
        %v1600 = vadd.f32 %v1489, %v1599
        %v1601 = vpop.f32.mrf.mxu0
        %1602 = vmatprep.mubr.bf16.mxu0 0
        %1603 = vmatmul.mubr.bf16.gmra.mxu0 %v1456
        %v1604 = vpop.f32.mrf.mxu0
        %v1605 = vadd.f32 %v1489, %v1604
        %v1606 = vpop.f32.mrf.mxu0
        %v1607 = vpop.f32.mrf.mxu0
        %v1608 = vadd.f32 %v1489, %v1607
        %v1609 = vpop.f32.mrf.mxu0
        %1610 = vmatprep.mubr.bf16.mxu0 0
        %1611 = vmatmul.mubr.bf16.gmra.mxu0 %v1457
        %v1612 = vpop.f32.mrf.mxu0
        %v1613 = vadd.f32 %v1489, %v1612
        %v1614 = vpop.f32.mrf.mxu0
        %v1615 = vpop.f32.mrf.mxu0
        %v1616 = vadd.f32 %v1489, %v1615
        %v1617 = vpop.f32.mrf.mxu0
        %1618 = vmatprep.mubr.bf16.mxu0 0
        %1619 = vmatmul.mubr.bf16.gmra.mxu0 %v1458
        %v1620 = vpop.f32.mrf.mxu0
        %v1621 = vadd.f32 %v1489, %v1620
        %v1622 = vpop.f32.mrf.mxu0
        %v1623 = vpop.f32.mrf.mxu0
        %v1624 = vadd.f32 %v1489, %v1623
        %v1625 = vpop.f32.mrf.mxu0
        %1626 = vmatprep.mubr.bf16.mxu0 0
        %1627 = vmatmul.mubr.bf16.gmra.mxu0 %v1459
        %v1628 = vpop.f32.mrf.mxu0
        %v1629 = vadd.f32 %v1489, %v1628
        %v1630 = vpop.f32.mrf.mxu0
        %v1631 = vpop.f32.mrf.mxu0
        %v1632 = vadd.f32 %v1489, %v1631
        %v1633 = vpop.f32.mrf.mxu0
        %1634 = vmatprep.mubr.bf16.mxu0 0
        %1635 = vmatmul.mubr.bf16.gmra.mxu0 %v1460
        %v1636 = vpop.f32.mrf.mxu0
        %v1637 = vadd.f32 %v1489, %v1636
        %v1638 = vpop.f32.mrf.mxu0
        %v1639 = vpop.f32.mrf.mxu0
        %v1640 = vadd.f32 %v1489, %v1639
        %v1641 = vpop.f32.mrf.mxu0
        %1642 = vmatprep.mubr.bf16.mxu0 0
        %1643 = vmatmul.mubr.bf16.gmra.mxu0 %v1461
        %v1644 = vpop.f32.mrf.mxu0
        %v1645 = vadd.f32 %v1489, %v1644
        %v1646 = vpop.f32.mrf.mxu0
        %v1647 = vpop.f32.mrf.mxu0
        %v1648 = vadd.f32 %v1489, %v1647
        %v1649 = vpop.f32.mrf.mxu0
        %1650 = vmatprep.mubr.bf16.mxu0 0
        %1651 = vmatmul.mubr.bf16.gmra.mxu0 %v1462
        %v1652 = vpop.f32.mrf.mxu0
        %v1653 = vadd.f32 %v1489, %v1652
        %v1654 = vpop.f32.mrf.mxu0
        %v1655 = vpop.f32.mrf.mxu0
        %v1656 = vadd.f32 %v1489, %v1655
        %v1657 = vpop.f32.mrf.mxu0
        %1658 = vmatprep.mubr.bf16.mxu0 0
        %1659 = vmatmul.mubr.bf16.gmra.mxu0 %v1463
        %v1660 = vpop.f32.mrf.mxu0
        %v1661 = vadd.f32 %v1489, %v1660
        %v1662 = vpop.f32.mrf.mxu0
        %v1663 = vpop.f32.mrf.mxu0
        %v1664 = vadd.f32 %v1489, %v1663
        %v1665 = vpop.f32.mrf.mxu0
        %1666 = vmatprep.mubr.bf16.mxu0 0
        %1667 = vmatmul.mubr.bf16.gmra.mxu0 %v1464
        %v1668 = vpop.f32.mrf.mxu0
        %v1669 = vadd.f32 %v1489, %v1668
        %v1670 = vpop.f32.mrf.mxu0
        %v1671 = vpop.f32.mrf.mxu0
        %v1672 = vadd.f32 %v1489, %v1671
        %v1673 = vpop.f32.mrf.mxu0
        %1674 = vmatprep.mubr.bf16.mxu0 0
        %1675 = vmatmul.mubr.bf16.gmra.mxu0 %v1465
        %v1676 = vpop.f32.mrf.mxu0
        %v1677 = vadd.f32 %v1489, %v1676
        %v1678 = vpop.f32.mrf.mxu0
        %v1679 = vpop.f32.mrf.mxu0
        %v1680 = vadd.f32 %v1489, %v1679
        %v1681 = vpop.f32.mrf.mxu0
        %1682 = vmatprep.mubr.bf16.mxu0 0
        %1683 = vmatmul.mubr.bf16.gmra.mxu0 %v1466
        %v1684 = vpop.f32.mrf.mxu0
        %v1685 = vadd.f32 %v1489, %v1684
        %v1686 = vpop.f32.mrf.mxu0
        %v1687 = vpop.f32.mrf.mxu0
        %v1688 = vadd.f32 %v1489, %v1687
        %v1689 = vpop.f32.mrf.mxu0
        %1690 = vmatprep.mubr.bf16.mxu0 0
        %1691 = vmatmul.mubr.bf16.gmra.mxu0 %v1467
        %v1692 = vpop.f32.mrf.mxu0
        %v1693 = vadd.f32 %v1489, %v1692
        %v1694 = vpop.f32.mrf.mxu0
        %v1695 = vpop.f32.mrf.mxu0
        %v1696 = vadd.f32 %v1489, %v1695
        %v1697 = vpop.f32.mrf.mxu0
        %1698 = vdwg.mxu0
        %v1699 = vmax.f32 %v1573, 0.0
        %v1700 = vmax.f32 %v1576, 0.0
        %v1701 = vmax.f32 %v1581, 0.0
        %v1702 = vmax.f32 %v1584, 0.0
        %v1703 = vmax.f32 %v1589, 0.0
        %v1704 = vmax.f32 %v1592, 0.0
        %v1705 = vmax.f32 %v1597, 0.0
        %v1706 = vmax.f32 %v1600, 0.0
        %v1707 = vmax.f32 %v1605, 0.0
        %v1708 = vmax.f32 %v1608, 0.0
        %v1709 = vmax.f32 %v1613, 0.0
        %v1710 = vmax.f32 %v1616, 0.0
        %v1711 = vmax.f32 %v1621, 0.0
        %v1712 = vmax.f32 %v1624, 0.0
        %v1713 = vmax.f32 %v1629, 0.0
        %v1714 = vmax.f32 %v1632, 0.0
        %v1715 = vmax.f32 %v1637, 0.0
        %v1716 = vmax.f32 %v1640, 0.0
        %v1717 = vmax.f32 %v1645, 0.0
        %v1718 = vmax.f32 %v1648, 0.0
        %v1719 = vmax.f32 %v1653, 0.0
        %v1720 = vmax.f32 %v1656, 0.0
        %v1721 = vmax.f32 %v1661, 0.0
        %v1722 = vmax.f32 %v1664, 0.0
        %v1723 = vmax.f32 %v1669, 0.0
        %v1724 = vmax.f32 %v1672, 0.0
        %v1725 = vmax.f32 %v1677, 0.0
        %v1726 = vmax.f32 %v1680, 0.0
        %v1727 = vmax.f32 %v1685, 0.0
        %v1728 = vmax.f32 %v1688, 0.0
        %v1729 = vmax.f32 %v1693, 0.0
        %v1730 = vmax.f32 %v1696, 0.0
        %v1731 = vpack.c.bf16 %v1700, %v1699
        %v1732 = vpack.c.bf16 %v1702, %v1701
        %v1733 = vpack.c.bf16 %v1704, %v1703
        %v1734 = vpack.c.bf16 %v1706, %v1705
        %v1735 = vpack.c.bf16 %v1708, %v1707
        %v1736 = vpack.c.bf16 %v1710, %v1709
        %v1737 = vpack.c.bf16 %v1712, %v1711
        %v1738 = vpack.c.bf16 %v1714, %v1713
        %v1739 = vpack.c.bf16 %v1716, %v1715
        %v1740 = vpack.c.bf16 %v1718, %v1717
        %v1741 = vpack.c.bf16 %v1720, %v1719
        %v1742 = vpack.c.bf16 %v1722, %v1721
        %v1743 = vpack.c.bf16 %v1724, %v1723
        %v1744 = vpack.c.bf16 %v1726, %v1725
        %v1745 = vpack.c.bf16 %v1728, %v1727
        %v1746 = vpack.c.bf16 %v1730, %v1729
        %v1747 = vld [vmem:[%s6] sm:$0xf]
        %v1748 = vld [vmem:[%s6 + $0x4] sm:$0xf]
        %v1749 = vld [vmem:[%s6 + $0x8] sm:$0xf]
        %v1750 = vld [vmem:[%s6 + $0xc] sm:$0xf]
        %v1751 = vld [vmem:[%s6 + $0x10] sm:$0xf]
        %v1752 = vld [vmem:[%s6 + $0x14] sm:$0xf]
        %v1753 = vld [vmem:[%s6 + $0x18] sm:$0xf]
        %v1754 = vld [vmem:[%s6 + $0x1c] sm:$0xf]
        %v1755 = vld [vmem:[%s6 + $0x20] sm:$0xf]
        %v1756 = vld [vmem:[%s6 + $0x24] sm:$0xf]
        %v1757 = vld [vmem:[%s6 + $0x28] sm:$0xf]
        %v1758 = vld [vmem:[%s6 + $0x2c] sm:$0xf]
        %v1759 = vld [vmem:[%s6 + $0x30] sm:$0xf]
        %v1760 = vld [vmem:[%s6 + $0x34] sm:$0xf]
        %v1761 = vld [vmem:[%s6 + $0x38] sm:$0xf]
        %v1762 = vld [vmem:[%s6 + $0x3c] sm:$0xf]
        %v1763 = vld [vmem:[%s7] sm:$0x1]
        %v1765 = vlaneseq
        %v1766 = vshrl.u32 %v1765, 7
        %v1767 = vsub.s32 0, %v1766
        %v1768 = vrot.slane %v1763, %v1767
        %v1786 = vunpack.c.l.b16 %v1747
        %v1787 = vunpack.c.l.b16 %v1748
        %v1788 = vunpack.c.l.b16 %v1749
        %v1789 = vunpack.c.l.b16 %v1750
        %v1790 = vunpack.c.l.b16 %v1751
        %v1791 = vunpack.c.l.b16 %v1752
        %v1792 = vunpack.c.l.b16 %v1753
        %v1793 = vunpack.c.l.b16 %v1754
        %v1794 = vunpack.c.l.b16 %v1755
        %v1795 = vunpack.c.l.b16 %v1756
        %v1796 = vunpack.c.l.b16 %v1757
        %v1797 = vunpack.c.l.b16 %v1758
        %v1798 = vunpack.c.l.b16 %v1759
        %v1799 = vunpack.c.l.b16 %v1760
        %v1800 = vunpack.c.l.b16 %v1761
        %v1801 = vunpack.c.l.b16 %v1762
        %v1802 = vpack.c.b16 %v1787, %v1786
        %v1803 = vpack.c.b16 %v1789, %v1788
        %v1804 = vpack.c.b16 %v1791, %v1790
        %v1805 = vpack.c.b16 %v1793, %v1792
        %v1806 = vpack.c.b16 %v1795, %v1794
        %v1807 = vpack.c.b16 %v1797, %v1796
        %v1808 = vpack.c.b16 %v1799, %v1798
        %v1809 = vpack.c.b16 %v1801, %v1800
        %1818 = vmatprep.subr.bf16.mxu0 0
        %1819 = vmatpush1.bf16.msra.mxu0 %v1809
        %1820 = vmatprep.subr.bf16.mxu0 0
        %1821 = vmatpush1.bf16.msra.mxu0 %v1808
        %1822 = vmatprep.subr.bf16.mxu0 0
        %1823 = vmatpush1.bf16.msra.mxu0 %v1807
        %1824 = vmatprep.subr.bf16.mxu0 0
        %1825 = vmatpush1.bf16.msra.mxu0 %v1806
        %1826 = vmatprep.subr.bf16.mxu0 0
        %1827 = vmatpush1.bf16.msra.mxu0 %v1805
        %1828 = vmatprep.subr.bf16.mxu0 0
        %1829 = vmatpush1.bf16.msra.mxu0 %v1804
        %1830 = vmatprep.subr.bf16.mxu0 0
        %1831 = vmatpush1.bf16.msra.mxu0 %v1803
        %1832 = vmatprep.subr.bf16.mxu0 0
        %1833 = vmatpush1.bf16.msra.mxu0 %v1802
        %1834 = vmatprep.subr.bf16.mxu0 0
        %1835 = vmatpush2.bf16.msra.mxu0 0
        %1836 = vmatprep.subr.bf16.mxu0 0
        %1837 = vmatpush2.bf16.msra.mxu0 0
        %1838 = vmatprep.subr.bf16.mxu0 0
        %1839 = vmatpush2.bf16.msra.mxu0 0
        %1840 = vmatprep.subr.bf16.mxu0 0
        %1841 = vmatpush2.bf16.msra.mxu0 0
        %1842 = vmatprep.subr.bf16.mxu0 0
        %1843 = vmatpush2.bf16.msra.mxu0 0
        %1844 = vmatprep.subr.bf16.mxu0 0
        %1845 = vmatpush2.bf16.msra.mxu0 0
        %1846 = vmatprep.subr.bf16.mxu0 0
        %1847 = vmatpush2.bf16.msra.mxu0 0
        %1848 = vmatprep.subr.bf16.mxu0 0
        %1849 = vmatpush2.bf16.msra.mxu0 0
        %1850 = vmatprep.mubr.bf16.mxu0 0
        %1851 = vmatmul.mubr.bf16.gmra.mxu0 %v1731
        %v1852 = vpop.f32.mrf.mxu0
        %v1853 = vadd.f32 %v1768, %v1852
        %v1854 = vpop.f32.mrf.mxu0
        %v1855 = vpop.f32.mrf.mxu0
        %v1856 = vadd.f32 %v1768, %v1855
        %v1857 = vpop.f32.mrf.mxu0
        %1858 = vmatprep.mubr.bf16.mxu0 0
        %1859 = vmatmul.mubr.bf16.gmra.mxu0 %v1732
        %v1860 = vpop.f32.mrf.mxu0
        %v1861 = vadd.f32 %v1768, %v1860
        %v1862 = vpop.f32.mrf.mxu0
        %v1863 = vpop.f32.mrf.mxu0
        %v1864 = vadd.f32 %v1768, %v1863
        %v1865 = vpop.f32.mrf.mxu0
        %1866 = vmatprep.mubr.bf16.mxu0 0
        %1867 = vmatmul.mubr.bf16.gmra.mxu0 %v1733
        %v1868 = vpop.f32.mrf.mxu0
        %v1869 = vadd.f32 %v1768, %v1868
        %v1870 = vpop.f32.mrf.mxu0
        %v1871 = vpop.f32.mrf.mxu0
        %v1872 = vadd.f32 %v1768, %v1871
        %v1873 = vpop.f32.mrf.mxu0
        %1874 = vmatprep.mubr.bf16.mxu0 0
        %1875 = vmatmul.mubr.bf16.gmra.mxu0 %v1734
        %v1876 = vpop.f32.mrf.mxu0
        %v1877 = vadd.f32 %v1768, %v1876
        %v1878 = vpop.f32.mrf.mxu0
        %v1879 = vpop.f32.mrf.mxu0
        %v1880 = vadd.f32 %v1768, %v1879
        %v1881 = vpop.f32.mrf.mxu0
        %1882 = vmatprep.mubr.bf16.mxu0 0
        %1883 = vmatmul.mubr.bf16.gmra.mxu0 %v1735
        %v1884 = vpop.f32.mrf.mxu0
        %v1885 = vadd.f32 %v1768, %v1884
        %v1886 = vpop.f32.mrf.mxu0
        %v1887 = vpop.f32.mrf.mxu0
        %v1888 = vadd.f32 %v1768, %v1887
        %v1889 = vpop.f32.mrf.mxu0
        %1890 = vmatprep.mubr.bf16.mxu0 0
        %1891 = vmatmul.mubr.bf16.gmra.mxu0 %v1736
        %v1892 = vpop.f32.mrf.mxu0
        %v1893 = vadd.f32 %v1768, %v1892
        %v1894 = vpop.f32.mrf.mxu0
        %v1895 = vpop.f32.mrf.mxu0
        %v1896 = vadd.f32 %v1768, %v1895
        %v1897 = vpop.f32.mrf.mxu0
        %1898 = vmatprep.mubr.bf16.mxu0 0
        %1899 = vmatmul.mubr.bf16.gmra.mxu0 %v1737
        %v1900 = vpop.f32.mrf.mxu0
        %v1901 = vadd.f32 %v1768, %v1900
        %v1902 = vpop.f32.mrf.mxu0
        %v1903 = vpop.f32.mrf.mxu0
        %v1904 = vadd.f32 %v1768, %v1903
        %v1905 = vpop.f32.mrf.mxu0
        %1906 = vmatprep.mubr.bf16.mxu0 0
        %1907 = vmatmul.mubr.bf16.gmra.mxu0 %v1738
        %v1908 = vpop.f32.mrf.mxu0
        %v1909 = vadd.f32 %v1768, %v1908
        %v1910 = vpop.f32.mrf.mxu0
        %v1911 = vpop.f32.mrf.mxu0
        %v1912 = vadd.f32 %v1768, %v1911
        %v1913 = vpop.f32.mrf.mxu0
        %1914 = vmatprep.mubr.bf16.mxu0 0
        %1915 = vmatmul.mubr.bf16.gmra.mxu0 %v1739
        %v1916 = vpop.f32.mrf.mxu0
        %v1917 = vadd.f32 %v1768, %v1916
        %v1918 = vpop.f32.mrf.mxu0
        %v1919 = vpop.f32.mrf.mxu0
        %v1920 = vadd.f32 %v1768, %v1919
        %v1921 = vpop.f32.mrf.mxu0
        %1922 = vmatprep.mubr.bf16.mxu0 0
        %1923 = vmatmul.mubr.bf16.gmra.mxu0 %v1740
        %v1924 = vpop.f32.mrf.mxu0
        %v1925 = vadd.f32 %v1768, %v1924
        %v1926 = vpop.f32.mrf.mxu0
        %v1927 = vpop.f32.mrf.mxu0
        %v1928 = vadd.f32 %v1768, %v1927
        %v1929 = vpop.f32.mrf.mxu0
        %1930 = vmatprep.mubr.bf16.mxu0 0
        %1931 = vmatmul.mubr.bf16.gmra.mxu0 %v1741
        %v1932 = vpop.f32.mrf.mxu0
        %v1933 = vadd.f32 %v1768, %v1932
        %v1934 = vpop.f32.mrf.mxu0
        %v1935 = vpop.f32.mrf.mxu0
        %v1936 = vadd.f32 %v1768, %v1935
        %v1937 = vpop.f32.mrf.mxu0
        %1938 = vmatprep.mubr.bf16.mxu0 0
        %1939 = vmatmul.mubr.bf16.gmra.mxu0 %v1742
        %v1940 = vpop.f32.mrf.mxu0
        %v1941 = vadd.f32 %v1768, %v1940
        %v1942 = vpop.f32.mrf.mxu0
        %v1943 = vpop.f32.mrf.mxu0
        %v1944 = vadd.f32 %v1768, %v1943
        %v1945 = vpop.f32.mrf.mxu0
        %1946 = vmatprep.mubr.bf16.mxu0 0
        %1947 = vmatmul.mubr.bf16.gmra.mxu0 %v1743
        %v1948 = vpop.f32.mrf.mxu0
        %v1949 = vadd.f32 %v1768, %v1948
        %v1950 = vpop.f32.mrf.mxu0
        %v1951 = vpop.f32.mrf.mxu0
        %v1952 = vadd.f32 %v1768, %v1951
        %v1953 = vpop.f32.mrf.mxu0
        %1954 = vmatprep.mubr.bf16.mxu0 0
        %1955 = vmatmul.mubr.bf16.gmra.mxu0 %v1744
        %v1956 = vpop.f32.mrf.mxu0
        %v1957 = vadd.f32 %v1768, %v1956
        %v1958 = vpop.f32.mrf.mxu0
        %v1959 = vpop.f32.mrf.mxu0
        %v1960 = vadd.f32 %v1768, %v1959
        %v1961 = vpop.f32.mrf.mxu0
        %1962 = vmatprep.mubr.bf16.mxu0 0
        %1963 = vmatmul.mubr.bf16.gmra.mxu0 %v1745
        %v1964 = vpop.f32.mrf.mxu0
        %v1965 = vadd.f32 %v1768, %v1964
        %v1966 = vpop.f32.mrf.mxu0
        %v1967 = vpop.f32.mrf.mxu0
        %v1968 = vadd.f32 %v1768, %v1967
        %v1969 = vpop.f32.mrf.mxu0
        %1970 = vmatprep.mubr.bf16.mxu0 0
        %1971 = vmatmul.mubr.bf16.gmra.mxu0 %v1746
        %v1972 = vpop.f32.mrf.mxu0
        %v1973 = vadd.f32 %v1768, %v1972
        %v1974 = vpop.f32.mrf.mxu0
        %v1975 = vpop.f32.mrf.mxu0
        %v1976 = vadd.f32 %v1768, %v1975
        %v1977 = vpop.f32.mrf.mxu0
        %1978 = vdwg.mxu0
        %vm1979 = vcmask 15360
        %1980 = vst.msk [vmem:[%s394] sm:$0xff] %vm1979, %v1853
        %1981 = vst.msk [vmem:[%s394 + $0x8] sm:$0xff] %vm1979, %v1856
        %1982 = vst.msk [vmem:[%s394 + $0x10] sm:$0xff] %vm1979, %v1861
        %1983 = vst.msk [vmem:[%s394 + $0x18] sm:$0xff] %vm1979, %v1864
        %1984 = vst.msk [vmem:[%s394 + $0x20] sm:$0xff] %vm1979, %v1869
        %1985 = vst.msk [vmem:[%s394 + $0x28] sm:$0xff] %vm1979, %v1872
        %1986 = vst.msk [vmem:[%s394 + $0x30] sm:$0xff] %vm1979, %v1877
        %1987 = vst.msk [vmem:[%s394 + $0x38] sm:$0xff] %vm1979, %v1880
        %1988 = vst.msk [vmem:[%s394 + $0x40] sm:$0xff] %vm1979, %v1885
        %1989 = vst.msk [vmem:[%s394 + $0x48] sm:$0xff] %vm1979, %v1888
        %1990 = vst.msk [vmem:[%s394 + $0x50] sm:$0xff] %vm1979, %v1893
        %1991 = vst.msk [vmem:[%s394 + $0x58] sm:$0xff] %vm1979, %v1896
        %1992 = vst.msk [vmem:[%s394 + $0x60] sm:$0xff] %vm1979, %v1901
        %1993 = vst.msk [vmem:[%s394 + $0x68] sm:$0xff] %vm1979, %v1904
        %1994 = vst.msk [vmem:[%s394 + $0x70] sm:$0xff] %vm1979, %v1909
        %1995 = vst.msk [vmem:[%s394 + $0x78] sm:$0xff] %vm1979, %v1912
        %1996 = vst.msk [vmem:[%s394 + $0x80] sm:$0xff] %vm1979, %v1917
        %1997 = vst.msk [vmem:[%s394 + $0x88] sm:$0xff] %vm1979, %v1920
        %1998 = vst.msk [vmem:[%s394 + $0x90] sm:$0xff] %vm1979, %v1925
        %1999 = vst.msk [vmem:[%s394 + $0x98] sm:$0xff] %vm1979, %v1928
        %2000 = vst.msk [vmem:[%s394 + $0xa0] sm:$0xff] %vm1979, %v1933
        %2001 = vst.msk [vmem:[%s394 + $0xa8] sm:$0xff] %vm1979, %v1936
        %2002 = vst.msk [vmem:[%s394 + $0xb0] sm:$0xff] %vm1979, %v1941
        %2003 = vst.msk [vmem:[%s394 + $0xb8] sm:$0xff] %vm1979, %v1944
        %2004 = vst.msk [vmem:[%s394 + $0xc0] sm:$0xff] %vm1979, %v1949
        %2005 = vst.msk [vmem:[%s394 + $0xc8] sm:$0xff] %vm1979, %v1952
        %2006 = vst.msk [vmem:[%s394 + $0xd0] sm:$0xff] %vm1979, %v1957
        %2007 = vst.msk [vmem:[%s394 + $0xd8] sm:$0xff] %vm1979, %v1960
        %2008 = vst.msk [vmem:[%s394 + $0xe0] sm:$0xff] %vm1979, %v1965
        %2009 = vst.msk [vmem:[%s394 + $0xe8] sm:$0xff] %vm1979, %v1968
        %2010 = vst.msk [vmem:[%s394 + $0xf0] sm:$0xff] %vm1979, %v1973
        %2011 = vst.msk [vmem:[%s394 + $0xf8] sm:$0xff] %vm1979, %v1976
        %s2012 = smul.u32 16, %s24
        %p2013 = scmp.lt.s32.totalorder %s23, 1
        %s2014 = scalar_select %p2013, %s23, 1
        %p2015 = scmp.lt.s32.totalorder %s2012, 15
        %s2016 = scalar_select %p2015, %s2012, 15
        %s2017 = smul.addr %s2016, 2
        %s2018 = smul.addr %s2014, 32
        %s2019 = sadd.s32 %s2017, %s2018
        %s2020 = smul.addr %s2019, 8
        %s2021 = scalar_lea.vmem %s8, %s2020
        // Predicated region
        $region76: #{_lambda_.11} parent=70 // pred_check
          %p2022 = pneg %p231
        $region77: #{_lambda_.11} parent=70 // pred_check_branch
          %2024 = sbr.rel (%p2022) target = $region79
        $region78: #{_lambda_.11} parent=70 // pred_region
          %s2025 = smul.u32 16, %s24
        $region79: #{_lambda_.11} parent=70 // pred_fallthru
          _
      $region71: #{_lambda_.11} parent=5 // pred_fallthru
        _
      %p2026 = scmp.le.s32.totalorder 2, %s14
      // Predicated region
      $region80: #{_lambda_.11} parent=5 // pred_check
        %p2027 = pneg %p2026
      $region81: #{_lambda_.11} parent=5 // pred_check_branch
        %2029 = sbr.rel (%p2027) target = $region83
      $region82: #{_lambda_.11} parent=5 // pred_region
        %s2030 = ssub.s32 %s14, 2
        // Predicated region
        $region84: #{_lambda_.11} parent=82 // pred_check
          %p2031 = pneg %p237
        $region85: #{_lambda_.11} parent=82 // pred_check_branch
          %2033 = sbr.rel (%p2031) target = $region87
        $region86: #{_lambda_.11} parent=82 // pred_region
          %s2034 = smul.u32 16, %s26
          %p2035 = scmp.lt.s32.totalorder %s25, 1
          %s2036 = scalar_select %p2035, %s25, 1
          %p2037 = scmp.lt.s32.totalorder %s2034, 15
          %s2038 = scalar_select %p2037, %s2034, 15
          %s2039 = smul.addr %s2038, 2
          %s2040 = smul.addr %s2036, 32
          %s2041 = sadd.s32 %s2039, %s2040
          %s2042 = smul.addr %s2041, 8
          %s2043 = scalar_lea.vmem %s8, %s2042
        $region87: #{_lambda_.11} parent=82 // pred_fallthru
          _
      $region83: #{_lambda_.11} parent=5 // pred_fallthru
        _
    $region6: #{_lambda_.11} parent=1 // loop_footer
      %s18 = sadd.s32 1, %s14
    $region7: #{_lambda_.11} parent=1 // loop_footer_branch
      %13 = sbr.rel target = $region3
    $region8: #{_lambda_.11} parent=1 // loop_exit
      _

</llo_original>
